<compile_context>
chip_gen: v7x
topology: tpu7x:2x2x1
jax: 0.10.0
libtpu: 0.0.40
codegen_flags: <defaults>
</compile_context>

<pallas_src>
import functools

import numpy as np

import jax
import jax.numpy as jnp
from jax.experimental import pallas as pl
from jax.experimental.pallas import tpu as pltpu


CONV_COMPUTE_DTYPE = jnp.float32   # set to jnp.bfloat16 on v6e/v7x for native MXU rate


# ----------------------------------------------------------------------------
# Kernel 1: fused feature map + TensorLayer(16, normalize) + TensorLayer(8)
#
# Site ordering for layer 1 (lane index s1, 256 sites):
#   layer-1 site (m, n), m = 2p + rp, n = 2q + rq  ->  s1 = (2*rp + rq)*64 + 8*p + q
# so that layer 2's four inputs are the contiguous slices [0:64], [64:128], ...
# ----------------------------------------------------------------------------
def frontend_kernel(a_ref, b_ref, c_ref, d_ref, w1_ref, w2_ref, o_ref):
    pi4 = 3.1416 / 4.0                          # same constant as the PyTorch source
    # feature map (bond_data = 2 -> [cos, sin]) computed in-kernel (EUP)
    fa = (jnp.cos(a_ref[...] * pi4), jnp.sin(a_ref[...] * pi4))   # each (N, 256)
    fb = (jnp.cos(b_ref[...] * pi4), jnp.sin(b_ref[...] * pi4))
    fc = (jnp.cos(c_ref[...] * pi4), jnp.sin(c_ref[...] * pi4))
    fd = (jnp.cos(d_ref[...] * pi4), jnp.sin(d_ref[...] * pi4))

    w1 = w1_ref[...]                            # (32, 256)  rows = u*16 + (i,j,k,l)
    w2 = w2_ref[...]                            # (16, 64)   rows = (i,j,k,l)

    # ---- TensorLayer(tn=16, bond 2 -> 2), pair-factored bond^4 products ----
    ab = [fa[i] * fb[j] for i in range(2) for j in range(2)]      # (N, 256) x4
    cd = [fc[k] * fd[l] for k in range(2) for l in range(2)]
    prods = [ab[q // 4] * cd[q % 4] for q in range(16)]           # q = i*8+j*4+k*2+l

    out1 = []
    for u in range(2):
        acc = None
        for q in range(16):
            t = prods[q] * w1[u * 16 + q: u * 16 + q + 1, :]
            acc = t if acc is None else acc + t
        out1.append(acc)                                          # (N, 256)
    # F.normalize(dim=1, p=2) over the bond_up axis, eps = 1e-12
    inv = 1.0 / jnp.maximum(jnp.sqrt(out1[0] * out1[0] + out1[1] * out1[1]), 1e-12)
    out1 = [o * inv for o in out1]

    # ---- TensorLayer(tn=8, bond 2 -> 1), no normalize ----
    a2 = [out1[u][:, 0:64] for u in range(2)]
    b2 = [out1[u][:, 64:128] for u in range(2)]
    c2 = [out1[u][:, 128:192] for u in range(2)]
    d2 = [out1[u][:, 192:256] for u in range(2)]
    ab2 = [a2[i] * b2[j] for i in range(2) for j in range(2)]
    cd2 = [c2[k] * d2[l] for k in range(2) for l in range(2)]
    acc2 = None
    for q in range(16):
        t = (ab2[q // 4] * cd2[q % 4]) * w2[q: q + 1, :]
        acc2 = t if acc2 is None else acc2 + t
    o_ref[...] = acc2                                             # (N, 64), single store


def frontend(x_nchw, w_tl1, w_tl2):
    # x_nchw: (N, 1, 28, 28)  ->  compressed_flat (N, 64) with lanes = 8*p + q
    n = x_nchw.shape[0]
    x28 = x_nchw[:, 0, :, :]
    x32 = jnp.pad(x28, ((0, 0), (2, 2), (2, 2)))                  # data32[:,2:30,2:30]=data28

    # one-time de-interleave: grid row = 4p + 2rp + ro, col = 4q + 2rq + co
    c = x32.reshape(n, 8, 2, 2, 8, 2, 2)                          # (n, p, rp, ro, q, rq, co)
    c = jnp.transpose(c, (0, 3, 6, 2, 5, 1, 4)).reshape(n, 2, 2, 256)
    a_in, b_in = c[:, 0, 0, :], c[:, 0, 1, :]                     # (N, 256) each
    c_in, d_in = c[:, 1, 0, :], c[:, 1, 1, :]

    # layer-1 weight reordered to rows = u*16 + (i,j,k,l), cols = s1
    w1k = jnp.transpose(w_tl1.reshape(8, 2, 8, 2, 2, 2, 2, 2, 2),
                        (8, 4, 5, 6, 7, 1, 3, 0, 2)).reshape(32, 256)
    # layer-2 weight: rows = (i,j,k,l), cols = s2 = 8*p + q
    w2k = jnp.transpose(w_tl2.reshape(64, 16), (1, 0))

    return pl.pallas_call(
        frontend_kernel,
        out_shape=jax.ShapeDtypeStruct((n, 64), jnp.float32),
    )(a_in, b_in, c_in, d_in, w1k, w2k)


# ----------------------------------------------------------------------------
# Kernel 2: ConvTranspose2d (gather form) with in-kernel tap stacking.
# Layout: per batch element x is (Cin, Hp*Wp) with the flattened padded grid on lanes.
# Output footprint (Cout, L_o) with L_o = (OH-1)*Wp + OW; positions with ow >= OW are
# garbage and are sliced off in XLA.  Single MXU matmul per layer, lane-dense output.
# ----------------------------------------------------------------------------
def conv_tap_kernel(xp_ref, w_ref, b_ref, o_ref, *, k, wp, oh, ow, act, compute_dtype):
    x = xp_ref[0]                                                 # (Cin, Hp*Wp)
    l_o = (oh - 1) * wp + ow
    # in-VMEM "im2col": K*K lane-shifted copies stacked on sublanes
    rows = []
    for kh in range(k):
        rows.append(jnp.concatenate(
            [x[:, kh * wp + kw: kh * wp + kw + l_o] for kw in range(k)], axis=0))
    xs = jnp.concatenate(rows, axis=0)                            # (K*K*Cin, L_o)
    w = w_ref[...]                                                # (Cout, K*K*Cin)
    if compute_dtype != jnp.float32:                              # bf16 MXU path (v6e/v7x)
        xs = xs.astype(compute_dtype)
        w = w.astype(compute_dtype)
    acc = jnp.dot(w, xs, preferred_element_type=jnp.float32)      # (Cout, L_o)
    acc = acc + b_ref[...]
    if act == "relu":
        acc = jnp.maximum(acc, 0.0)
    elif act == "tanh":
        acc = jnp.tanh(acc)
    o_ref[0] = acc


def conv_transpose2d(x_nchw, weight, bias, *, stride, padding, act):
    # x_nchw: (N, Cin, H, W); weight: PyTorch ConvTranspose2d layout (Cin, Cout, K, K)
    n, cin, h, w = x_nchw.shape
    _, cout, k, _ = weight.shape
    pad_eff = k - 1 - padding

    # upsample (interior padding = stride-1) + zero-pad in one lax.pad (tiny array)
    zero = jnp.array(0.0, x_nchw.dtype)
    xp = jax.lax.pad(x_nchw, zero,
                     ((0, 0, 0), (0, 0, 0),
                      (pad_eff, pad_eff, stride - 1),
                      (pad_eff, pad_eff, stride - 1)))
    hp, wp = xp.shape[2], xp.shape[3]
    oh, ow = hp - k + 1, wp - k + 1
    l_p = hp * wp
    l_o = (oh - 1) * wp + ow
    xp_flat = xp.reshape(n, cin, l_p)

    # flipped kernel, rows ordered ((kh*K + kw)*Cin + ci) to match the in-kernel stack
    wflip = weight[:, :, ::-1, ::-1]
    wmat = jnp.transpose(jnp.transpose(wflip, (2, 3, 0, 1)).reshape(k * k * cin, cout),
                         (1, 0))                                  # (Cout, K*K*Cin)
    bcol = bias.reshape(cout, 1)

    out_flat = pl.pallas_call(
        functools.partial(conv_tap_kernel, k=k, wp=wp, oh=oh, ow=ow, act=act,
                          compute_dtype=CONV_COMPUTE_DTYPE),
        out_shape=jax.ShapeDtypeStruct((n, cout, l_o), jnp.float32),
        grid=(n,),
        in_specs=[
            pl.BlockSpec((1, cin, l_p), lambda i: (i, 0, 0)),
            pl.BlockSpec((cout, k * k * cin), lambda i: (0, 0)),
            pl.BlockSpec((cout, 1), lambda i: (0, 0)),
        ],
        out_specs=pl.BlockSpec((1, cout, l_o), lambda i: (i, 0, 0)),
        compiler_params=pltpu.CompilerParams(dimension_semantics=("parallel",)),
    )(xp_flat, wmat, bcol)

    # extract the valid (OH, OW) region from the padded-grid footprint (cheap XLA glue)
    out = jnp.pad(out_flat, ((0, 0), (0, 0), (0, oh * wp - l_o)))
    out = out.reshape(n, cout, oh, wp)[:, :, :, :ow]              # (N, Cout, OH, OW)
    return out


# ----------------------------------------------------------------------------
# Full Compressor forward
# ----------------------------------------------------------------------------
def compressor_forward(x, params):
    n = x.shape[0]
    comp_flat = frontend(x, params["w_tl1"], params["w_tl2"])     # (N, 64)
    compressed = comp_flat.reshape(n, 8, 8, 1)                    # TensorLayer output layout

    h = comp_flat.reshape(n, 1, 8, 8)                             # == permute(0,3,1,2)
    h = conv_transpose2d(h, params["w_d1"], params["b_d1"], stride=1, padding=0, act="relu")
    h = conv_transpose2d(h, params["w_d2"], params["b_d2"], stride=2, padding=1, act="relu")
    h = conv_transpose2d(h, params["w_d3"], params["b_d3"], stride=1, padding=1, act="tanh")
    out = h.reshape(n, -1)                                        # (N, 784)
    return out, compressed


# ----------------------------------------------------------------------------
# Deterministic parameter init (shapes from Compressor.__init__)
# ----------------------------------------------------------------------------
def init_params(key):
    ks = jax.random.split(key, 5)
    p = {}
    p["w_tl1"] = jax.random.uniform(ks[0], (16, 16, 2, 2, 2, 2, 2), jnp.float32)  # torch.rand
    p["w_tl2"] = jax.random.uniform(ks[1], (8, 8, 2, 2, 2, 2, 1), jnp.float32)

    def conv_t_init(k, cin, cout, ksize):
        kw, kb = jax.random.split(k)
        bound = 1.0 / ((cout * ksize * ksize) ** 0.5)
        w = jax.random.uniform(kw, (cin, cout, ksize, ksize), jnp.float32, -bound, bound)
        b = jax.random.uniform(kb, (cout,), jnp.float32, -bound, bound)
        return w, b

    p["w_d1"], p["b_d1"] = conv_t_init(ks[2], 1, 16, 4)   # ConvTranspose2d(1, 16, 4)
    p["w_d2"], p["b_d2"] = conv_t_init(ks[3], 16, 8, 8)   # ConvTranspose2d(16, 8, 8, s=2, p=1)
    p["w_d3"], p["b_d3"] = conv_t_init(ks[4], 8, 1, 5)    # ConvTranspose2d(8, 1, 5, p=1)
    return p


# ----------------------------------------------------------------------------
# Pure numpy reference (direct transcription of the PyTorch forward) for validation
# ----------------------------------------------------------------------------
def _ref_forward(x, params):
    x = np.asarray(x, np.float32)
    p = {k: np.asarray(v, np.float32) for k, v in params.items()}
    n = x.shape[0]

    data32 = np.zeros((n, 32, 32), np.float32)
    data32[:, 2:30, 2:30] = x[:, 0]
    ang = data32 * (3.1416 / 4)
    fm = np.stack([np.cos(ang), np.sin(ang)], axis=-1)

    def tensor_layer(data, w, tn, top):
        out = np.zeros((n, tn, tn, w.shape[-1]), np.float32)
        for m in range(tn):
            for nn in range(tn):
                a = data[:, 2 * m, 2 * nn, :]
                b = data[:, 2 * m, 2 * nn + 1, :]
                c = data[:, 2 * m + 1, 2 * nn, :]
                d = data[:, 2 * m + 1, 2 * nn + 1, :]
                local = np.einsum('ni,nj,nk,nl->nijkl', a, b, c, d)
                temp = np.einsum('nijkl,ijklu->nu', local, w[m, nn])
                if top == 0:
                    nrm = np.maximum(np.linalg.norm(temp, axis=1, keepdims=True), 1e-12)
                    temp = temp / nrm
                out[:, m, nn, :] = temp
        return out

    t1 = tensor_layer(fm, p["w_tl1"], 16, 0)
    t2 = tensor_layer(t1, p["w_tl2"], 8, 1)
    compressed = t2

    def conv_t(xc, w, b, stride, pad):
        cin, cout, k, _ = w.shape
        h, wd = xc.shape[2], xc.shape[3]
        oh = (h - 1) * stride - 2 * pad + k
        ow = (wd - 1) * stride - 2 * pad + k
        full = np.zeros((n, cout, (h - 1) * stride + k, (wd - 1) * stride + k), np.float32)
        for ih in range(h):
            for iw in range(wd):
                contrib = np.tensordot(xc[:, :, ih, iw], w, axes=([1], [0]))
                full[:, :, ih * stride: ih * stride + k, iw * stride: iw * stride + k] += contrib
        out = full[:, :, pad: pad + oh, pad: pad + ow]
        return out + b.reshape(1, cout, 1, 1)

    h1 = np.maximum(conv_t(compressed.transpose(0, 3, 1, 2), p["w_d1"], p["b_d1"], 1, 0), 0.0)
    h2 = np.maximum(conv_t(h1, p["w_d2"], p["b_d2"], 2, 1), 0.0)
    h3 = np.tanh(conv_t(h2, p["w_d3"], p["b_d3"], 1, 1))
    return h3.reshape(n, -1), compressed


if __name__ == "__main__":
    key = jax.random.PRNGKey(0)
    kx, kp = jax.random.split(key)
    x = jax.random.uniform(kx, (2, 1, 28, 28), jnp.float32)   # MNIST-like input, batch=2
    params = init_params(kp)

    fwd = jax.jit(compressor_forward)
    out, compressed = fwd(x, params)
    jax.block_until_ready((out, compressed))

    assert out.shape == (2, 784), out.shape
    assert compressed.shape == (2, 8, 8, 1), compressed.shape

    ref_out, ref_comp = _ref_forward(np.asarray(x), params)
    np.testing.assert_allclose(np.asarray(compressed), ref_comp, rtol=5e-2, atol=2e-2)
    np.testing.assert_allclose(np.asarray(out), ref_out, rtol=5e-2, atol=2e-2)

    print("KERNEL_OK")
</pallas_src>

<mosaic_0001>
module attributes {stable_mosaic.version = 11 : i64} {
  func.func @frontend_kernel(%arg0: memref<2x256xf32, #tpu.memory_space<vmem>>, %arg1: memref<2x256xf32, #tpu.memory_space<vmem>>, %arg2: memref<2x256xf32, #tpu.memory_space<vmem>>, %arg3: memref<2x256xf32, #tpu.memory_space<vmem>>, %arg4: memref<32x256xf32, #tpu.memory_space<vmem>>, %arg5: memref<16x64xf32, #tpu.memory_space<vmem>>, %arg6: memref<2x64xf32, #tpu.memory_space<vmem>>) attributes {dimension_semantics = [], scalar_prefetch = 0 : i64, scratch_operands = 0 : i64, tpu.core_type = #tpu.core_type<tc>} {
    %c0 = arith.constant 0 : index
    %c0_0 = arith.constant 0 : index
    %0 = vector.load %arg0[%c0, %c0_0] : memref<2x256xf32, #tpu.memory_space<vmem>>, vector<2x256xf32>
    %cst = arith.constant 0.785399973 : f32
    %1 = vector.broadcast %cst : f32 to vector<2x256xf32>
    %2 = arith.mulf %0, %1 : vector<2x256xf32>
    %3 = math.cos %2 : vector<2x256xf32>
    %c0_1 = arith.constant 0 : index
    %c0_2 = arith.constant 0 : index
    %4 = vector.load %arg0[%c0_1, %c0_2] : memref<2x256xf32, #tpu.memory_space<vmem>>, vector<2x256xf32>
    %cst_3 = arith.constant 0.785399973 : f32
    %5 = vector.broadcast %cst_3 : f32 to vector<2x256xf32>
    %6 = arith.mulf %4, %5 : vector<2x256xf32>
    %7 = math.sin %6 : vector<2x256xf32>
    %c0_4 = arith.constant 0 : index
    %c0_5 = arith.constant 0 : index
    %8 = vector.load %arg1[%c0_4, %c0_5] : memref<2x256xf32, #tpu.memory_space<vmem>>, vector<2x256xf32>
    %cst_6 = arith.constant 0.785399973 : f32
    %9 = vector.broadcast %cst_6 : f32 to vector<2x256xf32>
    %10 = arith.mulf %8, %9 : vector<2x256xf32>
    %11 = math.cos %10 : vector<2x256xf32>
    %c0_7 = arith.constant 0 : index
    %c0_8 = arith.constant 0 : index
    %12 = vector.load %arg1[%c0_7, %c0_8] : memref<2x256xf32, #tpu.memory_space<vmem>>, vector<2x256xf32>
    %cst_9 = arith.constant 0.785399973 : f32
    %13 = vector.broadcast %cst_9 : f32 to vector<2x256xf32>
    %14 = arith.mulf %12, %13 : vector<2x256xf32>
    %15 = math.sin %14 : vector<2x256xf32>
    %c0_10 = arith.constant 0 : index
    %c0_11 = arith.constant 0 : index
    %16 = vector.load %arg2[%c0_10, %c0_11] : memref<2x256xf32, #tpu.memory_space<vmem>>, vector<2x256xf32>
    %cst_12 = arith.constant 0.785399973 : f32
    %17 = vector.broadcast %cst_12 : f32 to vector<2x256xf32>
    %18 = arith.mulf %16, %17 : vector<2x256xf32>
    %19 = math.cos %18 : vector<2x256xf32>
    %c0_13 = arith.constant 0 : index
    %c0_14 = arith.constant 0 : index
    %20 = vector.load %arg2[%c0_13, %c0_14] : memref<2x256xf32, #tpu.memory_space<vmem>>, vector<2x256xf32>
    %cst_15 = arith.constant 0.785399973 : f32
    %21 = vector.broadcast %cst_15 : f32 to vector<2x256xf32>
    %22 = arith.mulf %20, %21 : vector<2x256xf32>
    %23 = math.sin %22 : vector<2x256xf32>
    %c0_16 = arith.constant 0 : index
    %c0_17 = arith.constant 0 : index
    %24 = vector.load %arg3[%c0_16, %c0_17] : memref<2x256xf32, #tpu.memory_space<vmem>>, vector<2x256xf32>
    %cst_18 = arith.constant 0.785399973 : f32
    %25 = vector.broadcast %cst_18 : f32 to vector<2x256xf32>
    %26 = arith.mulf %24, %25 : vector<2x256xf32>
    %27 = math.cos %26 : vector<2x256xf32>
    %c0_19 = arith.constant 0 : index
    %c0_20 = arith.constant 0 : index
    %28 = vector.load %arg3[%c0_19, %c0_20] : memref<2x256xf32, #tpu.memory_space<vmem>>, vector<2x256xf32>
    %cst_21 = arith.constant 0.785399973 : f32
    %29 = vector.broadcast %cst_21 : f32 to vector<2x256xf32>
    %30 = arith.mulf %28, %29 : vector<2x256xf32>
    %31 = math.sin %30 : vector<2x256xf32>
    %c0_22 = arith.constant 0 : index
    %c0_23 = arith.constant 0 : index
    %32 = vector.load %arg4[%c0_22, %c0_23] : memref<32x256xf32, #tpu.memory_space<vmem>>, vector<32x256xf32>
    %c0_24 = arith.constant 0 : index
    %c0_25 = arith.constant 0 : index
    %33 = vector.load %arg5[%c0_24, %c0_25] : memref<16x64xf32, #tpu.memory_space<vmem>>, vector<16x64xf32>
    %34 = arith.mulf %3, %11 : vector<2x256xf32>
    %35 = arith.mulf %3, %15 : vector<2x256xf32>
    %36 = arith.mulf %7, %11 : vector<2x256xf32>
    %37 = arith.mulf %7, %15 : vector<2x256xf32>
    %38 = arith.mulf %19, %27 : vector<2x256xf32>
    %39 = arith.mulf %19, %31 : vector<2x256xf32>
    %40 = arith.mulf %23, %27 : vector<2x256xf32>
    %41 = arith.mulf %23, %31 : vector<2x256xf32>
    %42 = arith.mulf %34, %38 : vector<2x256xf32>
    %43 = arith.mulf %34, %39 : vector<2x256xf32>
    %44 = arith.mulf %34, %40 : vector<2x256xf32>
    %45 = arith.mulf %34, %41 : vector<2x256xf32>
    %46 = arith.mulf %35, %38 : vector<2x256xf32>
    %47 = arith.mulf %35, %39 : vector<2x256xf32>
    %48 = arith.mulf %35, %40 : vector<2x256xf32>
    %49 = arith.mulf %35, %41 : vector<2x256xf32>
    %50 = arith.mulf %36, %38 : vector<2x256xf32>
    %51 = arith.mulf %36, %39 : vector<2x256xf32>
    %52 = arith.mulf %36, %40 : vector<2x256xf32>
    %53 = arith.mulf %36, %41 : vector<2x256xf32>
    %54 = arith.mulf %37, %38 : vector<2x256xf32>
    %55 = arith.mulf %37, %39 : vector<2x256xf32>
    %56 = arith.mulf %37, %40 : vector<2x256xf32>
    %57 = arith.mulf %37, %41 : vector<2x256xf32>
    %58 = vector.extract_strided_slice %32 {offsets = [0, 0], sizes = [1, 256], strides = [1, 1]} : vector<32x256xf32> to vector<1x256xf32>
    %59 = vector.broadcast %58 : vector<1x256xf32> to vector<2x256xf32>
    %60 = arith.mulf %42, %59 : vector<2x256xf32>
    %61 = vector.extract_strided_slice %32 {offsets = [1, 0], sizes = [1, 256], strides = [1, 1]} : vector<32x256xf32> to vector<1x256xf32>
    %62 = vector.broadcast %61 : vector<1x256xf32> to vector<2x256xf32>
    %63 = arith.mulf %43, %62 : vector<2x256xf32>
    %64 = arith.addf %60, %63 : vector<2x256xf32>
    %65 = vector.extract_strided_slice %32 {offsets = [2, 0], sizes = [1, 256], strides = [1, 1]} : vector<32x256xf32> to vector<1x256xf32>
    %66 = vector.broadcast %65 : vector<1x256xf32> to vector<2x256xf32>
    %67 = arith.mulf %44, %66 : vector<2x256xf32>
    %68 = arith.addf %64, %67 : vector<2x256xf32>
    %69 = vector.extract_strided_slice %32 {offsets = [3, 0], sizes = [1, 256], strides = [1, 1]} : vector<32x256xf32> to vector<1x256xf32>
    %70 = vector.broadcast %69 : vector<1x256xf32> to vector<2x256xf32>
    %71 = arith.mulf %45, %70 : vector<2x256xf32>
    %72 = arith.addf %68, %71 : vector<2x256xf32>
    %73 = vector.extract_strided_slice %32 {offsets = [4, 0], sizes = [1, 256], strides = [1, 1]} : vector<32x256xf32> to vector<1x256xf32>
    %74 = vector.broadcast %73 : vector<1x256xf32> to vector<2x256xf32>
    %75 = arith.mulf %46, %74 : vector<2x256xf32>
    %76 = arith.addf %72, %75 : vector<2x256xf32>
    %77 = vector.extract_strided_slice %32 {offsets = [5, 0], sizes = [1, 256], strides = [1, 1]} : vector<32x256xf32> to vector<1x256xf32>
    %78 = vector.broadcast %77 : vector<1x256xf32> to vector<2x256xf32>
    %79 = arith.mulf %47, %78 : vector<2x256xf32>
    %80 = arith.addf %76, %79 : vector<2x256xf32>
    %81 = vector.extract_strided_slice %32 {offsets = [6, 0], sizes = [1, 256], strides = [1, 1]} : vector<32x256xf32> to vector<1x256xf32>
    %82 = vector.broadcast %81 : vector<1x256xf32> to vector<2x256xf32>
    %83 = arith.mulf %48, %82 : vector<2x256xf32>
    %84 = arith.addf %80, %83 : vector<2x256xf32>
    %85 = vector.extract_strided_slice %32 {offsets = [7, 0], sizes = [1, 256], strides = [1, 1]} : vector<32x256xf32> to vector<1x256xf32>
    %86 = vector.broadcast %85 : vector<1x256xf32> to vector<2x256xf32>
    %87 = arith.mulf %49, %86 : vector<2x256xf32>
    %88 = arith.addf %84, %87 : vector<2x256xf32>
    %89 = vector.extract_strided_slice %32 {offsets = [8, 0], sizes = [1, 256], strides = [1, 1]} : vector<32x256xf32> to vector<1x256xf32>
    %90 = vector.broadcast %89 : vector<1x256xf32> to vector<2x256xf32>
    %91 = arith.mulf %50, %90 : vector<2x256xf32>
    %92 = arith.addf %88, %91 : vector<2x256xf32>
    %93 = vector.extract_strided_slice %32 {offsets = [9, 0], sizes = [1, 256], strides = [1, 1]} : vector<32x256xf32> to vector<1x256xf32>
    %94 = vector.broadcast %93 : vector<1x256xf32> to vector<2x256xf32>
    %95 = arith.mulf %51, %94 : vector<2x256xf32>
    %96 = arith.addf %92, %95 : vector<2x256xf32>
    %97 = vector.extract_strided_slice %32 {offsets = [10, 0], sizes = [1, 256], strides = [1, 1]} : vector<32x256xf32> to vector<1x256xf32>
    %98 = vector.broadcast %97 : vector<1x256xf32> to vector<2x256xf32>
    %99 = arith.mulf %52, %98 : vector<2x256xf32>
    %100 = arith.addf %96, %99 : vector<2x256xf32>
    %101 = vector.extract_strided_slice %32 {offsets = [11, 0], sizes = [1, 256], strides = [1, 1]} : vector<32x256xf32> to vector<1x256xf32>
    %102 = vector.broadcast %101 : vector<1x256xf32> to vector<2x256xf32>
    %103 = arith.mulf %53, %102 : vector<2x256xf32>
    %104 = arith.addf %100, %103 : vector<2x256xf32>
    %105 = vector.extract_strided_slice %32 {offsets = [12, 0], sizes = [1, 256], strides = [1, 1]} : vector<32x256xf32> to vector<1x256xf32>
    %106 = vector.broadcast %105 : vector<1x256xf32> to vector<2x256xf32>
    %107 = arith.mulf %54, %106 : vector<2x256xf32>
    %108 = arith.addf %104, %107 : vector<2x256xf32>
    %109 = vector.extract_strided_slice %32 {offsets = [13, 0], sizes = [1, 256], strides = [1, 1]} : vector<32x256xf32> to vector<1x256xf32>
    %110 = vector.broadcast %109 : vector<1x256xf32> to vector<2x256xf32>
    %111 = arith.mulf %55, %110 : vector<2x256xf32>
    %112 = arith.addf %108, %111 : vector<2x256xf32>
    %113 = vector.extract_strided_slice %32 {offsets = [14, 0], sizes = [1, 256], strides = [1, 1]} : vector<32x256xf32> to vector<1x256xf32>
    %114 = vector.broadcast %113 : vector<1x256xf32> to vector<2x256xf32>
    %115 = arith.mulf %56, %114 : vector<2x256xf32>
    %116 = arith.addf %112, %115 : vector<2x256xf32>
    %117 = vector.extract_strided_slice %32 {offsets = [15, 0], sizes = [1, 256], strides = [1, 1]} : vector<32x256xf32> to vector<1x256xf32>
    %118 = vector.broadcast %117 : vector<1x256xf32> to vector<2x256xf32>
    %119 = arith.mulf %57, %118 : vector<2x256xf32>
    %120 = arith.addf %116, %119 : vector<2x256xf32>
    %121 = vector.extract_strided_slice %32 {offsets = [16, 0], sizes = [1, 256], strides = [1, 1]} : vector<32x256xf32> to vector<1x256xf32>
    %122 = vector.broadcast %121 : vector<1x256xf32> to vector<2x256xf32>
    %123 = arith.mulf %42, %122 : vector<2x256xf32>
    %124 = vector.extract_strided_slice %32 {offsets = [17, 0], sizes = [1, 256], strides = [1, 1]} : vector<32x256xf32> to vector<1x256xf32>
    %125 = vector.broadcast %124 : vector<1x256xf32> to vector<2x256xf32>
    %126 = arith.mulf %43, %125 : vector<2x256xf32>
    %127 = arith.addf %123, %126 : vector<2x256xf32>
    %128 = vector.extract_strided_slice %32 {offsets = [18, 0], sizes = [1, 256], strides = [1, 1]} : vector<32x256xf32> to vector<1x256xf32>
    %129 = vector.broadcast %128 : vector<1x256xf32> to vector<2x256xf32>
    %130 = arith.mulf %44, %129 : vector<2x256xf32>
    %131 = arith.addf %127, %130 : vector<2x256xf32>
    %132 = vector.extract_strided_slice %32 {offsets = [19, 0], sizes = [1, 256], strides = [1, 1]} : vector<32x256xf32> to vector<1x256xf32>
    %133 = vector.broadcast %132 : vector<1x256xf32> to vector<2x256xf32>
    %134 = arith.mulf %45, %133 : vector<2x256xf32>
    %135 = arith.addf %131, %134 : vector<2x256xf32>
    %136 = vector.extract_strided_slice %32 {offsets = [20, 0], sizes = [1, 256], strides = [1, 1]} : vector<32x256xf32> to vector<1x256xf32>
    %137 = vector.broadcast %136 : vector<1x256xf32> to vector<2x256xf32>
    %138 = arith.mulf %46, %137 : vector<2x256xf32>
    %139 = arith.addf %135, %138 : vector<2x256xf32>
    %140 = vector.extract_strided_slice %32 {offsets = [21, 0], sizes = [1, 256], strides = [1, 1]} : vector<32x256xf32> to vector<1x256xf32>
    %141 = vector.broadcast %140 : vector<1x256xf32> to vector<2x256xf32>
    %142 = arith.mulf %47, %141 : vector<2x256xf32>
    %143 = arith.addf %139, %142 : vector<2x256xf32>
    %144 = vector.extract_strided_slice %32 {offsets = [22, 0], sizes = [1, 256], strides = [1, 1]} : vector<32x256xf32> to vector<1x256xf32>
    %145 = vector.broadcast %144 : vector<1x256xf32> to vector<2x256xf32>
    %146 = arith.mulf %48, %145 : vector<2x256xf32>
    %147 = arith.addf %143, %146 : vector<2x256xf32>
    %148 = vector.extract_strided_slice %32 {offsets = [23, 0], sizes = [1, 256], strides = [1, 1]} : vector<32x256xf32> to vector<1x256xf32>
    %149 = vector.broadcast %148 : vector<1x256xf32> to vector<2x256xf32>
    %150 = arith.mulf %49, %149 : vector<2x256xf32>
    %151 = arith.addf %147, %150 : vector<2x256xf32>
    %152 = vector.extract_strided_slice %32 {offsets = [24, 0], sizes = [1, 256], strides = [1, 1]} : vector<32x256xf32> to vector<1x256xf32>
    %153 = vector.broadcast %152 : vector<1x256xf32> to vector<2x256xf32>
    %154 = arith.mulf %50, %153 : vector<2x256xf32>
    %155 = arith.addf %151, %154 : vector<2x256xf32>
    %156 = vector.extract_strided_slice %32 {offsets = [25, 0], sizes = [1, 256], strides = [1, 1]} : vector<32x256xf32> to vector<1x256xf32>
    %157 = vector.broadcast %156 : vector<1x256xf32> to vector<2x256xf32>
    %158 = arith.mulf %51, %157 : vector<2x256xf32>
    %159 = arith.addf %155, %158 : vector<2x256xf32>
    %160 = vector.extract_strided_slice %32 {offsets = [26, 0], sizes = [1, 256], strides = [1, 1]} : vector<32x256xf32> to vector<1x256xf32>
    %161 = vector.broadcast %160 : vector<1x256xf32> to vector<2x256xf32>
    %162 = arith.mulf %52, %161 : vector<2x256xf32>
    %163 = arith.addf %159, %162 : vector<2x256xf32>
    %164 = vector.extract_strided_slice %32 {offsets = [27, 0], sizes = [1, 256], strides = [1, 1]} : vector<32x256xf32> to vector<1x256xf32>
    %165 = vector.broadcast %164 : vector<1x256xf32> to vector<2x256xf32>
    %166 = arith.mulf %53, %165 : vector<2x256xf32>
    %167 = arith.addf %163, %166 : vector<2x256xf32>
    %168 = vector.extract_strided_slice %32 {offsets = [28, 0], sizes = [1, 256], strides = [1, 1]} : vector<32x256xf32> to vector<1x256xf32>
    %169 = vector.broadcast %168 : vector<1x256xf32> to vector<2x256xf32>
    %170 = arith.mulf %54, %169 : vector<2x256xf32>
    %171 = arith.addf %167, %170 : vector<2x256xf32>
    %172 = vector.extract_strided_slice %32 {offsets = [29, 0], sizes = [1, 256], strides = [1, 1]} : vector<32x256xf32> to vector<1x256xf32>
    %173 = vector.broadcast %172 : vector<1x256xf32> to vector<2x256xf32>
    %174 = arith.mulf %55, %173 : vector<2x256xf32>
    %175 = arith.addf %171, %174 : vector<2x256xf32>
    %176 = vector.extract_strided_slice %32 {offsets = [30, 0], sizes = [1, 256], strides = [1, 1]} : vector<32x256xf32> to vector<1x256xf32>
    %177 = vector.broadcast %176 : vector<1x256xf32> to vector<2x256xf32>
    %178 = arith.mulf %56, %177 : vector<2x256xf32>
    %179 = arith.addf %175, %178 : vector<2x256xf32>
    %180 = vector.extract_strided_slice %32 {offsets = [31, 0], sizes = [1, 256], strides = [1, 1]} : vector<32x256xf32> to vector<1x256xf32>
    %181 = vector.broadcast %180 : vector<1x256xf32> to vector<2x256xf32>
    %182 = arith.mulf %57, %181 : vector<2x256xf32>
    %183 = arith.addf %179, %182 : vector<2x256xf32>
    %184 = arith.mulf %120, %120 : vector<2x256xf32>
    %185 = arith.mulf %183, %183 : vector<2x256xf32>
    %186 = arith.addf %184, %185 : vector<2x256xf32>
    %187 = math.sqrt %186 : vector<2x256xf32>
    %cst_26 = arith.constant 9.99999996E-13 : f32
    %188 = vector.broadcast %cst_26 : f32 to vector<2x256xf32>
    %189 = arith.maximumf %187, %188 : vector<2x256xf32>
    %cst_27 = arith.constant 1.000000e+00 : f32
    %190 = vector.broadcast %cst_27 : f32 to vector<2x256xf32>
    %191 = arith.divf %190, %189 : vector<2x256xf32>
    %192 = arith.mulf %120, %191 : vector<2x256xf32>
    %193 = arith.mulf %183, %191 : vector<2x256xf32>
    %194 = vector.extract_strided_slice %192 {offsets = [0, 0], sizes = [2, 64], strides = [1, 1]} : vector<2x256xf32> to vector<2x64xf32>
    %195 = vector.extract_strided_slice %193 {offsets = [0, 0], sizes = [2, 64], strides = [1, 1]} : vector<2x256xf32> to vector<2x64xf32>
    %196 = vector.extract_strided_slice %192 {offsets = [0, 64], sizes = [2, 64], strides = [1, 1]} : vector<2x256xf32> to vector<2x64xf32>
    %197 = vector.extract_strided_slice %193 {offsets = [0, 64], sizes = [2, 64], strides = [1, 1]} : vector<2x256xf32> to vector<2x64xf32>
    %198 = vector.extract_strided_slice %192 {offsets = [0, 128], sizes = [2, 64], strides = [1, 1]} : vector<2x256xf32> to vector<2x64xf32>
    %199 = vector.extract_strided_slice %193 {offsets = [0, 128], sizes = [2, 64], strides = [1, 1]} : vector<2x256xf32> to vector<2x64xf32>
    %200 = vector.extract_strided_slice %192 {offsets = [0, 192], sizes = [2, 64], strides = [1, 1]} : vector<2x256xf32> to vector<2x64xf32>
    %201 = vector.extract_strided_slice %193 {offsets = [0, 192], sizes = [2, 64], strides = [1, 1]} : vector<2x256xf32> to vector<2x64xf32>
    %202 = arith.mulf %194, %196 : vector<2x64xf32>
    %203 = arith.mulf %194, %197 : vector<2x64xf32>
    %204 = arith.mulf %195, %196 : vector<2x64xf32>
    %205 = arith.mulf %195, %197 : vector<2x64xf32>
    %206 = arith.mulf %198, %200 : vector<2x64xf32>
    %207 = arith.mulf %198, %201 : vector<2x64xf32>
    %208 = arith.mulf %199, %200 : vector<2x64xf32>
    %209 = arith.mulf %199, %201 : vector<2x64xf32>
    %210 = arith.mulf %202, %206 : vector<2x64xf32>
    %211 = vector.extract_strided_slice %33 {offsets = [0, 0], sizes = [1, 64], strides = [1, 1]} : vector<16x64xf32> to vector<1x64xf32>
    %212 = vector.broadcast %211 : vector<1x64xf32> to vector<2x64xf32>
    %213 = arith.mulf %210, %212 : vector<2x64xf32>
    %214 = arith.mulf %202, %207 : vector<2x64xf32>
    %215 = vector.extract_strided_slice %33 {offsets = [1, 0], sizes = [1, 64], strides = [1, 1]} : vector<16x64xf32> to vector<1x64xf32>
    %216 = vector.broadcast %215 : vector<1x64xf32> to vector<2x64xf32>
    %217 = arith.mulf %214, %216 : vector<2x64xf32>
    %218 = arith.addf %213, %217 : vector<2x64xf32>
    %219 = arith.mulf %202, %208 : vector<2x64xf32>
    %220 = vector.extract_strided_slice %33 {offsets = [2, 0], sizes = [1, 64], strides = [1, 1]} : vector<16x64xf32> to vector<1x64xf32>
    %221 = vector.broadcast %220 : vector<1x64xf32> to vector<2x64xf32>
    %222 = arith.mulf %219, %221 : vector<2x64xf32>
    %223 = arith.addf %218, %222 : vector<2x64xf32>
    %224 = arith.mulf %202, %209 : vector<2x64xf32>
    %225 = vector.extract_strided_slice %33 {offsets = [3, 0], sizes = [1, 64], strides = [1, 1]} : vector<16x64xf32> to vector<1x64xf32>
    %226 = vector.broadcast %225 : vector<1x64xf32> to vector<2x64xf32>
    %227 = arith.mulf %224, %226 : vector<2x64xf32>
    %228 = arith.addf %223, %227 : vector<2x64xf32>
    %229 = arith.mulf %203, %206 : vector<2x64xf32>
    %230 = vector.extract_strided_slice %33 {offsets = [4, 0], sizes = [1, 64], strides = [1, 1]} : vector<16x64xf32> to vector<1x64xf32>
    %231 = vector.broadcast %230 : vector<1x64xf32> to vector<2x64xf32>
    %232 = arith.mulf %229, %231 : vector<2x64xf32>
    %233 = arith.addf %228, %232 : vector<2x64xf32>
    %234 = arith.mulf %203, %207 : vector<2x64xf32>
    %235 = vector.extract_strided_slice %33 {offsets = [5, 0], sizes = [1, 64], strides = [1, 1]} : vector<16x64xf32> to vector<1x64xf32>
    %236 = vector.broadcast %235 : vector<1x64xf32> to vector<2x64xf32>
    %237 = arith.mulf %234, %236 : vector<2x64xf32>
    %238 = arith.addf %233, %237 : vector<2x64xf32>
    %239 = arith.mulf %203, %208 : vector<2x64xf32>
    %240 = vector.extract_strided_slice %33 {offsets = [6, 0], sizes = [1, 64], strides = [1, 1]} : vector<16x64xf32> to vector<1x64xf32>
    %241 = vector.broadcast %240 : vector<1x64xf32> to vector<2x64xf32>
    %242 = arith.mulf %239, %241 : vector<2x64xf32>
    %243 = arith.addf %238, %242 : vector<2x64xf32>
    %244 = arith.mulf %203, %209 : vector<2x64xf32>
    %245 = vector.extract_strided_slice %33 {offsets = [7, 0], sizes = [1, 64], strides = [1, 1]} : vector<16x64xf32> to vector<1x64xf32>
    %246 = vector.broadcast %245 : vector<1x64xf32> to vector<2x64xf32>
    %247 = arith.mulf %244, %246 : vector<2x64xf32>
    %248 = arith.addf %243, %247 : vector<2x64xf32>
    %249 = arith.mulf %204, %206 : vector<2x64xf32>
    %250 = vector.extract_strided_slice %33 {offsets = [8, 0], sizes = [1, 64], strides = [1, 1]} : vector<16x64xf32> to vector<1x64xf32>
    %251 = vector.broadcast %250 : vector<1x64xf32> to vector<2x64xf32>
    %252 = arith.mulf %249, %251 : vector<2x64xf32>
    %253 = arith.addf %248, %252 : vector<2x64xf32>
    %254 = arith.mulf %204, %207 : vector<2x64xf32>
    %255 = vector.extract_strided_slice %33 {offsets = [9, 0], sizes = [1, 64], strides = [1, 1]} : vector<16x64xf32> to vector<1x64xf32>
    %256 = vector.broadcast %255 : vector<1x64xf32> to vector<2x64xf32>
    %257 = arith.mulf %254, %256 : vector<2x64xf32>
    %258 = arith.addf %253, %257 : vector<2x64xf32>
    %259 = arith.mulf %204, %208 : vector<2x64xf32>
    %260 = vector.extract_strided_slice %33 {offsets = [10, 0], sizes = [1, 64], strides = [1, 1]} : vector<16x64xf32> to vector<1x64xf32>
    %261 = vector.broadcast %260 : vector<1x64xf32> to vector<2x64xf32>
    %262 = arith.mulf %259, %261 : vector<2x64xf32>
    %263 = arith.addf %258, %262 : vector<2x64xf32>
    %264 = arith.mulf %204, %209 : vector<2x64xf32>
    %265 = vector.extract_strided_slice %33 {offsets = [11, 0], sizes = [1, 64], strides = [1, 1]} : vector<16x64xf32> to vector<1x64xf32>
    %266 = vector.broadcast %265 : vector<1x64xf32> to vector<2x64xf32>
    %267 = arith.mulf %264, %266 : vector<2x64xf32>
    %268 = arith.addf %263, %267 : vector<2x64xf32>
    %269 = arith.mulf %205, %206 : vector<2x64xf32>
    %270 = vector.extract_strided_slice %33 {offsets = [12, 0], sizes = [1, 64], strides = [1, 1]} : vector<16x64xf32> to vector<1x64xf32>
    %271 = vector.broadcast %270 : vector<1x64xf32> to vector<2x64xf32>
    %272 = arith.mulf %269, %271 : vector<2x64xf32>
    %273 = arith.addf %268, %272 : vector<2x64xf32>
    %274 = arith.mulf %205, %207 : vector<2x64xf32>
    %275 = vector.extract_strided_slice %33 {offsets = [13, 0], sizes = [1, 64], strides = [1, 1]} : vector<16x64xf32> to vector<1x64xf32>
    %276 = vector.broadcast %275 : vector<1x64xf32> to vector<2x64xf32>
    %277 = arith.mulf %274, %276 : vector<2x64xf32>
    %278 = arith.addf %273, %277 : vector<2x64xf32>
    %279 = arith.mulf %205, %208 : vector<2x64xf32>
    %280 = vector.extract_strided_slice %33 {offsets = [14, 0], sizes = [1, 64], strides = [1, 1]} : vector<16x64xf32> to vector<1x64xf32>
    %281 = vector.broadcast %280 : vector<1x64xf32> to vector<2x64xf32>
    %282 = arith.mulf %279, %281 : vector<2x64xf32>
    %283 = arith.addf %278, %282 : vector<2x64xf32>
    %284 = arith.mulf %205, %209 : vector<2x64xf32>
    %285 = vector.extract_strided_slice %33 {offsets = [15, 0], sizes = [1, 64], strides = [1, 1]} : vector<16x64xf32> to vector<1x64xf32>
    %286 = vector.broadcast %285 : vector<1x64xf32> to vector<2x64xf32>
    %287 = arith.mulf %284, %286 : vector<2x64xf32>
    %288 = arith.addf %283, %287 : vector<2x64xf32>
    %c0_28 = arith.constant 0 : index
    %c0_29 = arith.constant 0 : index
    %289 = vector.load %arg6[%c0_28, %c0_29] : memref<2x64xf32, #tpu.memory_space<vmem>>, vector<2x64xf32>
    tpu.vector_store %arg6[%c0_28, %c0_29], %288 {strides = array<i32>} : memref<2x64xf32, #tpu.memory_space<vmem>>, vector<2x64xf32>,
    return
  }
}

module attributes {stable_mosaic.version = 11 : i64} {
  func.func @conv_tap_kernel(%arg0: i32, %arg1: memref<1x1x196xf32, #tpu.memory_space<vmem>>, %arg2: memref<16x16xf32, #tpu.memory_space<vmem>>, %arg3: memref<16x1xf32, #tpu.memory_space<vmem>>, %arg4: memref<1x16x151xf32, #tpu.memory_space<vmem>>) attributes {dimension_semantics = [#tpu.dimension_semantics<parallel>], iteration_bounds = array<i64: 2>, scalar_prefetch = 0 : i64, scratch_operands = 0 : i64, tpu.core_type = #tpu.core_type<tc>, window_params = [{transform_indices = @transform_0, window_bounds = array<i64: 1, 1, 196>}, {pipeline_mode = #tpu.pipeline_mode<synchronous>, transform_indices = @transform_1, window_bounds = array<i64: 16, 16>}, {pipeline_mode = #tpu.pipeline_mode<synchronous>, transform_indices = @transform_2, window_bounds = array<i64: 16, 1>}, {transform_indices = @transform_3, window_bounds = array<i64: 1, 16, 151>}]} {
    %c0 = arith.constant 0 : index
    %c0_0 = arith.constant 0 : index
    %c0_1 = arith.constant 0 : index
    %0 = vector.load %arg1[%c0, %c0_0, %c0_1] : memref<1x1x196xf32, #tpu.memory_space<vmem>>, vector<1x1x196xf32>
    %1 = vector.shape_cast %0 : vector<1x1x196xf32> to vector<1x196xf32>
    %2 = vector.extract_strided_slice %1 {offsets = [0, 0], sizes = [1, 151], strides = [1, 1]} : vector<1x196xf32> to vector<1x151xf32>
    %3 = vector.extract_strided_slice %1 {offsets = [0, 1], sizes = [1, 151], strides = [1, 1]} : vector<1x196xf32> to vector<1x151xf32>
    %4 = vector.extract_strided_slice %1 {offsets = [0, 2], sizes = [1, 151], strides = [1, 1]} : vector<1x196xf32> to vector<1x151xf32>
    %5 = vector.extract_strided_slice %1 {offsets = [0, 3], sizes = [1, 151], strides = [1, 1]} : vector<1x196xf32> to vector<1x151xf32>
    %6 = tpu.concatenate %2, %3, %4, %5 in 0 : vector<1x151xf32>, vector<1x151xf32>, vector<1x151xf32>, vector<1x151xf32> -> vector<4x151xf32>
    %7 = vector.extract_strided_slice %1 {offsets = [0, 14], sizes = [1, 151], strides = [1, 1]} : vector<1x196xf32> to vector<1x151xf32>
    %8 = vector.extract_strided_slice %1 {offsets = [0, 15], sizes = [1, 151], strides = [1, 1]} : vector<1x196xf32> to vector<1x151xf32>
    %9 = vector.extract_strided_slice %1 {offsets = [0, 16], sizes = [1, 151], strides = [1, 1]} : vector<1x196xf32> to vector<1x151xf32>
    %10 = vector.extract_strided_slice %1 {offsets = [0, 17], sizes = [1, 151], strides = [1, 1]} : vector<1x196xf32> to vector<1x151xf32>
    %11 = tpu.concatenate %7, %8, %9, %10 in 0 : vector<1x151xf32>, vector<1x151xf32>, vector<1x151xf32>, vector<1x151xf32> -> vector<4x151xf32>
    %12 = vector.extract_strided_slice %1 {offsets = [0, 28], sizes = [1, 151], strides = [1, 1]} : vector<1x196xf32> to vector<1x151xf32>
    %13 = vector.extract_strided_slice %1 {offsets = [0, 29], sizes = [1, 151], strides = [1, 1]} : vector<1x196xf32> to vector<1x151xf32>
    %14 = vector.extract_strided_slice %1 {offsets = [0, 30], sizes = [1, 151], strides = [1, 1]} : vector<1x196xf32> to vector<1x151xf32>
    %15 = vector.extract_strided_slice %1 {offsets = [0, 31], sizes = [1, 151], strides = [1, 1]} : vector<1x196xf32> to vector<1x151xf32>
    %16 = tpu.concatenate %12, %13, %14, %15 in 0 : vector<1x151xf32>, vector<1x151xf32>, vector<1x151xf32>, vector<1x151xf32> -> vector<4x151xf32>
    %17 = vector.extract_strided_slice %1 {offsets = [0, 42], sizes = [1, 151], strides = [1, 1]} : vector<1x196xf32> to vector<1x151xf32>
    %18 = vector.extract_strided_slice %1 {offsets = [0, 43], sizes = [1, 151], strides = [1, 1]} : vector<1x196xf32> to vector<1x151xf32>
    %19 = vector.extract_strided_slice %1 {offsets = [0, 44], sizes = [1, 151], strides = [1, 1]} : vector<1x196xf32> to vector<1x151xf32>
    %20 = vector.extract_strided_slice %1 {offsets = [0, 45], sizes = [1, 151], strides = [1, 1]} : vector<1x196xf32> to vector<1x151xf32>
    %21 = tpu.concatenate %17, %18, %19, %20 in 0 : vector<1x151xf32>, vector<1x151xf32>, vector<1x151xf32>, vector<1x151xf32> -> vector<4x151xf32>
    %22 = tpu.concatenate %6, %11, %16, %21 in 0 : vector<4x151xf32>, vector<4x151xf32>, vector<4x151xf32>, vector<4x151xf32> -> vector<16x151xf32>
    %c0_2 = arith.constant 0 : index
    %c0_3 = arith.constant 0 : index
    %23 = vector.load %arg2[%c0_2, %c0_3] : memref<16x16xf32, #tpu.memory_space<vmem>>, vector<16x16xf32>
    %cst = arith.constant dense<0.000000e+00> : vector<16x151xf32>
    %24 = tpu.matmul %23, %22, %cst {dimension_numbers = #tpu.dot_dimension_numbers<[1], [0], [0], [1], [0, 0, 1, 1], [], []>} : vector<16x16xf32>, vector<16x151xf32>, vector<16x151xf32> -> vector<16x151xf32>
    %c0_4 = arith.constant 0 : index
    %c0_5 = arith.constant 0 : index
    %25 = vector.load %arg3[%c0_4, %c0_5] : memref<16x1xf32, #tpu.memory_space<vmem>>, vector<16x1xf32>
    %26 = vector.broadcast %25 : vector<16x1xf32> to vector<16x151xf32>
    %27 = arith.addf %24, %26 : vector<16x151xf32>
    %cst_6 = arith.constant 0.000000e+00 : f32
    %28 = vector.broadcast %cst_6 : f32 to vector<16x151xf32>
    %29 = arith.maximumf %27, %28 : vector<16x151xf32>
    %c0_7 = arith.constant 0 : index
    %c0_8 = arith.constant 0 : index
    %c0_9 = arith.constant 0 : index
    %30 = vector.load %arg4[%c0_7, %c0_8, %c0_9] : memref<1x16x151xf32, #tpu.memory_space<vmem>>, vector<1x16x151xf32>
    %31 = vector.shape_cast %30 : vector<1x16x151xf32> to vector<16x151xf32>
    %32 = vector.shape_cast %29 : vector<16x151xf32> to vector<1x16x151xf32>
    tpu.vector_store %arg4[%c0_7, %c0_8, %c0_9], %32 {strides = array<i32>} : memref<1x16x151xf32, #tpu.memory_space<vmem>>, vector<1x16x151xf32>,
    return
  }
  func.func @transform_0(%arg0: i32) -> (i32, i32, i32) {
    %c0_i32 = arith.constant 0 : i32
    %c0_i32_0 = arith.constant 0 : i32
    %c0_i32_1 = arith.constant 0 : i32
    return %arg0, %c0_i32, %c0_i32_0 : i32, i32, i32
  }
  func.func @transform_1(%arg0: i32) -> (i32, i32) {
    %c0_i32 = arith.constant 0 : i32
    %c0_i32_0 = arith.constant 0 : i32
    %c0_i32_1 = arith.constant 0 : i32
    return %c0_i32, %c0_i32_0 : i32, i32
  }
  func.func @transform_2(%arg0: i32) -> (i32, i32) {
    %c0_i32 = arith.constant 0 : i32
    %c0_i32_0 = arith.constant 0 : i32
    %c0_i32_1 = arith.constant 0 : i32
    return %c0_i32, %c0_i32_0 : i32, i32
  }
  func.func @transform_3(%arg0: i32) -> (i32, i32, i32) {
    %c0_i32 = arith.constant 0 : i32
    %c0_i32_0 = arith.constant 0 : i32
    %c0_i32_1 = arith.constant 0 : i32
    return %arg0, %c0_i32, %c0_i32_0 : i32, i32, i32
  }
}

module attributes {stable_mosaic.version = 11 : i64} {
  func.func @conv_tap_kernel(%arg0: i32, %arg1: memref<1x16x1089xf32, #tpu.memory_space<vmem>>, %arg2: memref<8x1024xf32, #tpu.memory_space<vmem>>, %arg3: memref<8x1xf32, #tpu.memory_space<vmem>>, %arg4: memref<1x8x851xf32, #tpu.memory_space<vmem>>) attributes {dimension_semantics = [#tpu.dimension_semantics<parallel>], iteration_bounds = array<i64: 2>, scalar_prefetch = 0 : i64, scratch_operands = 0 : i64, tpu.core_type = #tpu.core_type<tc>, window_params = [{transform_indices = @transform_0, window_bounds = array<i64: 1, 16, 1089>}, {pipeline_mode = #tpu.pipeline_mode<synchronous>, transform_indices = @transform_1, window_bounds = array<i64: 8, 1024>}, {pipeline_mode = #tpu.pipeline_mode<synchronous>, transform_indices = @transform_2, window_bounds = array<i64: 8, 1>}, {transform_indices = @transform_3, window_bounds = array<i64: 1, 8, 851>}]} {
    %c0 = arith.constant 0 : index
    %c0_0 = arith.constant 0 : index
    %c0_1 = arith.constant 0 : index
    %0 = vector.load %arg1[%c0, %c0_0, %c0_1] : memref<1x16x1089xf32, #tpu.memory_space<vmem>>, vector<1x16x1089xf32>
    %1 = vector.shape_cast %0 : vector<1x16x1089xf32> to vector<16x1089xf32>
    %2 = vector.extract_strided_slice %1 {offsets = [0, 0], sizes = [16, 851], strides = [1, 1]} : vector<16x1089xf32> to vector<16x851xf32>
    %3 = vector.extract_strided_slice %1 {offsets = [0, 1], sizes = [16, 851], strides = [1, 1]} : vector<16x1089xf32> to vector<16x851xf32>
    %4 = vector.extract_strided_slice %1 {offsets = [0, 2], sizes = [16, 851], strides = [1, 1]} : vector<16x1089xf32> to vector<16x851xf32>
    %5 = vector.extract_strided_slice %1 {offsets = [0, 3], sizes = [16, 851], strides = [1, 1]} : vector<16x1089xf32> to vector<16x851xf32>
    %6 = vector.extract_strided_slice %1 {offsets = [0, 4], sizes = [16, 851], strides = [1, 1]} : vector<16x1089xf32> to vector<16x851xf32>
    %7 = vector.extract_strided_slice %1 {offsets = [0, 5], sizes = [16, 851], strides = [1, 1]} : vector<16x1089xf32> to vector<16x851xf32>
    %8 = vector.extract_strided_slice %1 {offsets = [0, 6], sizes = [16, 851], strides = [1, 1]} : vector<16x1089xf32> to vector<16x851xf32>
    %9 = vector.extract_strided_slice %1 {offsets = [0, 7], sizes = [16, 851], strides = [1, 1]} : vector<16x1089xf32> to vector<16x851xf32>
    %10 = tpu.concatenate %2, %3, %4, %5, %6, %7, %8, %9 in 0 : vector<16x851xf32>, vector<16x851xf32>, vector<16x851xf32>, vector<16x851xf32>, vector<16x851xf32>, vector<16x851xf32>, vector<16x851xf32>, vector<16x851xf32> -> vector<128x851xf32>
    %11 = vector.extract_strided_slice %1 {offsets = [0, 33], sizes = [16, 851], strides = [1, 1]} : vector<16x1089xf32> to vector<16x851xf32>
    %12 = vector.extract_strided_slice %1 {offsets = [0, 34], sizes = [16, 851], strides = [1, 1]} : vector<16x1089xf32> to vector<16x851xf32>
    %13 = vector.extract_strided_slice %1 {offsets = [0, 35], sizes = [16, 851], strides = [1, 1]} : vector<16x1089xf32> to vector<16x851xf32>
    %14 = vector.extract_strided_slice %1 {offsets = [0, 36], sizes = [16, 851], strides = [1, 1]} : vector<16x1089xf32> to vector<16x851xf32>
    %15 = vector.extract_strided_slice %1 {offsets = [0, 37], sizes = [16, 851], strides = [1, 1]} : vector<16x1089xf32> to vector<16x851xf32>
    %16 = vector.extract_strided_slice %1 {offsets = [0, 38], sizes = [16, 851], strides = [1, 1]} : vector<16x1089xf32> to vector<16x851xf32>
    %17 = vector.extract_strided_slice %1 {offsets = [0, 39], sizes = [16, 851], strides = [1, 1]} : vector<16x1089xf32> to vector<16x851xf32>
    %18 = vector.extract_strided_slice %1 {offsets = [0, 40], sizes = [16, 851], strides = [1, 1]} : vector<16x1089xf32> to vector<16x851xf32>
    %19 = tpu.concatenate %11, %12, %13, %14, %15, %16, %17, %18 in 0 : vector<16x851xf32>, vector<16x851xf32>, vector<16x851xf32>, vector<16x851xf32>, vector<16x851xf32>, vector<16x851xf32>, vector<16x851xf32>, vector<16x851xf32> -> vector<128x851xf32>
    %20 = vector.extract_strided_slice %1 {offsets = [0, 66], sizes = [16, 851], strides = [1, 1]} : vector<16x1089xf32> to vector<16x851xf32>
    %21 = vector.extract_strided_slice %1 {offsets = [0, 67], sizes = [16, 851], strides = [1, 1]} : vector<16x1089xf32> to vector<16x851xf32>
    %22 = vector.extract_strided_slice %1 {offsets = [0, 68], sizes = [16, 851], strides = [1, 1]} : vector<16x1089xf32> to vector<16x851xf32>
    %23 = vector.extract_strided_slice %1 {offsets = [0, 69], sizes = [16, 851], strides = [1, 1]} : vector<16x1089xf32> to vector<16x851xf32>
    %24 = vector.extract_strided_slice %1 {offsets = [0, 70], sizes = [16, 851], strides = [1, 1]} : vector<16x1089xf32> to vector<16x851xf32>
    %25 = vector.extract_strided_slice %1 {offsets = [0, 71], sizes = [16, 851], strides = [1, 1]} : vector<16x1089xf32> to vector<16x851xf32>
    %26 = vector.extract_strided_slice %1 {offsets = [0, 72], sizes = [16, 851], strides = [1, 1]} : vector<16x1089xf32> to vector<16x851xf32>
    %27 = vector.extract_strided_slice %1 {offsets = [0, 73], sizes = [16, 851], strides = [1, 1]} : vector<16x1089xf32> to vector<16x851xf32>
    %28 = tpu.concatenate %20, %21, %22, %23, %24, %25, %26, %27 in 0 : vector<16x851xf32>, vector<16x851xf32>, vector<16x851xf32>, vector<16x851xf32>, vector<16x851xf32>, vector<16x851xf32>, vector<16x851xf32>, vector<16x851xf32> -> vector<128x851xf32>
    %29 = vector.extract_strided_slice %1 {offsets = [0, 99], sizes = [16, 851], strides = [1, 1]} : vector<16x1089xf32> to vector<16x851xf32>
    %30 = vector.extract_strided_slice %1 {offsets = [0, 100], sizes = [16, 851], strides = [1, 1]} : vector<16x1089xf32> to vector<16x851xf32>
    %31 = vector.extract_strided_slice %1 {offsets = [0, 101], sizes = [16, 851], strides = [1, 1]} : vector<16x1089xf32> to vector<16x851xf32>
    %32 = vector.extract_strided_slice %1 {offsets = [0, 102], sizes = [16, 851], strides = [1, 1]} : vector<16x1089xf32> to vector<16x851xf32>
    %33 = vector.extract_strided_slice %1 {offsets = [0, 103], sizes = [16, 851], strides = [1, 1]} : vector<16x1089xf32> to vector<16x851xf32>
    %34 = vector.extract_strided_slice %1 {offsets = [0, 104], sizes = [16, 851], strides = [1, 1]} : vector<16x1089xf32> to vector<16x851xf32>
    %35 = vector.extract_strided_slice %1 {offsets = [0, 105], sizes = [16, 851], strides = [1, 1]} : vector<16x1089xf32> to vector<16x851xf32>
    %36 = vector.extract_strided_slice %1 {offsets = [0, 106], sizes = [16, 851], strides = [1, 1]} : vector<16x1089xf32> to vector<16x851xf32>
    %37 = tpu.concatenate %29, %30, %31, %32, %33, %34, %35, %36 in 0 : vector<16x851xf32>, vector<16x851xf32>, vector<16x851xf32>, vector<16x851xf32>, vector<16x851xf32>, vector<16x851xf32>, vector<16x851xf32>, vector<16x851xf32> -> vector<128x851xf32>
    %38 = vector.extract_strided_slice %1 {offsets = [0, 132], sizes = [16, 851], strides = [1, 1]} : vector<16x1089xf32> to vector<16x851xf32>
    %39 = vector.extract_strided_slice %1 {offsets = [0, 133], sizes = [16, 851], strides = [1, 1]} : vector<16x1089xf32> to vector<16x851xf32>
    %40 = vector.extract_strided_slice %1 {offsets = [0, 134], sizes = [16, 851], strides = [1, 1]} : vector<16x1089xf32> to vector<16x851xf32>
    %41 = vector.extract_strided_slice %1 {offsets = [0, 135], sizes = [16, 851], strides = [1, 1]} : vector<16x1089xf32> to vector<16x851xf32>
    %42 = vector.extract_strided_slice %1 {offsets = [0, 136], sizes = [16, 851], strides = [1, 1]} : vector<16x1089xf32> to vector<16x851xf32>
    %43 = vector.extract_strided_slice %1 {offsets = [0, 137], sizes = [16, 851], strides = [1, 1]} : vector<16x1089xf32> to vector<16x851xf32>
    %44 = vector.extract_strided_slice %1 {offsets = [0, 138], sizes = [16, 851], strides = [1, 1]} : vector<16x1089xf32> to vector<16x851xf32>
    %45 = vector.extract_strided_slice %1 {offsets = [0, 139], sizes = [16, 851], strides = [1, 1]} : vector<16x1089xf32> to vector<16x851xf32>
    %46 = tpu.concatenate %38, %39, %40, %41, %42, %43, %44, %45 in 0 : vector<16x851xf32>, vector<16x851xf32>, vector<16x851xf32>, vector<16x851xf32>, vector<16x851xf32>, vector<16x851xf32>, vector<16x851xf32>, vector<16x851xf32> -> vector<128x851xf32>
    %47 = vector.extract_strided_slice %1 {offsets = [0, 165], sizes = [16, 851], strides = [1, 1]} : vector<16x1089xf32> to vector<16x851xf32>
    %48 = vector.extract_strided_slice %1 {offsets = [0, 166], sizes = [16, 851], strides = [1, 1]} : vector<16x1089xf32> to vector<16x851xf32>
    %49 = vector.extract_strided_slice %1 {offsets = [0, 167], sizes = [16, 851], strides = [1, 1]} : vector<16x1089xf32> to vector<16x851xf32>
    %50 = vector.extract_strided_slice %1 {offsets = [0, 168], sizes = [16, 851], strides = [1, 1]} : vector<16x1089xf32> to vector<16x851xf32>
    %51 = vector.extract_strided_slice %1 {offsets = [0, 169], sizes = [16, 851], strides = [1, 1]} : vector<16x1089xf32> to vector<16x851xf32>
    %52 = vector.extract_strided_slice %1 {offsets = [0, 170], sizes = [16, 851], strides = [1, 1]} : vector<16x1089xf32> to vector<16x851xf32>
    %53 = vector.extract_strided_slice %1 {offsets = [0, 171], sizes = [16, 851], strides = [1, 1]} : vector<16x1089xf32> to vector<16x851xf32>
    %54 = vector.extract_strided_slice %1 {offsets = [0, 172], sizes = [16, 851], strides = [1, 1]} : vector<16x1089xf32> to vector<16x851xf32>
    %55 = tpu.concatenate %47, %48, %49, %50, %51, %52, %53, %54 in 0 : vector<16x851xf32>, vector<16x851xf32>, vector<16x851xf32>, vector<16x851xf32>, vector<16x851xf32>, vector<16x851xf32>, vector<16x851xf32>, vector<16x851xf32> -> vector<128x851xf32>
    %56 = vector.extract_strided_slice %1 {offsets = [0, 198], sizes = [16, 851], strides = [1, 1]} : vector<16x1089xf32> to vector<16x851xf32>
    %57 = vector.extract_strided_slice %1 {offsets = [0, 199], sizes = [16, 851], strides = [1, 1]} : vector<16x1089xf32> to vector<16x851xf32>
    %58 = vector.extract_strided_slice %1 {offsets = [0, 200], sizes = [16, 851], strides = [1, 1]} : vector<16x1089xf32> to vector<16x851xf32>
    %59 = vector.extract_strided_slice %1 {offsets = [0, 201], sizes = [16, 851], strides = [1, 1]} : vector<16x1089xf32> to vector<16x851xf32>
    %60 = vector.extract_strided_slice %1 {offsets = [0, 202], sizes = [16, 851], strides = [1, 1]} : vector<16x1089xf32> to vector<16x851xf32>
    %61 = vector.extract_strided_slice %1 {offsets = [0, 203], sizes = [16, 851], strides = [1, 1]} : vector<16x1089xf32> to vector<16x851xf32>
    %62 = vector.extract_strided_slice %1 {offsets = [0, 204], sizes = [16, 851], strides = [1, 1]} : vector<16x1089xf32> to vector<16x851xf32>
    %63 = vector.extract_strided_slice %1 {offsets = [0, 205], sizes = [16, 851], strides = [1, 1]} : vector<16x1089xf32> to vector<16x851xf32>
    %64 = tpu.concatenate %56, %57, %58, %59, %60, %61, %62, %63 in 0 : vector<16x851xf32>, vector<16x851xf32>, vector<16x851xf32>, vector<16x851xf32>, vector<16x851xf32>, vector<16x851xf32>, vector<16x851xf32>, vector<16x851xf32> -> vector<128x851xf32>
    %65 = vector.extract_strided_slice %1 {offsets = [0, 231], sizes = [16, 851], strides = [1, 1]} : vector<16x1089xf32> to vector<16x851xf32>
    %66 = vector.extract_strided_slice %1 {offsets = [0, 232], sizes = [16, 851], strides = [1, 1]} : vector<16x1089xf32> to vector<16x851xf32>
    %67 = vector.extract_strided_slice %1 {offsets = [0, 233], sizes = [16, 851], strides = [1, 1]} : vector<16x1089xf32> to vector<16x851xf32>
    %68 = vector.extract_strided_slice %1 {offsets = [0, 234], sizes = [16, 851], strides = [1, 1]} : vector<16x1089xf32> to vector<16x851xf32>
    %69 = vector.extract_strided_slice %1 {offsets = [0, 235], sizes = [16, 851], strides = [1, 1]} : vector<16x1089xf32> to vector<16x851xf32>
    %70 = vector.extract_strided_slice %1 {offsets = [0, 236], sizes = [16, 851], strides = [1, 1]} : vector<16x1089xf32> to vector<16x851xf32>
    %71 = vector.extract_strided_slice %1 {offsets = [0, 237], sizes = [16, 851], strides = [1, 1]} : vector<16x1089xf32> to vector<16x851xf32>
    %72 = vector.extract_strided_slice %1 {offsets = [0, 238], sizes = [16, 851], strides = [1, 1]} : vector<16x1089xf32> to vector<16x851xf32>
    %73 = tpu.concatenate %65, %66, %67, %68, %69, %70, %71, %72 in 0 : vector<16x851xf32>, vector<16x851xf32>, vector<16x851xf32>, vector<16x851xf32>, vector<16x851xf32>, vector<16x851xf32>, vector<16x851xf32>, vector<16x851xf32> -> vector<128x851xf32>
    %74 = tpu.concatenate %10, %19, %28, %37, %46, %55, %64, %73 in 0 : vector<128x851xf32>, vector<128x851xf32>, vector<128x851xf32>, vector<128x851xf32>, vector<128x851xf32>, vector<128x851xf32>, vector<128x851xf32>, vector<128x851xf32> -> vector<1024x851xf32>
    %c0_2 = arith.constant 0 : index
    %c0_3 = arith.constant 0 : index
    %75 = vector.load %arg2[%c0_2, %c0_3] : memref<8x1024xf32, #tpu.memory_space<vmem>>, vector<8x1024xf32>
    %cst = arith.constant dense<0.000000e+00> : vector<8x851xf32>
    %76 = tpu.matmul %75, %74, %cst {dimension_numbers = #tpu.dot_dimension_numbers<[1], [0], [0], [1], [0, 0, 1, 1], [], []>} : vector<8x1024xf32>, vector<1024x851xf32>, vector<8x851xf32> -> vector<8x851xf32>
    %c0_4 = arith.constant 0 : index
    %c0_5 = arith.constant 0 : index
    %77 = vector.load %arg3[%c0_4, %c0_5] : memref<8x1xf32, #tpu.memory_space<vmem>>, vector<8x1xf32>
    %78 = vector.broadcast %77 : vector<8x1xf32> to vector<8x851xf32>
    %79 = arith.addf %76, %78 : vector<8x851xf32>
    %cst_6 = arith.constant 0.000000e+00 : f32
    %80 = vector.broadcast %cst_6 : f32 to vector<8x851xf32>
    %81 = arith.maximumf %79, %80 : vector<8x851xf32>
    %c0_7 = arith.constant 0 : index
    %c0_8 = arith.constant 0 : index
    %c0_9 = arith.constant 0 : index
    %82 = vector.load %arg4[%c0_7, %c0_8, %c0_9] : memref<1x8x851xf32, #tpu.memory_space<vmem>>, vector<1x8x851xf32>
    %83 = vector.shape_cast %82 : vector<1x8x851xf32> to vector<8x851xf32>
    %84 = vector.shape_cast %81 : vector<8x851xf32> to vector<1x8x851xf32>
    tpu.vector_store %arg4[%c0_7, %c0_8, %c0_9], %84 {strides = array<i32>} : memref<1x8x851xf32, #tpu.memory_space<vmem>>, vector<1x8x851xf32>,
    return
  }
  func.func @transform_0(%arg0: i32) -> (i32, i32, i32) {
    %c0_i32 = arith.constant 0 : i32
    %c0_i32_0 = arith.constant 0 : i32
    %c0_i32_1 = arith.constant 0 : i32
    return %arg0, %c0_i32, %c0_i32_0 : i32, i32, i32
  }
  func.func @transform_1(%arg0: i32) -> (i32, i32) {
    %c0_i32 = arith.constant 0 : i32
    %c0_i32_0 = arith.constant 0 : i32
    %c0_i32_1 = arith.constant 0 : i32
    return %c0_i32, %c0_i32_0 : i32, i32
  }
  func.func @transform_2(%arg0: i32) -> (i32, i32) {
    %c0_i32 = arith.constant 0 : i32
    %c0_i32_0 = arith.constant 0 : i32
    %c0_i32_1 = arith.constant 0 : i32
    return %c0_i32, %c0_i32_0 : i32, i32
  }
  func.func @transform_3(%arg0: i32) -> (i32, i32, i32) {
    %c0_i32 = arith.constant 0 : i32
    %c0_i32_0 = arith.constant 0 : i32
    %c0_i32_1 = arith.constant 0 : i32
    return %arg0, %c0_i32, %c0_i32_0 : i32, i32, i32
  }
}

module attributes {stable_mosaic.version = 11 : i64} {
  func.func @conv_tap_kernel(%arg0: i32, %arg1: memref<1x8x1024xf32, #tpu.memory_space<vmem>>, %arg2: memref<1x200xf32, #tpu.memory_space<vmem>>, %arg3: memref<1x1xf32, #tpu.memory_space<vmem>>, %arg4: memref<1x1x892xf32, #tpu.memory_space<vmem>>) attributes {dimension_semantics = [#tpu.dimension_semantics<parallel>], iteration_bounds = array<i64: 2>, scalar_prefetch = 0 : i64, scratch_operands = 0 : i64, tpu.core_type = #tpu.core_type<tc>, window_params = [{transform_indices = @transform_0, window_bounds = array<i64: 1, 8, 1024>}, {pipeline_mode = #tpu.pipeline_mode<synchronous>, transform_indices = @transform_1, window_bounds = array<i64: 1, 200>}, {pipeline_mode = #tpu.pipeline_mode<synchronous>, transform_indices = @transform_2, window_bounds = array<i64: 1, 1>}, {transform_indices = @transform_3, window_bounds = array<i64: 1, 1, 892>}]} {
    %c0 = arith.constant 0 : index
    %c0_0 = arith.constant 0 : index
    %c0_1 = arith.constant 0 : index
    %0 = vector.load %arg1[%c0, %c0_0, %c0_1] : memref<1x8x1024xf32, #tpu.memory_space<vmem>>, vector<1x8x1024xf32>
    %1 = vector.shape_cast %0 : vector<1x8x1024xf32> to vector<8x1024xf32>
    %2 = vector.extract_strided_slice %1 {offsets = [0, 0], sizes = [8, 892], strides = [1, 1]} : vector<8x1024xf32> to vector<8x892xf32>
    %3 = vector.extract_strided_slice %1 {offsets = [0, 1], sizes = [8, 892], strides = [1, 1]} : vector<8x1024xf32> to vector<8x892xf32>
    %4 = vector.extract_strided_slice %1 {offsets = [0, 2], sizes = [8, 892], strides = [1, 1]} : vector<8x1024xf32> to vector<8x892xf32>
    %5 = vector.extract_strided_slice %1 {offsets = [0, 3], sizes = [8, 892], strides = [1, 1]} : vector<8x1024xf32> to vector<8x892xf32>
    %6 = vector.extract_strided_slice %1 {offsets = [0, 4], sizes = [8, 892], strides = [1, 1]} : vector<8x1024xf32> to vector<8x892xf32>
    %7 = tpu.concatenate %2, %3, %4, %5, %6 in 0 : vector<8x892xf32>, vector<8x892xf32>, vector<8x892xf32>, vector<8x892xf32>, vector<8x892xf32> -> vector<40x892xf32>
    %8 = vector.extract_strided_slice %1 {offsets = [0, 32], sizes = [8, 892], strides = [1, 1]} : vector<8x1024xf32> to vector<8x892xf32>
    %9 = vector.extract_strided_slice %1 {offsets = [0, 33], sizes = [8, 892], strides = [1, 1]} : vector<8x1024xf32> to vector<8x892xf32>
    %10 = vector.extract_strided_slice %1 {offsets = [0, 34], sizes = [8, 892], strides = [1, 1]} : vector<8x1024xf32> to vector<8x892xf32>
    %11 = vector.extract_strided_slice %1 {offsets = [0, 35], sizes = [8, 892], strides = [1, 1]} : vector<8x1024xf32> to vector<8x892xf32>
    %12 = vector.extract_strided_slice %1 {offsets = [0, 36], sizes = [8, 892], strides = [1, 1]} : vector<8x1024xf32> to vector<8x892xf32>
    %13 = tpu.concatenate %8, %9, %10, %11, %12 in 0 : vector<8x892xf32>, vector<8x892xf32>, vector<8x892xf32>, vector<8x892xf32>, vector<8x892xf32> -> vector<40x892xf32>
    %14 = vector.extract_strided_slice %1 {offsets = [0, 64], sizes = [8, 892], strides = [1, 1]} : vector<8x1024xf32> to vector<8x892xf32>
    %15 = vector.extract_strided_slice %1 {offsets = [0, 65], sizes = [8, 892], strides = [1, 1]} : vector<8x1024xf32> to vector<8x892xf32>
    %16 = vector.extract_strided_slice %1 {offsets = [0, 66], sizes = [8, 892], strides = [1, 1]} : vector<8x1024xf32> to vector<8x892xf32>
    %17 = vector.extract_strided_slice %1 {offsets = [0, 67], sizes = [8, 892], strides = [1, 1]} : vector<8x1024xf32> to vector<8x892xf32>
    %18 = vector.extract_strided_slice %1 {offsets = [0, 68], sizes = [8, 892], strides = [1, 1]} : vector<8x1024xf32> to vector<8x892xf32>
    %19 = tpu.concatenate %14, %15, %16, %17, %18 in 0 : vector<8x892xf32>, vector<8x892xf32>, vector<8x892xf32>, vector<8x892xf32>, vector<8x892xf32> -> vector<40x892xf32>
    %20 = vector.extract_strided_slice %1 {offsets = [0, 96], sizes = [8, 892], strides = [1, 1]} : vector<8x1024xf32> to vector<8x892xf32>
    %21 = vector.extract_strided_slice %1 {offsets = [0, 97], sizes = [8, 892], strides = [1, 1]} : vector<8x1024xf32> to vector<8x892xf32>
    %22 = vector.extract_strided_slice %1 {offsets = [0, 98], sizes = [8, 892], strides = [1, 1]} : vector<8x1024xf32> to vector<8x892xf32>
    %23 = vector.extract_strided_slice %1 {offsets = [0, 99], sizes = [8, 892], strides = [1, 1]} : vector<8x1024xf32> to vector<8x892xf32>
    %24 = vector.extract_strided_slice %1 {offsets = [0, 100], sizes = [8, 892], strides = [1, 1]} : vector<8x1024xf32> to vector<8x892xf32>
    %25 = tpu.concatenate %20, %21, %22, %23, %24 in 0 : vector<8x892xf32>, vector<8x892xf32>, vector<8x892xf32>, vector<8x892xf32>, vector<8x892xf32> -> vector<40x892xf32>
    %26 = vector.extract_strided_slice %1 {offsets = [0, 128], sizes = [8, 892], strides = [1, 1]} : vector<8x1024xf32> to vector<8x892xf32>
    %27 = vector.extract_strided_slice %1 {offsets = [0, 129], sizes = [8, 892], strides = [1, 1]} : vector<8x1024xf32> to vector<8x892xf32>
    %28 = vector.extract_strided_slice %1 {offsets = [0, 130], sizes = [8, 892], strides = [1, 1]} : vector<8x1024xf32> to vector<8x892xf32>
    %29 = vector.extract_strided_slice %1 {offsets = [0, 131], sizes = [8, 892], strides = [1, 1]} : vector<8x1024xf32> to vector<8x892xf32>
    %30 = vector.extract_strided_slice %1 {offsets = [0, 132], sizes = [8, 892], strides = [1, 1]} : vector<8x1024xf32> to vector<8x892xf32>
    %31 = tpu.concatenate %26, %27, %28, %29, %30 in 0 : vector<8x892xf32>, vector<8x892xf32>, vector<8x892xf32>, vector<8x892xf32>, vector<8x892xf32> -> vector<40x892xf32>
    %32 = tpu.concatenate %7, %13, %19, %25, %31 in 0 : vector<40x892xf32>, vector<40x892xf32>, vector<40x892xf32>, vector<40x892xf32>, vector<40x892xf32> -> vector<200x892xf32>
    %c0_2 = arith.constant 0 : index
    %c0_3 = arith.constant 0 : index
    %33 = vector.load %arg2[%c0_2, %c0_3] : memref<1x200xf32, #tpu.memory_space<vmem>>, vector<1x200xf32>
    %cst = arith.constant dense<0.000000e+00> : vector<1x892xf32>
    %34 = tpu.matmul %33, %32, %cst {dimension_numbers = #tpu.dot_dimension_numbers<[1], [0], [0], [1], [0, 0, 1, 1], [], []>} : vector<1x200xf32>, vector<200x892xf32>, vector<1x892xf32> -> vector<1x892xf32>
    %c0_4 = arith.constant 0 : index
    %c0_5 = arith.constant 0 : index
    %35 = vector.load %arg3[%c0_4, %c0_5] : memref<1x1xf32, #tpu.memory_space<vmem>>, vector<1x1xf32>
    %36 = vector.broadcast %35 : vector<1x1xf32> to vector<1x892xf32>
    %37 = arith.addf %34, %36 : vector<1x892xf32>
    %38 = math.tanh %37 : vector<1x892xf32>
    %c0_6 = arith.constant 0 : index
    %c0_7 = arith.constant 0 : index
    %c0_8 = arith.constant 0 : index
    %39 = vector.load %arg4[%c0_6, %c0_7, %c0_8] : memref<1x1x892xf32, #tpu.memory_space<vmem>>, vector<1x1x892xf32>
    %40 = vector.shape_cast %39 : vector<1x1x892xf32> to vector<1x892xf32>
    %41 = vector.shape_cast %38 : vector<1x892xf32> to vector<1x1x892xf32>
    tpu.vector_store %arg4[%c0_6, %c0_7, %c0_8], %41 {strides = array<i32>} : memref<1x1x892xf32, #tpu.memory_space<vmem>>, vector<1x1x892xf32>,
    return
  }
  func.func @transform_0(%arg0: i32) -> (i32, i32, i32) {
    %c0_i32 = arith.constant 0 : i32
    %c0_i32_0 = arith.constant 0 : i32
    %c0_i32_1 = arith.constant 0 : i32
    return %arg0, %c0_i32, %c0_i32_0 : i32, i32, i32
  }
  func.func @transform_1(%arg0: i32) -> (i32, i32) {
    %c0_i32 = arith.constant 0 : i32
    %c0_i32_0 = arith.constant 0 : i32
    %c0_i32_1 = arith.constant 0 : i32
    return %c0_i32, %c0_i32_0 : i32, i32
  }
  func.func @transform_2(%arg0: i32) -> (i32, i32) {
    %c0_i32 = arith.constant 0 : i32
    %c0_i32_0 = arith.constant 0 : i32
    %c0_i32_1 = arith.constant 0 : i32
    return %c0_i32, %c0_i32_0 : i32, i32
  }
  func.func @transform_3(%arg0: i32) -> (i32, i32, i32) {
    %c0_i32 = arith.constant 0 : i32
    %c0_i32_0 = arith.constant 0 : i32
    %c0_i32_1 = arith.constant 0 : i32
    return %arg0, %c0_i32, %c0_i32_0 : i32, i32, i32
  }
}

</mosaic_0001>

<llo_original>
// kernel: compressor_forward.4
$region0: #{compressor_forward.4}
  #allocation0 [shape = 'u32[]', space=smem, size = 0x4, offset = 0x4, fixed_abs, tag = 'smem constant byte address 0x4 - core index']
  #allocation1 [shape = 'u32[144,128]{1,0:T(1,128)}', space=vmem, size = 0x12000, scoped, tag = 'internal scratch']
  %s0 = inlined_call_operand.vmem [shape: f32[2,256], index: 0, kind: input, shape index: {}]
  %s1 = inlined_call_operand.vmem [shape: f32[2,256], index: 1, kind: input, shape index: {}]
  %s2 = inlined_call_operand.vmem [shape: f32[2,256], index: 2, kind: input, shape index: {}]
  %s3 = inlined_call_operand.vmem [shape: f32[2,256], index: 3, kind: input, shape index: {}]
  %s4 = inlined_call_operand.vmem [shape: f32[32,256], index: 4, kind: input, shape index: {}]
  %s5 = inlined_call_operand.vmem [shape: f32[16,64], index: 5, kind: input, shape index: {}]
  %s6 = inlined_call_operand.vmem [shape: f32[2,64], index: 6, kind: output, shape index: {}]
  %s7 = sld [smem:[#allocation0]]
  $region34: #{compressor_forward.4} parent=0
    _
  %s9 = ssub.s32 1, %s7
  %s10 = scalar_select 0, %s9, %s7
  // Predicated region
  $region2: #{compressor_forward.4} parent=0 // pred_check
    _
  $region3: #{compressor_forward.4} parent=0 // pred_check_branch
    %12 = sbr.rel (0) target = $region5
  $region4: #{compressor_forward.4} parent=0 // pred_region
    _
  $region5: #{compressor_forward.4} parent=0 // pred_fallthru
    _
  // Predicated region
  $region6: #{compressor_forward.4} parent=0 // pred_check
    _
  $region7: #{compressor_forward.4} parent=0 // pred_check_branch
    %14 = sbr.rel (0) target = $region9
  $region8: #{compressor_forward.4} parent=0 // pred_region
    _
  $region9: #{compressor_forward.4} parent=0 // pred_fallthru
    _
  // Predicated region
  $region10: #{compressor_forward.4} parent=0 // pred_check
    _
  $region11: #{compressor_forward.4} parent=0 // pred_check_branch
    %16 = sbr.rel (0) target = $region13
  $region12: #{compressor_forward.4} parent=0 // pred_region
    _
  $region13: #{compressor_forward.4} parent=0 // pred_fallthru
    _
  // Predicated region
  $region14: #{compressor_forward.4} parent=0 // pred_check
    _
  $region15: #{compressor_forward.4} parent=0 // pred_check_branch
    %18 = sbr.rel (0) target = $region17
  $region16: #{compressor_forward.4} parent=0 // pred_region
    _
  $region17: #{compressor_forward.4} parent=0 // pred_fallthru
    _
  // Predicated region
  $region18: #{compressor_forward.4} parent=0 // pred_check
    _
  $region19: #{compressor_forward.4} parent=0 // pred_check_branch
    %20 = sbr.rel (0) target = $region21
  $region20: #{compressor_forward.4} parent=0 // pred_region
    _
  $region21: #{compressor_forward.4} parent=0 // pred_fallthru
    _
  // Predicated region
  $region22: #{compressor_forward.4} parent=0 // pred_check
    _
  $region23: #{compressor_forward.4} parent=0 // pred_check_branch
    %22 = sbr.rel (0) target = $region25
  $region24: #{compressor_forward.4} parent=0 // pred_region
    _
  $region25: #{compressor_forward.4} parent=0 // pred_fallthru
    _
  %v23 = vld [vmem:[%s0] sm:$0xf]
  %v24 = vmul.f32 %v23, 0.7854
  %v25 = vand.u32 2147483647, %v24
  %vm26 = vcmp.le.f32.partialorder %v25, 0.7853982
  %vm27 = vcmp.lt.s32.totalorder %v24, 0
  %v28 = vand.u32 %v24, 2139095040
  %v29 = vshrl.u32 %v28, 23
  %v30 = vsub.s32 %v29, 127
  %v31 = vand.u32 2147483647, %v24
  %v32 = vand.u32 %v31, 8388607
  %v33 = vor.u32 %v32, 8388608
  %v34 = vsub.s32 0, %v33
  %v35 = vadd.s32 %v30, 1
  %vm36 = vcmp.gt.s32.totalorder %v35, 0
  %v37 = vsel %vm36, %v35, 0
  %v38 = vshrl.u32 %v37, 5
  %v39 = vand.u32 %v37, 31
  %v40 = vsub.s32 32, %v39
  %v41 = vshrl.u32 683565275, %v40
  %v42 = vshll.u32 683565275, %v39
  %v43 = vshrl.u32 2475754826, %v40
  %v44 = vor.u32 %v42, %v43
  %v45 = vshll.u32 2475754826, %v39
  %v46 = vshrl.u32 2131351028, %v40
  %v47 = vor.u32 %v45, %v46
  %v48 = vshll.u32 2131351028, %v39
  %v49 = vshrl.u32 2102212464, %v40
  %v50 = vor.u32 %v48, %v49
  %v51 = vshll.u32 2102212464, %v39
  %v52 = vshrl.u32 920167782, %v40
  %v53 = vor.u32 %v51, %v52
  %v54 = vshll.u32 920167782, %v39
  %v55 = vshrl.u32 1326507024, %v40
  %v56 = vor.u32 %v54, %v55
  %vm57 = vcmp.lt.s32.totalorder %v38, 1
  %vm58 = vcmp.lt.s32.totalorder %v38, 2
  %vm59 = vcmp.lt.s32.totalorder %v38, 3
  %vm60 = vcmp.lt.s32.totalorder %v38, 4
  %v61 = vsel %vm57, %v41, %v44
  %v62 = vsel %vm60, %v50, 2102212464
  %v63 = vsel %vm59, %v47, %v62
  %v64 = vsel %vm58, %v61, %v63
  %v65 = vsel %vm57, %v44, %v47
  %v66 = vsel %vm60, %v53, 920167782
  %v67 = vsel %vm59, %v50, %v66
  %v68 = vsel %vm58, %v65, %v67
  %v69 = vsel %vm57, %v47, %v50
  %v70 = vsel %vm60, %v56, 1326507024
  %v71 = vsel %vm59, %v53, %v70
  %v72 = vsel %vm58, %v69, %v71
  %v73 = vshll.u32 %v33, 8
  %v74 = vmul.u32.u64.compose %v73, %v72
  %v75 = vextract.low.u32 %v74
  %v76 = vextract.high.u32 %v74
  %v77 = vmul.u32.u64.compose %v73, %v68
  %v78 = vextract.low.u32 %v77
  %v79 = vextract.high.u32 %v77
  %v80 = vmul.u32 %v73, %v64
  %v81 = vadd.s32 %v76, %v78
  %vm82 = vc.u32 %v76, %v78
  %v83 = vadd.s32 %v79, 1
  %v84 = vsel %vm82, %v83, %v79
  %v85 = vadd.s32 %v80, %v84
  %v86 = vadd.s32 %v85, 536870912
  %v87 = vshrl.u32 %v86, 30
  %v88 = vshll.u32 %v87, 30
  %v89 = vsub.s32 %v85, %v88
  %vm90 = vcmp.lt.s32.totalorder %v89, 0
  %v91 = vsub.s32 0, %v89
  %v92 = vsel %vm90, %v91, %v89
  %v93 = vclz %v92
  %v94 = vsub.s32 %v93, 2
  %vm95 = vcmp.gt.s32.totalorder 0, %v94
  %v96 = vsel %vm95, 0, %v94
  %v97 = vsub.s32 32, %v96
  %v98 = vshll.u32 %v89, %v96
  %v99 = vshrl.u32 %v81, %v97
  %v100 = vor.u32 %v98, %v99
  %v101 = vsub.s32 4294967266, %v96
  %v102 = vadd.s32 %v101, 127
  %v103 = vshll.u32 %v102, 23
  %v104 = vor.u32 4788187, %v103
  %v105 = vand.u32 2147483647, %v104
  %v107 = vcvt.s32.f32 %v100
  %v108 = vmul.f32 %v107, %v105
  %v109 = vxor.u32 %v108, 2147483648
  %v110 = vsel %vm27, %v109, %v108
  %v111 = vsub.s32 4, %v87
  %v112 = vsel %vm27, %v111, %v87
  %v113 = vsel %vm26, %v24, %v110
  %v114 = vsel %vm26, 0, %v112
  %v115 = vcosq.f32.pop %v113
  %v116 = vsinq.f32.pop %v113
  %vm117 = vweird.f32 %v24
  %v118 = vand.u32 %v114, 3
  %vm119 = vcmp.lt.s32.totalorder %v118, 2
  %vm120 = vcmp.eq.s32.totalorder %v118, 0
  %v121 = vxor.u32 %v116, 2147483648
  %v122 = vsel %vm120, %v115, %v121
  %vm123 = vcmp.eq.s32.totalorder %v118, 2
  %v124 = vxor.u32 %v115, 2147483648
  %v125 = vsel %vm123, %v124, %v116
  %v126 = vsel %vm119, %v122, %v125
  %v127 = vsel %vm117, nan, %v126
  %v128 = vand.u32 2147483647, %v24
  %vm129 = vcmp.le.f32.partialorder %v128, 0.7853982
  %vm130 = vcmp.lt.s32.totalorder %v24, 0
  %v131 = vand.u32 %v24, 2139095040
  %v132 = vshrl.u32 %v131, 23
  %v133 = vsub.s32 %v132, 127
  %v134 = vand.u32 2147483647, %v24
  %v135 = vand.u32 %v134, 8388607
  %v136 = vor.u32 %v135, 8388608
  %v137 = vsub.s32 0, %v136
  %v138 = vadd.s32 %v133, 1
  %vm139 = vcmp.gt.s32.totalorder %v138, 0
  %v140 = vsel %vm139, %v138, 0
  %v141 = vshrl.u32 %v140, 5
  %v142 = vand.u32 %v140, 31
  %v143 = vsub.s32 32, %v142
  %v144 = vshrl.u32 683565275, %v143
  %v145 = vshll.u32 683565275, %v142
  %v146 = vshrl.u32 2475754826, %v143
  %v147 = vor.u32 %v145, %v146
  %v148 = vshll.u32 2475754826, %v142
  %v149 = vshrl.u32 2131351028, %v143
  %v150 = vor.u32 %v148, %v149
  %v151 = vshll.u32 2131351028, %v142
  %v152 = vshrl.u32 2102212464, %v143
  %v153 = vor.u32 %v151, %v152
  %v154 = vshll.u32 2102212464, %v142
  %v155 = vshrl.u32 920167782, %v143
  %v156 = vor.u32 %v154, %v155
  %v157 = vshll.u32 920167782, %v142
  %v158 = vshrl.u32 1326507024, %v143
  %v159 = vor.u32 %v157, %v158
  %vm160 = vcmp.lt.s32.totalorder %v141, 1
  %vm161 = vcmp.lt.s32.totalorder %v141, 2
  %vm162 = vcmp.lt.s32.totalorder %v141, 3
  %vm163 = vcmp.lt.s32.totalorder %v141, 4
  %v164 = vsel %vm160, %v144, %v147
  %v165 = vsel %vm163, %v153, 2102212464
  %v166 = vsel %vm162, %v150, %v165
  %v167 = vsel %vm161, %v164, %v166
  %v168 = vsel %vm160, %v147, %v150
  %v169 = vsel %vm163, %v156, 920167782
  %v170 = vsel %vm162, %v153, %v169
  %v171 = vsel %vm161, %v168, %v170
  %v172 = vsel %vm160, %v150, %v153
  %v173 = vsel %vm163, %v159, 1326507024
  %v174 = vsel %vm162, %v156, %v173
  %v175 = vsel %vm161, %v172, %v174
  %v176 = vshll.u32 %v136, 8
  %v177 = vmul.u32.u64.compose %v176, %v175
  %v178 = vextract.low.u32 %v177
  %v179 = vextract.high.u32 %v177
  %v180 = vmul.u32.u64.compose %v176, %v171
  %v181 = vextract.low.u32 %v180
  %v182 = vextract.high.u32 %v180
  %v183 = vmul.u32 %v176, %v167
  %v184 = vadd.s32 %v179, %v181
  %vm185 = vc.u32 %v179, %v181
  %v186 = vadd.s32 %v182, 1
  %v187 = vsel %vm185, %v186, %v182
  %v188 = vadd.s32 %v183, %v187
  %v189 = vadd.s32 %v188, 536870912
  %v190 = vshrl.u32 %v189, 30
  %v191 = vshll.u32 %v190, 30
  %v192 = vsub.s32 %v188, %v191
  %vm193 = vcmp.lt.s32.totalorder %v192, 0
  %v194 = vsub.s32 0, %v192
  %v195 = vsel %vm193, %v194, %v192
  %v196 = vclz %v195
  %v197 = vsub.s32 %v196, 2
  %vm198 = vcmp.gt.s32.totalorder 0, %v197
  %v199 = vsel %vm198, 0, %v197
  %v200 = vsub.s32 32, %v199
  %v201 = vshll.u32 %v192, %v199
  %v202 = vshrl.u32 %v184, %v200
  %v203 = vor.u32 %v201, %v202
  %v204 = vsub.s32 4294967266, %v199
  %v205 = vadd.s32 %v204, 127
  %v206 = vshll.u32 %v205, 23
  %v207 = vor.u32 4788187, %v206
  %v208 = vand.u32 2147483647, %v207
  %v210 = vcvt.s32.f32 %v203
  %v211 = vmul.f32 %v210, %v208
  %v212 = vxor.u32 %v211, 2147483648
  %v213 = vsel %vm130, %v212, %v211
  %v214 = vsub.s32 4, %v190
  %v215 = vsel %vm130, %v214, %v190
  %v216 = vsel %vm129, %v24, %v213
  %v217 = vsel %vm129, 0, %v215
  %v218 = vcosq.f32.pop %v216
  %v219 = vsinq.f32.pop %v216
  %vm220 = vweird.f32 %v24
  %v221 = vadd.s32 %v217, 3
  %v222 = vand.u32 %v221, 3
  %vm223 = vcmp.lt.s32.totalorder %v222, 2
  %vm224 = vcmp.eq.s32.totalorder %v222, 0
  %v225 = vxor.u32 %v219, 2147483648
  %v226 = vsel %vm224, %v218, %v225
  %vm227 = vcmp.eq.s32.totalorder %v222, 2
  %v228 = vxor.u32 %v218, 2147483648
  %v229 = vsel %vm227, %v228, %v219
  %v230 = vsel %vm223, %v226, %v229
  %v231 = vsel %vm220, nan, %v230
  %v232 = vld [vmem:[%s1] sm:$0xf]
  %v233 = vmul.f32 %v232, 0.7854
  %v234 = vand.u32 2147483647, %v233
  %vm235 = vcmp.le.f32.partialorder %v234, 0.7853982
  %vm236 = vcmp.lt.s32.totalorder %v233, 0
  %v237 = vand.u32 %v233, 2139095040
  %v238 = vshrl.u32 %v237, 23
  %v239 = vsub.s32 %v238, 127
  %v240 = vand.u32 2147483647, %v233
  %v241 = vand.u32 %v240, 8388607
  %v242 = vor.u32 %v241, 8388608
  %v243 = vsub.s32 0, %v242
  %v244 = vadd.s32 %v239, 1
  %vm245 = vcmp.gt.s32.totalorder %v244, 0
  %v246 = vsel %vm245, %v244, 0
  %v247 = vshrl.u32 %v246, 5
  %v248 = vand.u32 %v246, 31
  %v249 = vsub.s32 32, %v248
  %v250 = vshrl.u32 683565275, %v249
  %v251 = vshll.u32 683565275, %v248
  %v252 = vshrl.u32 2475754826, %v249
  %v253 = vor.u32 %v251, %v252
  %v254 = vshll.u32 2475754826, %v248
  %v255 = vshrl.u32 2131351028, %v249
  %v256 = vor.u32 %v254, %v255
  %v257 = vshll.u32 2131351028, %v248
  %v258 = vshrl.u32 2102212464, %v249
  %v259 = vor.u32 %v257, %v258
  %v260 = vshll.u32 2102212464, %v248
  %v261 = vshrl.u32 920167782, %v249
  %v262 = vor.u32 %v260, %v261
  %v263 = vshll.u32 920167782, %v248
  %v264 = vshrl.u32 1326507024, %v249
  %v265 = vor.u32 %v263, %v264
  %vm266 = vcmp.lt.s32.totalorder %v247, 1
  %vm267 = vcmp.lt.s32.totalorder %v247, 2
  %vm268 = vcmp.lt.s32.totalorder %v247, 3
  %vm269 = vcmp.lt.s32.totalorder %v247, 4
  %v270 = vsel %vm266, %v250, %v253
  %v271 = vsel %vm269, %v259, 2102212464
  %v272 = vsel %vm268, %v256, %v271
  %v273 = vsel %vm267, %v270, %v272
  %v274 = vsel %vm266, %v253, %v256
  %v275 = vsel %vm269, %v262, 920167782
  %v276 = vsel %vm268, %v259, %v275
  %v277 = vsel %vm267, %v274, %v276
  %v278 = vsel %vm266, %v256, %v259
  %v279 = vsel %vm269, %v265, 1326507024
  %v280 = vsel %vm268, %v262, %v279
  %v281 = vsel %vm267, %v278, %v280
  %v282 = vshll.u32 %v242, 8
  %v283 = vmul.u32.u64.compose %v282, %v281
  %v284 = vextract.low.u32 %v283
  %v285 = vextract.high.u32 %v283
  %v286 = vmul.u32.u64.compose %v282, %v277
  %v287 = vextract.low.u32 %v286
  %v288 = vextract.high.u32 %v286
  %v289 = vmul.u32 %v282, %v273
  %v290 = vadd.s32 %v285, %v287
  %vm291 = vc.u32 %v285, %v287
  %v292 = vadd.s32 %v288, 1
  %v293 = vsel %vm291, %v292, %v288
  %v294 = vadd.s32 %v289, %v293
  %v295 = vadd.s32 %v294, 536870912
  %v296 = vshrl.u32 %v295, 30
  %v297 = vshll.u32 %v296, 30
  %v298 = vsub.s32 %v294, %v297
  %vm299 = vcmp.lt.s32.totalorder %v298, 0
  %v300 = vsub.s32 0, %v298
  %v301 = vsel %vm299, %v300, %v298
  %v302 = vclz %v301
  %v303 = vsub.s32 %v302, 2
  %vm304 = vcmp.gt.s32.totalorder 0, %v303
  %v305 = vsel %vm304, 0, %v303
  %v306 = vsub.s32 32, %v305
  %v307 = vshll.u32 %v298, %v305
  %v308 = vshrl.u32 %v290, %v306
  %v309 = vor.u32 %v307, %v308
  %v310 = vsub.s32 4294967266, %v305
  %v311 = vadd.s32 %v310, 127
  %v312 = vshll.u32 %v311, 23
  %v313 = vor.u32 4788187, %v312
  %v314 = vand.u32 2147483647, %v313
  %v316 = vcvt.s32.f32 %v309
  %v317 = vmul.f32 %v316, %v314
  %v318 = vxor.u32 %v317, 2147483648
  %v319 = vsel %vm236, %v318, %v317
  %v320 = vsub.s32 4, %v296
  %v321 = vsel %vm236, %v320, %v296
  %v322 = vsel %vm235, %v233, %v319
  %v323 = vsel %vm235, 0, %v321
  %v324 = vcosq.f32.pop %v322
  %v325 = vsinq.f32.pop %v322
  %vm326 = vweird.f32 %v233
  %v327 = vand.u32 %v323, 3
  %vm328 = vcmp.lt.s32.totalorder %v327, 2
  %vm329 = vcmp.eq.s32.totalorder %v327, 0
  %v330 = vxor.u32 %v325, 2147483648
  %v331 = vsel %vm329, %v324, %v330
  %vm332 = vcmp.eq.s32.totalorder %v327, 2
  %v333 = vxor.u32 %v324, 2147483648
  %v334 = vsel %vm332, %v333, %v325
  %v335 = vsel %vm328, %v331, %v334
  %v336 = vsel %vm326, nan, %v335
  %v337 = vand.u32 2147483647, %v233
  %vm338 = vcmp.le.f32.partialorder %v337, 0.7853982
  %vm339 = vcmp.lt.s32.totalorder %v233, 0
  %v340 = vand.u32 %v233, 2139095040
  %v341 = vshrl.u32 %v340, 23
  %v342 = vsub.s32 %v341, 127
  %v343 = vand.u32 2147483647, %v233
  %v344 = vand.u32 %v343, 8388607
  %v345 = vor.u32 %v344, 8388608
  %v346 = vsub.s32 0, %v345
  %v347 = vadd.s32 %v342, 1
  %vm348 = vcmp.gt.s32.totalorder %v347, 0
  %v349 = vsel %vm348, %v347, 0
  %v350 = vshrl.u32 %v349, 5
  %v351 = vand.u32 %v349, 31
  %v352 = vsub.s32 32, %v351
  %v353 = vshrl.u32 683565275, %v352
  %v354 = vshll.u32 683565275, %v351
  %v355 = vshrl.u32 2475754826, %v352
  %v356 = vor.u32 %v354, %v355
  %v357 = vshll.u32 2475754826, %v351
  %v358 = vshrl.u32 2131351028, %v352
  %v359 = vor.u32 %v357, %v358
  %v360 = vshll.u32 2131351028, %v351
  %v361 = vshrl.u32 2102212464, %v352
  %v362 = vor.u32 %v360, %v361
  %v363 = vshll.u32 2102212464, %v351
  %v364 = vshrl.u32 920167782, %v352
  %v365 = vor.u32 %v363, %v364
  %v366 = vshll.u32 920167782, %v351
  %v367 = vshrl.u32 1326507024, %v352
  %v368 = vor.u32 %v366, %v367
  %vm369 = vcmp.lt.s32.totalorder %v350, 1
  %vm370 = vcmp.lt.s32.totalorder %v350, 2
  %vm371 = vcmp.lt.s32.totalorder %v350, 3
  %vm372 = vcmp.lt.s32.totalorder %v350, 4
  %v373 = vsel %vm369, %v353, %v356
  %v374 = vsel %vm372, %v362, 2102212464
  %v375 = vsel %vm371, %v359, %v374
  %v376 = vsel %vm370, %v373, %v375
  %v377 = vsel %vm369, %v356, %v359
  %v378 = vsel %vm372, %v365, 920167782
  %v379 = vsel %vm371, %v362, %v378
  %v380 = vsel %vm370, %v377, %v379
  %v381 = vsel %vm369, %v359, %v362
  %v382 = vsel %vm372, %v368, 1326507024
  %v383 = vsel %vm371, %v365, %v382
  %v384 = vsel %vm370, %v381, %v383
  %v385 = vshll.u32 %v345, 8
  %v386 = vmul.u32.u64.compose %v385, %v384
  %v387 = vextract.low.u32 %v386
  %v388 = vextract.high.u32 %v386
  %v389 = vmul.u32.u64.compose %v385, %v380
  %v390 = vextract.low.u32 %v389
  %v391 = vextract.high.u32 %v389
  %v392 = vmul.u32 %v385, %v376
  %v393 = vadd.s32 %v388, %v390
  %vm394 = vc.u32 %v388, %v390
  %v395 = vadd.s32 %v391, 1
  %v396 = vsel %vm394, %v395, %v391
  %v397 = vadd.s32 %v392, %v396
  %v398 = vadd.s32 %v397, 536870912
  %v399 = vshrl.u32 %v398, 30
  %v400 = vshll.u32 %v399, 30
  %v401 = vsub.s32 %v397, %v400
  %vm402 = vcmp.lt.s32.totalorder %v401, 0
  %v403 = vsub.s32 0, %v401
  %v404 = vsel %vm402, %v403, %v401
  %v405 = vclz %v404
  %v406 = vsub.s32 %v405, 2
  %vm407 = vcmp.gt.s32.totalorder 0, %v406
  %v408 = vsel %vm407, 0, %v406
  %v409 = vsub.s32 32, %v408
  %v410 = vshll.u32 %v401, %v408
  %v411 = vshrl.u32 %v393, %v409
  %v412 = vor.u32 %v410, %v411
  %v413 = vsub.s32 4294967266, %v408
  %v414 = vadd.s32 %v413, 127
  %v415 = vshll.u32 %v414, 23
  %v416 = vor.u32 4788187, %v415
  %v417 = vand.u32 2147483647, %v416
  %v419 = vcvt.s32.f32 %v412
  %v420 = vmul.f32 %v419, %v417
  %v421 = vxor.u32 %v420, 2147483648
  %v422 = vsel %vm339, %v421, %v420
  %v423 = vsub.s32 4, %v399
  %v424 = vsel %vm339, %v423, %v399
  %v425 = vsel %vm338, %v233, %v422
  %v426 = vsel %vm338, 0, %v424
  %v427 = vcosq.f32.pop %v425
  %v428 = vsinq.f32.pop %v425
  %vm429 = vweird.f32 %v233
  %v430 = vadd.s32 %v426, 3
  %v431 = vand.u32 %v430, 3
  %vm432 = vcmp.lt.s32.totalorder %v431, 2
  %vm433 = vcmp.eq.s32.totalorder %v431, 0
  %v434 = vxor.u32 %v428, 2147483648
  %v435 = vsel %vm433, %v427, %v434
  %vm436 = vcmp.eq.s32.totalorder %v431, 2
  %v437 = vxor.u32 %v427, 2147483648
  %v438 = vsel %vm436, %v437, %v428
  %v439 = vsel %vm432, %v435, %v438
  %v440 = vsel %vm429, nan, %v439
  %v441 = vld [vmem:[%s2] sm:$0xf]
  %v442 = vmul.f32 %v441, 0.7854
  %v443 = vand.u32 2147483647, %v442
  %vm444 = vcmp.le.f32.partialorder %v443, 0.7853982
  %vm445 = vcmp.lt.s32.totalorder %v442, 0
  %v446 = vand.u32 %v442, 2139095040
  %v447 = vshrl.u32 %v446, 23
  %v448 = vsub.s32 %v447, 127
  %v449 = vand.u32 2147483647, %v442
  %v450 = vand.u32 %v449, 8388607
  %v451 = vor.u32 %v450, 8388608
  %v452 = vsub.s32 0, %v451
  %v453 = vadd.s32 %v448, 1
  %vm454 = vcmp.gt.s32.totalorder %v453, 0
  %v455 = vsel %vm454, %v453, 0
  %v456 = vshrl.u32 %v455, 5
  %v457 = vand.u32 %v455, 31
  %v458 = vsub.s32 32, %v457
  %v459 = vshrl.u32 683565275, %v458
  %v460 = vshll.u32 683565275, %v457
  %v461 = vshrl.u32 2475754826, %v458
  %v462 = vor.u32 %v460, %v461
  %v463 = vshll.u32 2475754826, %v457
  %v464 = vshrl.u32 2131351028, %v458
  %v465 = vor.u32 %v463, %v464
  %v466 = vshll.u32 2131351028, %v457
  %v467 = vshrl.u32 2102212464, %v458
  %v468 = vor.u32 %v466, %v467
  %v469 = vshll.u32 2102212464, %v457
  %v470 = vshrl.u32 920167782, %v458
  %v471 = vor.u32 %v469, %v470
  %v472 = vshll.u32 920167782, %v457
  %v473 = vshrl.u32 1326507024, %v458
  %v474 = vor.u32 %v472, %v473
  %vm475 = vcmp.lt.s32.totalorder %v456, 1
  %vm476 = vcmp.lt.s32.totalorder %v456, 2
  %vm477 = vcmp.lt.s32.totalorder %v456, 3
  %vm478 = vcmp.lt.s32.totalorder %v456, 4
  %v479 = vsel %vm475, %v459, %v462
  %v480 = vsel %vm478, %v468, 2102212464
  %v481 = vsel %vm477, %v465, %v480
  %v482 = vsel %vm476, %v479, %v481
  %v483 = vsel %vm475, %v462, %v465
  %v484 = vsel %vm478, %v471, 920167782
  %v485 = vsel %vm477, %v468, %v484
  %v486 = vsel %vm476, %v483, %v485
  %v487 = vsel %vm475, %v465, %v468
  %v488 = vsel %vm478, %v474, 1326507024
  %v489 = vsel %vm477, %v471, %v488
  %v490 = vsel %vm476, %v487, %v489
  %v491 = vshll.u32 %v451, 8
  %v492 = vmul.u32.u64.compose %v491, %v490
  %v493 = vextract.low.u32 %v492
  %v494 = vextract.high.u32 %v492
  %v495 = vmul.u32.u64.compose %v491, %v486
  %v496 = vextract.low.u32 %v495
  %v497 = vextract.high.u32 %v495
  %v498 = vmul.u32 %v491, %v482
  %v499 = vadd.s32 %v494, %v496
  %vm500 = vc.u32 %v494, %v496
  %v501 = vadd.s32 %v497, 1
  %v502 = vsel %vm500, %v501, %v497
  %v503 = vadd.s32 %v498, %v502
  %v504 = vadd.s32 %v503, 536870912
  %v505 = vshrl.u32 %v504, 30
  %v506 = vshll.u32 %v505, 30
  %v507 = vsub.s32 %v503, %v506
  %vm508 = vcmp.lt.s32.totalorder %v507, 0
  %v509 = vsub.s32 0, %v507
  %v510 = vsel %vm508, %v509, %v507
  %v511 = vclz %v510
  %v512 = vsub.s32 %v511, 2
  %vm513 = vcmp.gt.s32.totalorder 0, %v512
  %v514 = vsel %vm513, 0, %v512
  %v515 = vsub.s32 32, %v514
  %v516 = vshll.u32 %v507, %v514
  %v517 = vshrl.u32 %v499, %v515
  %v518 = vor.u32 %v516, %v517
  %v519 = vsub.s32 4294967266, %v514
  %v520 = vadd.s32 %v519, 127
  %v521 = vshll.u32 %v520, 23
  %v522 = vor.u32 4788187, %v521
  %v523 = vand.u32 2147483647, %v522
  %v525 = vcvt.s32.f32 %v518
  %v526 = vmul.f32 %v525, %v523
  %v527 = vxor.u32 %v526, 2147483648
  %v528 = vsel %vm445, %v527, %v526
  %v529 = vsub.s32 4, %v505
  %v530 = vsel %vm445, %v529, %v505
  %v531 = vsel %vm444, %v442, %v528
  %v532 = vsel %vm444, 0, %v530
  %v533 = vcosq.f32.pop %v531
  %v534 = vsinq.f32.pop %v531
  %vm535 = vweird.f32 %v442
  %v536 = vand.u32 %v532, 3
  %vm537 = vcmp.lt.s32.totalorder %v536, 2
  %vm538 = vcmp.eq.s32.totalorder %v536, 0
  %v539 = vxor.u32 %v534, 2147483648
  %v540 = vsel %vm538, %v533, %v539
  %vm541 = vcmp.eq.s32.totalorder %v536, 2
  %v542 = vxor.u32 %v533, 2147483648
  %v543 = vsel %vm541, %v542, %v534
  %v544 = vsel %vm537, %v540, %v543
  %v545 = vsel %vm535, nan, %v544
  %v546 = vand.u32 2147483647, %v442
  %vm547 = vcmp.le.f32.partialorder %v546, 0.7853982
  %vm548 = vcmp.lt.s32.totalorder %v442, 0
  %v549 = vand.u32 %v442, 2139095040
  %v550 = vshrl.u32 %v549, 23
  %v551 = vsub.s32 %v550, 127
  %v552 = vand.u32 2147483647, %v442
  %v553 = vand.u32 %v552, 8388607
  %v554 = vor.u32 %v553, 8388608
  %v555 = vsub.s32 0, %v554
  %v556 = vadd.s32 %v551, 1
  %vm557 = vcmp.gt.s32.totalorder %v556, 0
  %v558 = vsel %vm557, %v556, 0
  %v559 = vshrl.u32 %v558, 5
  %v560 = vand.u32 %v558, 31
  %v561 = vsub.s32 32, %v560
  %v562 = vshrl.u32 683565275, %v561
  %v563 = vshll.u32 683565275, %v560
  %v564 = vshrl.u32 2475754826, %v561
  %v565 = vor.u32 %v563, %v564
  %v566 = vshll.u32 2475754826, %v560
  %v567 = vshrl.u32 2131351028, %v561
  %v568 = vor.u32 %v566, %v567
  %v569 = vshll.u32 2131351028, %v560
  %v570 = vshrl.u32 2102212464, %v561
  %v571 = vor.u32 %v569, %v570
  %v572 = vshll.u32 2102212464, %v560
  %v573 = vshrl.u32 920167782, %v561
  %v574 = vor.u32 %v572, %v573
  %v575 = vshll.u32 920167782, %v560
  %v576 = vshrl.u32 1326507024, %v561
  %v577 = vor.u32 %v575, %v576
  %vm578 = vcmp.lt.s32.totalorder %v559, 1
  %vm579 = vcmp.lt.s32.totalorder %v559, 2
  %vm580 = vcmp.lt.s32.totalorder %v559, 3
  %vm581 = vcmp.lt.s32.totalorder %v559, 4
  %v582 = vsel %vm578, %v562, %v565
  %v583 = vsel %vm581, %v571, 2102212464
  %v584 = vsel %vm580, %v568, %v583
  %v585 = vsel %vm579, %v582, %v584
  %v586 = vsel %vm578, %v565, %v568
  %v587 = vsel %vm581, %v574, 920167782
  %v588 = vsel %vm580, %v571, %v587
  %v589 = vsel %vm579, %v586, %v588
  %v590 = vsel %vm578, %v568, %v571
  %v591 = vsel %vm581, %v577, 1326507024
  %v592 = vsel %vm580, %v574, %v591
  %v593 = vsel %vm579, %v590, %v592
  %v594 = vshll.u32 %v554, 8
  %v595 = vmul.u32.u64.compose %v594, %v593
  %v596 = vextract.low.u32 %v595
  %v597 = vextract.high.u32 %v595
  %v598 = vmul.u32.u64.compose %v594, %v589
  %v599 = vextract.low.u32 %v598
  %v600 = vextract.high.u32 %v598
  %v601 = vmul.u32 %v594, %v585
  %v602 = vadd.s32 %v597, %v599
  %vm603 = vc.u32 %v597, %v599
  %v604 = vadd.s32 %v600, 1
  %v605 = vsel %vm603, %v604, %v600
  %v606 = vadd.s32 %v601, %v605
  %v607 = vadd.s32 %v606, 536870912
  %v608 = vshrl.u32 %v607, 30
  %v609 = vshll.u32 %v608, 30
  %v610 = vsub.s32 %v606, %v609
  %vm611 = vcmp.lt.s32.totalorder %v610, 0
  %v612 = vsub.s32 0, %v610
  %v613 = vsel %vm611, %v612, %v610
  %v614 = vclz %v613
  %v615 = vsub.s32 %v614, 2
  %vm616 = vcmp.gt.s32.totalorder 0, %v615
  %v617 = vsel %vm616, 0, %v615
  %v618 = vsub.s32 32, %v617
  %v619 = vshll.u32 %v610, %v617
  %v620 = vshrl.u32 %v602, %v618
  %v621 = vor.u32 %v619, %v620
  %v622 = vsub.s32 4294967266, %v617
  %v623 = vadd.s32 %v622, 127
  %v624 = vshll.u32 %v623, 23
  %v625 = vor.u32 4788187, %v624
  %v626 = vand.u32 2147483647, %v625
  %v628 = vcvt.s32.f32 %v621
  %v629 = vmul.f32 %v628, %v626
  %v630 = vxor.u32 %v629, 2147483648
  %v631 = vsel %vm548, %v630, %v629
  %v632 = vsub.s32 4, %v608
  %v633 = vsel %vm548, %v632, %v608
  %v634 = vsel %vm547, %v442, %v631
  %v635 = vsel %vm547, 0, %v633
  %v636 = vcosq.f32.pop %v634
  %v637 = vsinq.f32.pop %v634
  %vm638 = vweird.f32 %v442
  %v639 = vadd.s32 %v635, 3
  %v640 = vand.u32 %v639, 3
  %vm641 = vcmp.lt.s32.totalorder %v640, 2
  %vm642 = vcmp.eq.s32.totalorder %v640, 0
  %v643 = vxor.u32 %v637, 2147483648
  %v644 = vsel %vm642, %v636, %v643
  %vm645 = vcmp.eq.s32.totalorder %v640, 2
  %v646 = vxor.u32 %v636, 2147483648
  %v647 = vsel %vm645, %v646, %v637
  %v648 = vsel %vm641, %v644, %v647
  %v649 = vsel %vm638, nan, %v648
  %v650 = vld [vmem:[%s3] sm:$0xf]
  %v651 = vmul.f32 %v650, 0.7854
  %v652 = vand.u32 2147483647, %v651
  %vm653 = vcmp.le.f32.partialorder %v652, 0.7853982
  %vm654 = vcmp.lt.s32.totalorder %v651, 0
  %v655 = vand.u32 %v651, 2139095040
  %v656 = vshrl.u32 %v655, 23
  %v657 = vsub.s32 %v656, 127
  %v658 = vand.u32 2147483647, %v651
  %v659 = vand.u32 %v658, 8388607
  %v660 = vor.u32 %v659, 8388608
  %v661 = vsub.s32 0, %v660
  %v662 = vadd.s32 %v657, 1
  %vm663 = vcmp.gt.s32.totalorder %v662, 0
  %v664 = vsel %vm663, %v662, 0
  %v665 = vshrl.u32 %v664, 5
  %v666 = vand.u32 %v664, 31
  %v667 = vsub.s32 32, %v666
  %v668 = vshrl.u32 683565275, %v667
  %v669 = vshll.u32 683565275, %v666
  %v670 = vshrl.u32 2475754826, %v667
  %v671 = vor.u32 %v669, %v670
  %v672 = vshll.u32 2475754826, %v666
  %v673 = vshrl.u32 2131351028, %v667
  %v674 = vor.u32 %v672, %v673
  %v675 = vshll.u32 2131351028, %v666
  %v676 = vshrl.u32 2102212464, %v667
  %v677 = vor.u32 %v675, %v676
  %v678 = vshll.u32 2102212464, %v666
  %v679 = vshrl.u32 920167782, %v667
  %v680 = vor.u32 %v678, %v679
  %v681 = vshll.u32 920167782, %v666
  %v682 = vshrl.u32 1326507024, %v667
  %v683 = vor.u32 %v681, %v682
  %vm684 = vcmp.lt.s32.totalorder %v665, 1
  %vm685 = vcmp.lt.s32.totalorder %v665, 2
  %vm686 = vcmp.lt.s32.totalorder %v665, 3
  %vm687 = vcmp.lt.s32.totalorder %v665, 4
  %v688 = vsel %vm684, %v668, %v671
  %v689 = vsel %vm687, %v677, 2102212464
  %v690 = vsel %vm686, %v674, %v689
  %v691 = vsel %vm685, %v688, %v690
  %v692 = vsel %vm684, %v671, %v674
  %v693 = vsel %vm687, %v680, 920167782
  %v694 = vsel %vm686, %v677, %v693
  %v695 = vsel %vm685, %v692, %v694
  %v696 = vsel %vm684, %v674, %v677
  %v697 = vsel %vm687, %v683, 1326507024
  %v698 = vsel %vm686, %v680, %v697
  %v699 = vsel %vm685, %v696, %v698
  %v700 = vshll.u32 %v660, 8
  %v701 = vmul.u32.u64.compose %v700, %v699
  %v702 = vextract.low.u32 %v701
  %v703 = vextract.high.u32 %v701
  %v704 = vmul.u32.u64.compose %v700, %v695
  %v705 = vextract.low.u32 %v704
  %v706 = vextract.high.u32 %v704
  %v707 = vmul.u32 %v700, %v691
  %v708 = vadd.s32 %v703, %v705
  %vm709 = vc.u32 %v703, %v705
  %v710 = vadd.s32 %v706, 1
  %v711 = vsel %vm709, %v710, %v706
  %v712 = vadd.s32 %v707, %v711
  %v713 = vadd.s32 %v712, 536870912
  %v714 = vshrl.u32 %v713, 30
  %v715 = vshll.u32 %v714, 30
  %v716 = vsub.s32 %v712, %v715
  %vm717 = vcmp.lt.s32.totalorder %v716, 0
  %v718 = vsub.s32 0, %v716
  %v719 = vsel %vm717, %v718, %v716
  %v720 = vclz %v719
  %v721 = vsub.s32 %v720, 2
  %vm722 = vcmp.gt.s32.totalorder 0, %v721
  %v723 = vsel %vm722, 0, %v721
  %v724 = vsub.s32 32, %v723
  %v725 = vshll.u32 %v716, %v723
  %v726 = vshrl.u32 %v708, %v724
  %v727 = vor.u32 %v725, %v726
  %v728 = vsub.s32 4294967266, %v723
  %v729 = vadd.s32 %v728, 127
  %v730 = vshll.u32 %v729, 23
  %v731 = vor.u32 4788187, %v730
  %v732 = vand.u32 2147483647, %v731
  %v734 = vcvt.s32.f32 %v727
  %v735 = vmul.f32 %v734, %v732
  %v736 = vxor.u32 %v735, 2147483648
  %v737 = vsel %vm654, %v736, %v735
  %v738 = vsub.s32 4, %v714
  %v739 = vsel %vm654, %v738, %v714
  %v740 = vsel %vm653, %v651, %v737
  %v741 = vsel %vm653, 0, %v739
  %v742 = vcosq.f32.pop %v740
  %v743 = vsinq.f32.pop %v740
  %vm744 = vweird.f32 %v651
  %v745 = vand.u32 %v741, 3
  %vm746 = vcmp.lt.s32.totalorder %v745, 2
  %vm747 = vcmp.eq.s32.totalorder %v745, 0
  %v748 = vxor.u32 %v743, 2147483648
  %v749 = vsel %vm747, %v742, %v748
  %vm750 = vcmp.eq.s32.totalorder %v745, 2
  %v751 = vxor.u32 %v742, 2147483648
  %v752 = vsel %vm750, %v751, %v743
  %v753 = vsel %vm746, %v749, %v752
  %v754 = vsel %vm744, nan, %v753
  %v755 = vand.u32 2147483647, %v651
  %vm756 = vcmp.le.f32.partialorder %v755, 0.7853982
  %vm757 = vcmp.lt.s32.totalorder %v651, 0
  %v758 = vand.u32 %v651, 2139095040
  %v759 = vshrl.u32 %v758, 23
  %v760 = vsub.s32 %v759, 127
  %v761 = vand.u32 2147483647, %v651
  %v762 = vand.u32 %v761, 8388607
  %v763 = vor.u32 %v762, 8388608
  %v764 = vsub.s32 0, %v763
  %v765 = vadd.s32 %v760, 1
  %vm766 = vcmp.gt.s32.totalorder %v765, 0
  %v767 = vsel %vm766, %v765, 0
  %v768 = vshrl.u32 %v767, 5
  %v769 = vand.u32 %v767, 31
  %v770 = vsub.s32 32, %v769
  %v771 = vshrl.u32 683565275, %v770
  %v772 = vshll.u32 683565275, %v769
  %v773 = vshrl.u32 2475754826, %v770
  %v774 = vor.u32 %v772, %v773
  %v775 = vshll.u32 2475754826, %v769
  %v776 = vshrl.u32 2131351028, %v770
  %v777 = vor.u32 %v775, %v776
  %v778 = vshll.u32 2131351028, %v769
  %v779 = vshrl.u32 2102212464, %v770
  %v780 = vor.u32 %v778, %v779
  %v781 = vshll.u32 2102212464, %v769
  %v782 = vshrl.u32 920167782, %v770
  %v783 = vor.u32 %v781, %v782
  %v784 = vshll.u32 920167782, %v769
  %v785 = vshrl.u32 1326507024, %v770
  %v786 = vor.u32 %v784, %v785
  %vm787 = vcmp.lt.s32.totalorder %v768, 1
  %vm788 = vcmp.lt.s32.totalorder %v768, 2
  %vm789 = vcmp.lt.s32.totalorder %v768, 3
  %vm790 = vcmp.lt.s32.totalorder %v768, 4
  %v791 = vsel %vm787, %v771, %v774
  %v792 = vsel %vm790, %v780, 2102212464
  %v793 = vsel %vm789, %v777, %v792
  %v794 = vsel %vm788, %v791, %v793
  %v795 = vsel %vm787, %v774, %v777
  %v796 = vsel %vm790, %v783, 920167782
  %v797 = vsel %vm789, %v780, %v796
  %v798 = vsel %vm788, %v795, %v797
  %v799 = vsel %vm787, %v777, %v780
  %v800 = vsel %vm790, %v786, 1326507024
  %v801 = vsel %vm789, %v783, %v800
  %v802 = vsel %vm788, %v799, %v801
  %v803 = vshll.u32 %v763, 8
  %v804 = vmul.u32.u64.compose %v803, %v802
  %v805 = vextract.low.u32 %v804
  %v806 = vextract.high.u32 %v804
  %v807 = vmul.u32.u64.compose %v803, %v798
  %v808 = vextract.low.u32 %v807
  %v809 = vextract.high.u32 %v807
  %v810 = vmul.u32 %v803, %v794
  %v811 = vadd.s32 %v806, %v808
  %vm812 = vc.u32 %v806, %v808
  %v813 = vadd.s32 %v809, 1
  %v814 = vsel %vm812, %v813, %v809
  %v815 = vadd.s32 %v810, %v814
  %v816 = vadd.s32 %v815, 536870912
  %v817 = vshrl.u32 %v816, 30
  %v818 = vshll.u32 %v817, 30
  %v819 = vsub.s32 %v815, %v818
  %vm820 = vcmp.lt.s32.totalorder %v819, 0
  %v821 = vsub.s32 0, %v819
  %v822 = vsel %vm820, %v821, %v819
  %v823 = vclz %v822
  %v824 = vsub.s32 %v823, 2
  %vm825 = vcmp.gt.s32.totalorder 0, %v824
  %v826 = vsel %vm825, 0, %v824
  %v827 = vsub.s32 32, %v826
  %v828 = vshll.u32 %v819, %v826
  %v829 = vshrl.u32 %v811, %v827
  %v830 = vor.u32 %v828, %v829
  %v831 = vsub.s32 4294967266, %v826
  %v832 = vadd.s32 %v831, 127
  %v833 = vshll.u32 %v832, 23
  %v834 = vor.u32 4788187, %v833
  %v835 = vand.u32 2147483647, %v834
  %v837 = vcvt.s32.f32 %v830
  %v838 = vmul.f32 %v837, %v835
  %v839 = vxor.u32 %v838, 2147483648
  %v840 = vsel %vm757, %v839, %v838
  %v841 = vsub.s32 4, %v817
  %v842 = vsel %vm757, %v841, %v817
  %v843 = vsel %vm756, %v651, %v840
  %v844 = vsel %vm756, 0, %v842
  %v845 = vcosq.f32.pop %v843
  %v846 = vsinq.f32.pop %v843
  %vm847 = vweird.f32 %v651
  %v848 = vadd.s32 %v844, 3
  %v849 = vand.u32 %v848, 3
  %vm850 = vcmp.lt.s32.totalorder %v849, 2
  %vm851 = vcmp.eq.s32.totalorder %v849, 0
  %v852 = vxor.u32 %v846, 2147483648
  %v853 = vsel %vm851, %v845, %v852
  %vm854 = vcmp.eq.s32.totalorder %v849, 2
  %v855 = vxor.u32 %v845, 2147483648
  %v856 = vsel %vm854, %v855, %v846
  %v857 = vsel %vm850, %v853, %v856
  %v858 = vsel %vm847, nan, %v857
  %v859 = vld [vmem:[%s4] sm:$0xff]
  %v860 = vld [vmem:[%s4 + $0x8] sm:$0xff]
  %v861 = vld [vmem:[%s4 + $0x10] sm:$0xff]
  %v862 = vld [vmem:[%s4 + $0x18] sm:$0xff]
  %v863 = vld [vmem:[%s4 + $0x20] sm:$0xff]
  %v864 = vld [vmem:[%s4 + $0x28] sm:$0xff]
  %v865 = vld [vmem:[%s4 + $0x30] sm:$0xff]
  %v866 = vld [vmem:[%s4 + $0x38] sm:$0xff]
  %v867 = vld [vmem:[%s5] sm:$0xff]
  %v868 = vld [vmem:[%s5 + $0x8] sm:$0xff]
  %v869 = vmul.f32 %v127, %v336
  %v870 = vmul.f32 %v127, %v440
  %v871 = vmul.f32 %v231, %v336
  %v872 = vmul.f32 %v231, %v440
  %v873 = vmul.f32 %v545, %v754
  %v874 = vmul.f32 %v545, %v858
  %v875 = vmul.f32 %v649, %v754
  %v876 = vmul.f32 %v649, %v858
  %v877 = vmul.f32 %v869, %v873
  %v878 = vmul.f32 %v869, %v874
  %v879 = vmul.f32 %v869, %v875
  %v880 = vmul.f32 %v869, %v876
  %v881 = vmul.f32 %v870, %v873
  %v882 = vmul.f32 %v870, %v874
  %v883 = vmul.f32 %v870, %v875
  %v884 = vmul.f32 %v870, %v876
  %v885 = vmul.f32 %v871, %v873
  %v886 = vmul.f32 %v871, %v874
  %v887 = vmul.f32 %v871, %v875
  %v888 = vmul.f32 %v871, %v876
  %v889 = vmul.f32 %v872, %v873
  %v890 = vmul.f32 %v872, %v874
  %v891 = vmul.f32 %v872, %v875
  %v892 = vmul.f32 %v872, %v876
  %v893 = vlaneseq
  %v894 = vshrl.u32 %v893, 7
  %v895 = vsub.s32 0, %v894
  %v896 = vrot.slane %v859, %v895
  %v897 = vlaneseq
  %v898 = vshrl.u32 %v897, 7
  %v899 = vsub.s32 0, %v898
  %v900 = vrot.slane %v860, %v899
  %v903 = vcombine.low %v896, %v900
  %v905 = vunpack.c.l.s4 1983009808
  %v906 = vunpack.c.0.s8 %v905
  %v907 = vlaneseq
  %v908 = vshrl.u32 %v907, 7
  %v909 = vsub.s32 %v906, %v908
  %v910 = vrot.slane %v903, %v909
  %v912 = vmul.f32 %v877, %v910
  %v913 = vlaneseq
  %v914 = vshrl.u32 %v913, 7
  %v915 = vsub.s32 1, %v914
  %v916 = vrot.slane %v859, %v915
  %v917 = vlaneseq
  %v918 = vshrl.u32 %v917, 7
  %v919 = vsub.s32 1, %v918
  %v920 = vrot.slane %v860, %v919
  %v923 = vcombine.low %v916, %v920
  %v925 = vunpack.c.l.s4 1983009808
  %v926 = vunpack.c.0.s8 %v925
  %v927 = vlaneseq
  %v928 = vshrl.u32 %v927, 7
  %v929 = vsub.s32 %v926, %v928
  %v930 = vrot.slane %v923, %v929
  %v932 = vmul.f32 %v878, %v930
  %v933 = vadd.f32 %v912, %v932
  %v934 = vlaneseq
  %v935 = vshrl.u32 %v934, 7
  %v936 = vsub.s32 2, %v935
  %v937 = vrot.slane %v859, %v936
  %v938 = vlaneseq
  %v939 = vshrl.u32 %v938, 7
  %v940 = vsub.s32 2, %v939
  %v941 = vrot.slane %v860, %v940
  %v944 = vcombine.low %v937, %v941
  %v946 = vunpack.c.l.s4 1983009808
  %v947 = vunpack.c.0.s8 %v946
  %v948 = vlaneseq
  %v949 = vshrl.u32 %v948, 7
  %v950 = vsub.s32 %v947, %v949
  %v951 = vrot.slane %v944, %v950
  %v953 = vmul.f32 %v879, %v951
  %v954 = vadd.f32 %v933, %v953
  %v955 = vlaneseq
  %v956 = vshrl.u32 %v955, 7
  %v957 = vsub.s32 3, %v956
  %v958 = vrot.slane %v859, %v957
  %v959 = vlaneseq
  %v960 = vshrl.u32 %v959, 7
  %v961 = vsub.s32 3, %v960
  %v962 = vrot.slane %v860, %v961
  %v965 = vcombine.low %v958, %v962
  %v967 = vunpack.c.l.s4 1983009808
  %v968 = vunpack.c.0.s8 %v967
  %v969 = vlaneseq
  %v970 = vshrl.u32 %v969, 7
  %v971 = vsub.s32 %v968, %v970
  %v972 = vrot.slane %v965, %v971
  %v974 = vmul.f32 %v880, %v972
  %v975 = vadd.f32 %v954, %v974
  %v976 = vlaneseq
  %v977 = vshrl.u32 %v976, 7
  %v978 = vsub.s32 4, %v977
  %v979 = vrot.slane %v859, %v978
  %v980 = vlaneseq
  %v981 = vshrl.u32 %v980, 7
  %v982 = vsub.s32 4, %v981
  %v983 = vrot.slane %v860, %v982
  %v986 = vcombine.low %v979, %v983
  %v988 = vunpack.c.l.s4 1983009808
  %v989 = vunpack.c.0.s8 %v988
  %v990 = vlaneseq
  %v991 = vshrl.u32 %v990, 7
  %v992 = vsub.s32 %v989, %v991
  %v993 = vrot.slane %v986, %v992
  %v995 = vmul.f32 %v881, %v993
  %v996 = vadd.f32 %v975, %v995
  %v997 = vlaneseq
  %v998 = vshrl.u32 %v997, 7
  %v999 = vsub.s32 5, %v998
  %v1000 = vrot.slane %v859, %v999
  %v1001 = vlaneseq
  %v1002 = vshrl.u32 %v1001, 7
  %v1003 = vsub.s32 5, %v1002
  %v1004 = vrot.slane %v860, %v1003
  %v1007 = vcombine.low %v1000, %v1004
  %v1009 = vunpack.c.l.s4 1983009808
  %v1010 = vunpack.c.0.s8 %v1009
  %v1011 = vlaneseq
  %v1012 = vshrl.u32 %v1011, 7
  %v1013 = vsub.s32 %v1010, %v1012
  %v1014 = vrot.slane %v1007, %v1013
  %v1016 = vmul.f32 %v882, %v1014
  %v1017 = vadd.f32 %v996, %v1016
  %v1018 = vlaneseq
  %v1019 = vshrl.u32 %v1018, 7
  %v1020 = vsub.s32 6, %v1019
  %v1021 = vrot.slane %v859, %v1020
  %v1022 = vlaneseq
  %v1023 = vshrl.u32 %v1022, 7
  %v1024 = vsub.s32 6, %v1023
  %v1025 = vrot.slane %v860, %v1024
  %v1028 = vcombine.low %v1021, %v1025
  %v1030 = vunpack.c.l.s4 1983009808
  %v1031 = vunpack.c.0.s8 %v1030
  %v1032 = vlaneseq
  %v1033 = vshrl.u32 %v1032, 7
  %v1034 = vsub.s32 %v1031, %v1033
  %v1035 = vrot.slane %v1028, %v1034
  %v1037 = vmul.f32 %v883, %v1035
  %v1038 = vadd.f32 %v1017, %v1037
  %v1039 = vlaneseq
  %v1040 = vshrl.u32 %v1039, 7
  %v1041 = vsub.s32 7, %v1040
  %v1042 = vrot.slane %v859, %v1041
  %v1043 = vlaneseq
  %v1044 = vshrl.u32 %v1043, 7
  %v1045 = vsub.s32 7, %v1044
  %v1046 = vrot.slane %v860, %v1045
  %v1049 = vcombine.low %v1042, %v1046
  %v1051 = vunpack.c.l.s4 1983009808
  %v1052 = vunpack.c.0.s8 %v1051
  %v1053 = vlaneseq
  %v1054 = vshrl.u32 %v1053, 7
  %v1055 = vsub.s32 %v1052, %v1054
  %v1056 = vrot.slane %v1049, %v1055
  %v1058 = vmul.f32 %v884, %v1056
  %v1059 = vadd.f32 %v1038, %v1058
  %v1060 = vlaneseq
  %v1061 = vshrl.u32 %v1060, 7
  %v1062 = vsub.s32 0, %v1061
  %v1063 = vrot.slane %v861, %v1062
  %v1064 = vlaneseq
  %v1065 = vshrl.u32 %v1064, 7
  %v1066 = vsub.s32 0, %v1065
  %v1067 = vrot.slane %v862, %v1066
  %v1070 = vcombine.low %v1063, %v1067
  %v1072 = vunpack.c.l.s4 1983009808
  %v1073 = vunpack.c.0.s8 %v1072
  %v1074 = vlaneseq
  %v1075 = vshrl.u32 %v1074, 7
  %v1076 = vsub.s32 %v1073, %v1075
  %v1077 = vrot.slane %v1070, %v1076
  %v1079 = vmul.f32 %v885, %v1077
  %v1080 = vadd.f32 %v1059, %v1079
  %v1081 = vlaneseq
  %v1082 = vshrl.u32 %v1081, 7
  %v1083 = vsub.s32 1, %v1082
  %v1084 = vrot.slane %v861, %v1083
  %v1085 = vlaneseq
  %v1086 = vshrl.u32 %v1085, 7
  %v1087 = vsub.s32 1, %v1086
  %v1088 = vrot.slane %v862, %v1087
  %v1091 = vcombine.low %v1084, %v1088
  %v1093 = vunpack.c.l.s4 1983009808
  %v1094 = vunpack.c.0.s8 %v1093
  %v1095 = vlaneseq
  %v1096 = vshrl.u32 %v1095, 7
  %v1097 = vsub.s32 %v1094, %v1096
  %v1098 = vrot.slane %v1091, %v1097
  %v1100 = vmul.f32 %v886, %v1098
  %v1101 = vadd.f32 %v1080, %v1100
  %v1102 = vlaneseq
  %v1103 = vshrl.u32 %v1102, 7
  %v1104 = vsub.s32 2, %v1103
  %v1105 = vrot.slane %v861, %v1104
  %v1106 = vlaneseq
  %v1107 = vshrl.u32 %v1106, 7
  %v1108 = vsub.s32 2, %v1107
  %v1109 = vrot.slane %v862, %v1108
  %v1112 = vcombine.low %v1105, %v1109
  %v1114 = vunpack.c.l.s4 1983009808
  %v1115 = vunpack.c.0.s8 %v1114
  %v1116 = vlaneseq
  %v1117 = vshrl.u32 %v1116, 7
  %v1118 = vsub.s32 %v1115, %v1117
  %v1119 = vrot.slane %v1112, %v1118
  %v1121 = vmul.f32 %v887, %v1119
  %v1122 = vadd.f32 %v1101, %v1121
  %v1123 = vlaneseq
  %v1124 = vshrl.u32 %v1123, 7
  %v1125 = vsub.s32 3, %v1124
  %v1126 = vrot.slane %v861, %v1125
  %v1127 = vlaneseq
  %v1128 = vshrl.u32 %v1127, 7
  %v1129 = vsub.s32 3, %v1128
  %v1130 = vrot.slane %v862, %v1129
  %v1133 = vcombine.low %v1126, %v1130
  %v1135 = vunpack.c.l.s4 1983009808
  %v1136 = vunpack.c.0.s8 %v1135
  %v1137 = vlaneseq
  %v1138 = vshrl.u32 %v1137, 7
  %v1139 = vsub.s32 %v1136, %v1138
  %v1140 = vrot.slane %v1133, %v1139
  %v1142 = vmul.f32 %v888, %v1140
  %v1143 = vadd.f32 %v1122, %v1142
  %v1144 = vlaneseq
  %v1145 = vshrl.u32 %v1144, 7
  %v1146 = vsub.s32 4, %v1145
  %v1147 = vrot.slane %v861, %v1146
  %v1148 = vlaneseq
  %v1149 = vshrl.u32 %v1148, 7
  %v1150 = vsub.s32 4, %v1149
  %v1151 = vrot.slane %v862, %v1150
  %v1154 = vcombine.low %v1147, %v1151
  %v1156 = vunpack.c.l.s4 1983009808
  %v1157 = vunpack.c.0.s8 %v1156
  %v1158 = vlaneseq
  %v1159 = vshrl.u32 %v1158, 7
  %v1160 = vsub.s32 %v1157, %v1159
  %v1161 = vrot.slane %v1154, %v1160
  %v1163 = vmul.f32 %v889, %v1161
  %v1164 = vadd.f32 %v1143, %v1163
  %v1165 = vlaneseq
  %v1166 = vshrl.u32 %v1165, 7
  %v1167 = vsub.s32 5, %v1166
  %v1168 = vrot.slane %v861, %v1167
  %v1169 = vlaneseq
  %v1170 = vshrl.u32 %v1169, 7
  %v1171 = vsub.s32 5, %v1170
  %v1172 = vrot.slane %v862, %v1171
  %v1175 = vcombine.low %v1168, %v1172
  %v1177 = vunpack.c.l.s4 1983009808
  %v1178 = vunpack.c.0.s8 %v1177
  %v1179 = vlaneseq
  %v1180 = vshrl.u32 %v1179, 7
  %v1181 = vsub.s32 %v1178, %v1180
  %v1182 = vrot.slane %v1175, %v1181
  %v1184 = vmul.f32 %v890, %v1182
  %v1185 = vadd.f32 %v1164, %v1184
  %v1186 = vlaneseq
  %v1187 = vshrl.u32 %v1186, 7
  %v1188 = vsub.s32 6, %v1187
  %v1189 = vrot.slane %v861, %v1188
  %v1190 = vlaneseq
  %v1191 = vshrl.u32 %v1190, 7
  %v1192 = vsub.s32 6, %v1191
  %v1193 = vrot.slane %v862, %v1192
  %v1196 = vcombine.low %v1189, %v1193
  %v1198 = vunpack.c.l.s4 1983009808
  %v1199 = vunpack.c.0.s8 %v1198
  %v1200 = vlaneseq
  %v1201 = vshrl.u32 %v1200, 7
  %v1202 = vsub.s32 %v1199, %v1201
  %v1203 = vrot.slane %v1196, %v1202
  %v1205 = vmul.f32 %v891, %v1203
  %v1206 = vadd.f32 %v1185, %v1205
  %v1207 = vlaneseq
  %v1208 = vshrl.u32 %v1207, 7
  %v1209 = vsub.s32 7, %v1208
  %v1210 = vrot.slane %v861, %v1209
  %v1211 = vlaneseq
  %v1212 = vshrl.u32 %v1211, 7
  %v1213 = vsub.s32 7, %v1212
  %v1214 = vrot.slane %v862, %v1213
  %v1217 = vcombine.low %v1210, %v1214
  %v1219 = vunpack.c.l.s4 1983009808
  %v1220 = vunpack.c.0.s8 %v1219
  %v1221 = vlaneseq
  %v1222 = vshrl.u32 %v1221, 7
  %v1223 = vsub.s32 %v1220, %v1222
  %v1224 = vrot.slane %v1217, %v1223
  %v1226 = vmul.f32 %v892, %v1224
  %v1227 = vadd.f32 %v1206, %v1226
  %v1228 = vlaneseq
  %v1229 = vshrl.u32 %v1228, 7
  %v1230 = vsub.s32 0, %v1229
  %v1231 = vrot.slane %v863, %v1230
  %v1232 = vlaneseq
  %v1233 = vshrl.u32 %v1232, 7
  %v1234 = vsub.s32 0, %v1233
  %v1235 = vrot.slane %v864, %v1234
  %v1238 = vcombine.low %v1231, %v1235
  %v1240 = vunpack.c.l.s4 1983009808
  %v1241 = vunpack.c.0.s8 %v1240
  %v1242 = vlaneseq
  %v1243 = vshrl.u32 %v1242, 7
  %v1244 = vsub.s32 %v1241, %v1243
  %v1245 = vrot.slane %v1238, %v1244
  %v1247 = vmul.f32 %v877, %v1245
  %v1248 = vlaneseq
  %v1249 = vshrl.u32 %v1248, 7
  %v1250 = vsub.s32 1, %v1249
  %v1251 = vrot.slane %v863, %v1250
  %v1252 = vlaneseq
  %v1253 = vshrl.u32 %v1252, 7
  %v1254 = vsub.s32 1, %v1253
  %v1255 = vrot.slane %v864, %v1254
  %v1258 = vcombine.low %v1251, %v1255
  %v1260 = vunpack.c.l.s4 1983009808
  %v1261 = vunpack.c.0.s8 %v1260
  %v1262 = vlaneseq
  %v1263 = vshrl.u32 %v1262, 7
  %v1264 = vsub.s32 %v1261, %v1263
  %v1265 = vrot.slane %v1258, %v1264
  %v1267 = vmul.f32 %v878, %v1265
  %v1268 = vadd.f32 %v1247, %v1267
  %v1269 = vlaneseq
  %v1270 = vshrl.u32 %v1269, 7
  %v1271 = vsub.s32 2, %v1270
  %v1272 = vrot.slane %v863, %v1271
  %v1273 = vlaneseq
  %v1274 = vshrl.u32 %v1273, 7
  %v1275 = vsub.s32 2, %v1274
  %v1276 = vrot.slane %v864, %v1275
  %v1279 = vcombine.low %v1272, %v1276
  %v1281 = vunpack.c.l.s4 1983009808
  %v1282 = vunpack.c.0.s8 %v1281
  %v1283 = vlaneseq
  %v1284 = vshrl.u32 %v1283, 7
  %v1285 = vsub.s32 %v1282, %v1284
  %v1286 = vrot.slane %v1279, %v1285
  %v1288 = vmul.f32 %v879, %v1286
  %v1289 = vadd.f32 %v1268, %v1288
  %v1290 = vlaneseq
  %v1291 = vshrl.u32 %v1290, 7
  %v1292 = vsub.s32 3, %v1291
  %v1293 = vrot.slane %v863, %v1292
  %v1294 = vlaneseq
  %v1295 = vshrl.u32 %v1294, 7
  %v1296 = vsub.s32 3, %v1295
  %v1297 = vrot.slane %v864, %v1296
  %v1300 = vcombine.low %v1293, %v1297
  %v1302 = vunpack.c.l.s4 1983009808
  %v1303 = vunpack.c.0.s8 %v1302
  %v1304 = vlaneseq
  %v1305 = vshrl.u32 %v1304, 7
  %v1306 = vsub.s32 %v1303, %v1305
  %v1307 = vrot.slane %v1300, %v1306
  %v1309 = vmul.f32 %v880, %v1307
  %v1310 = vadd.f32 %v1289, %v1309
  %v1311 = vlaneseq
  %v1312 = vshrl.u32 %v1311, 7
  %v1313 = vsub.s32 4, %v1312
  %v1314 = vrot.slane %v863, %v1313
  %v1315 = vlaneseq
  %v1316 = vshrl.u32 %v1315, 7
  %v1317 = vsub.s32 4, %v1316
  %v1318 = vrot.slane %v864, %v1317
  %v1321 = vcombine.low %v1314, %v1318
  %v1323 = vunpack.c.l.s4 1983009808
  %v1324 = vunpack.c.0.s8 %v1323
  %v1325 = vlaneseq
  %v1326 = vshrl.u32 %v1325, 7
  %v1327 = vsub.s32 %v1324, %v1326
  %v1328 = vrot.slane %v1321, %v1327
  %v1330 = vmul.f32 %v881, %v1328
  %v1331 = vadd.f32 %v1310, %v1330
  %v1332 = vlaneseq
  %v1333 = vshrl.u32 %v1332, 7
  %v1334 = vsub.s32 5, %v1333
  %v1335 = vrot.slane %v863, %v1334
  %v1336 = vlaneseq
  %v1337 = vshrl.u32 %v1336, 7
  %v1338 = vsub.s32 5, %v1337
  %v1339 = vrot.slane %v864, %v1338
  %v1342 = vcombine.low %v1335, %v1339
  %v1344 = vunpack.c.l.s4 1983009808
  %v1345 = vunpack.c.0.s8 %v1344
  %v1346 = vlaneseq
  %v1347 = vshrl.u32 %v1346, 7
  %v1348 = vsub.s32 %v1345, %v1347
  %v1349 = vrot.slane %v1342, %v1348
  %v1351 = vmul.f32 %v882, %v1349
  %v1352 = vadd.f32 %v1331, %v1351
  %v1353 = vlaneseq
  %v1354 = vshrl.u32 %v1353, 7
  %v1355 = vsub.s32 6, %v1354
  %v1356 = vrot.slane %v863, %v1355
  %v1357 = vlaneseq
  %v1358 = vshrl.u32 %v1357, 7
  %v1359 = vsub.s32 6, %v1358
  %v1360 = vrot.slane %v864, %v1359
  %v1363 = vcombine.low %v1356, %v1360
  %v1365 = vunpack.c.l.s4 1983009808
  %v1366 = vunpack.c.0.s8 %v1365
  %v1367 = vlaneseq
  %v1368 = vshrl.u32 %v1367, 7
  %v1369 = vsub.s32 %v1366, %v1368
  %v1370 = vrot.slane %v1363, %v1369
  %v1372 = vmul.f32 %v883, %v1370
  %v1373 = vadd.f32 %v1352, %v1372
  %v1374 = vlaneseq
  %v1375 = vshrl.u32 %v1374, 7
  %v1376 = vsub.s32 7, %v1375
  %v1377 = vrot.slane %v863, %v1376
  %v1378 = vlaneseq
  %v1379 = vshrl.u32 %v1378, 7
  %v1380 = vsub.s32 7, %v1379
  %v1381 = vrot.slane %v864, %v1380
  %v1384 = vcombine.low %v1377, %v1381
  %v1386 = vunpack.c.l.s4 1983009808
  %v1387 = vunpack.c.0.s8 %v1386
  %v1388 = vlaneseq
  %v1389 = vshrl.u32 %v1388, 7
  %v1390 = vsub.s32 %v1387, %v1389
  %v1391 = vrot.slane %v1384, %v1390
  %v1393 = vmul.f32 %v884, %v1391
  %v1394 = vadd.f32 %v1373, %v1393
  %v1395 = vlaneseq
  %v1396 = vshrl.u32 %v1395, 7
  %v1397 = vsub.s32 0, %v1396
  %v1398 = vrot.slane %v865, %v1397
  %v1399 = vlaneseq
  %v1400 = vshrl.u32 %v1399, 7
  %v1401 = vsub.s32 0, %v1400
  %v1402 = vrot.slane %v866, %v1401
  %v1405 = vcombine.low %v1398, %v1402
  %v1407 = vunpack.c.l.s4 1983009808
  %v1408 = vunpack.c.0.s8 %v1407
  %v1409 = vlaneseq
  %v1410 = vshrl.u32 %v1409, 7
  %v1411 = vsub.s32 %v1408, %v1410
  %v1412 = vrot.slane %v1405, %v1411
  %v1414 = vmul.f32 %v885, %v1412
  %v1415 = vadd.f32 %v1394, %v1414
  %v1416 = vlaneseq
  %v1417 = vshrl.u32 %v1416, 7
  %v1418 = vsub.s32 1, %v1417
  %v1419 = vrot.slane %v865, %v1418
  %v1420 = vlaneseq
  %v1421 = vshrl.u32 %v1420, 7
  %v1422 = vsub.s32 1, %v1421
  %v1423 = vrot.slane %v866, %v1422
  %v1426 = vcombine.low %v1419, %v1423
  %v1428 = vunpack.c.l.s4 1983009808
  %v1429 = vunpack.c.0.s8 %v1428
  %v1430 = vlaneseq
  %v1431 = vshrl.u32 %v1430, 7
  %v1432 = vsub.s32 %v1429, %v1431
  %v1433 = vrot.slane %v1426, %v1432
  %v1435 = vmul.f32 %v886, %v1433
  %v1436 = vadd.f32 %v1415, %v1435
  %v1437 = vlaneseq
  %v1438 = vshrl.u32 %v1437, 7
  %v1439 = vsub.s32 2, %v1438
  %v1440 = vrot.slane %v865, %v1439
  %v1441 = vlaneseq
  %v1442 = vshrl.u32 %v1441, 7
  %v1443 = vsub.s32 2, %v1442
  %v1444 = vrot.slane %v866, %v1443
  %v1447 = vcombine.low %v1440, %v1444
  %v1449 = vunpack.c.l.s4 1983009808
  %v1450 = vunpack.c.0.s8 %v1449
  %v1451 = vlaneseq
  %v1452 = vshrl.u32 %v1451, 7
  %v1453 = vsub.s32 %v1450, %v1452
  %v1454 = vrot.slane %v1447, %v1453
  %v1456 = vmul.f32 %v887, %v1454
  %v1457 = vadd.f32 %v1436, %v1456
  %v1458 = vlaneseq
  %v1459 = vshrl.u32 %v1458, 7
  %v1460 = vsub.s32 3, %v1459
  %v1461 = vrot.slane %v865, %v1460
  %v1462 = vlaneseq
  %v1463 = vshrl.u32 %v1462, 7
  %v1464 = vsub.s32 3, %v1463
  %v1465 = vrot.slane %v866, %v1464
  %v1468 = vcombine.low %v1461, %v1465
  %v1470 = vunpack.c.l.s4 1983009808
  %v1471 = vunpack.c.0.s8 %v1470
  %v1472 = vlaneseq
  %v1473 = vshrl.u32 %v1472, 7
  %v1474 = vsub.s32 %v1471, %v1473
  %v1475 = vrot.slane %v1468, %v1474
  %v1477 = vmul.f32 %v888, %v1475
  %v1478 = vadd.f32 %v1457, %v1477
  %v1479 = vlaneseq
  %v1480 = vshrl.u32 %v1479, 7
  %v1481 = vsub.s32 4, %v1480
  %v1482 = vrot.slane %v865, %v1481
  %v1483 = vlaneseq
  %v1484 = vshrl.u32 %v1483, 7
  %v1485 = vsub.s32 4, %v1484
  %v1486 = vrot.slane %v866, %v1485
  %v1489 = vcombine.low %v1482, %v1486
  %v1491 = vunpack.c.l.s4 1983009808
  %v1492 = vunpack.c.0.s8 %v1491
  %v1493 = vlaneseq
  %v1494 = vshrl.u32 %v1493, 7
  %v1495 = vsub.s32 %v1492, %v1494
  %v1496 = vrot.slane %v1489, %v1495
  %v1498 = vmul.f32 %v889, %v1496
  %v1499 = vadd.f32 %v1478, %v1498
  %v1500 = vlaneseq
  %v1501 = vshrl.u32 %v1500, 7
  %v1502 = vsub.s32 5, %v1501
  %v1503 = vrot.slane %v865, %v1502
  %v1504 = vlaneseq
  %v1505 = vshrl.u32 %v1504, 7
  %v1506 = vsub.s32 5, %v1505
  %v1507 = vrot.slane %v866, %v1506
  %v1510 = vcombine.low %v1503, %v1507
  %v1512 = vunpack.c.l.s4 1983009808
  %v1513 = vunpack.c.0.s8 %v1512
  %v1514 = vlaneseq
  %v1515 = vshrl.u32 %v1514, 7
  %v1516 = vsub.s32 %v1513, %v1515
  %v1517 = vrot.slane %v1510, %v1516
  %v1519 = vmul.f32 %v890, %v1517
  %v1520 = vadd.f32 %v1499, %v1519
  %v1521 = vlaneseq
  %v1522 = vshrl.u32 %v1521, 7
  %v1523 = vsub.s32 6, %v1522
  %v1524 = vrot.slane %v865, %v1523
  %v1525 = vlaneseq
  %v1526 = vshrl.u32 %v1525, 7
  %v1527 = vsub.s32 6, %v1526
  %v1528 = vrot.slane %v866, %v1527
  %v1531 = vcombine.low %v1524, %v1528
  %v1533 = vunpack.c.l.s4 1983009808
  %v1534 = vunpack.c.0.s8 %v1533
  %v1535 = vlaneseq
  %v1536 = vshrl.u32 %v1535, 7
  %v1537 = vsub.s32 %v1534, %v1536
  %v1538 = vrot.slane %v1531, %v1537
  %v1540 = vmul.f32 %v891, %v1538
  %v1541 = vadd.f32 %v1520, %v1540
  %v1542 = vlaneseq
  %v1543 = vshrl.u32 %v1542, 7
  %v1544 = vsub.s32 7, %v1543
  %v1545 = vrot.slane %v865, %v1544
  %v1546 = vlaneseq
  %v1547 = vshrl.u32 %v1546, 7
  %v1548 = vsub.s32 7, %v1547
  %v1549 = vrot.slane %v866, %v1548
  %v1552 = vcombine.low %v1545, %v1549
  %v1554 = vunpack.c.l.s4 1983009808
  %v1555 = vunpack.c.0.s8 %v1554
  %v1556 = vlaneseq
  %v1557 = vshrl.u32 %v1556, 7
  %v1558 = vsub.s32 %v1555, %v1557
  %v1559 = vrot.slane %v1552, %v1558
  %v1561 = vmul.f32 %v892, %v1559
  %v1562 = vadd.f32 %v1541, %v1561
  %v1563 = vmul.f32 %v1227, %v1227
  %v1564 = vmul.f32 %v1562, %v1562
  %v1565 = vadd.f32 %v1563, %v1564
  %v1566 = vrsqrt.pop %v1565
  %v1567 = vmul.f32 %v1565, %v1566
  %vm1568 = vcmp.eq.f32.partialorder %v1565, inf
  %v1569 = vsel %vm1568, %v1565, %v1567
  %vm1570 = vcmp.eq.f32.partialorder %v1565, 0.0
  %v1571 = vand.u32 %v1565, 2147483648
  %v1572 = vsel %vm1570, %v1571, %v1569
  %v1573 = vmax.f32 %v1572, 1e-12
  %v1574 = vrcp.pop %v1573
  %v1575 = vmul.f32 1.0, %v1574
  %v1576 = vmul.f32 %v1227, %v1575
  %v1577 = vmul.f32 %v1562, %v1575
  %1579 = vrot.lane.b32.xlu0 %v1576, 64
  %v1580 = vpop.permute.xlu0 %1579
  %v1582 = vmul.f32 %v1576, %v1580
  %1584 = vrot.lane.b32.xlu0 %v1577, 64
  %v1585 = vpop.permute.xlu0 %1584
  %v1587 = vmul.f32 %v1576, %v1585
  %v1588 = vmul.f32 %v1577, %v1580
  %v1589 = vmul.f32 %v1577, %v1585
  %v1590 = vrot.slane %v1576, 2
  %v1592 = vrot.slane %v1580, 2
  %v1594 = vmul.f32 %v1590, %v1592
  %v1595 = vrot.slane %v1585, 2
  %v1597 = vmul.f32 %v1590, %v1595
  %v1598 = vrot.slane %v1577, 2
  %v1600 = vmul.f32 %v1598, %v1592
  %v1601 = vmul.f32 %v1598, %v1595
  %v1602 = vmul.f32 %v1582, %v1594
  %v1603 = vlaneseq
  %v1604 = vshrl.u32 %v1603, 7
  %v1605 = vsub.s32 0, %v1604
  %v1606 = vrot.slane %v867, %v1605
  %v1607 = vmul.f32 %v1602, %v1606
  %v1608 = vmul.f32 %v1582, %v1597
  %v1609 = vlaneseq
  %v1610 = vshrl.u32 %v1609, 7
  %v1611 = vsub.s32 1, %v1610
  %v1612 = vrot.slane %v867, %v1611
  %v1613 = vmul.f32 %v1608, %v1612
  %v1614 = vadd.f32 %v1607, %v1613
  %v1615 = vmul.f32 %v1582, %v1600
  %v1616 = vlaneseq
  %v1617 = vshrl.u32 %v1616, 7
  %v1618 = vsub.s32 2, %v1617
  %v1619 = vrot.slane %v867, %v1618
  %v1620 = vmul.f32 %v1615, %v1619
  %v1621 = vadd.f32 %v1614, %v1620
  %v1622 = vmul.f32 %v1582, %v1601
  %v1623 = vlaneseq
  %v1624 = vshrl.u32 %v1623, 7
  %v1625 = vsub.s32 3, %v1624
  %v1626 = vrot.slane %v867, %v1625
  %v1627 = vmul.f32 %v1622, %v1626
  %v1628 = vadd.f32 %v1621, %v1627
  %v1629 = vmul.f32 %v1587, %v1594
  %v1630 = vlaneseq
  %v1631 = vshrl.u32 %v1630, 7
  %v1632 = vsub.s32 4, %v1631
  %v1633 = vrot.slane %v867, %v1632
  %v1634 = vmul.f32 %v1629, %v1633
  %v1635 = vadd.f32 %v1628, %v1634
  %v1636 = vmul.f32 %v1587, %v1597
  %v1637 = vlaneseq
  %v1638 = vshrl.u32 %v1637, 7
  %v1639 = vsub.s32 5, %v1638
  %v1640 = vrot.slane %v867, %v1639
  %v1641 = vmul.f32 %v1636, %v1640
  %v1642 = vadd.f32 %v1635, %v1641
  %v1643 = vmul.f32 %v1587, %v1600
  %v1644 = vlaneseq
  %v1645 = vshrl.u32 %v1644, 7
  %v1646 = vsub.s32 6, %v1645
  %v1647 = vrot.slane %v867, %v1646
  %v1648 = vmul.f32 %v1643, %v1647
  %v1649 = vadd.f32 %v1642, %v1648
  %v1650 = vmul.f32 %v1587, %v1601
  %v1651 = vlaneseq
  %v1652 = vshrl.u32 %v1651, 7
  %v1653 = vsub.s32 7, %v1652
  %v1654 = vrot.slane %v867, %v1653
  %v1655 = vmul.f32 %v1650, %v1654
  %v1656 = vadd.f32 %v1649, %v1655
  %v1657 = vmul.f32 %v1588, %v1594
  %v1658 = vlaneseq
  %v1659 = vshrl.u32 %v1658, 7
  %v1660 = vsub.s32 0, %v1659
  %v1661 = vrot.slane %v868, %v1660
  %v1662 = vmul.f32 %v1657, %v1661
  %v1663 = vadd.f32 %v1656, %v1662
  %v1664 = vmul.f32 %v1588, %v1597
  %v1665 = vlaneseq
  %v1666 = vshrl.u32 %v1665, 7
  %v1667 = vsub.s32 1, %v1666
  %v1668 = vrot.slane %v868, %v1667
  %v1669 = vmul.f32 %v1664, %v1668
  %v1670 = vadd.f32 %v1663, %v1669
  %v1671 = vmul.f32 %v1588, %v1600
  %v1672 = vlaneseq
  %v1673 = vshrl.u32 %v1672, 7
  %v1674 = vsub.s32 2, %v1673
  %v1675 = vrot.slane %v868, %v1674
  %v1676 = vmul.f32 %v1671, %v1675
  %v1677 = vadd.f32 %v1670, %v1676
  %v1678 = vmul.f32 %v1588, %v1601
  %v1679 = vlaneseq
  %v1680 = vshrl.u32 %v1679, 7
  %v1681 = vsub.s32 3, %v1680
  %v1682 = vrot.slane %v868, %v1681
  %v1683 = vmul.f32 %v1678, %v1682
  %v1684 = vadd.f32 %v1677, %v1683
  %v1685 = vmul.f32 %v1589, %v1594
  %v1686 = vlaneseq
  %v1687 = vshrl.u32 %v1686, 7
  %v1688 = vsub.s32 4, %v1687
  %v1689 = vrot.slane %v868, %v1688
  %v1690 = vmul.f32 %v1685, %v1689
  %v1691 = vadd.f32 %v1684, %v1690
  %v1692 = vmul.f32 %v1589, %v1597
  %v1693 = vlaneseq
  %v1694 = vshrl.u32 %v1693, 7
  %v1695 = vsub.s32 5, %v1694
  %v1696 = vrot.slane %v868, %v1695
  %v1697 = vmul.f32 %v1692, %v1696
  %v1698 = vadd.f32 %v1691, %v1697
  %v1699 = vmul.f32 %v1589, %v1600
  %v1700 = vlaneseq
  %v1701 = vshrl.u32 %v1700, 7
  %v1702 = vsub.s32 6, %v1701
  %v1703 = vrot.slane %v868, %v1702
  %v1704 = vmul.f32 %v1699, %v1703
  %v1705 = vadd.f32 %v1698, %v1704
  %v1706 = vmul.f32 %v1589, %v1601
  %v1707 = vlaneseq
  %v1708 = vshrl.u32 %v1707, 7
  %v1709 = vsub.s32 7, %v1708
  %v1710 = vrot.slane %v868, %v1709
  %v1711 = vmul.f32 %v1706, %v1710
  %v1712 = vadd.f32 %v1705, %v1711
  %vm1713 = vcmask 517120
  %1714 = vst.msk [vmem:[%s6] sm:$0x3] %vm1713, %v1712
  // Predicated region
  $region26: #{compressor_forward.4} parent=0 // pred_check
    _
  $region27: #{compressor_forward.4} parent=0 // pred_check_branch
    %1716 = sbr.rel (0) target = $region29
  $region28: #{compressor_forward.4} parent=0 // pred_region
    _
  $region29: #{compressor_forward.4} parent=0 // pred_fallthru
    _
  // Predicated region
  $region30: #{compressor_forward.4} parent=0 // pred_check
    _
  $region31: #{compressor_forward.4} parent=0 // pred_check_branch
    %1718 = sbr.rel (0) target = $region33
  $region32: #{compressor_forward.4} parent=0 // pred_region
    _
  $region33: #{compressor_forward.4} parent=0 // pred_fallthru
    _

// kernel: compressor_forward.5
$region0: #{compressor_forward.5}
  #allocation0 [shape = 'u32[]', space=smem, size = 0x4, offset = 0x4, fixed_abs, tag = 'smem constant byte address 0x4 - core index']
  #allocation1 [shape = 'u32[144,128]{1,0:T(1,128)}', space=vmem, size = 0x12000, scoped, tag = 'internal scratch']
  %s0 = inlined_call_operand.vmem [shape: f32[2,1,196], index: 0, kind: input, shape index: {}]
  %s1 = inlined_call_operand.vmem [shape: f32[16,16], index: 1, kind: input, shape index: {}]
  %s2 = inlined_call_operand.vmem [shape: f32[16,1], index: 2, kind: input, shape index: {}]
  %s3 = inlined_call_operand.vmem [shape: f32[2,16,151], index: 3, kind: output, shape index: {}]
  %s4 = sld [smem:[#allocation0]]
  $region45: #{compressor_forward.5} parent=0
    _
  %s6 = ssub.s32 1, %s4
  %s7 = scalar_select 0, %s6, %s4
  loop: start=0, step=1, limit=4
  $region2: #{compressor_forward.5} parent=0 // loop_pre_header
    _
  $region3: #{compressor_forward.5} parent=0 // loop_header
    %s9 = sphi 0, %s13
    %p10 = scmp.ge.s32.totalorder %s9, 4
    %s19 = sphi 0, %s21
    %s22 = sphi 0, %s19
    %s23 = sphi 0, %s22
    %s39 = sphi 0, %s23
    %s43 = sphi 0, %s43
    %s45 = sphi 0, %s43
    %s46 = sphi 0, %s45
    %s60 = sphi 0, %s46
    %s64 = sphi 0, %s64
    %s66 = sphi 0, %s64
    %s67 = sphi 0, %s66
    %s81 = sphi 0, %s67
    %s87 = sphi 0, %s89
    %s90 = sphi 0, %s87
    %s91 = sphi 0, %s90
    %s107 = sphi 0, %s91
  $region4: #{compressor_forward.5} parent=0 // loop_header_branch
    %12 = sbr.rel (%p10) target = $region8
  $region5: #{compressor_forward.5} parent=0 // loop_body
    %s14 = ssub.s32 %s9, 1
    %s15 = ssub.s32 %s9, 2
    %s16 = sadd.s32 %s9, 1
    %s17 = ssub.s32 %s9, %s16
    %p18 = scmp.eq.s32.totalorder %s17, 0
    %s20 = sadd.s32 %s19, 1
    %s21 = scalar_select %p18, %s19, %s20
    %p24 = pneg %p18
    %p25 = scmp.eq.s32.totalorder %s9, 1
    %p26 = por %p24, %p25
    %p27 = scmp.ne.s32.totalorder %s19, %s22
    %p28 = scmp.eq.s32.totalorder %s9, 0
    %p29 = por %p27, %p28
    %p30 = scmp.ne.s32.totalorder %s19, %s22
    %p31 = scmp.eq.s32.totalorder %s14, 1
    %p32 = por %p30, %p31
    %p33 = scmp.ne.s32.totalorder %s22, %s23
    %p34 = scmp.eq.s32.totalorder %s14, 0
    %p35 = por %p33, %p34
    %p36 = scmp.ne.s32.totalorder %s22, %s23
    %p37 = scmp.eq.s32.totalorder %s15, 1
    %p38 = por %p36, %p37
    %p40 = scmp.ne.s32.totalorder %s23, %s39
    %p41 = scmp.eq.s32.totalorder %s15, 0
    %p42 = por %p40, %p41
    %s44 = sadd.s32 %s43, 1
    %p47 = scmp.eq.s32.totalorder %s9, 1
    %p48 = scmp.ne.s32.totalorder %s43, %s45
    %p49 = scmp.eq.s32.totalorder %s9, 0
    %p50 = por %p48, %p49
    %p51 = scmp.ne.s32.totalorder %s43, %s45
    %p52 = scmp.eq.s32.totalorder %s14, 1
    %p53 = por %p51, %p52
    %p54 = scmp.ne.s32.totalorder %s45, %s46
    %p55 = scmp.eq.s32.totalorder %s14, 0
    %p56 = por %p54, %p55
    %p57 = scmp.ne.s32.totalorder %s45, %s46
    %p58 = scmp.eq.s32.totalorder %s15, 1
    %p59 = por %p57, %p58
    %p61 = scmp.ne.s32.totalorder %s46, %s60
    %p62 = scmp.eq.s32.totalorder %s15, 0
    %p63 = por %p61, %p62
    %s65 = sadd.s32 %s64, 1
    %p68 = scmp.eq.s32.totalorder %s9, 1
    %p69 = scmp.ne.s32.totalorder %s64, %s66
    %p70 = scmp.eq.s32.totalorder %s9, 0
    %p71 = por %p69, %p70
    %p72 = scmp.ne.s32.totalorder %s64, %s66
    %p73 = scmp.eq.s32.totalorder %s14, 1
    %p74 = por %p72, %p73
    %p75 = scmp.ne.s32.totalorder %s66, %s67
    %p76 = scmp.eq.s32.totalorder %s14, 0
    %p77 = por %p75, %p76
    %p78 = scmp.ne.s32.totalorder %s66, %s67
    %p79 = scmp.eq.s32.totalorder %s15, 1
    %p80 = por %p78, %p79
    %p82 = scmp.ne.s32.totalorder %s67, %s81
    %p83 = scmp.eq.s32.totalorder %s15, 0
    %p84 = por %p82, %p83
    %s85 = ssub.s32 %s9, %s16
    %p86 = scmp.eq.s32.totalorder %s85, 0
    %s88 = sadd.s32 %s87, 1
    %s89 = scalar_select %p86, %s87, %s88
    %p92 = pneg %p86
    %p93 = scmp.eq.s32.totalorder %s9, 1
    %p94 = por %p92, %p93
    %p95 = scmp.ne.s32.totalorder %s87, %s90
    %p96 = scmp.eq.s32.totalorder %s9, 0
    %p97 = por %p95, %p96
    %p98 = scmp.ne.s32.totalorder %s87, %s90
    %p99 = scmp.eq.s32.totalorder %s14, 1
    %p100 = por %p98, %p99
    %p101 = scmp.ne.s32.totalorder %s90, %s91
    %p102 = scmp.eq.s32.totalorder %s14, 0
    %p103 = por %p101, %p102
    %p104 = scmp.ne.s32.totalorder %s90, %s91
    %p105 = scmp.eq.s32.totalorder %s15, 1
    %p106 = por %p104, %p105
    %p108 = scmp.ne.s32.totalorder %s91, %s107
    %p109 = scmp.eq.s32.totalorder %s15, 0
    %p110 = por %p108, %p109
    %p111 = scmp.le.s32.totalorder 1, %s9
    %p112 = scmp.lt.s32.totalorder %s9, 3
    %p113 = pnand %p111, %p112
    %p114 = pneg %p113
    // Predicated region
    $region9: #{compressor_forward.5} parent=5 // pred_check
      _
    $region10: #{compressor_forward.5} parent=5 // pred_check_branch
      %116 = sbr.rel (%p113) target = $region12
    $region11: #{compressor_forward.5} parent=5 // pred_region
      %s117 = ssub.s32 %s9, 1
      // Predicated region
      $region13: #{compressor_forward.5} parent=11 // pred_check
        %p118 = pneg %p56
      $region14: #{compressor_forward.5} parent=11 // pred_check_branch
        %120 = sbr.rel (%p118) target = $region16
      $region15: #{compressor_forward.5} parent=11 // pred_region
        _
      $region16: #{compressor_forward.5} parent=11 // pred_fallthru
        _
      // Predicated region
      $region17: #{compressor_forward.5} parent=11 // pred_check
        %p121 = pneg %p77
      $region18: #{compressor_forward.5} parent=11 // pred_check_branch
        %123 = sbr.rel (%p121) target = $region20
      $region19: #{compressor_forward.5} parent=11 // pred_region
        _
      $region20: #{compressor_forward.5} parent=11 // pred_fallthru
        _
    $region12: #{compressor_forward.5} parent=5 // pred_fallthru
      _
    %p124 = scmp.lt.s32.totalorder %s9, 2
    // Predicated region
    $region21: #{compressor_forward.5} parent=5 // pred_check
      %p125 = pneg %p124
    $region22: #{compressor_forward.5} parent=5 // pred_check_branch
      %127 = sbr.rel (%p125) target = $region24
    $region23: #{compressor_forward.5} parent=5 // pred_region
      // Predicated region
      $region25: #{compressor_forward.5} parent=23 // pred_check
        %p128 = pneg %p29
      $region26: #{compressor_forward.5} parent=23 // pred_check_branch
        %130 = sbr.rel (%p128) target = $region28
      $region27: #{compressor_forward.5} parent=23 // pred_region
        %p131 = scmp.lt.s32.totalorder %s9, 1
        %s132 = scalar_select %p131, %s9, 1
        %s133 = smul.addr %s132, 2
        %s134 = scalar_lea.vmem %s0, %s133
      $region28: #{compressor_forward.5} parent=23 // pred_fallthru
        _
    $region24: #{compressor_forward.5} parent=5 // pred_fallthru
      _
    %p135 = scmp.le.s32.totalorder 1, %s9
    %p136 = scmp.lt.s32.totalorder %s9, 3
    %p137 = pnand %p135, %p136
    %p138 = pneg %p137
    // Predicated region
    $region29: #{compressor_forward.5} parent=5 // pred_check
      _
    $region30: #{compressor_forward.5} parent=5 // pred_check_branch
      %140 = sbr.rel (%p137) target = $region32
    $region31: #{compressor_forward.5} parent=5 // pred_region
      %s141 = ssub.s32 %s9, 1
      %p142 = scmp.lt.s32.totalorder %s14, 1
      %s143 = scalar_select %p142, %s14, 1
      %s144 = smul.addr %s143, 2
      %s145 = scalar_lea.vmem %s0, %s144
      %p146 = pneg %p35
      %p147 = pneg %p32
      %p148 = pneg %p56
      %p149 = pneg %p53
      %p150 = pneg %p77
      %p151 = pneg %p74
      %p152 = pneg %p103
      %p153 = pneg %p100
      %p154 = scmp.lt.s32.totalorder %s14, 1
      %s155 = scalar_select %p154, %s14, 1
      %s156 = smul.addr %s155, 4
      %s157 = smul.addr %s156, 8
      %s158 = scalar_lea.vmem %s3, %s157
      %p159 = scmp.lt.s32.totalorder %s14, 1
      %s160 = scalar_select %p159, %s14, 1
      %s161 = smul.addr %s160, 2
      %s162 = scalar_lea.vmem %s0, %s161
      %p163 = scmp.lt.s32.totalorder %s14, 1
      %s164 = scalar_select %p163, %s14, 1
      %s165 = smul.addr %s164, 4
      %s166 = smul.addr %s165, 8
      %s167 = scalar_lea.vmem %s3, %s166
      %v168 = vld [vmem:[%s162] sm:$0x3]
      %v170 = vlaneseq
      %v171 = vshrl.u32 %v170, 7
      %v172 = vsub.s32 0, %v171
      %v173 = vrot.slane %v168, %v172
      %v174 = vlaneseq
      %v175 = vshrl.u32 %v174, 7
      %v176 = vsub.s32 1, %v175
      %v177 = vrot.slane %v168, %v176
      %180 = vrot.lane.b32.xlu0 %v173, 127
      %v181 = vpop.permute.xlu0 %180
      %182 = vrot.lane.b32.xlu0 %v177, 127
      %v183 = vpop.permute.xlu0 %182
      %vm184 = vcmask 1039360
      %v185 = vsel %vm184, %v181, %v183
      %188 = vrot.lane.b32.xlu0 %v173, 126
      %v189 = vpop.permute.xlu0 %188
      %190 = vrot.lane.b32.xlu0 %v177, 126
      %v191 = vpop.permute.xlu0 %190
      %vm192 = vcmask 1031168
      %v193 = vsel %vm192, %v189, %v191
      %196 = vrot.lane.b32.xlu0 %v173, 125
      %v197 = vpop.permute.xlu0 %196
      %198 = vrot.lane.b32.xlu0 %v177, 125
      %v199 = vpop.permute.xlu0 %198
      %vm200 = vcmask 1022976
      %v201 = vsel %vm200, %v197, %v199
      %vm204 = vcmask 1040384
      %v205 = vsel %vm204, %v173, %v185
      %v206 = vsel %vm204, %v177, %v183
      %vm207 = vcmask 1041408
      %v208 = vsel %vm207, %v205, %v193
      %v209 = vsel %vm207, %v206, %v191
      %vm210 = vcmask 1042432
      %v211 = vsel %vm210, %v208, %v201
      %v212 = vsel %vm210, %v209, %v199
      %v215 = vrot.slane %v211, 4
      %v216 = vrot.slane %v212, 4
      %217 = vrot.lane.b32.xlu0 %v215, 114
      %v218 = vpop.permute.xlu0 %217
      %219 = vrot.lane.b32.xlu0 %v216, 114
      %v220 = vpop.permute.xlu0 %219
      %vm221 = vcmask 932864
      %v222 = vsel %vm221, %v218, %v220
      %225 = vrot.lane.b32.xlu0 %v211, 100
      %v226 = vpop.permute.xlu0 %225
      %227 = vrot.lane.b32.xlu0 %v212, 100
      %v228 = vpop.permute.xlu0 %227
      %vm229 = vcmask 818176
      %v230 = vsel %vm229, %v226, %v228
      %233 = vrot.lane.b32.xlu0 %v215, 86
      %v234 = vpop.permute.xlu0 %233
      %235 = vrot.lane.b32.xlu0 %v216, 86
      %v236 = vpop.permute.xlu0 %235
      %vm237 = vcmask 703488
      %v238 = vsel %vm237, %v234, %v236
      %vm241 = vcmask 1043456
      %v242 = vsel %vm241, %v211, %v222
      %v243 = vsel %vm241, %v212, %v220
      %v244 = vsel %vm241, %v230, %v238
      %v245 = vsel %vm241, %v228, %v236
      %v246 = vld [vmem:[%s1] sm:$0xff]
      %v247 = vld [vmem:[%s1 + $0x8] sm:$0xff]
      %v248 = vld [vmem:[%s2] sm:$0xff]
      %v249 = vld [vmem:[%s2 + $0x8] sm:$0xff]
      %251 = vset.pattern.permute.xlu0 0
      %252 = vperm.xlu0 %251, %v248
      %v253 = vpop.permute.xlu0 %252
      %256 = vset.pattern.permute.xlu0 0
      %257 = vperm.xlu0 %256, %v249
      %v258 = vpop.permute.xlu0 %257
      %vm260 = vcmask 130048
      %v262 = vsel %vm260, %v246, 0
      %v265 = vsel %vm260, %v247, 0
      %267 = vmatprep.subr.mxu0 %v243
      %268 = vmatpush1.msra.mxu0 %v242
      %269 = vmatprep.subr.mxu0 %v245
      %270 = vmatpush1.msra.mxu0 %v244
      %271 = vmatprep.subr.mxu0 0.0
      %272 = vmatpush1.msra.mxu0 0.0
      %273 = vmatprep.subr.mxu0 0.0
      %274 = vmatpush1.msra.mxu0 0.0
      %275 = vmatprep.subr.mxu0 0.0
      %276 = vmatpush1.msra.mxu0 0.0
      %277 = vmatprep.subr.mxu0 0.0
      %278 = vmatpush1.msra.mxu0 0.0
      %279 = vmatprep.subr.mxu0 0.0
      %280 = vmatpush1.msra.mxu0 0.0
      %281 = vmatprep.subr.mxu0 0.0
      %282 = vmatpush1.msra.mxu0 0.0
      %283 = vmatprep.subr.mxu0 0.0
      %284 = vmatpush1.msra.mxu0 0.0
      %285 = vmatprep.subr.mxu0 0.0
      %286 = vmatpush1.msra.mxu0 0.0
      %287 = vmatprep.subr.mxu0 0.0
      %288 = vmatpush1.msra.mxu0 0.0
      %289 = vmatprep.subr.mxu0 0.0
      %290 = vmatpush1.msra.mxu0 0.0
      %291 = vmatprep.subr.mxu0 0.0
      %292 = vmatpush1.msra.mxu0 0.0
      %293 = vmatprep.subr.mxu0 0.0
      %294 = vmatpush1.msra.mxu0 0.0
      %295 = vmatprep.subr.mxu0 0.0
      %296 = vmatpush1.msra.mxu0 0.0
      %297 = vmatprep.subr.mxu0 0.0
      %298 = vmatpush1.msra.mxu0 0.0
      %299 = vmatprep.subr.mxu0 0.0
      %300 = vmatpush1.msra.mxu0 0.0
      %301 = vmatprep.subr.mxu0 0.0
      %302 = vmatpush1.msra.mxu0 0.0
      %303 = vmatprep.subr.mxu0 0.0
      %304 = vmatpush1.msra.mxu0 0.0
      %305 = vmatprep.subr.mxu0 0.0
      %306 = vmatpush1.msra.mxu0 0.0
      %307 = vmatprep.subr.mxu0 0.0
      %308 = vmatpush1.msra.mxu0 0.0
      %309 = vmatprep.subr.mxu0 0.0
      %310 = vmatpush1.msra.mxu0 0.0
      %311 = vmatprep.subr.mxu0 0.0
      %312 = vmatpush1.msra.mxu0 0.0
      %313 = vmatprep.subr.mxu0 0.0
      %314 = vmatpush1.msra.mxu0 0.0
      %315 = vmatprep.subr.mxu0 0.0
      %316 = vmatpush1.msra.mxu0 0.0
      %317 = vmatprep.subr.mxu0 0.0
      %318 = vmatpush1.msra.mxu0 0.0
      %319 = vmatprep.subr.mxu0 0.0
      %320 = vmatpush1.msra.mxu0 0.0
      %321 = vmatprep.subr.mxu0 0.0
      %322 = vmatpush1.msra.mxu0 0.0
      %323 = vmatprep.subr.mxu0 0.0
      %324 = vmatpush1.msra.mxu0 0.0
      %325 = vmatprep.subr.mxu0 0.0
      %326 = vmatpush1.msra.mxu0 0.0
      %327 = vmatprep.subr.mxu0 0.0
      %328 = vmatpush1.msra.mxu0 0.0
      %329 = vmatprep.subr.mxu0 0.0
      %330 = vmatpush1.msra.mxu0 0.0
      %331 = vmatprep.mubr.f32.mxu0 0.0
      %332 = vmatmul.mubr.f32.gmra.mrb[0].mxu0 %v262
      %v333 = vpop.f32.mrb[0].mxu0
      %v334 = vadd.f32 %v253, %v333
      %v335 = vpop.f32.mrb[0].mxu0
      %v336 = vadd.f32 %v253, %v335
      %337 = vmatprep.mubr.f32.mxu0 0.0
      %338 = vmatmul.mubr.f32.gmra.mrb[0].mxu0 %v265
      %v339 = vpop.f32.mrb[0].mxu0
      %v340 = vadd.f32 %v258, %v339
      %v341 = vpop.f32.mrb[0].mxu0
      %v342 = vadd.f32 %v258, %v341
      %343 = vdwg.mxu0
      %v344 = vmax.f32 %v334, 0.0
      %v345 = vmax.f32 %v336, 0.0
      %v346 = vmax.f32 %v340, 0.0
      %v347 = vmax.f32 %v342, 0.0
      %348 = vst [vmem:[%s167] sm:$0xff] %v344
      %vm349 = vcmask 187392
      %350 = vst.msk [vmem:[%s167 + $0x8] sm:$0xff] %vm349, %v345
      %351 = vst [vmem:[%s167 + $0x10] sm:$0xff] %v346
      %352 = vst.msk [vmem:[%s167 + $0x18] sm:$0xff] %vm349, %v347
      %p353 = scmp.lt.s32.totalorder %s14, 1
      %s354 = scalar_select %p353, %s14, 1
      %s355 = smul.addr %s354, 4
      %s356 = smul.addr %s355, 8
      %s357 = scalar_lea.vmem %s3, %s356
      // Predicated region
      $region33: #{compressor_forward.5} parent=31 // pred_check
        %p358 = pneg %p100
      $region34: #{compressor_forward.5} parent=31 // pred_check_branch
        %360 = sbr.rel (%p358) target = $region36
      $region35: #{compressor_forward.5} parent=31 // pred_region
        _
      $region36: #{compressor_forward.5} parent=31 // pred_fallthru
        _
    $region32: #{compressor_forward.5} parent=5 // pred_fallthru
      _
    %p361 = scmp.le.s32.totalorder 2, %s9
    // Predicated region
    $region37: #{compressor_forward.5} parent=5 // pred_check
      %p362 = pneg %p361
    $region38: #{compressor_forward.5} parent=5 // pred_check_branch
      %364 = sbr.rel (%p362) target = $region40
    $region39: #{compressor_forward.5} parent=5 // pred_region
      %s365 = ssub.s32 %s9, 2
      // Predicated region
      $region41: #{compressor_forward.5} parent=39 // pred_check
        %p366 = pneg %p106
      $region42: #{compressor_forward.5} parent=39 // pred_check_branch
        %368 = sbr.rel (%p366) target = $region44
      $region43: #{compressor_forward.5} parent=39 // pred_region
        %p369 = scmp.lt.s32.totalorder %s15, 1
        %s370 = scalar_select %p369, %s15, 1
        %s371 = smul.addr %s370, 4
        %s372 = smul.addr %s371, 8
        %s373 = scalar_lea.vmem %s3, %s372
      $region44: #{compressor_forward.5} parent=39 // pred_fallthru
        _
    $region40: #{compressor_forward.5} parent=5 // pred_fallthru
      _
  $region6: #{compressor_forward.5} parent=0 // loop_footer
    %s13 = sadd.s32 1, %s9
  $region7: #{compressor_forward.5} parent=0 // loop_footer_branch
    %8 = sbr.rel target = $region3
  $region8: #{compressor_forward.5} parent=0 // loop_exit
    _

// kernel: compressor_forward.7
$region0: #{compressor_forward.7}
  #allocation0 [shape = 'u32[]', space=smem, size = 0x4, offset = 0x4, fixed_abs, tag = 'smem constant byte address 0x4 - core index']
  #allocation1 [shape = 'u32[144,128]{1,0:T(1,128)}', space=vmem, size = 0x12000, scoped, tag = 'internal scratch']
  #allocation2 [shape = 'f32[1,1]{1,0:T(1,128)S(1)}', space=vmem, size = 0x200, scoped, tag = 'scoped memory for compressor_forward.7']
  %s0 = inlined_call_operand.vmem [shape: f32[2,8,1024], index: 0, kind: input, shape index: {}]
  %s1 = inlined_call_operand.vmem [shape: f32[1,200], index: 1, kind: input, shape index: {}]
  %s2 = inlined_call_operand.<no memory space> [shape: f32[1,1], index: 2, kind: input, shape index: {}]
  %s3 = inlined_call_operand.vmem [shape: f32[2,1,892], index: 3, kind: output, shape index: {}]
  %s4 = sld [smem:[#allocation0]]
  $region45: #{compressor_forward.7} parent=0
    _
  %s6 = ssub.s32 1, %s4
  %s7 = scalar_select 0, %s6, %s4
  %v8 = vstv %s2
  %9 = vst [vmem:[#allocation2] sm:$0x1] %v8
  loop: start=0, step=1, limit=4
  $region2: #{compressor_forward.7} parent=0 // loop_pre_header
    _
  $region3: #{compressor_forward.7} parent=0 // loop_header
    %s11 = sphi 0, %s15
    %p12 = scmp.ge.s32.totalorder %s11, 4
    %s21 = sphi 0, %s23
    %s24 = sphi 0, %s21
    %s25 = sphi 0, %s24
    %s41 = sphi 0, %s25
    %s45 = sphi 0, %s45
    %s47 = sphi 0, %s45
    %s48 = sphi 0, %s47
    %s62 = sphi 0, %s48
    %s66 = sphi 0, %s66
    %s68 = sphi 0, %s66
    %s69 = sphi 0, %s68
    %s83 = sphi 0, %s69
    %s89 = sphi 0, %s91
    %s92 = sphi 0, %s89
    %s93 = sphi 0, %s92
    %s109 = sphi 0, %s93
  $region4: #{compressor_forward.7} parent=0 // loop_header_branch
    %14 = sbr.rel (%p12) target = $region8
  $region5: #{compressor_forward.7} parent=0 // loop_body
    %s16 = ssub.s32 %s11, 1
    %s17 = ssub.s32 %s11, 2
    %s18 = sadd.s32 %s11, 1
    %s19 = ssub.s32 %s11, %s18
    %p20 = scmp.eq.s32.totalorder %s19, 0
    %s22 = sadd.s32 %s21, 1
    %s23 = scalar_select %p20, %s21, %s22
    %p26 = pneg %p20
    %p27 = scmp.eq.s32.totalorder %s11, 1
    %p28 = por %p26, %p27
    %p29 = scmp.ne.s32.totalorder %s21, %s24
    %p30 = scmp.eq.s32.totalorder %s11, 0
    %p31 = por %p29, %p30
    %p32 = scmp.ne.s32.totalorder %s21, %s24
    %p33 = scmp.eq.s32.totalorder %s16, 1
    %p34 = por %p32, %p33
    %p35 = scmp.ne.s32.totalorder %s24, %s25
    %p36 = scmp.eq.s32.totalorder %s16, 0
    %p37 = por %p35, %p36
    %p38 = scmp.ne.s32.totalorder %s24, %s25
    %p39 = scmp.eq.s32.totalorder %s17, 1
    %p40 = por %p38, %p39
    %p42 = scmp.ne.s32.totalorder %s25, %s41
    %p43 = scmp.eq.s32.totalorder %s17, 0
    %p44 = por %p42, %p43
    %s46 = sadd.s32 %s45, 1
    %p49 = scmp.eq.s32.totalorder %s11, 1
    %p50 = scmp.ne.s32.totalorder %s45, %s47
    %p51 = scmp.eq.s32.totalorder %s11, 0
    %p52 = por %p50, %p51
    %p53 = scmp.ne.s32.totalorder %s45, %s47
    %p54 = scmp.eq.s32.totalorder %s16, 1
    %p55 = por %p53, %p54
    %p56 = scmp.ne.s32.totalorder %s47, %s48
    %p57 = scmp.eq.s32.totalorder %s16, 0
    %p58 = por %p56, %p57
    %p59 = scmp.ne.s32.totalorder %s47, %s48
    %p60 = scmp.eq.s32.totalorder %s17, 1
    %p61 = por %p59, %p60
    %p63 = scmp.ne.s32.totalorder %s48, %s62
    %p64 = scmp.eq.s32.totalorder %s17, 0
    %p65 = por %p63, %p64
    %s67 = sadd.s32 %s66, 1
    %p70 = scmp.eq.s32.totalorder %s11, 1
    %p71 = scmp.ne.s32.totalorder %s66, %s68
    %p72 = scmp.eq.s32.totalorder %s11, 0
    %p73 = por %p71, %p72
    %p74 = scmp.ne.s32.totalorder %s66, %s68
    %p75 = scmp.eq.s32.totalorder %s16, 1
    %p76 = por %p74, %p75
    %p77 = scmp.ne.s32.totalorder %s68, %s69
    %p78 = scmp.eq.s32.totalorder %s16, 0
    %p79 = por %p77, %p78
    %p80 = scmp.ne.s32.totalorder %s68, %s69
    %p81 = scmp.eq.s32.totalorder %s17, 1
    %p82 = por %p80, %p81
    %p84 = scmp.ne.s32.totalorder %s69, %s83
    %p85 = scmp.eq.s32.totalorder %s17, 0
    %p86 = por %p84, %p85
    %s87 = ssub.s32 %s11, %s18
    %p88 = scmp.eq.s32.totalorder %s87, 0
    %s90 = sadd.s32 %s89, 1
    %s91 = scalar_select %p88, %s89, %s90
    %p94 = pneg %p88
    %p95 = scmp.eq.s32.totalorder %s11, 1
    %p96 = por %p94, %p95
    %p97 = scmp.ne.s32.totalorder %s89, %s92
    %p98 = scmp.eq.s32.totalorder %s11, 0
    %p99 = por %p97, %p98
    %p100 = scmp.ne.s32.totalorder %s89, %s92
    %p101 = scmp.eq.s32.totalorder %s16, 1
    %p102 = por %p100, %p101
    %p103 = scmp.ne.s32.totalorder %s92, %s93
    %p104 = scmp.eq.s32.totalorder %s16, 0
    %p105 = por %p103, %p104
    %p106 = scmp.ne.s32.totalorder %s92, %s93
    %p107 = scmp.eq.s32.totalorder %s17, 1
    %p108 = por %p106, %p107
    %p110 = scmp.ne.s32.totalorder %s93, %s109
    %p111 = scmp.eq.s32.totalorder %s17, 0
    %p112 = por %p110, %p111
    %p113 = scmp.le.s32.totalorder 1, %s11
    %p114 = scmp.lt.s32.totalorder %s11, 3
    %p115 = pnand %p113, %p114
    %p116 = pneg %p115
    // Predicated region
    $region9: #{compressor_forward.7} parent=5 // pred_check
      _
    $region10: #{compressor_forward.7} parent=5 // pred_check_branch
      %118 = sbr.rel (%p115) target = $region12
    $region11: #{compressor_forward.7} parent=5 // pred_region
      %s119 = ssub.s32 %s11, 1
      // Predicated region
      $region13: #{compressor_forward.7} parent=11 // pred_check
        %p120 = pneg %p58
      $region14: #{compressor_forward.7} parent=11 // pred_check_branch
        %122 = sbr.rel (%p120) target = $region16
      $region15: #{compressor_forward.7} parent=11 // pred_region
        _
      $region16: #{compressor_forward.7} parent=11 // pred_fallthru
        _
      // Predicated region
      $region17: #{compressor_forward.7} parent=11 // pred_check
        %p123 = pneg %p79
      $region18: #{compressor_forward.7} parent=11 // pred_check_branch
        %125 = sbr.rel (%p123) target = $region20
      $region19: #{compressor_forward.7} parent=11 // pred_region
        _
      $region20: #{compressor_forward.7} parent=11 // pred_fallthru
        _
    $region12: #{compressor_forward.7} parent=5 // pred_fallthru
      _
    %p126 = scmp.lt.s32.totalorder %s11, 2
    // Predicated region
    $region21: #{compressor_forward.7} parent=5 // pred_check
      %p127 = pneg %p126
    $region22: #{compressor_forward.7} parent=5 // pred_check_branch
      %129 = sbr.rel (%p127) target = $region24
    $region23: #{compressor_forward.7} parent=5 // pred_region
      // Predicated region
      $region25: #{compressor_forward.7} parent=23 // pred_check
        %p130 = pneg %p31
      $region26: #{compressor_forward.7} parent=23 // pred_check_branch
        %132 = sbr.rel (%p130) target = $region28
      $region27: #{compressor_forward.7} parent=23 // pred_region
        %p133 = scmp.lt.s32.totalorder %s11, 1
        %s134 = scalar_select %p133, %s11, 1
        %s135 = smul.addr %s134, 8
        %s136 = smul.addr %s135, 8
        %s137 = scalar_lea.vmem %s0, %s136
      $region28: #{compressor_forward.7} parent=23 // pred_fallthru
        _
    $region24: #{compressor_forward.7} parent=5 // pred_fallthru
      _
    %p138 = scmp.le.s32.totalorder 1, %s11
    %p139 = scmp.lt.s32.totalorder %s11, 3
    %p140 = pnand %p138, %p139
    %p141 = pneg %p140
    // Predicated region
    $region29: #{compressor_forward.7} parent=5 // pred_check
      _
    $region30: #{compressor_forward.7} parent=5 // pred_check_branch
      %143 = sbr.rel (%p140) target = $region32
    $region31: #{compressor_forward.7} parent=5 // pred_region
      %s144 = ssub.s32 %s11, 1
      %p145 = scmp.lt.s32.totalorder %s16, 1
      %s146 = scalar_select %p145, %s16, 1
      %s147 = smul.addr %s146, 8
      %s148 = smul.addr %s147, 8
      %s149 = scalar_lea.vmem %s0, %s148
      %p150 = pneg %p37
      %p151 = pneg %p34
      %p152 = pneg %p58
      %p153 = pneg %p55
      %p154 = pneg %p79
      %p155 = pneg %p76
      %p156 = pneg %p105
      %p157 = pneg %p102
      %p158 = scmp.lt.s32.totalorder %s16, 1
      %s159 = scalar_select %p158, %s16, 1
      %s160 = smul.addr %s159, 7
      %s161 = scalar_lea.vmem %s3, %s160
      %p162 = scmp.lt.s32.totalorder %s16, 1
      %s163 = scalar_select %p162, %s16, 1
      %s164 = smul.addr %s163, 8
      %s165 = smul.addr %s164, 8
      %s166 = scalar_lea.vmem %s0, %s165
      %p167 = scmp.lt.s32.totalorder %s16, 1
      %s168 = scalar_select %p167, %s16, 1
      %s169 = smul.addr %s168, 7
      %s170 = scalar_lea.vmem %s3, %s169
      %v171 = vld [vmem:[%s166] sm:$0xff]
      %v172 = vld [vmem:[%s166 + $0x8] sm:$0xff]
      %v173 = vld [vmem:[%s166 + $0x10] sm:$0xff]
      %v174 = vld [vmem:[%s166 + $0x18] sm:$0xff]
      %v175 = vld [vmem:[%s166 + $0x20] sm:$0xff]
      %v176 = vld [vmem:[%s166 + $0x28] sm:$0xff]
      %v177 = vld [vmem:[%s166 + $0x30] sm:$0xff]
      %v178 = vld [vmem:[%s166 + $0x38] sm:$0xff]
      %186 = vrot.lane.b32.xlu0 %v171, 127
      %v187 = vpop.permute.xlu0 %186
      %188 = vrot.lane.b32.xlu0 %v172, 127
      %v189 = vpop.permute.xlu0 %188
      %190 = vrot.lane.b32.xlu0 %v173, 127
      %v191 = vpop.permute.xlu0 %190
      %192 = vrot.lane.b32.xlu0 %v174, 127
      %v193 = vpop.permute.xlu0 %192
      %194 = vrot.lane.b32.xlu0 %v175, 127
      %v195 = vpop.permute.xlu0 %194
      %196 = vrot.lane.b32.xlu0 %v176, 127
      %v197 = vpop.permute.xlu0 %196
      %198 = vrot.lane.b32.xlu0 %v177, 127
      %v199 = vpop.permute.xlu0 %198
      %vm200 = vcmask 1039360
      %v201 = vsel %vm200, %v187, %v189
      %v202 = vsel %vm200, %v189, %v191
      %v203 = vsel %vm200, %v191, %v193
      %v204 = vsel %vm200, %v193, %v195
      %v205 = vsel %vm200, %v195, %v197
      %v206 = vsel %vm200, %v197, %v199
      %214 = vrot.lane.b32.xlu0 %v171, 126
      %v215 = vpop.permute.xlu0 %214
      %216 = vrot.lane.b32.xlu0 %v172, 126
      %v217 = vpop.permute.xlu0 %216
      %218 = vrot.lane.b32.xlu0 %v173, 126
      %v219 = vpop.permute.xlu0 %218
      %220 = vrot.lane.b32.xlu0 %v174, 126
      %v221 = vpop.permute.xlu0 %220
      %222 = vrot.lane.b32.xlu0 %v175, 126
      %v223 = vpop.permute.xlu0 %222
      %224 = vrot.lane.b32.xlu0 %v176, 126
      %v225 = vpop.permute.xlu0 %224
      %226 = vrot.lane.b32.xlu0 %v177, 126
      %v227 = vpop.permute.xlu0 %226
      %vm228 = vcmask 1031168
      %v229 = vsel %vm228, %v215, %v217
      %v230 = vsel %vm228, %v217, %v219
      %v231 = vsel %vm228, %v219, %v221
      %v232 = vsel %vm228, %v221, %v223
      %v233 = vsel %vm228, %v223, %v225
      %v234 = vsel %vm228, %v225, %v227
      %242 = vrot.lane.b32.xlu0 %v171, 125
      %v243 = vpop.permute.xlu0 %242
      %244 = vrot.lane.b32.xlu0 %v172, 125
      %v245 = vpop.permute.xlu0 %244
      %246 = vrot.lane.b32.xlu0 %v173, 125
      %v247 = vpop.permute.xlu0 %246
      %248 = vrot.lane.b32.xlu0 %v174, 125
      %v249 = vpop.permute.xlu0 %248
      %250 = vrot.lane.b32.xlu0 %v175, 125
      %v251 = vpop.permute.xlu0 %250
      %252 = vrot.lane.b32.xlu0 %v176, 125
      %v253 = vpop.permute.xlu0 %252
      %254 = vrot.lane.b32.xlu0 %v177, 125
      %v255 = vpop.permute.xlu0 %254
      %vm256 = vcmask 1022976
      %v257 = vsel %vm256, %v243, %v245
      %v258 = vsel %vm256, %v245, %v247
      %v259 = vsel %vm256, %v247, %v249
      %v260 = vsel %vm256, %v249, %v251
      %v261 = vsel %vm256, %v251, %v253
      %v262 = vsel %vm256, %v253, %v255
      %270 = vrot.lane.b32.xlu0 %v171, 124
      %v271 = vpop.permute.xlu0 %270
      %272 = vrot.lane.b32.xlu0 %v172, 124
      %v273 = vpop.permute.xlu0 %272
      %274 = vrot.lane.b32.xlu0 %v173, 124
      %v275 = vpop.permute.xlu0 %274
      %276 = vrot.lane.b32.xlu0 %v174, 124
      %v277 = vpop.permute.xlu0 %276
      %278 = vrot.lane.b32.xlu0 %v175, 124
      %v279 = vpop.permute.xlu0 %278
      %280 = vrot.lane.b32.xlu0 %v176, 124
      %v281 = vpop.permute.xlu0 %280
      %282 = vrot.lane.b32.xlu0 %v177, 124
      %v283 = vpop.permute.xlu0 %282
      %vm284 = vcmask 1014784
      %v285 = vsel %vm284, %v271, %v273
      %v286 = vsel %vm284, %v273, %v275
      %v287 = vsel %vm284, %v275, %v277
      %v288 = vsel %vm284, %v277, %v279
      %v289 = vsel %vm284, %v279, %v281
      %v290 = vsel %vm284, %v281, %v283
      %299 = vrot.lane.b32.xlu0 %v178, 127
      %v300 = vpop.permute.xlu0 %299
      %v301 = vsel %vm200, %v199, %v300
      %302 = vrot.lane.b32.xlu0 %v178, 126
      %v303 = vpop.permute.xlu0 %302
      %v304 = vsel %vm228, %v227, %v303
      %305 = vrot.lane.b32.xlu0 %v178, 125
      %v306 = vpop.permute.xlu0 %305
      %v307 = vsel %vm256, %v255, %v306
      %308 = vrot.lane.b32.xlu0 %v178, 124
      %v309 = vpop.permute.xlu0 %308
      %v310 = vsel %vm284, %v283, %v309
      %319 = vrot.lane.b32.xlu0 %v171, 96
      %v320 = vpop.permute.xlu0 %319
      %321 = vrot.lane.b32.xlu0 %v172, 96
      %v322 = vpop.permute.xlu0 %321
      %323 = vrot.lane.b32.xlu0 %v173, 96
      %v324 = vpop.permute.xlu0 %323
      %325 = vrot.lane.b32.xlu0 %v174, 96
      %v326 = vpop.permute.xlu0 %325
      %327 = vrot.lane.b32.xlu0 %v175, 96
      %v328 = vpop.permute.xlu0 %327
      %329 = vrot.lane.b32.xlu0 %v176, 96
      %v330 = vpop.permute.xlu0 %329
      %331 = vrot.lane.b32.xlu0 %v177, 96
      %v332 = vpop.permute.xlu0 %331
      %333 = vrot.lane.b32.xlu0 %v178, 96
      %v334 = vpop.permute.xlu0 %333
      %335 = vrot.lane.b32.xlu0 %v201, 96
      %v336 = vpop.permute.xlu0 %335
      %337 = vrot.lane.b32.xlu0 %v202, 96
      %v338 = vpop.permute.xlu0 %337
      %339 = vrot.lane.b32.xlu0 %v203, 96
      %v340 = vpop.permute.xlu0 %339
      %341 = vrot.lane.b32.xlu0 %v204, 96
      %v342 = vpop.permute.xlu0 %341
      %343 = vrot.lane.b32.xlu0 %v205, 96
      %v344 = vpop.permute.xlu0 %343
      %345 = vrot.lane.b32.xlu0 %v206, 96
      %v346 = vpop.permute.xlu0 %345
      %347 = vrot.lane.b32.xlu0 %v301, 96
      %v348 = vpop.permute.xlu0 %347
      %349 = vrot.lane.b32.xlu0 %v300, 96
      %v350 = vpop.permute.xlu0 %349
      %351 = vrot.lane.b32.xlu0 %v229, 96
      %v352 = vpop.permute.xlu0 %351
      %353 = vrot.lane.b32.xlu0 %v230, 96
      %v354 = vpop.permute.xlu0 %353
      %355 = vrot.lane.b32.xlu0 %v231, 96
      %v356 = vpop.permute.xlu0 %355
      %357 = vrot.lane.b32.xlu0 %v232, 96
      %v358 = vpop.permute.xlu0 %357
      %359 = vrot.lane.b32.xlu0 %v233, 96
      %v360 = vpop.permute.xlu0 %359
      %361 = vrot.lane.b32.xlu0 %v234, 96
      %v362 = vpop.permute.xlu0 %361
      %363 = vrot.lane.b32.xlu0 %v304, 96
      %v364 = vpop.permute.xlu0 %363
      %365 = vrot.lane.b32.xlu0 %v303, 96
      %v366 = vpop.permute.xlu0 %365
      %367 = vrot.lane.b32.xlu0 %v257, 96
      %v368 = vpop.permute.xlu0 %367
      %369 = vrot.lane.b32.xlu0 %v258, 96
      %v370 = vpop.permute.xlu0 %369
      %371 = vrot.lane.b32.xlu0 %v259, 96
      %v372 = vpop.permute.xlu0 %371
      %373 = vrot.lane.b32.xlu0 %v260, 96
      %v374 = vpop.permute.xlu0 %373
      %375 = vrot.lane.b32.xlu0 %v261, 96
      %v376 = vpop.permute.xlu0 %375
      %377 = vrot.lane.b32.xlu0 %v262, 96
      %v378 = vpop.permute.xlu0 %377
      %379 = vrot.lane.b32.xlu0 %v307, 96
      %v380 = vpop.permute.xlu0 %379
      %381 = vrot.lane.b32.xlu0 %v306, 96
      %v382 = vpop.permute.xlu0 %381
      %383 = vrot.lane.b32.xlu0 %v285, 96
      %v384 = vpop.permute.xlu0 %383
      %385 = vrot.lane.b32.xlu0 %v286, 96
      %v386 = vpop.permute.xlu0 %385
      %387 = vrot.lane.b32.xlu0 %v287, 96
      %v388 = vpop.permute.xlu0 %387
      %389 = vrot.lane.b32.xlu0 %v288, 96
      %v390 = vpop.permute.xlu0 %389
      %391 = vrot.lane.b32.xlu0 %v289, 96
      %v392 = vpop.permute.xlu0 %391
      %393 = vrot.lane.b32.xlu0 %v290, 96
      %v394 = vpop.permute.xlu0 %393
      %395 = vrot.lane.b32.xlu0 %v310, 96
      %v396 = vpop.permute.xlu0 %395
      %397 = vrot.lane.b32.xlu0 %v309, 96
      %v398 = vpop.permute.xlu0 %397
      %vm399 = vcmask 785408
      %v400 = vsel %vm399, %v320, %v322
      %v401 = vsel %vm399, %v322, %v324
      %v402 = vsel %vm399, %v324, %v326
      %v403 = vsel %vm399, %v326, %v328
      %v404 = vsel %vm399, %v328, %v330
      %v405 = vsel %vm399, %v330, %v332
      %v406 = vsel %vm399, %v332, %v334
      %v407 = vsel %vm399, %v336, %v338
      %v408 = vsel %vm399, %v338, %v340
      %v409 = vsel %vm399, %v340, %v342
      %v410 = vsel %vm399, %v342, %v344
      %v411 = vsel %vm399, %v344, %v346
      %v412 = vsel %vm399, %v346, %v348
      %v413 = vsel %vm399, %v348, %v350
      %v414 = vsel %vm399, %v352, %v354
      %v415 = vsel %vm399, %v354, %v356
      %v416 = vsel %vm399, %v356, %v358
      %v417 = vsel %vm399, %v358, %v360
      %v418 = vsel %vm399, %v360, %v362
      %v419 = vsel %vm399, %v362, %v364
      %v420 = vsel %vm399, %v364, %v366
      %v421 = vsel %vm399, %v368, %v370
      %v422 = vsel %vm399, %v370, %v372
      %v423 = vsel %vm399, %v372, %v374
      %v424 = vsel %vm399, %v374, %v376
      %v425 = vsel %vm399, %v376, %v378
      %v426 = vsel %vm399, %v378, %v380
      %v427 = vsel %vm399, %v380, %v382
      %v428 = vsel %vm399, %v384, %v386
      %v429 = vsel %vm399, %v386, %v388
      %v430 = vsel %vm399, %v388, %v390
      %v431 = vsel %vm399, %v390, %v392
      %v432 = vsel %vm399, %v392, %v394
      %v433 = vsel %vm399, %v394, %v396
      %v434 = vsel %vm399, %v396, %v398
      %470 = vrot.lane.b32.xlu0 %v171, 64
      %v471 = vpop.permute.xlu0 %470
      %472 = vrot.lane.b32.xlu0 %v172, 64
      %v473 = vpop.permute.xlu0 %472
      %474 = vrot.lane.b32.xlu0 %v173, 64
      %v475 = vpop.permute.xlu0 %474
      %476 = vrot.lane.b32.xlu0 %v174, 64
      %v477 = vpop.permute.xlu0 %476
      %478 = vrot.lane.b32.xlu0 %v175, 64
      %v479 = vpop.permute.xlu0 %478
      %480 = vrot.lane.b32.xlu0 %v176, 64
      %v481 = vpop.permute.xlu0 %480
      %482 = vrot.lane.b32.xlu0 %v177, 64
      %v483 = vpop.permute.xlu0 %482
      %484 = vrot.lane.b32.xlu0 %v178, 64
      %v485 = vpop.permute.xlu0 %484
      %486 = vrot.lane.b32.xlu0 %v201, 64
      %v487 = vpop.permute.xlu0 %486
      %488 = vrot.lane.b32.xlu0 %v202, 64
      %v489 = vpop.permute.xlu0 %488
      %490 = vrot.lane.b32.xlu0 %v203, 64
      %v491 = vpop.permute.xlu0 %490
      %492 = vrot.lane.b32.xlu0 %v204, 64
      %v493 = vpop.permute.xlu0 %492
      %494 = vrot.lane.b32.xlu0 %v205, 64
      %v495 = vpop.permute.xlu0 %494
      %496 = vrot.lane.b32.xlu0 %v206, 64
      %v497 = vpop.permute.xlu0 %496
      %498 = vrot.lane.b32.xlu0 %v301, 64
      %v499 = vpop.permute.xlu0 %498
      %500 = vrot.lane.b32.xlu0 %v300, 64
      %v501 = vpop.permute.xlu0 %500
      %502 = vrot.lane.b32.xlu0 %v229, 64
      %v503 = vpop.permute.xlu0 %502
      %504 = vrot.lane.b32.xlu0 %v230, 64
      %v505 = vpop.permute.xlu0 %504
      %506 = vrot.lane.b32.xlu0 %v231, 64
      %v507 = vpop.permute.xlu0 %506
      %508 = vrot.lane.b32.xlu0 %v232, 64
      %v509 = vpop.permute.xlu0 %508
      %510 = vrot.lane.b32.xlu0 %v233, 64
      %v511 = vpop.permute.xlu0 %510
      %512 = vrot.lane.b32.xlu0 %v234, 64
      %v513 = vpop.permute.xlu0 %512
      %514 = vrot.lane.b32.xlu0 %v304, 64
      %v515 = vpop.permute.xlu0 %514
      %516 = vrot.lane.b32.xlu0 %v303, 64
      %v517 = vpop.permute.xlu0 %516
      %518 = vrot.lane.b32.xlu0 %v257, 64
      %v519 = vpop.permute.xlu0 %518
      %520 = vrot.lane.b32.xlu0 %v258, 64
      %v521 = vpop.permute.xlu0 %520
      %522 = vrot.lane.b32.xlu0 %v259, 64
      %v523 = vpop.permute.xlu0 %522
      %524 = vrot.lane.b32.xlu0 %v260, 64
      %v525 = vpop.permute.xlu0 %524
      %526 = vrot.lane.b32.xlu0 %v261, 64
      %v527 = vpop.permute.xlu0 %526
      %528 = vrot.lane.b32.xlu0 %v262, 64
      %v529 = vpop.permute.xlu0 %528
      %530 = vrot.lane.b32.xlu0 %v307, 64
      %v531 = vpop.permute.xlu0 %530
      %532 = vrot.lane.b32.xlu0 %v306, 64
      %v533 = vpop.permute.xlu0 %532
      %534 = vrot.lane.b32.xlu0 %v285, 64
      %v535 = vpop.permute.xlu0 %534
      %536 = vrot.lane.b32.xlu0 %v286, 64
      %v537 = vpop.permute.xlu0 %536
      %538 = vrot.lane.b32.xlu0 %v287, 64
      %v539 = vpop.permute.xlu0 %538
      %540 = vrot.lane.b32.xlu0 %v288, 64
      %v541 = vpop.permute.xlu0 %540
      %542 = vrot.lane.b32.xlu0 %v289, 64
      %v543 = vpop.permute.xlu0 %542
      %544 = vrot.lane.b32.xlu0 %v290, 64
      %v545 = vpop.permute.xlu0 %544
      %546 = vrot.lane.b32.xlu0 %v310, 64
      %v547 = vpop.permute.xlu0 %546
      %548 = vrot.lane.b32.xlu0 %v309, 64
      %v549 = vpop.permute.xlu0 %548
      %vm550 = vcmask 523264
      %v551 = vsel %vm550, %v471, %v473
      %v552 = vsel %vm550, %v473, %v475
      %v553 = vsel %vm550, %v475, %v477
      %v554 = vsel %vm550, %v477, %v479
      %v555 = vsel %vm550, %v479, %v481
      %v556 = vsel %vm550, %v481, %v483
      %v557 = vsel %vm550, %v483, %v485
      %v558 = vsel %vm550, %v487, %v489
      %v559 = vsel %vm550, %v489, %v491
      %v560 = vsel %vm550, %v491, %v493
      %v561 = vsel %vm550, %v493, %v495
      %v562 = vsel %vm550, %v495, %v497
      %v563 = vsel %vm550, %v497, %v499
      %v564 = vsel %vm550, %v499, %v501
      %v565 = vsel %vm550, %v503, %v505
      %v566 = vsel %vm550, %v505, %v507
      %v567 = vsel %vm550, %v507, %v509
      %v568 = vsel %vm550, %v509, %v511
      %v569 = vsel %vm550, %v511, %v513
      %v570 = vsel %vm550, %v513, %v515
      %v571 = vsel %vm550, %v515, %v517
      %v572 = vsel %vm550, %v519, %v521
      %v573 = vsel %vm550, %v521, %v523
      %v574 = vsel %vm550, %v523, %v525
      %v575 = vsel %vm550, %v525, %v527
      %v576 = vsel %vm550, %v527, %v529
      %v577 = vsel %vm550, %v529, %v531
      %v578 = vsel %vm550, %v531, %v533
      %v579 = vsel %vm550, %v535, %v537
      %v580 = vsel %vm550, %v537, %v539
      %v581 = vsel %vm550, %v539, %v541
      %v582 = vsel %vm550, %v541, %v543
      %v583 = vsel %vm550, %v543, %v545
      %v584 = vsel %vm550, %v545, %v547
      %v585 = vsel %vm550, %v547, %v549
      %621 = vrot.lane.b32.xlu0 %v171, 32
      %v622 = vpop.permute.xlu0 %621
      %623 = vrot.lane.b32.xlu0 %v172, 32
      %v624 = vpop.permute.xlu0 %623
      %625 = vrot.lane.b32.xlu0 %v173, 32
      %v626 = vpop.permute.xlu0 %625
      %627 = vrot.lane.b32.xlu0 %v174, 32
      %v628 = vpop.permute.xlu0 %627
      %629 = vrot.lane.b32.xlu0 %v175, 32
      %v630 = vpop.permute.xlu0 %629
      %631 = vrot.lane.b32.xlu0 %v176, 32
      %v632 = vpop.permute.xlu0 %631
      %633 = vrot.lane.b32.xlu0 %v177, 32
      %v634 = vpop.permute.xlu0 %633
      %635 = vrot.lane.b32.xlu0 %v178, 32
      %v636 = vpop.permute.xlu0 %635
      %637 = vrot.lane.b32.xlu0 %v201, 32
      %v638 = vpop.permute.xlu0 %637
      %639 = vrot.lane.b32.xlu0 %v202, 32
      %v640 = vpop.permute.xlu0 %639
      %641 = vrot.lane.b32.xlu0 %v203, 32
      %v642 = vpop.permute.xlu0 %641
      %643 = vrot.lane.b32.xlu0 %v204, 32
      %v644 = vpop.permute.xlu0 %643
      %645 = vrot.lane.b32.xlu0 %v205, 32
      %v646 = vpop.permute.xlu0 %645
      %647 = vrot.lane.b32.xlu0 %v206, 32
      %v648 = vpop.permute.xlu0 %647
      %649 = vrot.lane.b32.xlu0 %v301, 32
      %v650 = vpop.permute.xlu0 %649
      %651 = vrot.lane.b32.xlu0 %v300, 32
      %v652 = vpop.permute.xlu0 %651
      %653 = vrot.lane.b32.xlu0 %v229, 32
      %v654 = vpop.permute.xlu0 %653
      %655 = vrot.lane.b32.xlu0 %v230, 32
      %v656 = vpop.permute.xlu0 %655
      %657 = vrot.lane.b32.xlu0 %v231, 32
      %v658 = vpop.permute.xlu0 %657
      %659 = vrot.lane.b32.xlu0 %v232, 32
      %v660 = vpop.permute.xlu0 %659
      %661 = vrot.lane.b32.xlu0 %v233, 32
      %v662 = vpop.permute.xlu0 %661
      %663 = vrot.lane.b32.xlu0 %v234, 32
      %v664 = vpop.permute.xlu0 %663
      %665 = vrot.lane.b32.xlu0 %v304, 32
      %v666 = vpop.permute.xlu0 %665
      %667 = vrot.lane.b32.xlu0 %v303, 32
      %v668 = vpop.permute.xlu0 %667
      %669 = vrot.lane.b32.xlu0 %v257, 32
      %v670 = vpop.permute.xlu0 %669
      %671 = vrot.lane.b32.xlu0 %v258, 32
      %v672 = vpop.permute.xlu0 %671
      %673 = vrot.lane.b32.xlu0 %v259, 32
      %v674 = vpop.permute.xlu0 %673
      %675 = vrot.lane.b32.xlu0 %v260, 32
      %v676 = vpop.permute.xlu0 %675
      %677 = vrot.lane.b32.xlu0 %v261, 32
      %v678 = vpop.permute.xlu0 %677
      %679 = vrot.lane.b32.xlu0 %v262, 32
      %v680 = vpop.permute.xlu0 %679
      %681 = vrot.lane.b32.xlu0 %v307, 32
      %v682 = vpop.permute.xlu0 %681
      %683 = vrot.lane.b32.xlu0 %v306, 32
      %v684 = vpop.permute.xlu0 %683
      %685 = vrot.lane.b32.xlu0 %v285, 32
      %v686 = vpop.permute.xlu0 %685
      %687 = vrot.lane.b32.xlu0 %v286, 32
      %v688 = vpop.permute.xlu0 %687
      %689 = vrot.lane.b32.xlu0 %v287, 32
      %v690 = vpop.permute.xlu0 %689
      %691 = vrot.lane.b32.xlu0 %v288, 32
      %v692 = vpop.permute.xlu0 %691
      %693 = vrot.lane.b32.xlu0 %v289, 32
      %v694 = vpop.permute.xlu0 %693
      %695 = vrot.lane.b32.xlu0 %v290, 32
      %v696 = vpop.permute.xlu0 %695
      %697 = vrot.lane.b32.xlu0 %v310, 32
      %v698 = vpop.permute.xlu0 %697
      %699 = vrot.lane.b32.xlu0 %v309, 32
      %v700 = vpop.permute.xlu0 %699
      %vm701 = vcmask 261120
      %v702 = vsel %vm701, %v622, %v624
      %v703 = vsel %vm701, %v624, %v626
      %v704 = vsel %vm701, %v626, %v628
      %v705 = vsel %vm701, %v628, %v630
      %v706 = vsel %vm701, %v630, %v632
      %v707 = vsel %vm701, %v632, %v634
      %v708 = vsel %vm701, %v634, %v636
      %v709 = vsel %vm701, %v638, %v640
      %v710 = vsel %vm701, %v640, %v642
      %v711 = vsel %vm701, %v642, %v644
      %v712 = vsel %vm701, %v644, %v646
      %v713 = vsel %vm701, %v646, %v648
      %v714 = vsel %vm701, %v648, %v650
      %v715 = vsel %vm701, %v650, %v652
      %v716 = vsel %vm701, %v654, %v656
      %v717 = vsel %vm701, %v656, %v658
      %v718 = vsel %vm701, %v658, %v660
      %v719 = vsel %vm701, %v660, %v662
      %v720 = vsel %vm701, %v662, %v664
      %v721 = vsel %vm701, %v664, %v666
      %v722 = vsel %vm701, %v666, %v668
      %v723 = vsel %vm701, %v670, %v672
      %v724 = vsel %vm701, %v672, %v674
      %v725 = vsel %vm701, %v674, %v676
      %v726 = vsel %vm701, %v676, %v678
      %v727 = vsel %vm701, %v678, %v680
      %v728 = vsel %vm701, %v680, %v682
      %v729 = vsel %vm701, %v682, %v684
      %v730 = vsel %vm701, %v686, %v688
      %v731 = vsel %vm701, %v688, %v690
      %v732 = vsel %vm701, %v690, %v692
      %v733 = vsel %vm701, %v692, %v694
      %v734 = vsel %vm701, %v694, %v696
      %v735 = vsel %vm701, %v696, %v698
      %v736 = vsel %vm701, %v698, %v700
      %v772 = vld [vmem:[%s1] sm:$0x3]
      %v773 = vld [vmem:[#allocation2] sm:$0x1]
      %775 = vset.pattern.permute.xlu0 0
      %776 = vperm.xlu0 %775, %v773
      %v777 = vpop.permute.xlu0 %776
      %v779 = vlaneseq
      %v780 = vshrl.u32 %v779, 7
      %v781 = vsub.s32 0, %v780
      %v782 = vrot.slane %v777, %v781
      %v784 = vlaneseq
      %v785 = vshrl.u32 %v784, 7
      %v786 = vsub.s32 0, %v785
      %v787 = vrot.slane %v772, %v786
      %v788 = vlaneseq
      %v789 = vshrl.u32 %v788, 7
      %v790 = vsub.s32 1, %v789
      %v791 = vrot.slane %v772, %v790
      %vm793 = vcmask 588800
      %v794 = vsel %vm793, %v791, 0
      %796 = vmatprep.subr.mxu0 %v172
      %797 = vmatpush1.msra.mxu0 %v171
      %798 = vmatprep.subr.mxu0 %v202
      %799 = vmatpush1.msra.mxu0 %v201
      %800 = vmatprep.subr.mxu0 %v230
      %801 = vmatpush1.msra.mxu0 %v229
      %802 = vmatprep.subr.mxu0 %v258
      %803 = vmatpush1.msra.mxu0 %v257
      %804 = vmatprep.subr.mxu0 %v286
      %805 = vmatpush1.msra.mxu0 %v285
      %806 = vmatprep.subr.mxu0 %v401
      %807 = vmatpush1.msra.mxu0 %v400
      %808 = vmatprep.subr.mxu0 %v408
      %809 = vmatpush1.msra.mxu0 %v407
      %810 = vmatprep.subr.mxu0 %v415
      %811 = vmatpush1.msra.mxu0 %v414
      %812 = vmatprep.subr.mxu0 %v422
      %813 = vmatpush1.msra.mxu0 %v421
      %814 = vmatprep.subr.mxu0 %v429
      %815 = vmatpush1.msra.mxu0 %v428
      %816 = vmatprep.subr.mxu0 %v552
      %817 = vmatpush1.msra.mxu0 %v551
      %818 = vmatprep.subr.mxu0 %v559
      %819 = vmatpush1.msra.mxu0 %v558
      %820 = vmatprep.subr.mxu0 %v566
      %821 = vmatpush1.msra.mxu0 %v565
      %822 = vmatprep.subr.mxu0 %v573
      %823 = vmatpush1.msra.mxu0 %v572
      %824 = vmatprep.subr.mxu0 %v580
      %825 = vmatpush1.msra.mxu0 %v579
      %826 = vmatprep.subr.mxu0 %v703
      %827 = vmatpush1.msra.mxu0 %v702
      %828 = vmatprep.subr.mxu0 %v710
      %829 = vmatpush1.msra.mxu0 %v709
      %830 = vmatprep.subr.mxu0 %v717
      %831 = vmatpush1.msra.mxu0 %v716
      %832 = vmatprep.subr.mxu0 %v724
      %833 = vmatpush1.msra.mxu0 %v723
      %834 = vmatprep.subr.mxu0 %v731
      %835 = vmatpush1.msra.mxu0 %v730
      %836 = vmatprep.subr.mxu0 %v173
      %837 = vmatpush1.msra.mxu0 %v172
      %838 = vmatprep.subr.mxu0 %v203
      %839 = vmatpush1.msra.mxu0 %v202
      %840 = vmatprep.subr.mxu0 %v231
      %841 = vmatpush1.msra.mxu0 %v230
      %842 = vmatprep.subr.mxu0 %v259
      %843 = vmatpush1.msra.mxu0 %v258
      %844 = vmatprep.subr.mxu0 %v287
      %845 = vmatpush1.msra.mxu0 %v286
      %846 = vmatprep.subr.mxu0 0.0
      %847 = vmatpush1.msra.mxu0 0.0
      %848 = vmatprep.subr.mxu0 0.0
      %849 = vmatpush1.msra.mxu0 0.0
      %850 = vmatprep.subr.mxu0 0.0
      %851 = vmatpush1.msra.mxu0 0.0
      %852 = vmatprep.subr.mxu0 0.0
      %853 = vmatpush1.msra.mxu0 0.0
      %854 = vmatprep.subr.mxu0 0.0
      %855 = vmatpush1.msra.mxu0 0.0
      %856 = vmatprep.subr.mxu0 0.0
      %857 = vmatpush1.msra.mxu0 0.0
      %858 = vmatprep.subr.mxu0 0.0
      %859 = vmatpush1.msra.mxu0 0.0
      %860 = vmatprep.mubr.f32.mxu0 %v794
      %861 = vmatmul.mubr.f32.gmra.mrb[0].mxu0 %v787
      %v862 = vpop.f32.mrb[0].mxu0
      %v863 = vadd.f32 %v782, %v862
      %v864 = vpop.f32.mrb[0].mxu0
      %v865 = vadd.f32 %v782, %v864
      %866 = vdwg.mxu0
      %867 = vmatprep.subr.mxu0 %v174
      %868 = vmatpush1.msra.mxu0 %v173
      %869 = vmatprep.subr.mxu0 %v204
      %870 = vmatpush1.msra.mxu0 %v203
      %871 = vmatprep.subr.mxu0 %v232
      %872 = vmatpush1.msra.mxu0 %v231
      %873 = vmatprep.subr.mxu0 %v260
      %874 = vmatpush1.msra.mxu0 %v259
      %875 = vmatprep.subr.mxu0 %v288
      %876 = vmatpush1.msra.mxu0 %v287
      %877 = vmatprep.subr.mxu0 %v403
      %878 = vmatpush1.msra.mxu0 %v402
      %879 = vmatprep.subr.mxu0 %v410
      %880 = vmatpush1.msra.mxu0 %v409
      %881 = vmatprep.subr.mxu0 %v417
      %882 = vmatpush1.msra.mxu0 %v416
      %883 = vmatprep.subr.mxu0 %v424
      %884 = vmatpush1.msra.mxu0 %v423
      %885 = vmatprep.subr.mxu0 %v431
      %886 = vmatpush1.msra.mxu0 %v430
      %887 = vmatprep.subr.mxu0 %v554
      %888 = vmatpush1.msra.mxu0 %v553
      %889 = vmatprep.subr.mxu0 %v561
      %890 = vmatpush1.msra.mxu0 %v560
      %891 = vmatprep.subr.mxu0 %v568
      %892 = vmatpush1.msra.mxu0 %v567
      %893 = vmatprep.subr.mxu0 %v575
      %894 = vmatpush1.msra.mxu0 %v574
      %895 = vmatprep.subr.mxu0 %v582
      %896 = vmatpush1.msra.mxu0 %v581
      %897 = vmatprep.subr.mxu0 %v705
      %898 = vmatpush1.msra.mxu0 %v704
      %899 = vmatprep.subr.mxu0 %v712
      %900 = vmatpush1.msra.mxu0 %v711
      %901 = vmatprep.subr.mxu0 %v719
      %902 = vmatpush1.msra.mxu0 %v718
      %903 = vmatprep.subr.mxu0 %v726
      %904 = vmatpush1.msra.mxu0 %v725
      %905 = vmatprep.subr.mxu0 %v733
      %906 = vmatpush1.msra.mxu0 %v732
      %907 = vmatprep.subr.mxu0 %v175
      %908 = vmatpush1.msra.mxu0 %v174
      %909 = vmatprep.subr.mxu0 %v205
      %910 = vmatpush1.msra.mxu0 %v204
      %911 = vmatprep.subr.mxu0 %v233
      %912 = vmatpush1.msra.mxu0 %v232
      %913 = vmatprep.subr.mxu0 %v261
      %914 = vmatpush1.msra.mxu0 %v260
      %915 = vmatprep.subr.mxu0 %v289
      %916 = vmatpush1.msra.mxu0 %v288
      %917 = vmatprep.subr.mxu0 0.0
      %918 = vmatpush1.msra.mxu0 0.0
      %919 = vmatprep.subr.mxu0 0.0
      %920 = vmatpush1.msra.mxu0 0.0
      %921 = vmatprep.subr.mxu0 0.0
      %922 = vmatpush1.msra.mxu0 0.0
      %923 = vmatprep.subr.mxu0 0.0
      %924 = vmatpush1.msra.mxu0 0.0
      %925 = vmatprep.subr.mxu0 0.0
      %926 = vmatpush1.msra.mxu0 0.0
      %927 = vmatprep.subr.mxu0 0.0
      %928 = vmatpush1.msra.mxu0 0.0
      %929 = vmatprep.subr.mxu0 0.0
      %930 = vmatpush1.msra.mxu0 0.0
      %931 = vmatprep.mubr.f32.mxu0 %v794
      %932 = vmatmul.mubr.f32.gmra.mrb[0].mxu0 %v787
      %v933 = vpop.f32.mrb[0].mxu0
      %v934 = vadd.f32 %v782, %v933
      %v935 = vpop.f32.mrb[0].mxu0
      %v936 = vadd.f32 %v782, %v935
      %937 = vdwg.mxu0
      %938 = vmatprep.subr.mxu0 %v176
      %939 = vmatpush1.msra.mxu0 %v175
      %940 = vmatprep.subr.mxu0 %v206
      %941 = vmatpush1.msra.mxu0 %v205
      %942 = vmatprep.subr.mxu0 %v234
      %943 = vmatpush1.msra.mxu0 %v233
      %944 = vmatprep.subr.mxu0 %v262
      %945 = vmatpush1.msra.mxu0 %v261
      %946 = vmatprep.subr.mxu0 %v290
      %947 = vmatpush1.msra.mxu0 %v289
      %948 = vmatprep.subr.mxu0 %v405
      %949 = vmatpush1.msra.mxu0 %v404
      %950 = vmatprep.subr.mxu0 %v412
      %951 = vmatpush1.msra.mxu0 %v411
      %952 = vmatprep.subr.mxu0 %v419
      %953 = vmatpush1.msra.mxu0 %v418
      %954 = vmatprep.subr.mxu0 %v426
      %955 = vmatpush1.msra.mxu0 %v425
      %956 = vmatprep.subr.mxu0 %v433
      %957 = vmatpush1.msra.mxu0 %v432
      %958 = vmatprep.subr.mxu0 %v556
      %959 = vmatpush1.msra.mxu0 %v555
      %960 = vmatprep.subr.mxu0 %v563
      %961 = vmatpush1.msra.mxu0 %v562
      %962 = vmatprep.subr.mxu0 %v570
      %963 = vmatpush1.msra.mxu0 %v569
      %964 = vmatprep.subr.mxu0 %v577
      %965 = vmatpush1.msra.mxu0 %v576
      %966 = vmatprep.subr.mxu0 %v584
      %967 = vmatpush1.msra.mxu0 %v583
      %968 = vmatprep.subr.mxu0 %v707
      %969 = vmatpush1.msra.mxu0 %v706
      %970 = vmatprep.subr.mxu0 %v714
      %971 = vmatpush1.msra.mxu0 %v713
      %972 = vmatprep.subr.mxu0 %v721
      %973 = vmatpush1.msra.mxu0 %v720
      %974 = vmatprep.subr.mxu0 %v728
      %975 = vmatpush1.msra.mxu0 %v727
      %976 = vmatprep.subr.mxu0 %v735
      %977 = vmatpush1.msra.mxu0 %v734
      %978 = vmatprep.subr.mxu0 %v177
      %979 = vmatpush1.msra.mxu0 %v176
      %980 = vmatprep.subr.mxu0 %v301
      %981 = vmatpush1.msra.mxu0 %v206
      %982 = vmatprep.subr.mxu0 %v304
      %983 = vmatpush1.msra.mxu0 %v234
      %984 = vmatprep.subr.mxu0 %v307
      %985 = vmatpush1.msra.mxu0 %v262
      %986 = vmatprep.subr.mxu0 %v310
      %987 = vmatpush1.msra.mxu0 %v290
      %988 = vmatprep.subr.mxu0 0.0
      %989 = vmatpush1.msra.mxu0 0.0
      %990 = vmatprep.subr.mxu0 0.0
      %991 = vmatpush1.msra.mxu0 0.0
      %992 = vmatprep.subr.mxu0 0.0
      %993 = vmatpush1.msra.mxu0 0.0
      %994 = vmatprep.subr.mxu0 0.0
      %995 = vmatpush1.msra.mxu0 0.0
      %996 = vmatprep.subr.mxu0 0.0
      %997 = vmatpush1.msra.mxu0 0.0
      %998 = vmatprep.subr.mxu0 0.0
      %999 = vmatpush1.msra.mxu0 0.0
      %1000 = vmatprep.subr.mxu0 0.0
      %1001 = vmatpush1.msra.mxu0 0.0
      %1002 = vmatprep.mubr.f32.mxu0 %v794
      %1003 = vmatmul.mubr.f32.gmra.mrb[0].mxu0 %v787
      %v1004 = vpop.f32.mrb[0].mxu0
      %v1005 = vadd.f32 %v782, %v1004
      %v1006 = vpop.f32.mrb[0].mxu0
      %v1007 = vadd.f32 %v782, %v1006
      %1008 = vdwg.mxu0
      %1009 = vmatprep.subr.mxu0 0.0
      %1010 = vmatpush1.msra.mxu0 %v177
      %1011 = vmatprep.subr.mxu0 0.0
      %1012 = vmatpush1.msra.mxu0 %v199
      %1013 = vmatprep.subr.mxu0 0.0
      %1014 = vmatpush1.msra.mxu0 %v227
      %1015 = vmatprep.subr.mxu0 0.0
      %1016 = vmatpush1.msra.mxu0 %v255
      %1017 = vmatprep.subr.mxu0 0.0
      %1018 = vmatpush1.msra.mxu0 %v283
      %1019 = vmatprep.subr.mxu0 0.0
      %1020 = vmatpush1.msra.mxu0 %v406
      %1021 = vmatprep.subr.mxu0 0.0
      %1022 = vmatpush1.msra.mxu0 %v413
      %1023 = vmatprep.subr.mxu0 0.0
      %1024 = vmatpush1.msra.mxu0 %v420
      %1025 = vmatprep.subr.mxu0 0.0
      %1026 = vmatpush1.msra.mxu0 %v427
      %1027 = vmatprep.subr.mxu0 0.0
      %1028 = vmatpush1.msra.mxu0 %v434
      %1029 = vmatprep.subr.mxu0 0.0
      %1030 = vmatpush1.msra.mxu0 %v557
      %1031 = vmatprep.subr.mxu0 0.0
      %1032 = vmatpush1.msra.mxu0 %v564
      %1033 = vmatprep.subr.mxu0 0.0
      %1034 = vmatpush1.msra.mxu0 %v571
      %1035 = vmatprep.subr.mxu0 0.0
      %1036 = vmatpush1.msra.mxu0 %v578
      %1037 = vmatprep.subr.mxu0 0.0
      %1038 = vmatpush1.msra.mxu0 %v585
      %1039 = vmatprep.subr.mxu0 0.0
      %1040 = vmatpush1.msra.mxu0 %v708
      %1041 = vmatprep.subr.mxu0 0.0
      %1042 = vmatpush1.msra.mxu0 %v715
      %1043 = vmatprep.subr.mxu0 0.0
      %1044 = vmatpush1.msra.mxu0 %v722
      %1045 = vmatprep.subr.mxu0 0.0
      %1046 = vmatpush1.msra.mxu0 %v729
      %1047 = vmatprep.subr.mxu0 0.0
      %1048 = vmatpush1.msra.mxu0 %v736
      %1049 = vmatprep.subr.mxu0 0.0
      %1050 = vmatpush1.msra.mxu0 %v178
      %1051 = vmatprep.subr.mxu0 0.0
      %1052 = vmatpush1.msra.mxu0 %v300
      %1053 = vmatprep.subr.mxu0 0.0
      %1054 = vmatpush1.msra.mxu0 %v303
      %1055 = vmatprep.subr.mxu0 0.0
      %1056 = vmatpush1.msra.mxu0 %v306
      %1057 = vmatprep.subr.mxu0 0.0
      %1058 = vmatpush1.msra.mxu0 %v309
      %1059 = vmatprep.subr.mxu0 0.0
      %1060 = vmatpush1.msra.mxu0 0.0
      %1061 = vmatprep.subr.mxu0 0.0
      %1062 = vmatpush1.msra.mxu0 0.0
      %1063 = vmatprep.subr.mxu0 0.0
      %1064 = vmatpush1.msra.mxu0 0.0
      %1065 = vmatprep.subr.mxu0 0.0
      %1066 = vmatpush1.msra.mxu0 0.0
      %1067 = vmatprep.subr.mxu0 0.0
      %1068 = vmatpush1.msra.mxu0 0.0
      %1069 = vmatprep.subr.mxu0 0.0
      %1070 = vmatpush1.msra.mxu0 0.0
      %1071 = vmatprep.subr.mxu0 0.0
      %1072 = vmatpush1.msra.mxu0 0.0
      %1073 = vmatprep.mubr.f32.mxu0 %v794
      %1074 = vmatmul.mubr.f32.gmra.mrb[0].mxu0 %v787
      %v1075 = vpop.f32.mrb[0].mxu0
      %v1076 = vadd.f32 %v782, %v1075
      %v1077 = vpop.f32.mrb[0].mxu0
      %1078 = vdwg.mxu0
      %v1079 = vtanh.pop %v863
      %v1080 = vtanh.pop %v865
      %v1081 = vtanh.pop %v934
      %v1082 = vtanh.pop %v936
      %v1083 = vtanh.pop %v1005
      %v1084 = vtanh.pop %v1007
      %v1085 = vtanh.pop %v1076
      %v1093 = vcombine.low %v1079, %v1080
      %v1094 = vcombine.low %v1081, %v1082
      %v1095 = vcombine.low %v1083, %v1084
      %v1097 = vunpack.c.l.s4 1966171168
      %v1098 = vunpack.c.0.s8 %v1097
      %v1099 = vlaneseq
      %v1100 = vshrl.u32 %v1099, 7
      %v1101 = vsub.s32 %v1098, %v1100
      %v1102 = vrot.slane %v1093, %v1101
      %v1104 = vunpack.c.l.s4 1966171168
      %v1105 = vunpack.c.0.s8 %v1104
      %v1106 = vlaneseq
      %v1107 = vshrl.u32 %v1106, 7
      %v1108 = vsub.s32 %v1105, %v1107
      %v1109 = vrot.slane %v1094, %v1108
      %v1111 = vunpack.c.l.s4 1966171168
      %v1112 = vunpack.c.0.s8 %v1111
      %v1113 = vlaneseq
      %v1114 = vshrl.u32 %v1113, 7
      %v1115 = vsub.s32 %v1112, %v1114
      %v1116 = vrot.slane %v1095, %v1115
      %v1118 = vunpack.c.l.s4 1966171168
      %v1119 = vunpack.c.0.s8 %v1118
      %v1120 = vlaneseq
      %v1121 = vshrl.u32 %v1120, 7
      %v1122 = vsub.s32 %v1119, %v1121
      %v1123 = vrot.slane %v1085, %v1122
      %v1124 = vcombine.low %v1102, %v1109
      %v1125 = vcombine.low %v1116, %v1123
      %v1127 = vunpack.c.l.s4 1966171168
      %v1128 = vunpack.c.0.s8 %v1127
      %v1129 = vlaneseq
      %v1130 = vshrl.u32 %v1129, 7
      %v1131 = vsub.s32 %v1128, %v1130
      %v1132 = vrot.slane %v1124, %v1131
      %v1134 = vunpack.c.l.s4 1966171168
      %v1135 = vunpack.c.0.s8 %v1134
      %v1136 = vlaneseq
      %v1137 = vshrl.u32 %v1136, 7
      %v1138 = vsub.s32 %v1135, %v1137
      %v1139 = vrot.slane %v1125, %v1138
      %v1140 = vcombine.low %v1132, %v1139
      %v1142 = vlaneseq
      %vm1143 = vcmp.ge.s32.totalorder %v1142, 0
      %vm1144 = vcmp.lt.s32.totalorder %v1142, 892
      %vm1145 = vmand %vm1143, %vm1144
      %1146 = vst.msk [vmem:[%s170] sm:$0x7f] %vm1145, %v1140
      %p1147 = scmp.lt.s32.totalorder %s16, 1
      %s1148 = scalar_select %p1147, %s16, 1
      %s1149 = smul.addr %s1148, 7
      %s1150 = scalar_lea.vmem %s3, %s1149
      // Predicated region
      $region33: #{compressor_forward.7} parent=31 // pred_check
        %p1151 = pneg %p102
      $region34: #{compressor_forward.7} parent=31 // pred_check_branch
        %1153 = sbr.rel (%p1151) target = $region36
      $region35: #{compressor_forward.7} parent=31 // pred_region
        _
      $region36: #{compressor_forward.7} parent=31 // pred_fallthru
        _
    $region32: #{compressor_forward.7} parent=5 // pred_fallthru
      _
    %p1154 = scmp.le.s32.totalorder 2, %s11
    // Predicated region
    $region37: #{compressor_forward.7} parent=5 // pred_check
      %p1155 = pneg %p1154
    $region38: #{compressor_forward.7} parent=5 // pred_check_branch
      %1157 = sbr.rel (%p1155) target = $region40
    $region39: #{compressor_forward.7} parent=5 // pred_region
      %s1158 = ssub.s32 %s11, 2
      // Predicated region
      $region41: #{compressor_forward.7} parent=39 // pred_check
        %p1159 = pneg %p108
      $region42: #{compressor_forward.7} parent=39 // pred_check_branch
        %1161 = sbr.rel (%p1159) target = $region44
      $region43: #{compressor_forward.7} parent=39 // pred_region
        %p1162 = scmp.lt.s32.totalorder %s17, 1
        %s1163 = scalar_select %p1162, %s17, 1
        %s1164 = smul.addr %s1163, 7
        %s1165 = scalar_lea.vmem %s3, %s1164
      $region44: #{compressor_forward.7} parent=39 // pred_fallthru
        _
    $region40: #{compressor_forward.7} parent=5 // pred_fallthru
      _
  $region6: #{compressor_forward.7} parent=0 // loop_footer
    %s15 = sadd.s32 1, %s11
  $region7: #{compressor_forward.7} parent=0 // loop_footer_branch
    %10 = sbr.rel target = $region3
  $region8: #{compressor_forward.7} parent=0 // loop_exit
    _

// kernel: compressor_forward.6
$region0: #{compressor_forward.6}
  #allocation0 [shape = 'u32[]', space=smem, size = 0x4, offset = 0x4, fixed_abs, tag = 'smem constant byte address 0x4 - core index']
  #allocation1 [shape = 'u32[144,128]{1,0:T(1,128)}', space=vmem, size = 0x12000, scoped, tag = 'internal scratch']
  %s0 = inlined_call_operand.vmem [shape: f32[2,16,1089], index: 0, kind: input, shape index: {}]
  %s1 = inlined_call_operand.vmem [shape: f32[8,1024], index: 1, kind: input, shape index: {}]
  %s2 = inlined_call_operand.vmem [shape: f32[8,1], index: 2, kind: input, shape index: {}]
  %s3 = inlined_call_operand.vmem [shape: f32[2,8,851], index: 3, kind: output, shape index: {}]
  %s4 = sld [smem:[#allocation0]]
  $region45: #{compressor_forward.6} parent=0
    _
  %s6 = ssub.s32 1, %s4
  %s7 = scalar_select 0, %s6, %s4
  loop: start=0, step=1, limit=4
  $region2: #{compressor_forward.6} parent=0 // loop_pre_header
    _
  $region3: #{compressor_forward.6} parent=0 // loop_header
    %s9 = sphi 0, %s13
    %p10 = scmp.ge.s32.totalorder %s9, 4
    %s19 = sphi 0, %s21
    %s22 = sphi 0, %s19
    %s23 = sphi 0, %s22
    %s39 = sphi 0, %s23
    %s43 = sphi 0, %s43
    %s45 = sphi 0, %s43
    %s46 = sphi 0, %s45
    %s60 = sphi 0, %s46
    %s64 = sphi 0, %s64
    %s66 = sphi 0, %s64
    %s67 = sphi 0, %s66
    %s81 = sphi 0, %s67
    %s87 = sphi 0, %s89
    %s90 = sphi 0, %s87
    %s91 = sphi 0, %s90
    %s107 = sphi 0, %s91
  $region4: #{compressor_forward.6} parent=0 // loop_header_branch
    %12 = sbr.rel (%p10) target = $region8
  $region5: #{compressor_forward.6} parent=0 // loop_body
    %s14 = ssub.s32 %s9, 1
    %s15 = ssub.s32 %s9, 2
    %s16 = sadd.s32 %s9, 1
    %s17 = ssub.s32 %s9, %s16
    %p18 = scmp.eq.s32.totalorder %s17, 0
    %s20 = sadd.s32 %s19, 1
    %s21 = scalar_select %p18, %s19, %s20
    %p24 = pneg %p18
    %p25 = scmp.eq.s32.totalorder %s9, 1
    %p26 = por %p24, %p25
    %p27 = scmp.ne.s32.totalorder %s19, %s22
    %p28 = scmp.eq.s32.totalorder %s9, 0
    %p29 = por %p27, %p28
    %p30 = scmp.ne.s32.totalorder %s19, %s22
    %p31 = scmp.eq.s32.totalorder %s14, 1
    %p32 = por %p30, %p31
    %p33 = scmp.ne.s32.totalorder %s22, %s23
    %p34 = scmp.eq.s32.totalorder %s14, 0
    %p35 = por %p33, %p34
    %p36 = scmp.ne.s32.totalorder %s22, %s23
    %p37 = scmp.eq.s32.totalorder %s15, 1
    %p38 = por %p36, %p37
    %p40 = scmp.ne.s32.totalorder %s23, %s39
    %p41 = scmp.eq.s32.totalorder %s15, 0
    %p42 = por %p40, %p41
    %s44 = sadd.s32 %s43, 1
    %p47 = scmp.eq.s32.totalorder %s9, 1
    %p48 = scmp.ne.s32.totalorder %s43, %s45
    %p49 = scmp.eq.s32.totalorder %s9, 0
    %p50 = por %p48, %p49
    %p51 = scmp.ne.s32.totalorder %s43, %s45
    %p52 = scmp.eq.s32.totalorder %s14, 1
    %p53 = por %p51, %p52
    %p54 = scmp.ne.s32.totalorder %s45, %s46
    %p55 = scmp.eq.s32.totalorder %s14, 0
    %p56 = por %p54, %p55
    %p57 = scmp.ne.s32.totalorder %s45, %s46
    %p58 = scmp.eq.s32.totalorder %s15, 1
    %p59 = por %p57, %p58
    %p61 = scmp.ne.s32.totalorder %s46, %s60
    %p62 = scmp.eq.s32.totalorder %s15, 0
    %p63 = por %p61, %p62
    %s65 = sadd.s32 %s64, 1
    %p68 = scmp.eq.s32.totalorder %s9, 1
    %p69 = scmp.ne.s32.totalorder %s64, %s66
    %p70 = scmp.eq.s32.totalorder %s9, 0
    %p71 = por %p69, %p70
    %p72 = scmp.ne.s32.totalorder %s64, %s66
    %p73 = scmp.eq.s32.totalorder %s14, 1
    %p74 = por %p72, %p73
    %p75 = scmp.ne.s32.totalorder %s66, %s67
    %p76 = scmp.eq.s32.totalorder %s14, 0
    %p77 = por %p75, %p76
    %p78 = scmp.ne.s32.totalorder %s66, %s67
    %p79 = scmp.eq.s32.totalorder %s15, 1
    %p80 = por %p78, %p79
    %p82 = scmp.ne.s32.totalorder %s67, %s81
    %p83 = scmp.eq.s32.totalorder %s15, 0
    %p84 = por %p82, %p83
    %s85 = ssub.s32 %s9, %s16
    %p86 = scmp.eq.s32.totalorder %s85, 0
    %s88 = sadd.s32 %s87, 1
    %s89 = scalar_select %p86, %s87, %s88
    %p92 = pneg %p86
    %p93 = scmp.eq.s32.totalorder %s9, 1
    %p94 = por %p92, %p93
    %p95 = scmp.ne.s32.totalorder %s87, %s90
    %p96 = scmp.eq.s32.totalorder %s9, 0
    %p97 = por %p95, %p96
    %p98 = scmp.ne.s32.totalorder %s87, %s90
    %p99 = scmp.eq.s32.totalorder %s14, 1
    %p100 = por %p98, %p99
    %p101 = scmp.ne.s32.totalorder %s90, %s91
    %p102 = scmp.eq.s32.totalorder %s14, 0
    %p103 = por %p101, %p102
    %p104 = scmp.ne.s32.totalorder %s90, %s91
    %p105 = scmp.eq.s32.totalorder %s15, 1
    %p106 = por %p104, %p105
    %p108 = scmp.ne.s32.totalorder %s91, %s107
    %p109 = scmp.eq.s32.totalorder %s15, 0
    %p110 = por %p108, %p109
    %p111 = scmp.le.s32.totalorder 1, %s9
    %p112 = scmp.lt.s32.totalorder %s9, 3
    %p113 = pnand %p111, %p112
    %p114 = pneg %p113
    // Predicated region
    $region9: #{compressor_forward.6} parent=5 // pred_check
      _
    $region10: #{compressor_forward.6} parent=5 // pred_check_branch
      %116 = sbr.rel (%p113) target = $region12
    $region11: #{compressor_forward.6} parent=5 // pred_region
      %s117 = ssub.s32 %s9, 1
      // Predicated region
      $region13: #{compressor_forward.6} parent=11 // pred_check
        %p118 = pneg %p56
      $region14: #{compressor_forward.6} parent=11 // pred_check_branch
        %120 = sbr.rel (%p118) target = $region16
      $region15: #{compressor_forward.6} parent=11 // pred_region
        _
      $region16: #{compressor_forward.6} parent=11 // pred_fallthru
        _
      // Predicated region
      $region17: #{compressor_forward.6} parent=11 // pred_check
        %p121 = pneg %p77
      $region18: #{compressor_forward.6} parent=11 // pred_check_branch
        %123 = sbr.rel (%p121) target = $region20
      $region19: #{compressor_forward.6} parent=11 // pred_region
        _
      $region20: #{compressor_forward.6} parent=11 // pred_fallthru
        _
    $region12: #{compressor_forward.6} parent=5 // pred_fallthru
      _
    %p124 = scmp.lt.s32.totalorder %s9, 2
    // Predicated region
    $region21: #{compressor_forward.6} parent=5 // pred_check
      %p125 = pneg %p124
    $region22: #{compressor_forward.6} parent=5 // pred_check_branch
      %127 = sbr.rel (%p125) target = $region24
    $region23: #{compressor_forward.6} parent=5 // pred_region
      // Predicated region
      $region25: #{compressor_forward.6} parent=23 // pred_check
        %p128 = pneg %p29
      $region26: #{compressor_forward.6} parent=23 // pred_check_branch
        %130 = sbr.rel (%p128) target = $region28
      $region27: #{compressor_forward.6} parent=23 // pred_region
        %p131 = scmp.lt.s32.totalorder %s9, 1
        %s132 = scalar_select %p131, %s9, 1
        %s133 = smul.addr %s132, 18
        %s134 = smul.addr %s133, 8
        %s135 = scalar_lea.vmem %s0, %s134
      $region28: #{compressor_forward.6} parent=23 // pred_fallthru
        _
    $region24: #{compressor_forward.6} parent=5 // pred_fallthru
      _
    %p136 = scmp.le.s32.totalorder 1, %s9
    %p137 = scmp.lt.s32.totalorder %s9, 3
    %p138 = pnand %p136, %p137
    %p139 = pneg %p138
    // Predicated region
    $region29: #{compressor_forward.6} parent=5 // pred_check
      _
    $region30: #{compressor_forward.6} parent=5 // pred_check_branch
      %141 = sbr.rel (%p138) target = $region32
    $region31: #{compressor_forward.6} parent=5 // pred_region
      %s142 = ssub.s32 %s9, 1
      %p143 = scmp.lt.s32.totalorder %s14, 1
      %s144 = scalar_select %p143, %s14, 1
      %s145 = smul.addr %s144, 18
      %s146 = smul.addr %s145, 8
      %s147 = scalar_lea.vmem %s0, %s146
      %p148 = pneg %p35
      %p149 = pneg %p32
      %p150 = pneg %p56
      %p151 = pneg %p53
      %p152 = pneg %p77
      %p153 = pneg %p74
      %p154 = pneg %p103
      %p155 = pneg %p100
      %p156 = scmp.lt.s32.totalorder %s14, 1
      %s157 = scalar_select %p156, %s14, 1
      %s158 = smul.addr %s157, 7
      %s159 = smul.addr %s158, 8
      %s160 = scalar_lea.vmem %s3, %s159
      %p161 = scmp.lt.s32.totalorder %s14, 1
      %s162 = scalar_select %p161, %s14, 1
      %s163 = smul.addr %s162, 18
      %s164 = smul.addr %s163, 8
      %s165 = scalar_lea.vmem %s0, %s164
      %p166 = scmp.lt.s32.totalorder %s14, 1
      %s167 = scalar_select %p166, %s14, 1
      %s168 = smul.addr %s167, 7
      %s169 = smul.addr %s168, 8
      %s170 = scalar_lea.vmem %s3, %s169
      %v171 = vld [vmem:[%s165] sm:$0xff]
      %v172 = vld [vmem:[%s165 + $0x8] sm:$0xff]
      %v173 = vld [vmem:[%s165 + $0x10] sm:$0xff]
      %v174 = vld [vmem:[%s165 + $0x18] sm:$0xff]
      %v175 = vld [vmem:[%s165 + $0x20] sm:$0xff]
      %v176 = vld [vmem:[%s165 + $0x28] sm:$0xff]
      %v177 = vld [vmem:[%s165 + $0x30] sm:$0xff]
      %v178 = vld [vmem:[%s165 + $0x38] sm:$0xff]
      %v179 = vld [vmem:[%s165 + $0x40] sm:$0xff]
      %v180 = vld [vmem:[%s165 + $0x48] sm:$0xff]
      %v181 = vld [vmem:[%s165 + $0x50] sm:$0xff]
      %v182 = vld [vmem:[%s165 + $0x58] sm:$0xff]
      %v183 = vld [vmem:[%s165 + $0x60] sm:$0xff]
      %v184 = vld [vmem:[%s165 + $0x68] sm:$0xff]
      %v185 = vld [vmem:[%s165 + $0x70] sm:$0xff]
      %v186 = vld [vmem:[%s165 + $0x78] sm:$0xff]
      %v187 = vld [vmem:[%s165 + $0x80] sm:$0xff]
      %v188 = vld [vmem:[%s165 + $0x88] sm:$0xff]
      %203 = vrot.lane.b32.xlu0 %v171, 127
      %v204 = vpop.permute.xlu0 %203
      %205 = vrot.lane.b32.xlu0 %v172, 127
      %v206 = vpop.permute.xlu0 %205
      %207 = vrot.lane.b32.xlu0 %v173, 127
      %v208 = vpop.permute.xlu0 %207
      %209 = vrot.lane.b32.xlu0 %v174, 127
      %v210 = vpop.permute.xlu0 %209
      %211 = vrot.lane.b32.xlu0 %v175, 127
      %v212 = vpop.permute.xlu0 %211
      %213 = vrot.lane.b32.xlu0 %v176, 127
      %v214 = vpop.permute.xlu0 %213
      %215 = vrot.lane.b32.xlu0 %v177, 127
      %v216 = vpop.permute.xlu0 %215
      %217 = vrot.lane.b32.xlu0 %v180, 127
      %v218 = vpop.permute.xlu0 %217
      %219 = vrot.lane.b32.xlu0 %v181, 127
      %v220 = vpop.permute.xlu0 %219
      %221 = vrot.lane.b32.xlu0 %v182, 127
      %v222 = vpop.permute.xlu0 %221
      %223 = vrot.lane.b32.xlu0 %v183, 127
      %v224 = vpop.permute.xlu0 %223
      %225 = vrot.lane.b32.xlu0 %v184, 127
      %v226 = vpop.permute.xlu0 %225
      %227 = vrot.lane.b32.xlu0 %v185, 127
      %v228 = vpop.permute.xlu0 %227
      %229 = vrot.lane.b32.xlu0 %v186, 127
      %v230 = vpop.permute.xlu0 %229
      %vm231 = vcmask 1039360
      %v232 = vsel %vm231, %v204, %v206
      %v233 = vsel %vm231, %v206, %v208
      %v234 = vsel %vm231, %v208, %v210
      %v235 = vsel %vm231, %v210, %v212
      %v236 = vsel %vm231, %v212, %v214
      %v237 = vsel %vm231, %v214, %v216
      %v238 = vsel %vm231, %v218, %v220
      %v239 = vsel %vm231, %v220, %v222
      %v240 = vsel %vm231, %v222, %v224
      %v241 = vsel %vm231, %v224, %v226
      %v242 = vsel %vm231, %v226, %v228
      %v243 = vsel %vm231, %v228, %v230
      %258 = vrot.lane.b32.xlu0 %v171, 126
      %v259 = vpop.permute.xlu0 %258
      %260 = vrot.lane.b32.xlu0 %v172, 126
      %v261 = vpop.permute.xlu0 %260
      %262 = vrot.lane.b32.xlu0 %v173, 126
      %v263 = vpop.permute.xlu0 %262
      %264 = vrot.lane.b32.xlu0 %v174, 126
      %v265 = vpop.permute.xlu0 %264
      %266 = vrot.lane.b32.xlu0 %v175, 126
      %v267 = vpop.permute.xlu0 %266
      %268 = vrot.lane.b32.xlu0 %v176, 126
      %v269 = vpop.permute.xlu0 %268
      %270 = vrot.lane.b32.xlu0 %v177, 126
      %v271 = vpop.permute.xlu0 %270
      %272 = vrot.lane.b32.xlu0 %v180, 126
      %v273 = vpop.permute.xlu0 %272
      %274 = vrot.lane.b32.xlu0 %v181, 126
      %v275 = vpop.permute.xlu0 %274
      %276 = vrot.lane.b32.xlu0 %v182, 126
      %v277 = vpop.permute.xlu0 %276
      %278 = vrot.lane.b32.xlu0 %v183, 126
      %v279 = vpop.permute.xlu0 %278
      %280 = vrot.lane.b32.xlu0 %v184, 126
      %v281 = vpop.permute.xlu0 %280
      %282 = vrot.lane.b32.xlu0 %v185, 126
      %v283 = vpop.permute.xlu0 %282
      %284 = vrot.lane.b32.xlu0 %v186, 126
      %v285 = vpop.permute.xlu0 %284
      %vm286 = vcmask 1031168
      %v287 = vsel %vm286, %v259, %v261
      %v288 = vsel %vm286, %v261, %v263
      %v289 = vsel %vm286, %v263, %v265
      %v290 = vsel %vm286, %v265, %v267
      %v291 = vsel %vm286, %v267, %v269
      %v292 = vsel %vm286, %v269, %v271
      %v293 = vsel %vm286, %v273, %v275
      %v294 = vsel %vm286, %v275, %v277
      %v295 = vsel %vm286, %v277, %v279
      %v296 = vsel %vm286, %v279, %v281
      %v297 = vsel %vm286, %v281, %v283
      %v298 = vsel %vm286, %v283, %v285
      %313 = vrot.lane.b32.xlu0 %v171, 125
      %v314 = vpop.permute.xlu0 %313
      %315 = vrot.lane.b32.xlu0 %v172, 125
      %v316 = vpop.permute.xlu0 %315
      %317 = vrot.lane.b32.xlu0 %v173, 125
      %v318 = vpop.permute.xlu0 %317
      %319 = vrot.lane.b32.xlu0 %v174, 125
      %v320 = vpop.permute.xlu0 %319
      %321 = vrot.lane.b32.xlu0 %v175, 125
      %v322 = vpop.permute.xlu0 %321
      %323 = vrot.lane.b32.xlu0 %v176, 125
      %v324 = vpop.permute.xlu0 %323
      %325 = vrot.lane.b32.xlu0 %v177, 125
      %v326 = vpop.permute.xlu0 %325
      %327 = vrot.lane.b32.xlu0 %v180, 125
      %v328 = vpop.permute.xlu0 %327
      %329 = vrot.lane.b32.xlu0 %v181, 125
      %v330 = vpop.permute.xlu0 %329
      %331 = vrot.lane.b32.xlu0 %v182, 125
      %v332 = vpop.permute.xlu0 %331
      %333 = vrot.lane.b32.xlu0 %v183, 125
      %v334 = vpop.permute.xlu0 %333
      %335 = vrot.lane.b32.xlu0 %v184, 125
      %v336 = vpop.permute.xlu0 %335
      %337 = vrot.lane.b32.xlu0 %v185, 125
      %v338 = vpop.permute.xlu0 %337
      %339 = vrot.lane.b32.xlu0 %v186, 125
      %v340 = vpop.permute.xlu0 %339
      %vm341 = vcmask 1022976
      %v342 = vsel %vm341, %v314, %v316
      %v343 = vsel %vm341, %v316, %v318
      %v344 = vsel %vm341, %v318, %v320
      %v345 = vsel %vm341, %v320, %v322
      %v346 = vsel %vm341, %v322, %v324
      %v347 = vsel %vm341, %v324, %v326
      %v348 = vsel %vm341, %v328, %v330
      %v349 = vsel %vm341, %v330, %v332
      %v350 = vsel %vm341, %v332, %v334
      %v351 = vsel %vm341, %v334, %v336
      %v352 = vsel %vm341, %v336, %v338
      %v353 = vsel %vm341, %v338, %v340
      %368 = vrot.lane.b32.xlu0 %v171, 124
      %v369 = vpop.permute.xlu0 %368
      %370 = vrot.lane.b32.xlu0 %v172, 124
      %v371 = vpop.permute.xlu0 %370
      %372 = vrot.lane.b32.xlu0 %v173, 124
      %v373 = vpop.permute.xlu0 %372
      %374 = vrot.lane.b32.xlu0 %v174, 124
      %v375 = vpop.permute.xlu0 %374
      %376 = vrot.lane.b32.xlu0 %v175, 124
      %v377 = vpop.permute.xlu0 %376
      %378 = vrot.lane.b32.xlu0 %v176, 124
      %v379 = vpop.permute.xlu0 %378
      %380 = vrot.lane.b32.xlu0 %v177, 124
      %v381 = vpop.permute.xlu0 %380
      %382 = vrot.lane.b32.xlu0 %v180, 124
      %v383 = vpop.permute.xlu0 %382
      %384 = vrot.lane.b32.xlu0 %v181, 124
      %v385 = vpop.permute.xlu0 %384
      %386 = vrot.lane.b32.xlu0 %v182, 124
      %v387 = vpop.permute.xlu0 %386
      %388 = vrot.lane.b32.xlu0 %v183, 124
      %v389 = vpop.permute.xlu0 %388
      %390 = vrot.lane.b32.xlu0 %v184, 124
      %v391 = vpop.permute.xlu0 %390
      %392 = vrot.lane.b32.xlu0 %v185, 124
      %v393 = vpop.permute.xlu0 %392
      %394 = vrot.lane.b32.xlu0 %v186, 124
      %v395 = vpop.permute.xlu0 %394
      %vm396 = vcmask 1014784
      %v397 = vsel %vm396, %v369, %v371
      %v398 = vsel %vm396, %v371, %v373
      %v399 = vsel %vm396, %v373, %v375
      %v400 = vsel %vm396, %v375, %v377
      %v401 = vsel %vm396, %v377, %v379
      %v402 = vsel %vm396, %v379, %v381
      %v403 = vsel %vm396, %v383, %v385
      %v404 = vsel %vm396, %v385, %v387
      %v405 = vsel %vm396, %v387, %v389
      %v406 = vsel %vm396, %v389, %v391
      %v407 = vsel %vm396, %v391, %v393
      %v408 = vsel %vm396, %v393, %v395
      %423 = vrot.lane.b32.xlu0 %v171, 123
      %v424 = vpop.permute.xlu0 %423
      %425 = vrot.lane.b32.xlu0 %v172, 123
      %v426 = vpop.permute.xlu0 %425
      %427 = vrot.lane.b32.xlu0 %v173, 123
      %v428 = vpop.permute.xlu0 %427
      %429 = vrot.lane.b32.xlu0 %v174, 123
      %v430 = vpop.permute.xlu0 %429
      %431 = vrot.lane.b32.xlu0 %v175, 123
      %v432 = vpop.permute.xlu0 %431
      %433 = vrot.lane.b32.xlu0 %v176, 123
      %v434 = vpop.permute.xlu0 %433
      %435 = vrot.lane.b32.xlu0 %v177, 123
      %v436 = vpop.permute.xlu0 %435
      %437 = vrot.lane.b32.xlu0 %v180, 123
      %v438 = vpop.permute.xlu0 %437
      %439 = vrot.lane.b32.xlu0 %v181, 123
      %v440 = vpop.permute.xlu0 %439
      %441 = vrot.lane.b32.xlu0 %v182, 123
      %v442 = vpop.permute.xlu0 %441
      %443 = vrot.lane.b32.xlu0 %v183, 123
      %v444 = vpop.permute.xlu0 %443
      %445 = vrot.lane.b32.xlu0 %v184, 123
      %v446 = vpop.permute.xlu0 %445
      %447 = vrot.lane.b32.xlu0 %v185, 123
      %v448 = vpop.permute.xlu0 %447
      %449 = vrot.lane.b32.xlu0 %v186, 123
      %v450 = vpop.permute.xlu0 %449
      %vm451 = vcmask 1006592
      %v452 = vsel %vm451, %v424, %v426
      %v453 = vsel %vm451, %v426, %v428
      %v454 = vsel %vm451, %v428, %v430
      %v455 = vsel %vm451, %v430, %v432
      %v456 = vsel %vm451, %v432, %v434
      %v457 = vsel %vm451, %v434, %v436
      %v458 = vsel %vm451, %v438, %v440
      %v459 = vsel %vm451, %v440, %v442
      %v460 = vsel %vm451, %v442, %v444
      %v461 = vsel %vm451, %v444, %v446
      %v462 = vsel %vm451, %v446, %v448
      %v463 = vsel %vm451, %v448, %v450
      %478 = vrot.lane.b32.xlu0 %v171, 122
      %v479 = vpop.permute.xlu0 %478
      %480 = vrot.lane.b32.xlu0 %v172, 122
      %v481 = vpop.permute.xlu0 %480
      %482 = vrot.lane.b32.xlu0 %v173, 122
      %v483 = vpop.permute.xlu0 %482
      %484 = vrot.lane.b32.xlu0 %v174, 122
      %v485 = vpop.permute.xlu0 %484
      %486 = vrot.lane.b32.xlu0 %v175, 122
      %v487 = vpop.permute.xlu0 %486
      %488 = vrot.lane.b32.xlu0 %v176, 122
      %v489 = vpop.permute.xlu0 %488
      %490 = vrot.lane.b32.xlu0 %v177, 122
      %v491 = vpop.permute.xlu0 %490
      %492 = vrot.lane.b32.xlu0 %v180, 122
      %v493 = vpop.permute.xlu0 %492
      %494 = vrot.lane.b32.xlu0 %v181, 122
      %v495 = vpop.permute.xlu0 %494
      %496 = vrot.lane.b32.xlu0 %v182, 122
      %v497 = vpop.permute.xlu0 %496
      %498 = vrot.lane.b32.xlu0 %v183, 122
      %v499 = vpop.permute.xlu0 %498
      %500 = vrot.lane.b32.xlu0 %v184, 122
      %v501 = vpop.permute.xlu0 %500
      %502 = vrot.lane.b32.xlu0 %v185, 122
      %v503 = vpop.permute.xlu0 %502
      %504 = vrot.lane.b32.xlu0 %v186, 122
      %v505 = vpop.permute.xlu0 %504
      %vm506 = vcmask 998400
      %v507 = vsel %vm506, %v479, %v481
      %v508 = vsel %vm506, %v481, %v483
      %v509 = vsel %vm506, %v483, %v485
      %v510 = vsel %vm506, %v485, %v487
      %v511 = vsel %vm506, %v487, %v489
      %v512 = vsel %vm506, %v489, %v491
      %v513 = vsel %vm506, %v493, %v495
      %v514 = vsel %vm506, %v495, %v497
      %v515 = vsel %vm506, %v497, %v499
      %v516 = vsel %vm506, %v499, %v501
      %v517 = vsel %vm506, %v501, %v503
      %v518 = vsel %vm506, %v503, %v505
      %533 = vrot.lane.b32.xlu0 %v171, 121
      %v534 = vpop.permute.xlu0 %533
      %535 = vrot.lane.b32.xlu0 %v172, 121
      %v536 = vpop.permute.xlu0 %535
      %537 = vrot.lane.b32.xlu0 %v173, 121
      %v538 = vpop.permute.xlu0 %537
      %539 = vrot.lane.b32.xlu0 %v174, 121
      %v540 = vpop.permute.xlu0 %539
      %541 = vrot.lane.b32.xlu0 %v175, 121
      %v542 = vpop.permute.xlu0 %541
      %543 = vrot.lane.b32.xlu0 %v176, 121
      %v544 = vpop.permute.xlu0 %543
      %545 = vrot.lane.b32.xlu0 %v177, 121
      %v546 = vpop.permute.xlu0 %545
      %547 = vrot.lane.b32.xlu0 %v180, 121
      %v548 = vpop.permute.xlu0 %547
      %549 = vrot.lane.b32.xlu0 %v181, 121
      %v550 = vpop.permute.xlu0 %549
      %551 = vrot.lane.b32.xlu0 %v182, 121
      %v552 = vpop.permute.xlu0 %551
      %553 = vrot.lane.b32.xlu0 %v183, 121
      %v554 = vpop.permute.xlu0 %553
      %555 = vrot.lane.b32.xlu0 %v184, 121
      %v556 = vpop.permute.xlu0 %555
      %557 = vrot.lane.b32.xlu0 %v185, 121
      %v558 = vpop.permute.xlu0 %557
      %559 = vrot.lane.b32.xlu0 %v186, 121
      %v560 = vpop.permute.xlu0 %559
      %vm561 = vcmask 990208
      %v562 = vsel %vm561, %v534, %v536
      %v563 = vsel %vm561, %v536, %v538
      %v564 = vsel %vm561, %v538, %v540
      %v565 = vsel %vm561, %v540, %v542
      %v566 = vsel %vm561, %v542, %v544
      %v567 = vsel %vm561, %v544, %v546
      %v568 = vsel %vm561, %v548, %v550
      %v569 = vsel %vm561, %v550, %v552
      %v570 = vsel %vm561, %v552, %v554
      %v571 = vsel %vm561, %v554, %v556
      %v572 = vsel %vm561, %v556, %v558
      %v573 = vsel %vm561, %v558, %v560
      %590 = vrot.lane.b32.xlu0 %v178, 127
      %v591 = vpop.permute.xlu0 %590
      %592 = vrot.lane.b32.xlu0 %v187, 127
      %v593 = vpop.permute.xlu0 %592
      %v594 = vsel %vm231, %v216, %v591
      %v595 = vsel %vm231, %v230, %v593
      %596 = vrot.lane.b32.xlu0 %v178, 126
      %v597 = vpop.permute.xlu0 %596
      %598 = vrot.lane.b32.xlu0 %v187, 126
      %v599 = vpop.permute.xlu0 %598
      %v600 = vsel %vm286, %v271, %v597
      %v601 = vsel %vm286, %v285, %v599
      %602 = vrot.lane.b32.xlu0 %v178, 125
      %v603 = vpop.permute.xlu0 %602
      %604 = vrot.lane.b32.xlu0 %v187, 125
      %v605 = vpop.permute.xlu0 %604
      %v606 = vsel %vm341, %v326, %v603
      %v607 = vsel %vm341, %v340, %v605
      %608 = vrot.lane.b32.xlu0 %v178, 124
      %v609 = vpop.permute.xlu0 %608
      %610 = vrot.lane.b32.xlu0 %v187, 124
      %v611 = vpop.permute.xlu0 %610
      %v612 = vsel %vm396, %v381, %v609
      %v613 = vsel %vm396, %v395, %v611
      %614 = vrot.lane.b32.xlu0 %v178, 123
      %v615 = vpop.permute.xlu0 %614
      %616 = vrot.lane.b32.xlu0 %v187, 123
      %v617 = vpop.permute.xlu0 %616
      %v618 = vsel %vm451, %v436, %v615
      %v619 = vsel %vm451, %v450, %v617
      %620 = vrot.lane.b32.xlu0 %v178, 122
      %v621 = vpop.permute.xlu0 %620
      %622 = vrot.lane.b32.xlu0 %v187, 122
      %v623 = vpop.permute.xlu0 %622
      %v624 = vsel %vm506, %v491, %v621
      %v625 = vsel %vm506, %v505, %v623
      %626 = vrot.lane.b32.xlu0 %v178, 121
      %v627 = vpop.permute.xlu0 %626
      %628 = vrot.lane.b32.xlu0 %v187, 121
      %v629 = vpop.permute.xlu0 %628
      %v630 = vsel %vm561, %v546, %v627
      %v631 = vsel %vm561, %v560, %v629
      %634 = vrot.lane.b32.xlu0 %v179, 127
      %v635 = vpop.permute.xlu0 %634
      %636 = vrot.lane.b32.xlu0 %v188, 127
      %v637 = vpop.permute.xlu0 %636
      %v638 = vsel %vm231, %v591, %v635
      %v639 = vsel %vm231, %v593, %v637
      %640 = vrot.lane.b32.xlu0 %v179, 126
      %v641 = vpop.permute.xlu0 %640
      %642 = vrot.lane.b32.xlu0 %v188, 126
      %v643 = vpop.permute.xlu0 %642
      %v644 = vsel %vm286, %v597, %v641
      %v645 = vsel %vm286, %v599, %v643
      %646 = vrot.lane.b32.xlu0 %v179, 125
      %v647 = vpop.permute.xlu0 %646
      %648 = vrot.lane.b32.xlu0 %v188, 125
      %v649 = vpop.permute.xlu0 %648
      %v650 = vsel %vm341, %v603, %v647
      %v651 = vsel %vm341, %v605, %v649
      %652 = vrot.lane.b32.xlu0 %v179, 124
      %v653 = vpop.permute.xlu0 %652
      %654 = vrot.lane.b32.xlu0 %v188, 124
      %v655 = vpop.permute.xlu0 %654
      %v656 = vsel %vm396, %v609, %v653
      %v657 = vsel %vm396, %v611, %v655
      %658 = vrot.lane.b32.xlu0 %v179, 123
      %v659 = vpop.permute.xlu0 %658
      %660 = vrot.lane.b32.xlu0 %v188, 123
      %v661 = vpop.permute.xlu0 %660
      %v662 = vsel %vm451, %v615, %v659
      %v663 = vsel %vm451, %v617, %v661
      %664 = vrot.lane.b32.xlu0 %v179, 122
      %v665 = vpop.permute.xlu0 %664
      %666 = vrot.lane.b32.xlu0 %v188, 122
      %v667 = vpop.permute.xlu0 %666
      %v668 = vsel %vm506, %v621, %v665
      %v669 = vsel %vm506, %v623, %v667
      %670 = vrot.lane.b32.xlu0 %v179, 121
      %v671 = vpop.permute.xlu0 %670
      %672 = vrot.lane.b32.xlu0 %v188, 121
      %v673 = vpop.permute.xlu0 %672
      %v674 = vsel %vm561, %v627, %v671
      %v675 = vsel %vm561, %v629, %v673
      %676 = vrot.lane.b32.xlu0 %v171, 95
      %v677 = vpop.permute.xlu0 %676
      %678 = vrot.lane.b32.xlu0 %v172, 95
      %v679 = vpop.permute.xlu0 %678
      %680 = vrot.lane.b32.xlu0 %v173, 95
      %v681 = vpop.permute.xlu0 %680
      %682 = vrot.lane.b32.xlu0 %v174, 95
      %v683 = vpop.permute.xlu0 %682
      %684 = vrot.lane.b32.xlu0 %v175, 95
      %v685 = vpop.permute.xlu0 %684
      %686 = vrot.lane.b32.xlu0 %v176, 95
      %v687 = vpop.permute.xlu0 %686
      %688 = vrot.lane.b32.xlu0 %v177, 95
      %v689 = vpop.permute.xlu0 %688
      %690 = vrot.lane.b32.xlu0 %v180, 95
      %v691 = vpop.permute.xlu0 %690
      %692 = vrot.lane.b32.xlu0 %v181, 95
      %v693 = vpop.permute.xlu0 %692
      %694 = vrot.lane.b32.xlu0 %v182, 95
      %v695 = vpop.permute.xlu0 %694
      %696 = vrot.lane.b32.xlu0 %v183, 95
      %v697 = vpop.permute.xlu0 %696
      %698 = vrot.lane.b32.xlu0 %v184, 95
      %v699 = vpop.permute.xlu0 %698
      %700 = vrot.lane.b32.xlu0 %v185, 95
      %v701 = vpop.permute.xlu0 %700
      %702 = vrot.lane.b32.xlu0 %v186, 95
      %v703 = vpop.permute.xlu0 %702
      %704 = vrot.lane.b32.xlu0 %v232, 95
      %v705 = vpop.permute.xlu0 %704
      %706 = vrot.lane.b32.xlu0 %v233, 95
      %v707 = vpop.permute.xlu0 %706
      %708 = vrot.lane.b32.xlu0 %v234, 95
      %v709 = vpop.permute.xlu0 %708
      %710 = vrot.lane.b32.xlu0 %v235, 95
      %v711 = vpop.permute.xlu0 %710
      %712 = vrot.lane.b32.xlu0 %v236, 95
      %v713 = vpop.permute.xlu0 %712
      %714 = vrot.lane.b32.xlu0 %v237, 95
      %v715 = vpop.permute.xlu0 %714
      %716 = vrot.lane.b32.xlu0 %v216, 95
      %v717 = vpop.permute.xlu0 %716
      %718 = vrot.lane.b32.xlu0 %v238, 95
      %v719 = vpop.permute.xlu0 %718
      %720 = vrot.lane.b32.xlu0 %v239, 95
      %v721 = vpop.permute.xlu0 %720
      %722 = vrot.lane.b32.xlu0 %v240, 95
      %v723 = vpop.permute.xlu0 %722
      %724 = vrot.lane.b32.xlu0 %v241, 95
      %v725 = vpop.permute.xlu0 %724
      %726 = vrot.lane.b32.xlu0 %v242, 95
      %v727 = vpop.permute.xlu0 %726
      %728 = vrot.lane.b32.xlu0 %v243, 95
      %v729 = vpop.permute.xlu0 %728
      %730 = vrot.lane.b32.xlu0 %v230, 95
      %v731 = vpop.permute.xlu0 %730
      %732 = vrot.lane.b32.xlu0 %v287, 95
      %v733 = vpop.permute.xlu0 %732
      %734 = vrot.lane.b32.xlu0 %v288, 95
      %v735 = vpop.permute.xlu0 %734
      %736 = vrot.lane.b32.xlu0 %v289, 95
      %v737 = vpop.permute.xlu0 %736
      %738 = vrot.lane.b32.xlu0 %v290, 95
      %v739 = vpop.permute.xlu0 %738
      %740 = vrot.lane.b32.xlu0 %v291, 95
      %v741 = vpop.permute.xlu0 %740
      %742 = vrot.lane.b32.xlu0 %v292, 95
      %v743 = vpop.permute.xlu0 %742
      %744 = vrot.lane.b32.xlu0 %v271, 95
      %v745 = vpop.permute.xlu0 %744
      %746 = vrot.lane.b32.xlu0 %v293, 95
      %v747 = vpop.permute.xlu0 %746
      %748 = vrot.lane.b32.xlu0 %v294, 95
      %v749 = vpop.permute.xlu0 %748
      %750 = vrot.lane.b32.xlu0 %v295, 95
      %v751 = vpop.permute.xlu0 %750
      %752 = vrot.lane.b32.xlu0 %v296, 95
      %v753 = vpop.permute.xlu0 %752
      %754 = vrot.lane.b32.xlu0 %v297, 95
      %v755 = vpop.permute.xlu0 %754
      %756 = vrot.lane.b32.xlu0 %v298, 95
      %v757 = vpop.permute.xlu0 %756
      %758 = vrot.lane.b32.xlu0 %v285, 95
      %v759 = vpop.permute.xlu0 %758
      %760 = vrot.lane.b32.xlu0 %v342, 95
      %v761 = vpop.permute.xlu0 %760
      %762 = vrot.lane.b32.xlu0 %v343, 95
      %v763 = vpop.permute.xlu0 %762
      %764 = vrot.lane.b32.xlu0 %v344, 95
      %v765 = vpop.permute.xlu0 %764
      %766 = vrot.lane.b32.xlu0 %v345, 95
      %v767 = vpop.permute.xlu0 %766
      %768 = vrot.lane.b32.xlu0 %v346, 95
      %v769 = vpop.permute.xlu0 %768
      %770 = vrot.lane.b32.xlu0 %v347, 95
      %v771 = vpop.permute.xlu0 %770
      %772 = vrot.lane.b32.xlu0 %v326, 95
      %v773 = vpop.permute.xlu0 %772
      %774 = vrot.lane.b32.xlu0 %v348, 95
      %v775 = vpop.permute.xlu0 %774
      %776 = vrot.lane.b32.xlu0 %v349, 95
      %v777 = vpop.permute.xlu0 %776
      %778 = vrot.lane.b32.xlu0 %v350, 95
      %v779 = vpop.permute.xlu0 %778
      %780 = vrot.lane.b32.xlu0 %v351, 95
      %v781 = vpop.permute.xlu0 %780
      %782 = vrot.lane.b32.xlu0 %v352, 95
      %v783 = vpop.permute.xlu0 %782
      %784 = vrot.lane.b32.xlu0 %v353, 95
      %v785 = vpop.permute.xlu0 %784
      %786 = vrot.lane.b32.xlu0 %v340, 95
      %v787 = vpop.permute.xlu0 %786
      %788 = vrot.lane.b32.xlu0 %v397, 95
      %v789 = vpop.permute.xlu0 %788
      %790 = vrot.lane.b32.xlu0 %v398, 95
      %v791 = vpop.permute.xlu0 %790
      %792 = vrot.lane.b32.xlu0 %v399, 95
      %v793 = vpop.permute.xlu0 %792
      %794 = vrot.lane.b32.xlu0 %v400, 95
      %v795 = vpop.permute.xlu0 %794
      %796 = vrot.lane.b32.xlu0 %v401, 95
      %v797 = vpop.permute.xlu0 %796
      %798 = vrot.lane.b32.xlu0 %v402, 95
      %v799 = vpop.permute.xlu0 %798
      %800 = vrot.lane.b32.xlu0 %v381, 95
      %v801 = vpop.permute.xlu0 %800
      %802 = vrot.lane.b32.xlu0 %v403, 95
      %v803 = vpop.permute.xlu0 %802
      %804 = vrot.lane.b32.xlu0 %v404, 95
      %v805 = vpop.permute.xlu0 %804
      %806 = vrot.lane.b32.xlu0 %v405, 95
      %v807 = vpop.permute.xlu0 %806
      %808 = vrot.lane.b32.xlu0 %v406, 95
      %v809 = vpop.permute.xlu0 %808
      %810 = vrot.lane.b32.xlu0 %v407, 95
      %v811 = vpop.permute.xlu0 %810
      %812 = vrot.lane.b32.xlu0 %v408, 95
      %v813 = vpop.permute.xlu0 %812
      %814 = vrot.lane.b32.xlu0 %v395, 95
      %v815 = vpop.permute.xlu0 %814
      %816 = vrot.lane.b32.xlu0 %v452, 95
      %v817 = vpop.permute.xlu0 %816
      %818 = vrot.lane.b32.xlu0 %v453, 95
      %v819 = vpop.permute.xlu0 %818
      %820 = vrot.lane.b32.xlu0 %v454, 95
      %v821 = vpop.permute.xlu0 %820
      %822 = vrot.lane.b32.xlu0 %v455, 95
      %v823 = vpop.permute.xlu0 %822
      %824 = vrot.lane.b32.xlu0 %v456, 95
      %v825 = vpop.permute.xlu0 %824
      %826 = vrot.lane.b32.xlu0 %v457, 95
      %v827 = vpop.permute.xlu0 %826
      %828 = vrot.lane.b32.xlu0 %v436, 95
      %v829 = vpop.permute.xlu0 %828
      %830 = vrot.lane.b32.xlu0 %v458, 95
      %v831 = vpop.permute.xlu0 %830
      %832 = vrot.lane.b32.xlu0 %v459, 95
      %v833 = vpop.permute.xlu0 %832
      %834 = vrot.lane.b32.xlu0 %v460, 95
      %v835 = vpop.permute.xlu0 %834
      %836 = vrot.lane.b32.xlu0 %v461, 95
      %v837 = vpop.permute.xlu0 %836
      %838 = vrot.lane.b32.xlu0 %v462, 95
      %v839 = vpop.permute.xlu0 %838
      %840 = vrot.lane.b32.xlu0 %v463, 95
      %v841 = vpop.permute.xlu0 %840
      %842 = vrot.lane.b32.xlu0 %v450, 95
      %v843 = vpop.permute.xlu0 %842
      %844 = vrot.lane.b32.xlu0 %v507, 95
      %v845 = vpop.permute.xlu0 %844
      %846 = vrot.lane.b32.xlu0 %v508, 95
      %v847 = vpop.permute.xlu0 %846
      %848 = vrot.lane.b32.xlu0 %v509, 95
      %v849 = vpop.permute.xlu0 %848
      %850 = vrot.lane.b32.xlu0 %v510, 95
      %v851 = vpop.permute.xlu0 %850
      %852 = vrot.lane.b32.xlu0 %v511, 95
      %v853 = vpop.permute.xlu0 %852
      %854 = vrot.lane.b32.xlu0 %v512, 95
      %v855 = vpop.permute.xlu0 %854
      %856 = vrot.lane.b32.xlu0 %v491, 95
      %v857 = vpop.permute.xlu0 %856
      %858 = vrot.lane.b32.xlu0 %v513, 95
      %v859 = vpop.permute.xlu0 %858
      %860 = vrot.lane.b32.xlu0 %v514, 95
      %v861 = vpop.permute.xlu0 %860
      %862 = vrot.lane.b32.xlu0 %v515, 95
      %v863 = vpop.permute.xlu0 %862
      %864 = vrot.lane.b32.xlu0 %v516, 95
      %v865 = vpop.permute.xlu0 %864
      %866 = vrot.lane.b32.xlu0 %v517, 95
      %v867 = vpop.permute.xlu0 %866
      %868 = vrot.lane.b32.xlu0 %v518, 95
      %v869 = vpop.permute.xlu0 %868
      %870 = vrot.lane.b32.xlu0 %v505, 95
      %v871 = vpop.permute.xlu0 %870
      %872 = vrot.lane.b32.xlu0 %v562, 95
      %v873 = vpop.permute.xlu0 %872
      %874 = vrot.lane.b32.xlu0 %v563, 95
      %v875 = vpop.permute.xlu0 %874
      %876 = vrot.lane.b32.xlu0 %v564, 95
      %v877 = vpop.permute.xlu0 %876
      %878 = vrot.lane.b32.xlu0 %v565, 95
      %v879 = vpop.permute.xlu0 %878
      %880 = vrot.lane.b32.xlu0 %v566, 95
      %v881 = vpop.permute.xlu0 %880
      %882 = vrot.lane.b32.xlu0 %v567, 95
      %v883 = vpop.permute.xlu0 %882
      %884 = vrot.lane.b32.xlu0 %v546, 95
      %v885 = vpop.permute.xlu0 %884
      %886 = vrot.lane.b32.xlu0 %v568, 95
      %v887 = vpop.permute.xlu0 %886
      %888 = vrot.lane.b32.xlu0 %v569, 95
      %v889 = vpop.permute.xlu0 %888
      %890 = vrot.lane.b32.xlu0 %v570, 95
      %v891 = vpop.permute.xlu0 %890
      %892 = vrot.lane.b32.xlu0 %v571, 95
      %v893 = vpop.permute.xlu0 %892
      %894 = vrot.lane.b32.xlu0 %v572, 95
      %v895 = vpop.permute.xlu0 %894
      %896 = vrot.lane.b32.xlu0 %v573, 95
      %v897 = vpop.permute.xlu0 %896
      %898 = vrot.lane.b32.xlu0 %v560, 95
      %v899 = vpop.permute.xlu0 %898
      %vm900 = vcmask 777216
      %v901 = vsel %vm900, %v677, %v679
      %v902 = vsel %vm900, %v679, %v681
      %v903 = vsel %vm900, %v681, %v683
      %v904 = vsel %vm900, %v683, %v685
      %v905 = vsel %vm900, %v685, %v687
      %v906 = vsel %vm900, %v687, %v689
      %v907 = vsel %vm900, %v691, %v693
      %v908 = vsel %vm900, %v693, %v695
      %v909 = vsel %vm900, %v695, %v697
      %v910 = vsel %vm900, %v697, %v699
      %v911 = vsel %vm900, %v699, %v701
      %v912 = vsel %vm900, %v701, %v703
      %v913 = vsel %vm900, %v705, %v707
      %v914 = vsel %vm900, %v707, %v709
      %v915 = vsel %vm900, %v709, %v711
      %v916 = vsel %vm900, %v711, %v713
      %v917 = vsel %vm900, %v713, %v715
      %v918 = vsel %vm900, %v715, %v717
      %v919 = vsel %vm900, %v719, %v721
      %v920 = vsel %vm900, %v721, %v723
      %v921 = vsel %vm900, %v723, %v725
      %v922 = vsel %vm900, %v725, %v727
      %v923 = vsel %vm900, %v727, %v729
      %v924 = vsel %vm900, %v729, %v731
      %v925 = vsel %vm900, %v733, %v735
      %v926 = vsel %vm900, %v735, %v737
      %v927 = vsel %vm900, %v737, %v739
      %v928 = vsel %vm900, %v739, %v741
      %v929 = vsel %vm900, %v741, %v743
      %v930 = vsel %vm900, %v743, %v745
      %v931 = vsel %vm900, %v747, %v749
      %v932 = vsel %vm900, %v749, %v751
      %v933 = vsel %vm900, %v751, %v753
      %v934 = vsel %vm900, %v753, %v755
      %v935 = vsel %vm900, %v755, %v757
      %v936 = vsel %vm900, %v757, %v759
      %v937 = vsel %vm900, %v761, %v763
      %v938 = vsel %vm900, %v763, %v765
      %v939 = vsel %vm900, %v765, %v767
      %v940 = vsel %vm900, %v767, %v769
      %v941 = vsel %vm900, %v769, %v771
      %v942 = vsel %vm900, %v771, %v773
      %v943 = vsel %vm900, %v775, %v777
      %v944 = vsel %vm900, %v777, %v779
      %v945 = vsel %vm900, %v779, %v781
      %v946 = vsel %vm900, %v781, %v783
      %v947 = vsel %vm900, %v783, %v785
      %v948 = vsel %vm900, %v785, %v787
      %v949 = vsel %vm900, %v789, %v791
      %v950 = vsel %vm900, %v791, %v793
      %v951 = vsel %vm900, %v793, %v795
      %v952 = vsel %vm900, %v795, %v797
      %v953 = vsel %vm900, %v797, %v799
      %v954 = vsel %vm900, %v799, %v801
      %v955 = vsel %vm900, %v803, %v805
      %v956 = vsel %vm900, %v805, %v807
      %v957 = vsel %vm900, %v807, %v809
      %v958 = vsel %vm900, %v809, %v811
      %v959 = vsel %vm900, %v811, %v813
      %v960 = vsel %vm900, %v813, %v815
      %v961 = vsel %vm900, %v817, %v819
      %v962 = vsel %vm900, %v819, %v821
      %v963 = vsel %vm900, %v821, %v823
      %v964 = vsel %vm900, %v823, %v825
      %v965 = vsel %vm900, %v825, %v827
      %v966 = vsel %vm900, %v827, %v829
      %v967 = vsel %vm900, %v831, %v833
      %v968 = vsel %vm900, %v833, %v835
      %v969 = vsel %vm900, %v835, %v837
      %v970 = vsel %vm900, %v837, %v839
      %v971 = vsel %vm900, %v839, %v841
      %v972 = vsel %vm900, %v841, %v843
      %v973 = vsel %vm900, %v845, %v847
      %v974 = vsel %vm900, %v847, %v849
      %v975 = vsel %vm900, %v849, %v851
      %v976 = vsel %vm900, %v851, %v853
      %v977 = vsel %vm900, %v853, %v855
      %v978 = vsel %vm900, %v855, %v857
      %v979 = vsel %vm900, %v859, %v861
      %v980 = vsel %vm900, %v861, %v863
      %v981 = vsel %vm900, %v863, %v865
      %v982 = vsel %vm900, %v865, %v867
      %v983 = vsel %vm900, %v867, %v869
      %v984 = vsel %vm900, %v869, %v871
      %v985 = vsel %vm900, %v873, %v875
      %v986 = vsel %vm900, %v875, %v877
      %v987 = vsel %vm900, %v877, %v879
      %v988 = vsel %vm900, %v879, %v881
      %v989 = vsel %vm900, %v881, %v883
      %v990 = vsel %vm900, %v883, %v885
      %v991 = vsel %vm900, %v887, %v889
      %v992 = vsel %vm900, %v889, %v891
      %v993 = vsel %vm900, %v891, %v893
      %v994 = vsel %vm900, %v893, %v895
      %v995 = vsel %vm900, %v895, %v897
      %v996 = vsel %vm900, %v897, %v899
      %1109 = vrot.lane.b32.xlu0 %v171, 62
      %v1110 = vpop.permute.xlu0 %1109
      %1111 = vrot.lane.b32.xlu0 %v172, 62
      %v1112 = vpop.permute.xlu0 %1111
      %1113 = vrot.lane.b32.xlu0 %v173, 62
      %v1114 = vpop.permute.xlu0 %1113
      %1115 = vrot.lane.b32.xlu0 %v174, 62
      %v1116 = vpop.permute.xlu0 %1115
      %1117 = vrot.lane.b32.xlu0 %v175, 62
      %v1118 = vpop.permute.xlu0 %1117
      %1119 = vrot.lane.b32.xlu0 %v176, 62
      %v1120 = vpop.permute.xlu0 %1119
      %1121 = vrot.lane.b32.xlu0 %v177, 62
      %v1122 = vpop.permute.xlu0 %1121
      %1123 = vrot.lane.b32.xlu0 %v178, 62
      %v1124 = vpop.permute.xlu0 %1123
      %1125 = vrot.lane.b32.xlu0 %v180, 62
      %v1126 = vpop.permute.xlu0 %1125
      %1127 = vrot.lane.b32.xlu0 %v181, 62
      %v1128 = vpop.permute.xlu0 %1127
      %1129 = vrot.lane.b32.xlu0 %v182, 62
      %v1130 = vpop.permute.xlu0 %1129
      %1131 = vrot.lane.b32.xlu0 %v183, 62
      %v1132 = vpop.permute.xlu0 %1131
      %1133 = vrot.lane.b32.xlu0 %v184, 62
      %v1134 = vpop.permute.xlu0 %1133
      %1135 = vrot.lane.b32.xlu0 %v185, 62
      %v1136 = vpop.permute.xlu0 %1135
      %1137 = vrot.lane.b32.xlu0 %v186, 62
      %v1138 = vpop.permute.xlu0 %1137
      %1139 = vrot.lane.b32.xlu0 %v187, 62
      %v1140 = vpop.permute.xlu0 %1139
      %1141 = vrot.lane.b32.xlu0 %v232, 62
      %v1142 = vpop.permute.xlu0 %1141
      %1143 = vrot.lane.b32.xlu0 %v233, 62
      %v1144 = vpop.permute.xlu0 %1143
      %1145 = vrot.lane.b32.xlu0 %v234, 62
      %v1146 = vpop.permute.xlu0 %1145
      %1147 = vrot.lane.b32.xlu0 %v235, 62
      %v1148 = vpop.permute.xlu0 %1147
      %1149 = vrot.lane.b32.xlu0 %v236, 62
      %v1150 = vpop.permute.xlu0 %1149
      %1151 = vrot.lane.b32.xlu0 %v237, 62
      %v1152 = vpop.permute.xlu0 %1151
      %1153 = vrot.lane.b32.xlu0 %v594, 62
      %v1154 = vpop.permute.xlu0 %1153
      %1155 = vrot.lane.b32.xlu0 %v591, 62
      %v1156 = vpop.permute.xlu0 %1155
      %1157 = vrot.lane.b32.xlu0 %v238, 62
      %v1158 = vpop.permute.xlu0 %1157
      %1159 = vrot.lane.b32.xlu0 %v239, 62
      %v1160 = vpop.permute.xlu0 %1159
      %1161 = vrot.lane.b32.xlu0 %v240, 62
      %v1162 = vpop.permute.xlu0 %1161
      %1163 = vrot.lane.b32.xlu0 %v241, 62
      %v1164 = vpop.permute.xlu0 %1163
      %1165 = vrot.lane.b32.xlu0 %v242, 62
      %v1166 = vpop.permute.xlu0 %1165
      %1167 = vrot.lane.b32.xlu0 %v243, 62
      %v1168 = vpop.permute.xlu0 %1167
      %1169 = vrot.lane.b32.xlu0 %v595, 62
      %v1170 = vpop.permute.xlu0 %1169
      %1171 = vrot.lane.b32.xlu0 %v593, 62
      %v1172 = vpop.permute.xlu0 %1171
      %1173 = vrot.lane.b32.xlu0 %v287, 62
      %v1174 = vpop.permute.xlu0 %1173
      %1175 = vrot.lane.b32.xlu0 %v288, 62
      %v1176 = vpop.permute.xlu0 %1175
      %1177 = vrot.lane.b32.xlu0 %v289, 62
      %v1178 = vpop.permute.xlu0 %1177
      %1179 = vrot.lane.b32.xlu0 %v290, 62
      %v1180 = vpop.permute.xlu0 %1179
      %1181 = vrot.lane.b32.xlu0 %v291, 62
      %v1182 = vpop.permute.xlu0 %1181
      %1183 = vrot.lane.b32.xlu0 %v292, 62
      %v1184 = vpop.permute.xlu0 %1183
      %1185 = vrot.lane.b32.xlu0 %v600, 62
      %v1186 = vpop.permute.xlu0 %1185
      %1187 = vrot.lane.b32.xlu0 %v597, 62
      %v1188 = vpop.permute.xlu0 %1187
      %1189 = vrot.lane.b32.xlu0 %v293, 62
      %v1190 = vpop.permute.xlu0 %1189
      %1191 = vrot.lane.b32.xlu0 %v294, 62
      %v1192 = vpop.permute.xlu0 %1191
      %1193 = vrot.lane.b32.xlu0 %v295, 62
      %v1194 = vpop.permute.xlu0 %1193
      %1195 = vrot.lane.b32.xlu0 %v296, 62
      %v1196 = vpop.permute.xlu0 %1195
      %1197 = vrot.lane.b32.xlu0 %v297, 62
      %v1198 = vpop.permute.xlu0 %1197
      %1199 = vrot.lane.b32.xlu0 %v298, 62
      %v1200 = vpop.permute.xlu0 %1199
      %1201 = vrot.lane.b32.xlu0 %v601, 62
      %v1202 = vpop.permute.xlu0 %1201
      %1203 = vrot.lane.b32.xlu0 %v599, 62
      %v1204 = vpop.permute.xlu0 %1203
      %1205 = vrot.lane.b32.xlu0 %v342, 62
      %v1206 = vpop.permute.xlu0 %1205
      %1207 = vrot.lane.b32.xlu0 %v343, 62
      %v1208 = vpop.permute.xlu0 %1207
      %1209 = vrot.lane.b32.xlu0 %v344, 62
      %v1210 = vpop.permute.xlu0 %1209
      %1211 = vrot.lane.b32.xlu0 %v345, 62
      %v1212 = vpop.permute.xlu0 %1211
      %1213 = vrot.lane.b32.xlu0 %v346, 62
      %v1214 = vpop.permute.xlu0 %1213
      %1215 = vrot.lane.b32.xlu0 %v347, 62
      %v1216 = vpop.permute.xlu0 %1215
      %1217 = vrot.lane.b32.xlu0 %v606, 62
      %v1218 = vpop.permute.xlu0 %1217
      %1219 = vrot.lane.b32.xlu0 %v603, 62
      %v1220 = vpop.permute.xlu0 %1219
      %1221 = vrot.lane.b32.xlu0 %v348, 62
      %v1222 = vpop.permute.xlu0 %1221
      %1223 = vrot.lane.b32.xlu0 %v349, 62
      %v1224 = vpop.permute.xlu0 %1223
      %1225 = vrot.lane.b32.xlu0 %v350, 62
      %v1226 = vpop.permute.xlu0 %1225
      %1227 = vrot.lane.b32.xlu0 %v351, 62
      %v1228 = vpop.permute.xlu0 %1227
      %1229 = vrot.lane.b32.xlu0 %v352, 62
      %v1230 = vpop.permute.xlu0 %1229
      %1231 = vrot.lane.b32.xlu0 %v353, 62
      %v1232 = vpop.permute.xlu0 %1231
      %1233 = vrot.lane.b32.xlu0 %v607, 62
      %v1234 = vpop.permute.xlu0 %1233
      %1235 = vrot.lane.b32.xlu0 %v605, 62
      %v1236 = vpop.permute.xlu0 %1235
      %1237 = vrot.lane.b32.xlu0 %v397, 62
      %v1238 = vpop.permute.xlu0 %1237
      %1239 = vrot.lane.b32.xlu0 %v398, 62
      %v1240 = vpop.permute.xlu0 %1239
      %1241 = vrot.lane.b32.xlu0 %v399, 62
      %v1242 = vpop.permute.xlu0 %1241
      %1243 = vrot.lane.b32.xlu0 %v400, 62
      %v1244 = vpop.permute.xlu0 %1243
      %1245 = vrot.lane.b32.xlu0 %v401, 62
      %v1246 = vpop.permute.xlu0 %1245
      %1247 = vrot.lane.b32.xlu0 %v402, 62
      %v1248 = vpop.permute.xlu0 %1247
      %1249 = vrot.lane.b32.xlu0 %v612, 62
      %v1250 = vpop.permute.xlu0 %1249
      %1251 = vrot.lane.b32.xlu0 %v609, 62
      %v1252 = vpop.permute.xlu0 %1251
      %1253 = vrot.lane.b32.xlu0 %v403, 62
      %v1254 = vpop.permute.xlu0 %1253
      %1255 = vrot.lane.b32.xlu0 %v404, 62
      %v1256 = vpop.permute.xlu0 %1255
      %1257 = vrot.lane.b32.xlu0 %v405, 62
      %v1258 = vpop.permute.xlu0 %1257
      %1259 = vrot.lane.b32.xlu0 %v406, 62
      %v1260 = vpop.permute.xlu0 %1259
      %1261 = vrot.lane.b32.xlu0 %v407, 62
      %v1262 = vpop.permute.xlu0 %1261
      %1263 = vrot.lane.b32.xlu0 %v408, 62
      %v1264 = vpop.permute.xlu0 %1263
      %1265 = vrot.lane.b32.xlu0 %v613, 62
      %v1266 = vpop.permute.xlu0 %1265
      %1267 = vrot.lane.b32.xlu0 %v611, 62
      %v1268 = vpop.permute.xlu0 %1267
      %1269 = vrot.lane.b32.xlu0 %v452, 62
      %v1270 = vpop.permute.xlu0 %1269
      %1271 = vrot.lane.b32.xlu0 %v453, 62
      %v1272 = vpop.permute.xlu0 %1271
      %1273 = vrot.lane.b32.xlu0 %v454, 62
      %v1274 = vpop.permute.xlu0 %1273
      %1275 = vrot.lane.b32.xlu0 %v455, 62
      %v1276 = vpop.permute.xlu0 %1275
      %1277 = vrot.lane.b32.xlu0 %v456, 62
      %v1278 = vpop.permute.xlu0 %1277
      %1279 = vrot.lane.b32.xlu0 %v457, 62
      %v1280 = vpop.permute.xlu0 %1279
      %1281 = vrot.lane.b32.xlu0 %v618, 62
      %v1282 = vpop.permute.xlu0 %1281
      %1283 = vrot.lane.b32.xlu0 %v615, 62
      %v1284 = vpop.permute.xlu0 %1283
      %1285 = vrot.lane.b32.xlu0 %v458, 62
      %v1286 = vpop.permute.xlu0 %1285
      %1287 = vrot.lane.b32.xlu0 %v459, 62
      %v1288 = vpop.permute.xlu0 %1287
      %1289 = vrot.lane.b32.xlu0 %v460, 62
      %v1290 = vpop.permute.xlu0 %1289
      %1291 = vrot.lane.b32.xlu0 %v461, 62
      %v1292 = vpop.permute.xlu0 %1291
      %1293 = vrot.lane.b32.xlu0 %v462, 62
      %v1294 = vpop.permute.xlu0 %1293
      %1295 = vrot.lane.b32.xlu0 %v463, 62
      %v1296 = vpop.permute.xlu0 %1295
      %1297 = vrot.lane.b32.xlu0 %v619, 62
      %v1298 = vpop.permute.xlu0 %1297
      %1299 = vrot.lane.b32.xlu0 %v617, 62
      %v1300 = vpop.permute.xlu0 %1299
      %1301 = vrot.lane.b32.xlu0 %v507, 62
      %v1302 = vpop.permute.xlu0 %1301
      %1303 = vrot.lane.b32.xlu0 %v508, 62
      %v1304 = vpop.permute.xlu0 %1303
      %1305 = vrot.lane.b32.xlu0 %v509, 62
      %v1306 = vpop.permute.xlu0 %1305
      %1307 = vrot.lane.b32.xlu0 %v510, 62
      %v1308 = vpop.permute.xlu0 %1307
      %1309 = vrot.lane.b32.xlu0 %v511, 62
      %v1310 = vpop.permute.xlu0 %1309
      %1311 = vrot.lane.b32.xlu0 %v512, 62
      %v1312 = vpop.permute.xlu0 %1311
      %1313 = vrot.lane.b32.xlu0 %v624, 62
      %v1314 = vpop.permute.xlu0 %1313
      %1315 = vrot.lane.b32.xlu0 %v621, 62
      %v1316 = vpop.permute.xlu0 %1315
      %1317 = vrot.lane.b32.xlu0 %v513, 62
      %v1318 = vpop.permute.xlu0 %1317
      %1319 = vrot.lane.b32.xlu0 %v514, 62
      %v1320 = vpop.permute.xlu0 %1319
      %1321 = vrot.lane.b32.xlu0 %v515, 62
      %v1322 = vpop.permute.xlu0 %1321
      %1323 = vrot.lane.b32.xlu0 %v516, 62
      %v1324 = vpop.permute.xlu0 %1323
      %1325 = vrot.lane.b32.xlu0 %v517, 62
      %v1326 = vpop.permute.xlu0 %1325
      %1327 = vrot.lane.b32.xlu0 %v518, 62
      %v1328 = vpop.permute.xlu0 %1327
      %1329 = vrot.lane.b32.xlu0 %v625, 62
      %v1330 = vpop.permute.xlu0 %1329
      %1331 = vrot.lane.b32.xlu0 %v623, 62
      %v1332 = vpop.permute.xlu0 %1331
      %1333 = vrot.lane.b32.xlu0 %v562, 62
      %v1334 = vpop.permute.xlu0 %1333
      %1335 = vrot.lane.b32.xlu0 %v563, 62
      %v1336 = vpop.permute.xlu0 %1335
      %1337 = vrot.lane.b32.xlu0 %v564, 62
      %v1338 = vpop.permute.xlu0 %1337
      %1339 = vrot.lane.b32.xlu0 %v565, 62
      %v1340 = vpop.permute.xlu0 %1339
      %1341 = vrot.lane.b32.xlu0 %v566, 62
      %v1342 = vpop.permute.xlu0 %1341
      %1343 = vrot.lane.b32.xlu0 %v567, 62
      %v1344 = vpop.permute.xlu0 %1343
      %1345 = vrot.lane.b32.xlu0 %v630, 62
      %v1346 = vpop.permute.xlu0 %1345
      %1347 = vrot.lane.b32.xlu0 %v627, 62
      %v1348 = vpop.permute.xlu0 %1347
      %1349 = vrot.lane.b32.xlu0 %v568, 62
      %v1350 = vpop.permute.xlu0 %1349
      %1351 = vrot.lane.b32.xlu0 %v569, 62
      %v1352 = vpop.permute.xlu0 %1351
      %1353 = vrot.lane.b32.xlu0 %v570, 62
      %v1354 = vpop.permute.xlu0 %1353
      %1355 = vrot.lane.b32.xlu0 %v571, 62
      %v1356 = vpop.permute.xlu0 %1355
      %1357 = vrot.lane.b32.xlu0 %v572, 62
      %v1358 = vpop.permute.xlu0 %1357
      %1359 = vrot.lane.b32.xlu0 %v573, 62
      %v1360 = vpop.permute.xlu0 %1359
      %1361 = vrot.lane.b32.xlu0 %v631, 62
      %v1362 = vpop.permute.xlu0 %1361
      %1363 = vrot.lane.b32.xlu0 %v629, 62
      %v1364 = vpop.permute.xlu0 %1363
      %vm1365 = vcmask 506880
      %v1366 = vsel %vm1365, %v1110, %v1112
      %v1367 = vsel %vm1365, %v1112, %v1114
      %v1368 = vsel %vm1365, %v1114, %v1116
      %v1369 = vsel %vm1365, %v1116, %v1118
      %v1370 = vsel %vm1365, %v1118, %v1120
      %v1371 = vsel %vm1365, %v1120, %v1122
      %v1372 = vsel %vm1365, %v1122, %v1124
      %v1373 = vsel %vm1365, %v1126, %v1128
      %v1374 = vsel %vm1365, %v1128, %v1130
      %v1375 = vsel %vm1365, %v1130, %v1132
      %v1376 = vsel %vm1365, %v1132, %v1134
      %v1377 = vsel %vm1365, %v1134, %v1136
      %v1378 = vsel %vm1365, %v1136, %v1138
      %v1379 = vsel %vm1365, %v1138, %v1140
      %v1380 = vsel %vm1365, %v1142, %v1144
      %v1381 = vsel %vm1365, %v1144, %v1146
      %v1382 = vsel %vm1365, %v1146, %v1148
      %v1383 = vsel %vm1365, %v1148, %v1150
      %v1384 = vsel %vm1365, %v1150, %v1152
      %v1385 = vsel %vm1365, %v1152, %v1154
      %v1386 = vsel %vm1365, %v1154, %v1156
      %v1387 = vsel %vm1365, %v1158, %v1160
      %v1388 = vsel %vm1365, %v1160, %v1162
      %v1389 = vsel %vm1365, %v1162, %v1164
      %v1390 = vsel %vm1365, %v1164, %v1166
      %v1391 = vsel %vm1365, %v1166, %v1168
      %v1392 = vsel %vm1365, %v1168, %v1170
      %v1393 = vsel %vm1365, %v1170, %v1172
      %v1394 = vsel %vm1365, %v1174, %v1176
      %v1395 = vsel %vm1365, %v1176, %v1178
      %v1396 = vsel %vm1365, %v1178, %v1180
      %v1397 = vsel %vm1365, %v1180, %v1182
      %v1398 = vsel %vm1365, %v1182, %v1184
      %v1399 = vsel %vm1365, %v1184, %v1186
      %v1400 = vsel %vm1365, %v1186, %v1188
      %v1401 = vsel %vm1365, %v1190, %v1192
      %v1402 = vsel %vm1365, %v1192, %v1194
      %v1403 = vsel %vm1365, %v1194, %v1196
      %v1404 = vsel %vm1365, %v1196, %v1198
      %v1405 = vsel %vm1365, %v1198, %v1200
      %v1406 = vsel %vm1365, %v1200, %v1202
      %v1407 = vsel %vm1365, %v1202, %v1204
      %v1408 = vsel %vm1365, %v1206, %v1208
      %v1409 = vsel %vm1365, %v1208, %v1210
      %v1410 = vsel %vm1365, %v1210, %v1212
      %v1411 = vsel %vm1365, %v1212, %v1214
      %v1412 = vsel %vm1365, %v1214, %v1216
      %v1413 = vsel %vm1365, %v1216, %v1218
      %v1414 = vsel %vm1365, %v1218, %v1220
      %v1415 = vsel %vm1365, %v1222, %v1224
      %v1416 = vsel %vm1365, %v1224, %v1226
      %v1417 = vsel %vm1365, %v1226, %v1228
      %v1418 = vsel %vm1365, %v1228, %v1230
      %v1419 = vsel %vm1365, %v1230, %v1232
      %v1420 = vsel %vm1365, %v1232, %v1234
      %v1421 = vsel %vm1365, %v1234, %v1236
      %v1422 = vsel %vm1365, %v1238, %v1240
      %v1423 = vsel %vm1365, %v1240, %v1242
      %v1424 = vsel %vm1365, %v1242, %v1244
      %v1425 = vsel %vm1365, %v1244, %v1246
      %v1426 = vsel %vm1365, %v1246, %v1248
      %v1427 = vsel %vm1365, %v1248, %v1250
      %v1428 = vsel %vm1365, %v1250, %v1252
      %v1429 = vsel %vm1365, %v1254, %v1256
      %v1430 = vsel %vm1365, %v1256, %v1258
      %v1431 = vsel %vm1365, %v1258, %v1260
      %v1432 = vsel %vm1365, %v1260, %v1262
      %v1433 = vsel %vm1365, %v1262, %v1264
      %v1434 = vsel %vm1365, %v1264, %v1266
      %v1435 = vsel %vm1365, %v1266, %v1268
      %v1436 = vsel %vm1365, %v1270, %v1272
      %v1437 = vsel %vm1365, %v1272, %v1274
      %v1438 = vsel %vm1365, %v1274, %v1276
      %v1439 = vsel %vm1365, %v1276, %v1278
      %v1440 = vsel %vm1365, %v1278, %v1280
      %v1441 = vsel %vm1365, %v1280, %v1282
      %v1442 = vsel %vm1365, %v1282, %v1284
      %v1443 = vsel %vm1365, %v1286, %v1288
      %v1444 = vsel %vm1365, %v1288, %v1290
      %v1445 = vsel %vm1365, %v1290, %v1292
      %v1446 = vsel %vm1365, %v1292, %v1294
      %v1447 = vsel %vm1365, %v1294, %v1296
      %v1448 = vsel %vm1365, %v1296, %v1298
      %v1449 = vsel %vm1365, %v1298, %v1300
      %v1450 = vsel %vm1365, %v1302, %v1304
      %v1451 = vsel %vm1365, %v1304, %v1306
      %v1452 = vsel %vm1365, %v1306, %v1308
      %v1453 = vsel %vm1365, %v1308, %v1310
      %v1454 = vsel %vm1365, %v1310, %v1312
      %v1455 = vsel %vm1365, %v1312, %v1314
      %v1456 = vsel %vm1365, %v1314, %v1316
      %v1457 = vsel %vm1365, %v1318, %v1320
      %v1458 = vsel %vm1365, %v1320, %v1322
      %v1459 = vsel %vm1365, %v1322, %v1324
      %v1460 = vsel %vm1365, %v1324, %v1326
      %v1461 = vsel %vm1365, %v1326, %v1328
      %v1462 = vsel %vm1365, %v1328, %v1330
      %v1463 = vsel %vm1365, %v1330, %v1332
      %v1464 = vsel %vm1365, %v1334, %v1336
      %v1465 = vsel %vm1365, %v1336, %v1338
      %v1466 = vsel %vm1365, %v1338, %v1340
      %v1467 = vsel %vm1365, %v1340, %v1342
      %v1468 = vsel %vm1365, %v1342, %v1344
      %v1469 = vsel %vm1365, %v1344, %v1346
      %v1470 = vsel %vm1365, %v1346, %v1348
      %v1471 = vsel %vm1365, %v1350, %v1352
      %v1472 = vsel %vm1365, %v1352, %v1354
      %v1473 = vsel %vm1365, %v1354, %v1356
      %v1474 = vsel %vm1365, %v1356, %v1358
      %v1475 = vsel %vm1365, %v1358, %v1360
      %v1476 = vsel %vm1365, %v1360, %v1362
      %v1477 = vsel %vm1365, %v1362, %v1364
      %1590 = vrot.lane.b32.xlu0 %v171, 29
      %v1591 = vpop.permute.xlu0 %1590
      %1592 = vrot.lane.b32.xlu0 %v172, 29
      %v1593 = vpop.permute.xlu0 %1592
      %1594 = vrot.lane.b32.xlu0 %v173, 29
      %v1595 = vpop.permute.xlu0 %1594
      %1596 = vrot.lane.b32.xlu0 %v174, 29
      %v1597 = vpop.permute.xlu0 %1596
      %1598 = vrot.lane.b32.xlu0 %v175, 29
      %v1599 = vpop.permute.xlu0 %1598
      %1600 = vrot.lane.b32.xlu0 %v176, 29
      %v1601 = vpop.permute.xlu0 %1600
      %1602 = vrot.lane.b32.xlu0 %v177, 29
      %v1603 = vpop.permute.xlu0 %1602
      %1604 = vrot.lane.b32.xlu0 %v178, 29
      %v1605 = vpop.permute.xlu0 %1604
      %1606 = vrot.lane.b32.xlu0 %v180, 29
      %v1607 = vpop.permute.xlu0 %1606
      %1608 = vrot.lane.b32.xlu0 %v181, 29
      %v1609 = vpop.permute.xlu0 %1608
      %1610 = vrot.lane.b32.xlu0 %v182, 29
      %v1611 = vpop.permute.xlu0 %1610
      %1612 = vrot.lane.b32.xlu0 %v183, 29
      %v1613 = vpop.permute.xlu0 %1612
      %1614 = vrot.lane.b32.xlu0 %v184, 29
      %v1615 = vpop.permute.xlu0 %1614
      %1616 = vrot.lane.b32.xlu0 %v185, 29
      %v1617 = vpop.permute.xlu0 %1616
      %1618 = vrot.lane.b32.xlu0 %v186, 29
      %v1619 = vpop.permute.xlu0 %1618
      %1620 = vrot.lane.b32.xlu0 %v187, 29
      %v1621 = vpop.permute.xlu0 %1620
      %1622 = vrot.lane.b32.xlu0 %v232, 29
      %v1623 = vpop.permute.xlu0 %1622
      %1624 = vrot.lane.b32.xlu0 %v233, 29
      %v1625 = vpop.permute.xlu0 %1624
      %1626 = vrot.lane.b32.xlu0 %v234, 29
      %v1627 = vpop.permute.xlu0 %1626
      %1628 = vrot.lane.b32.xlu0 %v235, 29
      %v1629 = vpop.permute.xlu0 %1628
      %1630 = vrot.lane.b32.xlu0 %v236, 29
      %v1631 = vpop.permute.xlu0 %1630
      %1632 = vrot.lane.b32.xlu0 %v237, 29
      %v1633 = vpop.permute.xlu0 %1632
      %1634 = vrot.lane.b32.xlu0 %v594, 29
      %v1635 = vpop.permute.xlu0 %1634
      %1636 = vrot.lane.b32.xlu0 %v591, 29
      %v1637 = vpop.permute.xlu0 %1636
      %1638 = vrot.lane.b32.xlu0 %v238, 29
      %v1639 = vpop.permute.xlu0 %1638
      %1640 = vrot.lane.b32.xlu0 %v239, 29
      %v1641 = vpop.permute.xlu0 %1640
      %1642 = vrot.lane.b32.xlu0 %v240, 29
      %v1643 = vpop.permute.xlu0 %1642
      %1644 = vrot.lane.b32.xlu0 %v241, 29
      %v1645 = vpop.permute.xlu0 %1644
      %1646 = vrot.lane.b32.xlu0 %v242, 29
      %v1647 = vpop.permute.xlu0 %1646
      %1648 = vrot.lane.b32.xlu0 %v243, 29
      %v1649 = vpop.permute.xlu0 %1648
      %1650 = vrot.lane.b32.xlu0 %v595, 29
      %v1651 = vpop.permute.xlu0 %1650
      %1652 = vrot.lane.b32.xlu0 %v593, 29
      %v1653 = vpop.permute.xlu0 %1652
      %1654 = vrot.lane.b32.xlu0 %v287, 29
      %v1655 = vpop.permute.xlu0 %1654
      %1656 = vrot.lane.b32.xlu0 %v288, 29
      %v1657 = vpop.permute.xlu0 %1656
      %1658 = vrot.lane.b32.xlu0 %v289, 29
      %v1659 = vpop.permute.xlu0 %1658
      %1660 = vrot.lane.b32.xlu0 %v290, 29
      %v1661 = vpop.permute.xlu0 %1660
      %1662 = vrot.lane.b32.xlu0 %v291, 29
      %v1663 = vpop.permute.xlu0 %1662
      %1664 = vrot.lane.b32.xlu0 %v292, 29
      %v1665 = vpop.permute.xlu0 %1664
      %1666 = vrot.lane.b32.xlu0 %v600, 29
      %v1667 = vpop.permute.xlu0 %1666
      %1668 = vrot.lane.b32.xlu0 %v597, 29
      %v1669 = vpop.permute.xlu0 %1668
      %1670 = vrot.lane.b32.xlu0 %v293, 29
      %v1671 = vpop.permute.xlu0 %1670
      %1672 = vrot.lane.b32.xlu0 %v294, 29
      %v1673 = vpop.permute.xlu0 %1672
      %1674 = vrot.lane.b32.xlu0 %v295, 29
      %v1675 = vpop.permute.xlu0 %1674
      %1676 = vrot.lane.b32.xlu0 %v296, 29
      %v1677 = vpop.permute.xlu0 %1676
      %1678 = vrot.lane.b32.xlu0 %v297, 29
      %v1679 = vpop.permute.xlu0 %1678
      %1680 = vrot.lane.b32.xlu0 %v298, 29
      %v1681 = vpop.permute.xlu0 %1680
      %1682 = vrot.lane.b32.xlu0 %v601, 29
      %v1683 = vpop.permute.xlu0 %1682
      %1684 = vrot.lane.b32.xlu0 %v599, 29
      %v1685 = vpop.permute.xlu0 %1684
      %1686 = vrot.lane.b32.xlu0 %v342, 29
      %v1687 = vpop.permute.xlu0 %1686
      %1688 = vrot.lane.b32.xlu0 %v343, 29
      %v1689 = vpop.permute.xlu0 %1688
      %1690 = vrot.lane.b32.xlu0 %v344, 29
      %v1691 = vpop.permute.xlu0 %1690
      %1692 = vrot.lane.b32.xlu0 %v345, 29
      %v1693 = vpop.permute.xlu0 %1692
      %1694 = vrot.lane.b32.xlu0 %v346, 29
      %v1695 = vpop.permute.xlu0 %1694
      %1696 = vrot.lane.b32.xlu0 %v347, 29
      %v1697 = vpop.permute.xlu0 %1696
      %1698 = vrot.lane.b32.xlu0 %v606, 29
      %v1699 = vpop.permute.xlu0 %1698
      %1700 = vrot.lane.b32.xlu0 %v603, 29
      %v1701 = vpop.permute.xlu0 %1700
      %1702 = vrot.lane.b32.xlu0 %v348, 29
      %v1703 = vpop.permute.xlu0 %1702
      %1704 = vrot.lane.b32.xlu0 %v349, 29
      %v1705 = vpop.permute.xlu0 %1704
      %1706 = vrot.lane.b32.xlu0 %v350, 29
      %v1707 = vpop.permute.xlu0 %1706
      %1708 = vrot.lane.b32.xlu0 %v351, 29
      %v1709 = vpop.permute.xlu0 %1708
      %1710 = vrot.lane.b32.xlu0 %v352, 29
      %v1711 = vpop.permute.xlu0 %1710
      %1712 = vrot.lane.b32.xlu0 %v353, 29
      %v1713 = vpop.permute.xlu0 %1712
      %1714 = vrot.lane.b32.xlu0 %v607, 29
      %v1715 = vpop.permute.xlu0 %1714
      %1716 = vrot.lane.b32.xlu0 %v605, 29
      %v1717 = vpop.permute.xlu0 %1716
      %1718 = vrot.lane.b32.xlu0 %v397, 29
      %v1719 = vpop.permute.xlu0 %1718
      %1720 = vrot.lane.b32.xlu0 %v398, 29
      %v1721 = vpop.permute.xlu0 %1720
      %1722 = vrot.lane.b32.xlu0 %v399, 29
      %v1723 = vpop.permute.xlu0 %1722
      %1724 = vrot.lane.b32.xlu0 %v400, 29
      %v1725 = vpop.permute.xlu0 %1724
      %1726 = vrot.lane.b32.xlu0 %v401, 29
      %v1727 = vpop.permute.xlu0 %1726
      %1728 = vrot.lane.b32.xlu0 %v402, 29
      %v1729 = vpop.permute.xlu0 %1728
      %1730 = vrot.lane.b32.xlu0 %v612, 29
      %v1731 = vpop.permute.xlu0 %1730
      %1732 = vrot.lane.b32.xlu0 %v609, 29
      %v1733 = vpop.permute.xlu0 %1732
      %1734 = vrot.lane.b32.xlu0 %v403, 29
      %v1735 = vpop.permute.xlu0 %1734
      %1736 = vrot.lane.b32.xlu0 %v404, 29
      %v1737 = vpop.permute.xlu0 %1736
      %1738 = vrot.lane.b32.xlu0 %v405, 29
      %v1739 = vpop.permute.xlu0 %1738
      %1740 = vrot.lane.b32.xlu0 %v406, 29
      %v1741 = vpop.permute.xlu0 %1740
      %1742 = vrot.lane.b32.xlu0 %v407, 29
      %v1743 = vpop.permute.xlu0 %1742
      %1744 = vrot.lane.b32.xlu0 %v408, 29
      %v1745 = vpop.permute.xlu0 %1744
      %1746 = vrot.lane.b32.xlu0 %v613, 29
      %v1747 = vpop.permute.xlu0 %1746
      %1748 = vrot.lane.b32.xlu0 %v611, 29
      %v1749 = vpop.permute.xlu0 %1748
      %1750 = vrot.lane.b32.xlu0 %v452, 29
      %v1751 = vpop.permute.xlu0 %1750
      %1752 = vrot.lane.b32.xlu0 %v453, 29
      %v1753 = vpop.permute.xlu0 %1752
      %1754 = vrot.lane.b32.xlu0 %v454, 29
      %v1755 = vpop.permute.xlu0 %1754
      %1756 = vrot.lane.b32.xlu0 %v455, 29
      %v1757 = vpop.permute.xlu0 %1756
      %1758 = vrot.lane.b32.xlu0 %v456, 29
      %v1759 = vpop.permute.xlu0 %1758
      %1760 = vrot.lane.b32.xlu0 %v457, 29
      %v1761 = vpop.permute.xlu0 %1760
      %1762 = vrot.lane.b32.xlu0 %v618, 29
      %v1763 = vpop.permute.xlu0 %1762
      %1764 = vrot.lane.b32.xlu0 %v615, 29
      %v1765 = vpop.permute.xlu0 %1764
      %1766 = vrot.lane.b32.xlu0 %v458, 29
      %v1767 = vpop.permute.xlu0 %1766
      %1768 = vrot.lane.b32.xlu0 %v459, 29
      %v1769 = vpop.permute.xlu0 %1768
      %1770 = vrot.lane.b32.xlu0 %v460, 29
      %v1771 = vpop.permute.xlu0 %1770
      %1772 = vrot.lane.b32.xlu0 %v461, 29
      %v1773 = vpop.permute.xlu0 %1772
      %1774 = vrot.lane.b32.xlu0 %v462, 29
      %v1775 = vpop.permute.xlu0 %1774
      %1776 = vrot.lane.b32.xlu0 %v463, 29
      %v1777 = vpop.permute.xlu0 %1776
      %1778 = vrot.lane.b32.xlu0 %v619, 29
      %v1779 = vpop.permute.xlu0 %1778
      %1780 = vrot.lane.b32.xlu0 %v617, 29
      %v1781 = vpop.permute.xlu0 %1780
      %1782 = vrot.lane.b32.xlu0 %v507, 29
      %v1783 = vpop.permute.xlu0 %1782
      %1784 = vrot.lane.b32.xlu0 %v508, 29
      %v1785 = vpop.permute.xlu0 %1784
      %1786 = vrot.lane.b32.xlu0 %v509, 29
      %v1787 = vpop.permute.xlu0 %1786
      %1788 = vrot.lane.b32.xlu0 %v510, 29
      %v1789 = vpop.permute.xlu0 %1788
      %1790 = vrot.lane.b32.xlu0 %v511, 29
      %v1791 = vpop.permute.xlu0 %1790
      %1792 = vrot.lane.b32.xlu0 %v512, 29
      %v1793 = vpop.permute.xlu0 %1792
      %1794 = vrot.lane.b32.xlu0 %v624, 29
      %v1795 = vpop.permute.xlu0 %1794
      %1796 = vrot.lane.b32.xlu0 %v621, 29
      %v1797 = vpop.permute.xlu0 %1796
      %1798 = vrot.lane.b32.xlu0 %v513, 29
      %v1799 = vpop.permute.xlu0 %1798
      %1800 = vrot.lane.b32.xlu0 %v514, 29
      %v1801 = vpop.permute.xlu0 %1800
      %1802 = vrot.lane.b32.xlu0 %v515, 29
      %v1803 = vpop.permute.xlu0 %1802
      %1804 = vrot.lane.b32.xlu0 %v516, 29
      %v1805 = vpop.permute.xlu0 %1804
      %1806 = vrot.lane.b32.xlu0 %v517, 29
      %v1807 = vpop.permute.xlu0 %1806
      %1808 = vrot.lane.b32.xlu0 %v518, 29
      %v1809 = vpop.permute.xlu0 %1808
      %1810 = vrot.lane.b32.xlu0 %v625, 29
      %v1811 = vpop.permute.xlu0 %1810
      %1812 = vrot.lane.b32.xlu0 %v623, 29
      %v1813 = vpop.permute.xlu0 %1812
      %1814 = vrot.lane.b32.xlu0 %v562, 29
      %v1815 = vpop.permute.xlu0 %1814
      %1816 = vrot.lane.b32.xlu0 %v563, 29
      %v1817 = vpop.permute.xlu0 %1816
      %1818 = vrot.lane.b32.xlu0 %v564, 29
      %v1819 = vpop.permute.xlu0 %1818
      %1820 = vrot.lane.b32.xlu0 %v565, 29
      %v1821 = vpop.permute.xlu0 %1820
      %1822 = vrot.lane.b32.xlu0 %v566, 29
      %v1823 = vpop.permute.xlu0 %1822
      %1824 = vrot.lane.b32.xlu0 %v567, 29
      %v1825 = vpop.permute.xlu0 %1824
      %1826 = vrot.lane.b32.xlu0 %v630, 29
      %v1827 = vpop.permute.xlu0 %1826
      %1828 = vrot.lane.b32.xlu0 %v627, 29
      %v1829 = vpop.permute.xlu0 %1828
      %1830 = vrot.lane.b32.xlu0 %v568, 29
      %v1831 = vpop.permute.xlu0 %1830
      %1832 = vrot.lane.b32.xlu0 %v569, 29
      %v1833 = vpop.permute.xlu0 %1832
      %1834 = vrot.lane.b32.xlu0 %v570, 29
      %v1835 = vpop.permute.xlu0 %1834
      %1836 = vrot.lane.b32.xlu0 %v571, 29
      %v1837 = vpop.permute.xlu0 %1836
      %1838 = vrot.lane.b32.xlu0 %v572, 29
      %v1839 = vpop.permute.xlu0 %1838
      %1840 = vrot.lane.b32.xlu0 %v573, 29
      %v1841 = vpop.permute.xlu0 %1840
      %1842 = vrot.lane.b32.xlu0 %v631, 29
      %v1843 = vpop.permute.xlu0 %1842
      %1844 = vrot.lane.b32.xlu0 %v629, 29
      %v1845 = vpop.permute.xlu0 %1844
      %vm1846 = vcmask 236544
      %v1847 = vsel %vm1846, %v1591, %v1593
      %v1848 = vsel %vm1846, %v1593, %v1595
      %v1849 = vsel %vm1846, %v1595, %v1597
      %v1850 = vsel %vm1846, %v1597, %v1599
      %v1851 = vsel %vm1846, %v1599, %v1601
      %v1852 = vsel %vm1846, %v1601, %v1603
      %v1853 = vsel %vm1846, %v1603, %v1605
      %v1854 = vsel %vm1846, %v1607, %v1609
      %v1855 = vsel %vm1846, %v1609, %v1611
      %v1856 = vsel %vm1846, %v1611, %v1613
      %v1857 = vsel %vm1846, %v1613, %v1615
      %v1858 = vsel %vm1846, %v1615, %v1617
      %v1859 = vsel %vm1846, %v1617, %v1619
      %v1860 = vsel %vm1846, %v1619, %v1621
      %v1861 = vsel %vm1846, %v1623, %v1625
      %v1862 = vsel %vm1846, %v1625, %v1627
      %v1863 = vsel %vm1846, %v1627, %v1629
      %v1864 = vsel %vm1846, %v1629, %v1631
      %v1865 = vsel %vm1846, %v1631, %v1633
      %v1866 = vsel %vm1846, %v1633, %v1635
      %v1867 = vsel %vm1846, %v1635, %v1637
      %v1868 = vsel %vm1846, %v1639, %v1641
      %v1869 = vsel %vm1846, %v1641, %v1643
      %v1870 = vsel %vm1846, %v1643, %v1645
      %v1871 = vsel %vm1846, %v1645, %v1647
      %v1872 = vsel %vm1846, %v1647, %v1649
      %v1873 = vsel %vm1846, %v1649, %v1651
      %v1874 = vsel %vm1846, %v1651, %v1653
      %v1875 = vsel %vm1846, %v1655, %v1657
      %v1876 = vsel %vm1846, %v1657, %v1659
      %v1877 = vsel %vm1846, %v1659, %v1661
      %v1878 = vsel %vm1846, %v1661, %v1663
      %v1879 = vsel %vm1846, %v1663, %v1665
      %v1880 = vsel %vm1846, %v1665, %v1667
      %v1881 = vsel %vm1846, %v1667, %v1669
      %v1882 = vsel %vm1846, %v1671, %v1673
      %v1883 = vsel %vm1846, %v1673, %v1675
      %v1884 = vsel %vm1846, %v1675, %v1677
      %v1885 = vsel %vm1846, %v1677, %v1679
      %v1886 = vsel %vm1846, %v1679, %v1681
      %v1887 = vsel %vm1846, %v1681, %v1683
      %v1888 = vsel %vm1846, %v1683, %v1685
      %v1889 = vsel %vm1846, %v1687, %v1689
      %v1890 = vsel %vm1846, %v1689, %v1691
      %v1891 = vsel %vm1846, %v1691, %v1693
      %v1892 = vsel %vm1846, %v1693, %v1695
      %v1893 = vsel %vm1846, %v1695, %v1697
      %v1894 = vsel %vm1846, %v1697, %v1699
      %v1895 = vsel %vm1846, %v1699, %v1701
      %v1896 = vsel %vm1846, %v1703, %v1705
      %v1897 = vsel %vm1846, %v1705, %v1707
      %v1898 = vsel %vm1846, %v1707, %v1709
      %v1899 = vsel %vm1846, %v1709, %v1711
      %v1900 = vsel %vm1846, %v1711, %v1713
      %v1901 = vsel %vm1846, %v1713, %v1715
      %v1902 = vsel %vm1846, %v1715, %v1717
      %v1903 = vsel %vm1846, %v1719, %v1721
      %v1904 = vsel %vm1846, %v1721, %v1723
      %v1905 = vsel %vm1846, %v1723, %v1725
      %v1906 = vsel %vm1846, %v1725, %v1727
      %v1907 = vsel %vm1846, %v1727, %v1729
      %v1908 = vsel %vm1846, %v1729, %v1731
      %v1909 = vsel %vm1846, %v1731, %v1733
      %v1910 = vsel %vm1846, %v1735, %v1737
      %v1911 = vsel %vm1846, %v1737, %v1739
      %v1912 = vsel %vm1846, %v1739, %v1741
      %v1913 = vsel %vm1846, %v1741, %v1743
      %v1914 = vsel %vm1846, %v1743, %v1745
      %v1915 = vsel %vm1846, %v1745, %v1747
      %v1916 = vsel %vm1846, %v1747, %v1749
      %v1917 = vsel %vm1846, %v1751, %v1753
      %v1918 = vsel %vm1846, %v1753, %v1755
      %v1919 = vsel %vm1846, %v1755, %v1757
      %v1920 = vsel %vm1846, %v1757, %v1759
      %v1921 = vsel %vm1846, %v1759, %v1761
      %v1922 = vsel %vm1846, %v1761, %v1763
      %v1923 = vsel %vm1846, %v1763, %v1765
      %v1924 = vsel %vm1846, %v1767, %v1769
      %v1925 = vsel %vm1846, %v1769, %v1771
      %v1926 = vsel %vm1846, %v1771, %v1773
      %v1927 = vsel %vm1846, %v1773, %v1775
      %v1928 = vsel %vm1846, %v1775, %v1777
      %v1929 = vsel %vm1846, %v1777, %v1779
      %v1930 = vsel %vm1846, %v1779, %v1781
      %v1931 = vsel %vm1846, %v1783, %v1785
      %v1932 = vsel %vm1846, %v1785, %v1787
      %v1933 = vsel %vm1846, %v1787, %v1789
      %v1934 = vsel %vm1846, %v1789, %v1791
      %v1935 = vsel %vm1846, %v1791, %v1793
      %v1936 = vsel %vm1846, %v1793, %v1795
      %v1937 = vsel %vm1846, %v1795, %v1797
      %v1938 = vsel %vm1846, %v1799, %v1801
      %v1939 = vsel %vm1846, %v1801, %v1803
      %v1940 = vsel %vm1846, %v1803, %v1805
      %v1941 = vsel %vm1846, %v1805, %v1807
      %v1942 = vsel %vm1846, %v1807, %v1809
      %v1943 = vsel %vm1846, %v1809, %v1811
      %v1944 = vsel %vm1846, %v1811, %v1813
      %v1945 = vsel %vm1846, %v1815, %v1817
      %v1946 = vsel %vm1846, %v1817, %v1819
      %v1947 = vsel %vm1846, %v1819, %v1821
      %v1948 = vsel %vm1846, %v1821, %v1823
      %v1949 = vsel %vm1846, %v1823, %v1825
      %v1950 = vsel %vm1846, %v1825, %v1827
      %v1951 = vsel %vm1846, %v1827, %v1829
      %v1952 = vsel %vm1846, %v1831, %v1833
      %v1953 = vsel %vm1846, %v1833, %v1835
      %v1954 = vsel %vm1846, %v1835, %v1837
      %v1955 = vsel %vm1846, %v1837, %v1839
      %v1956 = vsel %vm1846, %v1839, %v1841
      %v1957 = vsel %vm1846, %v1841, %v1843
      %v1958 = vsel %vm1846, %v1843, %v1845
      %2071 = vrot.lane.b32.xlu0 %v233, 124
      %v2072 = vpop.permute.xlu0 %2071
      %2073 = vrot.lane.b32.xlu0 %v234, 124
      %v2074 = vpop.permute.xlu0 %2073
      %2075 = vrot.lane.b32.xlu0 %v235, 124
      %v2076 = vpop.permute.xlu0 %2075
      %2077 = vrot.lane.b32.xlu0 %v236, 124
      %v2078 = vpop.permute.xlu0 %2077
      %2079 = vrot.lane.b32.xlu0 %v237, 124
      %v2080 = vpop.permute.xlu0 %2079
      %2081 = vrot.lane.b32.xlu0 %v594, 124
      %v2082 = vpop.permute.xlu0 %2081
      %2083 = vrot.lane.b32.xlu0 %v591, 124
      %v2084 = vpop.permute.xlu0 %2083
      %2085 = vrot.lane.b32.xlu0 %v239, 124
      %v2086 = vpop.permute.xlu0 %2085
      %2087 = vrot.lane.b32.xlu0 %v240, 124
      %v2088 = vpop.permute.xlu0 %2087
      %2089 = vrot.lane.b32.xlu0 %v241, 124
      %v2090 = vpop.permute.xlu0 %2089
      %2091 = vrot.lane.b32.xlu0 %v242, 124
      %v2092 = vpop.permute.xlu0 %2091
      %2093 = vrot.lane.b32.xlu0 %v243, 124
      %v2094 = vpop.permute.xlu0 %2093
      %2095 = vrot.lane.b32.xlu0 %v595, 124
      %v2096 = vpop.permute.xlu0 %2095
      %2097 = vrot.lane.b32.xlu0 %v593, 124
      %v2098 = vpop.permute.xlu0 %2097
      %2099 = vrot.lane.b32.xlu0 %v288, 124
      %v2100 = vpop.permute.xlu0 %2099
      %2101 = vrot.lane.b32.xlu0 %v289, 124
      %v2102 = vpop.permute.xlu0 %2101
      %2103 = vrot.lane.b32.xlu0 %v290, 124
      %v2104 = vpop.permute.xlu0 %2103
      %2105 = vrot.lane.b32.xlu0 %v291, 124
      %v2106 = vpop.permute.xlu0 %2105
      %2107 = vrot.lane.b32.xlu0 %v292, 124
      %v2108 = vpop.permute.xlu0 %2107
      %2109 = vrot.lane.b32.xlu0 %v600, 124
      %v2110 = vpop.permute.xlu0 %2109
      %2111 = vrot.lane.b32.xlu0 %v597, 124
      %v2112 = vpop.permute.xlu0 %2111
      %2113 = vrot.lane.b32.xlu0 %v294, 124
      %v2114 = vpop.permute.xlu0 %2113
      %2115 = vrot.lane.b32.xlu0 %v295, 124
      %v2116 = vpop.permute.xlu0 %2115
      %2117 = vrot.lane.b32.xlu0 %v296, 124
      %v2118 = vpop.permute.xlu0 %2117
      %2119 = vrot.lane.b32.xlu0 %v297, 124
      %v2120 = vpop.permute.xlu0 %2119
      %2121 = vrot.lane.b32.xlu0 %v298, 124
      %v2122 = vpop.permute.xlu0 %2121
      %2123 = vrot.lane.b32.xlu0 %v601, 124
      %v2124 = vpop.permute.xlu0 %2123
      %2125 = vrot.lane.b32.xlu0 %v599, 124
      %v2126 = vpop.permute.xlu0 %2125
      %2127 = vrot.lane.b32.xlu0 %v343, 124
      %v2128 = vpop.permute.xlu0 %2127
      %2129 = vrot.lane.b32.xlu0 %v344, 124
      %v2130 = vpop.permute.xlu0 %2129
      %2131 = vrot.lane.b32.xlu0 %v345, 124
      %v2132 = vpop.permute.xlu0 %2131
      %2133 = vrot.lane.b32.xlu0 %v346, 124
      %v2134 = vpop.permute.xlu0 %2133
      %2135 = vrot.lane.b32.xlu0 %v347, 124
      %v2136 = vpop.permute.xlu0 %2135
      %2137 = vrot.lane.b32.xlu0 %v606, 124
      %v2138 = vpop.permute.xlu0 %2137
      %2139 = vrot.lane.b32.xlu0 %v603, 124
      %v2140 = vpop.permute.xlu0 %2139
      %2141 = vrot.lane.b32.xlu0 %v349, 124
      %v2142 = vpop.permute.xlu0 %2141
      %2143 = vrot.lane.b32.xlu0 %v350, 124
      %v2144 = vpop.permute.xlu0 %2143
      %2145 = vrot.lane.b32.xlu0 %v351, 124
      %v2146 = vpop.permute.xlu0 %2145
      %2147 = vrot.lane.b32.xlu0 %v352, 124
      %v2148 = vpop.permute.xlu0 %2147
      %2149 = vrot.lane.b32.xlu0 %v353, 124
      %v2150 = vpop.permute.xlu0 %2149
      %2151 = vrot.lane.b32.xlu0 %v607, 124
      %v2152 = vpop.permute.xlu0 %2151
      %2153 = vrot.lane.b32.xlu0 %v605, 124
      %v2154 = vpop.permute.xlu0 %2153
      %2155 = vrot.lane.b32.xlu0 %v398, 124
      %v2156 = vpop.permute.xlu0 %2155
      %2157 = vrot.lane.b32.xlu0 %v399, 124
      %v2158 = vpop.permute.xlu0 %2157
      %2159 = vrot.lane.b32.xlu0 %v400, 124
      %v2160 = vpop.permute.xlu0 %2159
      %2161 = vrot.lane.b32.xlu0 %v401, 124
      %v2162 = vpop.permute.xlu0 %2161
      %2163 = vrot.lane.b32.xlu0 %v402, 124
      %v2164 = vpop.permute.xlu0 %2163
      %2165 = vrot.lane.b32.xlu0 %v612, 124
      %v2166 = vpop.permute.xlu0 %2165
      %2167 = vrot.lane.b32.xlu0 %v609, 124
      %v2168 = vpop.permute.xlu0 %2167
      %2169 = vrot.lane.b32.xlu0 %v404, 124
      %v2170 = vpop.permute.xlu0 %2169
      %2171 = vrot.lane.b32.xlu0 %v405, 124
      %v2172 = vpop.permute.xlu0 %2171
      %2173 = vrot.lane.b32.xlu0 %v406, 124
      %v2174 = vpop.permute.xlu0 %2173
      %2175 = vrot.lane.b32.xlu0 %v407, 124
      %v2176 = vpop.permute.xlu0 %2175
      %2177 = vrot.lane.b32.xlu0 %v408, 124
      %v2178 = vpop.permute.xlu0 %2177
      %2179 = vrot.lane.b32.xlu0 %v613, 124
      %v2180 = vpop.permute.xlu0 %2179
      %2181 = vrot.lane.b32.xlu0 %v611, 124
      %v2182 = vpop.permute.xlu0 %2181
      %2183 = vrot.lane.b32.xlu0 %v453, 124
      %v2184 = vpop.permute.xlu0 %2183
      %2185 = vrot.lane.b32.xlu0 %v454, 124
      %v2186 = vpop.permute.xlu0 %2185
      %2187 = vrot.lane.b32.xlu0 %v455, 124
      %v2188 = vpop.permute.xlu0 %2187
      %2189 = vrot.lane.b32.xlu0 %v456, 124
      %v2190 = vpop.permute.xlu0 %2189
      %2191 = vrot.lane.b32.xlu0 %v457, 124
      %v2192 = vpop.permute.xlu0 %2191
      %2193 = vrot.lane.b32.xlu0 %v618, 124
      %v2194 = vpop.permute.xlu0 %2193
      %2195 = vrot.lane.b32.xlu0 %v615, 124
      %v2196 = vpop.permute.xlu0 %2195
      %2197 = vrot.lane.b32.xlu0 %v459, 124
      %v2198 = vpop.permute.xlu0 %2197
      %2199 = vrot.lane.b32.xlu0 %v460, 124
      %v2200 = vpop.permute.xlu0 %2199
      %2201 = vrot.lane.b32.xlu0 %v461, 124
      %v2202 = vpop.permute.xlu0 %2201
      %2203 = vrot.lane.b32.xlu0 %v462, 124
      %v2204 = vpop.permute.xlu0 %2203
      %2205 = vrot.lane.b32.xlu0 %v463, 124
      %v2206 = vpop.permute.xlu0 %2205
      %2207 = vrot.lane.b32.xlu0 %v619, 124
      %v2208 = vpop.permute.xlu0 %2207
      %2209 = vrot.lane.b32.xlu0 %v617, 124
      %v2210 = vpop.permute.xlu0 %2209
      %2211 = vrot.lane.b32.xlu0 %v508, 124
      %v2212 = vpop.permute.xlu0 %2211
      %2213 = vrot.lane.b32.xlu0 %v509, 124
      %v2214 = vpop.permute.xlu0 %2213
      %2215 = vrot.lane.b32.xlu0 %v510, 124
      %v2216 = vpop.permute.xlu0 %2215
      %2217 = vrot.lane.b32.xlu0 %v511, 124
      %v2218 = vpop.permute.xlu0 %2217
      %2219 = vrot.lane.b32.xlu0 %v512, 124
      %v2220 = vpop.permute.xlu0 %2219
      %2221 = vrot.lane.b32.xlu0 %v624, 124
      %v2222 = vpop.permute.xlu0 %2221
      %2223 = vrot.lane.b32.xlu0 %v621, 124
      %v2224 = vpop.permute.xlu0 %2223
      %2225 = vrot.lane.b32.xlu0 %v514, 124
      %v2226 = vpop.permute.xlu0 %2225
      %2227 = vrot.lane.b32.xlu0 %v515, 124
      %v2228 = vpop.permute.xlu0 %2227
      %2229 = vrot.lane.b32.xlu0 %v516, 124
      %v2230 = vpop.permute.xlu0 %2229
      %2231 = vrot.lane.b32.xlu0 %v517, 124
      %v2232 = vpop.permute.xlu0 %2231
      %2233 = vrot.lane.b32.xlu0 %v518, 124
      %v2234 = vpop.permute.xlu0 %2233
      %2235 = vrot.lane.b32.xlu0 %v625, 124
      %v2236 = vpop.permute.xlu0 %2235
      %2237 = vrot.lane.b32.xlu0 %v623, 124
      %v2238 = vpop.permute.xlu0 %2237
      %2239 = vrot.lane.b32.xlu0 %v563, 124
      %v2240 = vpop.permute.xlu0 %2239
      %2241 = vrot.lane.b32.xlu0 %v564, 124
      %v2242 = vpop.permute.xlu0 %2241
      %2243 = vrot.lane.b32.xlu0 %v565, 124
      %v2244 = vpop.permute.xlu0 %2243
      %2245 = vrot.lane.b32.xlu0 %v566, 124
      %v2246 = vpop.permute.xlu0 %2245
      %2247 = vrot.lane.b32.xlu0 %v567, 124
      %v2248 = vpop.permute.xlu0 %2247
      %2249 = vrot.lane.b32.xlu0 %v630, 124
      %v2250 = vpop.permute.xlu0 %2249
      %2251 = vrot.lane.b32.xlu0 %v627, 124
      %v2252 = vpop.permute.xlu0 %2251
      %2253 = vrot.lane.b32.xlu0 %v569, 124
      %v2254 = vpop.permute.xlu0 %2253
      %2255 = vrot.lane.b32.xlu0 %v570, 124
      %v2256 = vpop.permute.xlu0 %2255
      %2257 = vrot.lane.b32.xlu0 %v571, 124
      %v2258 = vpop.permute.xlu0 %2257
      %2259 = vrot.lane.b32.xlu0 %v572, 124
      %v2260 = vpop.permute.xlu0 %2259
      %2261 = vrot.lane.b32.xlu0 %v573, 124
      %v2262 = vpop.permute.xlu0 %2261
      %2263 = vrot.lane.b32.xlu0 %v631, 124
      %v2264 = vpop.permute.xlu0 %2263
      %2265 = vrot.lane.b32.xlu0 %v629, 124
      %v2266 = vpop.permute.xlu0 %2265
      %v2267 = vsel %vm396, %v2072, %v2074
      %v2268 = vsel %vm396, %v2074, %v2076
      %v2269 = vsel %vm396, %v2076, %v2078
      %v2270 = vsel %vm396, %v2078, %v2080
      %v2271 = vsel %vm396, %v2080, %v2082
      %v2272 = vsel %vm396, %v2082, %v2084
      %v2273 = vsel %vm396, %v2086, %v2088
      %v2274 = vsel %vm396, %v2088, %v2090
      %v2275 = vsel %vm396, %v2090, %v2092
      %v2276 = vsel %vm396, %v2092, %v2094
      %v2277 = vsel %vm396, %v2094, %v2096
      %v2278 = vsel %vm396, %v2096, %v2098
      %v2279 = vsel %vm396, %v2100, %v2102
      %v2280 = vsel %vm396, %v2102, %v2104
      %v2281 = vsel %vm396, %v2104, %v2106
      %v2282 = vsel %vm396, %v2106, %v2108
      %v2283 = vsel %vm396, %v2108, %v2110
      %v2284 = vsel %vm396, %v2110, %v2112
      %v2285 = vsel %vm396, %v2114, %v2116
      %v2286 = vsel %vm396, %v2116, %v2118
      %v2287 = vsel %vm396, %v2118, %v2120
      %v2288 = vsel %vm396, %v2120, %v2122
      %v2289 = vsel %vm396, %v2122, %v2124
      %v2290 = vsel %vm396, %v2124, %v2126
      %v2291 = vsel %vm396, %v2128, %v2130
      %v2292 = vsel %vm396, %v2130, %v2132
      %v2293 = vsel %vm396, %v2132, %v2134
      %v2294 = vsel %vm396, %v2134, %v2136
      %v2295 = vsel %vm396, %v2136, %v2138
      %v2296 = vsel %vm396, %v2138, %v2140
      %v2297 = vsel %vm396, %v2142, %v2144
      %v2298 = vsel %vm396, %v2144, %v2146
      %v2299 = vsel %vm396, %v2146, %v2148
      %v2300 = vsel %vm396, %v2148, %v2150
      %v2301 = vsel %vm396, %v2150, %v2152
      %v2302 = vsel %vm396, %v2152, %v2154
      %v2303 = vsel %vm396, %v2156, %v2158
      %v2304 = vsel %vm396, %v2158, %v2160
      %v2305 = vsel %vm396, %v2160, %v2162
      %v2306 = vsel %vm396, %v2162, %v2164
      %v2307 = vsel %vm396, %v2164, %v2166
      %v2308 = vsel %vm396, %v2166, %v2168
      %v2309 = vsel %vm396, %v2170, %v2172
      %v2310 = vsel %vm396, %v2172, %v2174
      %v2311 = vsel %vm396, %v2174, %v2176
      %v2312 = vsel %vm396, %v2176, %v2178
      %v2313 = vsel %vm396, %v2178, %v2180
      %v2314 = vsel %vm396, %v2180, %v2182
      %v2315 = vsel %vm396, %v2184, %v2186
      %v2316 = vsel %vm396, %v2186, %v2188
      %v2317 = vsel %vm396, %v2188, %v2190
      %v2318 = vsel %vm396, %v2190, %v2192
      %v2319 = vsel %vm396, %v2192, %v2194
      %v2320 = vsel %vm396, %v2194, %v2196
      %v2321 = vsel %vm396, %v2198, %v2200
      %v2322 = vsel %vm396, %v2200, %v2202
      %v2323 = vsel %vm396, %v2202, %v2204
      %v2324 = vsel %vm396, %v2204, %v2206
      %v2325 = vsel %vm396, %v2206, %v2208
      %v2326 = vsel %vm396, %v2208, %v2210
      %v2327 = vsel %vm396, %v2212, %v2214
      %v2328 = vsel %vm396, %v2214, %v2216
      %v2329 = vsel %vm396, %v2216, %v2218
      %v2330 = vsel %vm396, %v2218, %v2220
      %v2331 = vsel %vm396, %v2220, %v2222
      %v2332 = vsel %vm396, %v2222, %v2224
      %v2333 = vsel %vm396, %v2226, %v2228
      %v2334 = vsel %vm396, %v2228, %v2230
      %v2335 = vsel %vm396, %v2230, %v2232
      %v2336 = vsel %vm396, %v2232, %v2234
      %v2337 = vsel %vm396, %v2234, %v2236
      %v2338 = vsel %vm396, %v2236, %v2238
      %v2339 = vsel %vm396, %v2240, %v2242
      %v2340 = vsel %vm396, %v2242, %v2244
      %v2341 = vsel %vm396, %v2244, %v2246
      %v2342 = vsel %vm396, %v2246, %v2248
      %v2343 = vsel %vm396, %v2248, %v2250
      %v2344 = vsel %vm396, %v2250, %v2252
      %v2345 = vsel %vm396, %v2254, %v2256
      %v2346 = vsel %vm396, %v2256, %v2258
      %v2347 = vsel %vm396, %v2258, %v2260
      %v2348 = vsel %vm396, %v2260, %v2262
      %v2349 = vsel %vm396, %v2262, %v2264
      %v2350 = vsel %vm396, %v2264, %v2266
      %2453 = vrot.lane.b32.xlu0 %v172, 91
      %v2454 = vpop.permute.xlu0 %2453
      %2455 = vrot.lane.b32.xlu0 %v173, 91
      %v2456 = vpop.permute.xlu0 %2455
      %2457 = vrot.lane.b32.xlu0 %v174, 91
      %v2458 = vpop.permute.xlu0 %2457
      %2459 = vrot.lane.b32.xlu0 %v175, 91
      %v2460 = vpop.permute.xlu0 %2459
      %2461 = vrot.lane.b32.xlu0 %v176, 91
      %v2462 = vpop.permute.xlu0 %2461
      %2463 = vrot.lane.b32.xlu0 %v177, 91
      %v2464 = vpop.permute.xlu0 %2463
      %2465 = vrot.lane.b32.xlu0 %v178, 91
      %v2466 = vpop.permute.xlu0 %2465
      %2467 = vrot.lane.b32.xlu0 %v181, 91
      %v2468 = vpop.permute.xlu0 %2467
      %2469 = vrot.lane.b32.xlu0 %v182, 91
      %v2470 = vpop.permute.xlu0 %2469
      %2471 = vrot.lane.b32.xlu0 %v183, 91
      %v2472 = vpop.permute.xlu0 %2471
      %2473 = vrot.lane.b32.xlu0 %v184, 91
      %v2474 = vpop.permute.xlu0 %2473
      %2475 = vrot.lane.b32.xlu0 %v185, 91
      %v2476 = vpop.permute.xlu0 %2475
      %2477 = vrot.lane.b32.xlu0 %v186, 91
      %v2478 = vpop.permute.xlu0 %2477
      %2479 = vrot.lane.b32.xlu0 %v187, 91
      %v2480 = vpop.permute.xlu0 %2479
      %2481 = vrot.lane.b32.xlu0 %v233, 91
      %v2482 = vpop.permute.xlu0 %2481
      %2483 = vrot.lane.b32.xlu0 %v234, 91
      %v2484 = vpop.permute.xlu0 %2483
      %2485 = vrot.lane.b32.xlu0 %v235, 91
      %v2486 = vpop.permute.xlu0 %2485
      %2487 = vrot.lane.b32.xlu0 %v236, 91
      %v2488 = vpop.permute.xlu0 %2487
      %2489 = vrot.lane.b32.xlu0 %v237, 91
      %v2490 = vpop.permute.xlu0 %2489
      %2491 = vrot.lane.b32.xlu0 %v594, 91
      %v2492 = vpop.permute.xlu0 %2491
      %2493 = vrot.lane.b32.xlu0 %v591, 91
      %v2494 = vpop.permute.xlu0 %2493
      %2495 = vrot.lane.b32.xlu0 %v239, 91
      %v2496 = vpop.permute.xlu0 %2495
      %2497 = vrot.lane.b32.xlu0 %v240, 91
      %v2498 = vpop.permute.xlu0 %2497
      %2499 = vrot.lane.b32.xlu0 %v241, 91
      %v2500 = vpop.permute.xlu0 %2499
      %2501 = vrot.lane.b32.xlu0 %v242, 91
      %v2502 = vpop.permute.xlu0 %2501
      %2503 = vrot.lane.b32.xlu0 %v243, 91
      %v2504 = vpop.permute.xlu0 %2503
      %2505 = vrot.lane.b32.xlu0 %v595, 91
      %v2506 = vpop.permute.xlu0 %2505
      %2507 = vrot.lane.b32.xlu0 %v593, 91
      %v2508 = vpop.permute.xlu0 %2507
      %2509 = vrot.lane.b32.xlu0 %v288, 91
      %v2510 = vpop.permute.xlu0 %2509
      %2511 = vrot.lane.b32.xlu0 %v289, 91
      %v2512 = vpop.permute.xlu0 %2511
      %2513 = vrot.lane.b32.xlu0 %v290, 91
      %v2514 = vpop.permute.xlu0 %2513
      %2515 = vrot.lane.b32.xlu0 %v291, 91
      %v2516 = vpop.permute.xlu0 %2515
      %2517 = vrot.lane.b32.xlu0 %v292, 91
      %v2518 = vpop.permute.xlu0 %2517
      %2519 = vrot.lane.b32.xlu0 %v600, 91
      %v2520 = vpop.permute.xlu0 %2519
      %2521 = vrot.lane.b32.xlu0 %v597, 91
      %v2522 = vpop.permute.xlu0 %2521
      %2523 = vrot.lane.b32.xlu0 %v294, 91
      %v2524 = vpop.permute.xlu0 %2523
      %2525 = vrot.lane.b32.xlu0 %v295, 91
      %v2526 = vpop.permute.xlu0 %2525
      %2527 = vrot.lane.b32.xlu0 %v296, 91
      %v2528 = vpop.permute.xlu0 %2527
      %2529 = vrot.lane.b32.xlu0 %v297, 91
      %v2530 = vpop.permute.xlu0 %2529
      %2531 = vrot.lane.b32.xlu0 %v298, 91
      %v2532 = vpop.permute.xlu0 %2531
      %2533 = vrot.lane.b32.xlu0 %v601, 91
      %v2534 = vpop.permute.xlu0 %2533
      %2535 = vrot.lane.b32.xlu0 %v599, 91
      %v2536 = vpop.permute.xlu0 %2535
      %2537 = vrot.lane.b32.xlu0 %v343, 91
      %v2538 = vpop.permute.xlu0 %2537
      %2539 = vrot.lane.b32.xlu0 %v344, 91
      %v2540 = vpop.permute.xlu0 %2539
      %2541 = vrot.lane.b32.xlu0 %v345, 91
      %v2542 = vpop.permute.xlu0 %2541
      %2543 = vrot.lane.b32.xlu0 %v346, 91
      %v2544 = vpop.permute.xlu0 %2543
      %2545 = vrot.lane.b32.xlu0 %v347, 91
      %v2546 = vpop.permute.xlu0 %2545
      %2547 = vrot.lane.b32.xlu0 %v606, 91
      %v2548 = vpop.permute.xlu0 %2547
      %2549 = vrot.lane.b32.xlu0 %v603, 91
      %v2550 = vpop.permute.xlu0 %2549
      %2551 = vrot.lane.b32.xlu0 %v349, 91
      %v2552 = vpop.permute.xlu0 %2551
      %2553 = vrot.lane.b32.xlu0 %v350, 91
      %v2554 = vpop.permute.xlu0 %2553
      %2555 = vrot.lane.b32.xlu0 %v351, 91
      %v2556 = vpop.permute.xlu0 %2555
      %2557 = vrot.lane.b32.xlu0 %v352, 91
      %v2558 = vpop.permute.xlu0 %2557
      %2559 = vrot.lane.b32.xlu0 %v353, 91
      %v2560 = vpop.permute.xlu0 %2559
      %2561 = vrot.lane.b32.xlu0 %v607, 91
      %v2562 = vpop.permute.xlu0 %2561
      %2563 = vrot.lane.b32.xlu0 %v605, 91
      %v2564 = vpop.permute.xlu0 %2563
      %2565 = vrot.lane.b32.xlu0 %v398, 91
      %v2566 = vpop.permute.xlu0 %2565
      %2567 = vrot.lane.b32.xlu0 %v399, 91
      %v2568 = vpop.permute.xlu0 %2567
      %2569 = vrot.lane.b32.xlu0 %v400, 91
      %v2570 = vpop.permute.xlu0 %2569
      %2571 = vrot.lane.b32.xlu0 %v401, 91
      %v2572 = vpop.permute.xlu0 %2571
      %2573 = vrot.lane.b32.xlu0 %v402, 91
      %v2574 = vpop.permute.xlu0 %2573
      %2575 = vrot.lane.b32.xlu0 %v612, 91
      %v2576 = vpop.permute.xlu0 %2575
      %2577 = vrot.lane.b32.xlu0 %v609, 91
      %v2578 = vpop.permute.xlu0 %2577
      %2579 = vrot.lane.b32.xlu0 %v404, 91
      %v2580 = vpop.permute.xlu0 %2579
      %2581 = vrot.lane.b32.xlu0 %v405, 91
      %v2582 = vpop.permute.xlu0 %2581
      %2583 = vrot.lane.b32.xlu0 %v406, 91
      %v2584 = vpop.permute.xlu0 %2583
      %2585 = vrot.lane.b32.xlu0 %v407, 91
      %v2586 = vpop.permute.xlu0 %2585
      %2587 = vrot.lane.b32.xlu0 %v408, 91
      %v2588 = vpop.permute.xlu0 %2587
      %2589 = vrot.lane.b32.xlu0 %v613, 91
      %v2590 = vpop.permute.xlu0 %2589
      %2591 = vrot.lane.b32.xlu0 %v611, 91
      %v2592 = vpop.permute.xlu0 %2591
      %2593 = vrot.lane.b32.xlu0 %v453, 91
      %v2594 = vpop.permute.xlu0 %2593
      %2595 = vrot.lane.b32.xlu0 %v454, 91
      %v2596 = vpop.permute.xlu0 %2595
      %2597 = vrot.lane.b32.xlu0 %v455, 91
      %v2598 = vpop.permute.xlu0 %2597
      %2599 = vrot.lane.b32.xlu0 %v456, 91
      %v2600 = vpop.permute.xlu0 %2599
      %2601 = vrot.lane.b32.xlu0 %v457, 91
      %v2602 = vpop.permute.xlu0 %2601
      %2603 = vrot.lane.b32.xlu0 %v618, 91
      %v2604 = vpop.permute.xlu0 %2603
      %2605 = vrot.lane.b32.xlu0 %v615, 91
      %v2606 = vpop.permute.xlu0 %2605
      %2607 = vrot.lane.b32.xlu0 %v459, 91
      %v2608 = vpop.permute.xlu0 %2607
      %2609 = vrot.lane.b32.xlu0 %v460, 91
      %v2610 = vpop.permute.xlu0 %2609
      %2611 = vrot.lane.b32.xlu0 %v461, 91
      %v2612 = vpop.permute.xlu0 %2611
      %2613 = vrot.lane.b32.xlu0 %v462, 91
      %v2614 = vpop.permute.xlu0 %2613
      %2615 = vrot.lane.b32.xlu0 %v463, 91
      %v2616 = vpop.permute.xlu0 %2615
      %2617 = vrot.lane.b32.xlu0 %v619, 91
      %v2618 = vpop.permute.xlu0 %2617
      %2619 = vrot.lane.b32.xlu0 %v617, 91
      %v2620 = vpop.permute.xlu0 %2619
      %2621 = vrot.lane.b32.xlu0 %v508, 91
      %v2622 = vpop.permute.xlu0 %2621
      %2623 = vrot.lane.b32.xlu0 %v509, 91
      %v2624 = vpop.permute.xlu0 %2623
      %2625 = vrot.lane.b32.xlu0 %v510, 91
      %v2626 = vpop.permute.xlu0 %2625
      %2627 = vrot.lane.b32.xlu0 %v511, 91
      %v2628 = vpop.permute.xlu0 %2627
      %2629 = vrot.lane.b32.xlu0 %v512, 91
      %v2630 = vpop.permute.xlu0 %2629
      %2631 = vrot.lane.b32.xlu0 %v624, 91
      %v2632 = vpop.permute.xlu0 %2631
      %2633 = vrot.lane.b32.xlu0 %v621, 91
      %v2634 = vpop.permute.xlu0 %2633
      %2635 = vrot.lane.b32.xlu0 %v514, 91
      %v2636 = vpop.permute.xlu0 %2635
      %2637 = vrot.lane.b32.xlu0 %v515, 91
      %v2638 = vpop.permute.xlu0 %2637
      %2639 = vrot.lane.b32.xlu0 %v516, 91
      %v2640 = vpop.permute.xlu0 %2639
      %2641 = vrot.lane.b32.xlu0 %v517, 91
      %v2642 = vpop.permute.xlu0 %2641
      %2643 = vrot.lane.b32.xlu0 %v518, 91
      %v2644 = vpop.permute.xlu0 %2643
      %2645 = vrot.lane.b32.xlu0 %v625, 91
      %v2646 = vpop.permute.xlu0 %2645
      %2647 = vrot.lane.b32.xlu0 %v623, 91
      %v2648 = vpop.permute.xlu0 %2647
      %2649 = vrot.lane.b32.xlu0 %v563, 91
      %v2650 = vpop.permute.xlu0 %2649
      %2651 = vrot.lane.b32.xlu0 %v564, 91
      %v2652 = vpop.permute.xlu0 %2651
      %2653 = vrot.lane.b32.xlu0 %v565, 91
      %v2654 = vpop.permute.xlu0 %2653
      %2655 = vrot.lane.b32.xlu0 %v566, 91
      %v2656 = vpop.permute.xlu0 %2655
      %2657 = vrot.lane.b32.xlu0 %v567, 91
      %v2658 = vpop.permute.xlu0 %2657
      %2659 = vrot.lane.b32.xlu0 %v630, 91
      %v2660 = vpop.permute.xlu0 %2659
      %2661 = vrot.lane.b32.xlu0 %v627, 91
      %v2662 = vpop.permute.xlu0 %2661
      %2663 = vrot.lane.b32.xlu0 %v569, 91
      %v2664 = vpop.permute.xlu0 %2663
      %2665 = vrot.lane.b32.xlu0 %v570, 91
      %v2666 = vpop.permute.xlu0 %2665
      %2667 = vrot.lane.b32.xlu0 %v571, 91
      %v2668 = vpop.permute.xlu0 %2667
      %2669 = vrot.lane.b32.xlu0 %v572, 91
      %v2670 = vpop.permute.xlu0 %2669
      %2671 = vrot.lane.b32.xlu0 %v573, 91
      %v2672 = vpop.permute.xlu0 %2671
      %2673 = vrot.lane.b32.xlu0 %v631, 91
      %v2674 = vpop.permute.xlu0 %2673
      %2675 = vrot.lane.b32.xlu0 %v629, 91
      %v2676 = vpop.permute.xlu0 %2675
      %vm2677 = vcmask 744448
      %v2678 = vsel %vm2677, %v2454, %v2456
      %v2679 = vsel %vm2677, %v2456, %v2458
      %v2680 = vsel %vm2677, %v2458, %v2460
      %v2681 = vsel %vm2677, %v2460, %v2462
      %v2682 = vsel %vm2677, %v2462, %v2464
      %v2683 = vsel %vm2677, %v2464, %v2466
      %v2684 = vsel %vm2677, %v2468, %v2470
      %v2685 = vsel %vm2677, %v2470, %v2472
      %v2686 = vsel %vm2677, %v2472, %v2474
      %v2687 = vsel %vm2677, %v2474, %v2476
      %v2688 = vsel %vm2677, %v2476, %v2478
      %v2689 = vsel %vm2677, %v2478, %v2480
      %v2690 = vsel %vm2677, %v2482, %v2484
      %v2691 = vsel %vm2677, %v2484, %v2486
      %v2692 = vsel %vm2677, %v2486, %v2488
      %v2693 = vsel %vm2677, %v2488, %v2490
      %v2694 = vsel %vm2677, %v2490, %v2492
      %v2695 = vsel %vm2677, %v2492, %v2494
      %v2696 = vsel %vm2677, %v2496, %v2498
      %v2697 = vsel %vm2677, %v2498, %v2500
      %v2698 = vsel %vm2677, %v2500, %v2502
      %v2699 = vsel %vm2677, %v2502, %v2504
      %v2700 = vsel %vm2677, %v2504, %v2506
      %v2701 = vsel %vm2677, %v2506, %v2508
      %v2702 = vsel %vm2677, %v2510, %v2512
      %v2703 = vsel %vm2677, %v2512, %v2514
      %v2704 = vsel %vm2677, %v2514, %v2516
      %v2705 = vsel %vm2677, %v2516, %v2518
      %v2706 = vsel %vm2677, %v2518, %v2520
      %v2707 = vsel %vm2677, %v2520, %v2522
      %v2708 = vsel %vm2677, %v2524, %v2526
      %v2709 = vsel %vm2677, %v2526, %v2528
      %v2710 = vsel %vm2677, %v2528, %v2530
      %v2711 = vsel %vm2677, %v2530, %v2532
      %v2712 = vsel %vm2677, %v2532, %v2534
      %v2713 = vsel %vm2677, %v2534, %v2536
      %v2714 = vsel %vm2677, %v2538, %v2540
      %v2715 = vsel %vm2677, %v2540, %v2542
      %v2716 = vsel %vm2677, %v2542, %v2544
      %v2717 = vsel %vm2677, %v2544, %v2546
      %v2718 = vsel %vm2677, %v2546, %v2548
      %v2719 = vsel %vm2677, %v2548, %v2550
      %v2720 = vsel %vm2677, %v2552, %v2554
      %v2721 = vsel %vm2677, %v2554, %v2556
      %v2722 = vsel %vm2677, %v2556, %v2558
      %v2723 = vsel %vm2677, %v2558, %v2560
      %v2724 = vsel %vm2677, %v2560, %v2562
      %v2725 = vsel %vm2677, %v2562, %v2564
      %v2726 = vsel %vm2677, %v2566, %v2568
      %v2727 = vsel %vm2677, %v2568, %v2570
      %v2728 = vsel %vm2677, %v2570, %v2572
      %v2729 = vsel %vm2677, %v2572, %v2574
      %v2730 = vsel %vm2677, %v2574, %v2576
      %v2731 = vsel %vm2677, %v2576, %v2578
      %v2732 = vsel %vm2677, %v2580, %v2582
      %v2733 = vsel %vm2677, %v2582, %v2584
      %v2734 = vsel %vm2677, %v2584, %v2586
      %v2735 = vsel %vm2677, %v2586, %v2588
      %v2736 = vsel %vm2677, %v2588, %v2590
      %v2737 = vsel %vm2677, %v2590, %v2592
      %v2738 = vsel %vm2677, %v2594, %v2596
      %v2739 = vsel %vm2677, %v2596, %v2598
      %v2740 = vsel %vm2677, %v2598, %v2600
      %v2741 = vsel %vm2677, %v2600, %v2602
      %v2742 = vsel %vm2677, %v2602, %v2604
      %v2743 = vsel %vm2677, %v2604, %v2606
      %v2744 = vsel %vm2677, %v2608, %v2610
      %v2745 = vsel %vm2677, %v2610, %v2612
      %v2746 = vsel %vm2677, %v2612, %v2614
      %v2747 = vsel %vm2677, %v2614, %v2616
      %v2748 = vsel %vm2677, %v2616, %v2618
      %v2749 = vsel %vm2677, %v2618, %v2620
      %v2750 = vsel %vm2677, %v2622, %v2624
      %v2751 = vsel %vm2677, %v2624, %v2626
      %v2752 = vsel %vm2677, %v2626, %v2628
      %v2753 = vsel %vm2677, %v2628, %v2630
      %v2754 = vsel %vm2677, %v2630, %v2632
      %v2755 = vsel %vm2677, %v2632, %v2634
      %v2756 = vsel %vm2677, %v2636, %v2638
      %v2757 = vsel %vm2677, %v2638, %v2640
      %v2758 = vsel %vm2677, %v2640, %v2642
      %v2759 = vsel %vm2677, %v2642, %v2644
      %v2760 = vsel %vm2677, %v2644, %v2646
      %v2761 = vsel %vm2677, %v2646, %v2648
      %v2762 = vsel %vm2677, %v2650, %v2652
      %v2763 = vsel %vm2677, %v2652, %v2654
      %v2764 = vsel %vm2677, %v2654, %v2656
      %v2765 = vsel %vm2677, %v2656, %v2658
      %v2766 = vsel %vm2677, %v2658, %v2660
      %v2767 = vsel %vm2677, %v2660, %v2662
      %v2768 = vsel %vm2677, %v2664, %v2666
      %v2769 = vsel %vm2677, %v2666, %v2668
      %v2770 = vsel %vm2677, %v2668, %v2670
      %v2771 = vsel %vm2677, %v2670, %v2672
      %v2772 = vsel %vm2677, %v2672, %v2674
      %v2773 = vsel %vm2677, %v2674, %v2676
      %2886 = vrot.lane.b32.xlu0 %v172, 58
      %v2887 = vpop.permute.xlu0 %2886
      %2888 = vrot.lane.b32.xlu0 %v173, 58
      %v2889 = vpop.permute.xlu0 %2888
      %2890 = vrot.lane.b32.xlu0 %v174, 58
      %v2891 = vpop.permute.xlu0 %2890
      %2892 = vrot.lane.b32.xlu0 %v175, 58
      %v2893 = vpop.permute.xlu0 %2892
      %2894 = vrot.lane.b32.xlu0 %v176, 58
      %v2895 = vpop.permute.xlu0 %2894
      %2896 = vrot.lane.b32.xlu0 %v177, 58
      %v2897 = vpop.permute.xlu0 %2896
      %2898 = vrot.lane.b32.xlu0 %v178, 58
      %v2899 = vpop.permute.xlu0 %2898
      %2900 = vrot.lane.b32.xlu0 %v179, 58
      %v2901 = vpop.permute.xlu0 %2900
      %2902 = vrot.lane.b32.xlu0 %v181, 58
      %v2903 = vpop.permute.xlu0 %2902
      %2904 = vrot.lane.b32.xlu0 %v182, 58
      %v2905 = vpop.permute.xlu0 %2904
      %2906 = vrot.lane.b32.xlu0 %v183, 58
      %v2907 = vpop.permute.xlu0 %2906
      %2908 = vrot.lane.b32.xlu0 %v184, 58
      %v2909 = vpop.permute.xlu0 %2908
      %2910 = vrot.lane.b32.xlu0 %v185, 58
      %v2911 = vpop.permute.xlu0 %2910
      %2912 = vrot.lane.b32.xlu0 %v186, 58
      %v2913 = vpop.permute.xlu0 %2912
      %2914 = vrot.lane.b32.xlu0 %v187, 58
      %v2915 = vpop.permute.xlu0 %2914
      %2916 = vrot.lane.b32.xlu0 %v188, 58
      %v2917 = vpop.permute.xlu0 %2916
      %2918 = vrot.lane.b32.xlu0 %v233, 58
      %v2919 = vpop.permute.xlu0 %2918
      %2920 = vrot.lane.b32.xlu0 %v234, 58
      %v2921 = vpop.permute.xlu0 %2920
      %2922 = vrot.lane.b32.xlu0 %v235, 58
      %v2923 = vpop.permute.xlu0 %2922
      %2924 = vrot.lane.b32.xlu0 %v236, 58
      %v2925 = vpop.permute.xlu0 %2924
      %2926 = vrot.lane.b32.xlu0 %v237, 58
      %v2927 = vpop.permute.xlu0 %2926
      %2928 = vrot.lane.b32.xlu0 %v594, 58
      %v2929 = vpop.permute.xlu0 %2928
      %2930 = vrot.lane.b32.xlu0 %v638, 58
      %v2931 = vpop.permute.xlu0 %2930
      %2932 = vrot.lane.b32.xlu0 %v635, 58
      %v2933 = vpop.permute.xlu0 %2932
      %2934 = vrot.lane.b32.xlu0 %v239, 58
      %v2935 = vpop.permute.xlu0 %2934
      %2936 = vrot.lane.b32.xlu0 %v240, 58
      %v2937 = vpop.permute.xlu0 %2936
      %2938 = vrot.lane.b32.xlu0 %v241, 58
      %v2939 = vpop.permute.xlu0 %2938
      %2940 = vrot.lane.b32.xlu0 %v242, 58
      %v2941 = vpop.permute.xlu0 %2940
      %2942 = vrot.lane.b32.xlu0 %v243, 58
      %v2943 = vpop.permute.xlu0 %2942
      %2944 = vrot.lane.b32.xlu0 %v595, 58
      %v2945 = vpop.permute.xlu0 %2944
      %2946 = vrot.lane.b32.xlu0 %v639, 58
      %v2947 = vpop.permute.xlu0 %2946
      %2948 = vrot.lane.b32.xlu0 %v637, 58
      %v2949 = vpop.permute.xlu0 %2948
      %2950 = vrot.lane.b32.xlu0 %v288, 58
      %v2951 = vpop.permute.xlu0 %2950
      %2952 = vrot.lane.b32.xlu0 %v289, 58
      %v2953 = vpop.permute.xlu0 %2952
      %2954 = vrot.lane.b32.xlu0 %v290, 58
      %v2955 = vpop.permute.xlu0 %2954
      %2956 = vrot.lane.b32.xlu0 %v291, 58
      %v2957 = vpop.permute.xlu0 %2956
      %2958 = vrot.lane.b32.xlu0 %v292, 58
      %v2959 = vpop.permute.xlu0 %2958
      %2960 = vrot.lane.b32.xlu0 %v600, 58
      %v2961 = vpop.permute.xlu0 %2960
      %2962 = vrot.lane.b32.xlu0 %v644, 58
      %v2963 = vpop.permute.xlu0 %2962
      %2964 = vrot.lane.b32.xlu0 %v641, 58
      %v2965 = vpop.permute.xlu0 %2964
      %2966 = vrot.lane.b32.xlu0 %v294, 58
      %v2967 = vpop.permute.xlu0 %2966
      %2968 = vrot.lane.b32.xlu0 %v295, 58
      %v2969 = vpop.permute.xlu0 %2968
      %2970 = vrot.lane.b32.xlu0 %v296, 58
      %v2971 = vpop.permute.xlu0 %2970
      %2972 = vrot.lane.b32.xlu0 %v297, 58
      %v2973 = vpop.permute.xlu0 %2972
      %2974 = vrot.lane.b32.xlu0 %v298, 58
      %v2975 = vpop.permute.xlu0 %2974
      %2976 = vrot.lane.b32.xlu0 %v601, 58
      %v2977 = vpop.permute.xlu0 %2976
      %2978 = vrot.lane.b32.xlu0 %v645, 58
      %v2979 = vpop.permute.xlu0 %2978
      %2980 = vrot.lane.b32.xlu0 %v643, 58
      %v2981 = vpop.permute.xlu0 %2980
      %2982 = vrot.lane.b32.xlu0 %v343, 58
      %v2983 = vpop.permute.xlu0 %2982
      %2984 = vrot.lane.b32.xlu0 %v344, 58
      %v2985 = vpop.permute.xlu0 %2984
      %2986 = vrot.lane.b32.xlu0 %v345, 58
      %v2987 = vpop.permute.xlu0 %2986
      %2988 = vrot.lane.b32.xlu0 %v346, 58
      %v2989 = vpop.permute.xlu0 %2988
      %2990 = vrot.lane.b32.xlu0 %v347, 58
      %v2991 = vpop.permute.xlu0 %2990
      %2992 = vrot.lane.b32.xlu0 %v606, 58
      %v2993 = vpop.permute.xlu0 %2992
      %2994 = vrot.lane.b32.xlu0 %v650, 58
      %v2995 = vpop.permute.xlu0 %2994
      %2996 = vrot.lane.b32.xlu0 %v647, 58
      %v2997 = vpop.permute.xlu0 %2996
      %2998 = vrot.lane.b32.xlu0 %v349, 58
      %v2999 = vpop.permute.xlu0 %2998
      %3000 = vrot.lane.b32.xlu0 %v350, 58
      %v3001 = vpop.permute.xlu0 %3000
      %3002 = vrot.lane.b32.xlu0 %v351, 58
      %v3003 = vpop.permute.xlu0 %3002
      %3004 = vrot.lane.b32.xlu0 %v352, 58
      %v3005 = vpop.permute.xlu0 %3004
      %3006 = vrot.lane.b32.xlu0 %v353, 58
      %v3007 = vpop.permute.xlu0 %3006
      %3008 = vrot.lane.b32.xlu0 %v607, 58
      %v3009 = vpop.permute.xlu0 %3008
      %3010 = vrot.lane.b32.xlu0 %v651, 58
      %v3011 = vpop.permute.xlu0 %3010
      %3012 = vrot.lane.b32.xlu0 %v649, 58
      %v3013 = vpop.permute.xlu0 %3012
      %3014 = vrot.lane.b32.xlu0 %v398, 58
      %v3015 = vpop.permute.xlu0 %3014
      %3016 = vrot.lane.b32.xlu0 %v399, 58
      %v3017 = vpop.permute.xlu0 %3016
      %3018 = vrot.lane.b32.xlu0 %v400, 58
      %v3019 = vpop.permute.xlu0 %3018
      %3020 = vrot.lane.b32.xlu0 %v401, 58
      %v3021 = vpop.permute.xlu0 %3020
      %3022 = vrot.lane.b32.xlu0 %v402, 58
      %v3023 = vpop.permute.xlu0 %3022
      %3024 = vrot.lane.b32.xlu0 %v612, 58
      %v3025 = vpop.permute.xlu0 %3024
      %3026 = vrot.lane.b32.xlu0 %v656, 58
      %v3027 = vpop.permute.xlu0 %3026
      %3028 = vrot.lane.b32.xlu0 %v653, 58
      %v3029 = vpop.permute.xlu0 %3028
      %3030 = vrot.lane.b32.xlu0 %v404, 58
      %v3031 = vpop.permute.xlu0 %3030
      %3032 = vrot.lane.b32.xlu0 %v405, 58
      %v3033 = vpop.permute.xlu0 %3032
      %3034 = vrot.lane.b32.xlu0 %v406, 58
      %v3035 = vpop.permute.xlu0 %3034
      %3036 = vrot.lane.b32.xlu0 %v407, 58
      %v3037 = vpop.permute.xlu0 %3036
      %3038 = vrot.lane.b32.xlu0 %v408, 58
      %v3039 = vpop.permute.xlu0 %3038
      %3040 = vrot.lane.b32.xlu0 %v613, 58
      %v3041 = vpop.permute.xlu0 %3040
      %3042 = vrot.lane.b32.xlu0 %v657, 58
      %v3043 = vpop.permute.xlu0 %3042
      %3044 = vrot.lane.b32.xlu0 %v655, 58
      %v3045 = vpop.permute.xlu0 %3044
      %3046 = vrot.lane.b32.xlu0 %v453, 58
      %v3047 = vpop.permute.xlu0 %3046
      %3048 = vrot.lane.b32.xlu0 %v454, 58
      %v3049 = vpop.permute.xlu0 %3048
      %3050 = vrot.lane.b32.xlu0 %v455, 58
      %v3051 = vpop.permute.xlu0 %3050
      %3052 = vrot.lane.b32.xlu0 %v456, 58
      %v3053 = vpop.permute.xlu0 %3052
      %3054 = vrot.lane.b32.xlu0 %v457, 58
      %v3055 = vpop.permute.xlu0 %3054
      %3056 = vrot.lane.b32.xlu0 %v618, 58
      %v3057 = vpop.permute.xlu0 %3056
      %3058 = vrot.lane.b32.xlu0 %v662, 58
      %v3059 = vpop.permute.xlu0 %3058
      %3060 = vrot.lane.b32.xlu0 %v659, 58
      %v3061 = vpop.permute.xlu0 %3060
      %3062 = vrot.lane.b32.xlu0 %v459, 58
      %v3063 = vpop.permute.xlu0 %3062
      %3064 = vrot.lane.b32.xlu0 %v460, 58
      %v3065 = vpop.permute.xlu0 %3064
      %3066 = vrot.lane.b32.xlu0 %v461, 58
      %v3067 = vpop.permute.xlu0 %3066
      %3068 = vrot.lane.b32.xlu0 %v462, 58
      %v3069 = vpop.permute.xlu0 %3068
      %3070 = vrot.lane.b32.xlu0 %v463, 58
      %v3071 = vpop.permute.xlu0 %3070
      %3072 = vrot.lane.b32.xlu0 %v619, 58
      %v3073 = vpop.permute.xlu0 %3072
      %3074 = vrot.lane.b32.xlu0 %v663, 58
      %v3075 = vpop.permute.xlu0 %3074
      %3076 = vrot.lane.b32.xlu0 %v661, 58
      %v3077 = vpop.permute.xlu0 %3076
      %3078 = vrot.lane.b32.xlu0 %v508, 58
      %v3079 = vpop.permute.xlu0 %3078
      %3080 = vrot.lane.b32.xlu0 %v509, 58
      %v3081 = vpop.permute.xlu0 %3080
      %3082 = vrot.lane.b32.xlu0 %v510, 58
      %v3083 = vpop.permute.xlu0 %3082
      %3084 = vrot.lane.b32.xlu0 %v511, 58
      %v3085 = vpop.permute.xlu0 %3084
      %3086 = vrot.lane.b32.xlu0 %v512, 58
      %v3087 = vpop.permute.xlu0 %3086
      %3088 = vrot.lane.b32.xlu0 %v624, 58
      %v3089 = vpop.permute.xlu0 %3088
      %3090 = vrot.lane.b32.xlu0 %v668, 58
      %v3091 = vpop.permute.xlu0 %3090
      %3092 = vrot.lane.b32.xlu0 %v665, 58
      %v3093 = vpop.permute.xlu0 %3092
      %3094 = vrot.lane.b32.xlu0 %v514, 58
      %v3095 = vpop.permute.xlu0 %3094
      %3096 = vrot.lane.b32.xlu0 %v515, 58
      %v3097 = vpop.permute.xlu0 %3096
      %3098 = vrot.lane.b32.xlu0 %v516, 58
      %v3099 = vpop.permute.xlu0 %3098
      %3100 = vrot.lane.b32.xlu0 %v517, 58
      %v3101 = vpop.permute.xlu0 %3100
      %3102 = vrot.lane.b32.xlu0 %v518, 58
      %v3103 = vpop.permute.xlu0 %3102
      %3104 = vrot.lane.b32.xlu0 %v625, 58
      %v3105 = vpop.permute.xlu0 %3104
      %3106 = vrot.lane.b32.xlu0 %v669, 58
      %v3107 = vpop.permute.xlu0 %3106
      %3108 = vrot.lane.b32.xlu0 %v667, 58
      %v3109 = vpop.permute.xlu0 %3108
      %3110 = vrot.lane.b32.xlu0 %v563, 58
      %v3111 = vpop.permute.xlu0 %3110
      %3112 = vrot.lane.b32.xlu0 %v564, 58
      %v3113 = vpop.permute.xlu0 %3112
      %3114 = vrot.lane.b32.xlu0 %v565, 58
      %v3115 = vpop.permute.xlu0 %3114
      %3116 = vrot.lane.b32.xlu0 %v566, 58
      %v3117 = vpop.permute.xlu0 %3116
      %3118 = vrot.lane.b32.xlu0 %v567, 58
      %v3119 = vpop.permute.xlu0 %3118
      %3120 = vrot.lane.b32.xlu0 %v630, 58
      %v3121 = vpop.permute.xlu0 %3120
      %3122 = vrot.lane.b32.xlu0 %v674, 58
      %v3123 = vpop.permute.xlu0 %3122
      %3124 = vrot.lane.b32.xlu0 %v671, 58
      %v3125 = vpop.permute.xlu0 %3124
      %3126 = vrot.lane.b32.xlu0 %v569, 58
      %v3127 = vpop.permute.xlu0 %3126
      %3128 = vrot.lane.b32.xlu0 %v570, 58
      %v3129 = vpop.permute.xlu0 %3128
      %3130 = vrot.lane.b32.xlu0 %v571, 58
      %v3131 = vpop.permute.xlu0 %3130
      %3132 = vrot.lane.b32.xlu0 %v572, 58
      %v3133 = vpop.permute.xlu0 %3132
      %3134 = vrot.lane.b32.xlu0 %v573, 58
      %v3135 = vpop.permute.xlu0 %3134
      %3136 = vrot.lane.b32.xlu0 %v631, 58
      %v3137 = vpop.permute.xlu0 %3136
      %3138 = vrot.lane.b32.xlu0 %v675, 58
      %v3139 = vpop.permute.xlu0 %3138
      %3140 = vrot.lane.b32.xlu0 %v673, 58
      %v3141 = vpop.permute.xlu0 %3140
      %vm3142 = vcmask 474112
      %v3143 = vsel %vm3142, %v2887, %v2889
      %v3144 = vsel %vm3142, %v2889, %v2891
      %v3145 = vsel %vm3142, %v2891, %v2893
      %v3146 = vsel %vm3142, %v2893, %v2895
      %v3147 = vsel %vm3142, %v2895, %v2897
      %v3148 = vsel %vm3142, %v2897, %v2899
      %v3149 = vsel %vm3142, %v2899, %v2901
      %v3150 = vsel %vm3142, %v2903, %v2905
      %v3151 = vsel %vm3142, %v2905, %v2907
      %v3152 = vsel %vm3142, %v2907, %v2909
      %v3153 = vsel %vm3142, %v2909, %v2911
      %v3154 = vsel %vm3142, %v2911, %v2913
      %v3155 = vsel %vm3142, %v2913, %v2915
      %v3156 = vsel %vm3142, %v2915, %v2917
      %v3157 = vsel %vm3142, %v2919, %v2921
      %v3158 = vsel %vm3142, %v2921, %v2923
      %v3159 = vsel %vm3142, %v2923, %v2925
      %v3160 = vsel %vm3142, %v2925, %v2927
      %v3161 = vsel %vm3142, %v2927, %v2929
      %v3162 = vsel %vm3142, %v2929, %v2931
      %v3163 = vsel %vm3142, %v2931, %v2933
      %v3164 = vsel %vm3142, %v2935, %v2937
      %v3165 = vsel %vm3142, %v2937, %v2939
      %v3166 = vsel %vm3142, %v2939, %v2941
      %v3167 = vsel %vm3142, %v2941, %v2943
      %v3168 = vsel %vm3142, %v2943, %v2945
      %v3169 = vsel %vm3142, %v2945, %v2947
      %v3170 = vsel %vm3142, %v2947, %v2949
      %v3171 = vsel %vm3142, %v2951, %v2953
      %v3172 = vsel %vm3142, %v2953, %v2955
      %v3173 = vsel %vm3142, %v2955, %v2957
      %v3174 = vsel %vm3142, %v2957, %v2959
      %v3175 = vsel %vm3142, %v2959, %v2961
      %v3176 = vsel %vm3142, %v2961, %v2963
      %v3177 = vsel %vm3142, %v2963, %v2965
      %v3178 = vsel %vm3142, %v2967, %v2969
      %v3179 = vsel %vm3142, %v2969, %v2971
      %v3180 = vsel %vm3142, %v2971, %v2973
      %v3181 = vsel %vm3142, %v2973, %v2975
      %v3182 = vsel %vm3142, %v2975, %v2977
      %v3183 = vsel %vm3142, %v2977, %v2979
      %v3184 = vsel %vm3142, %v2979, %v2981
      %v3185 = vsel %vm3142, %v2983, %v2985
      %v3186 = vsel %vm3142, %v2985, %v2987
      %v3187 = vsel %vm3142, %v2987, %v2989
      %v3188 = vsel %vm3142, %v2989, %v2991
      %v3189 = vsel %vm3142, %v2991, %v2993
      %v3190 = vsel %vm3142, %v2993, %v2995
      %v3191 = vsel %vm3142, %v2995, %v2997
      %v3192 = vsel %vm3142, %v2999, %v3001
      %v3193 = vsel %vm3142, %v3001, %v3003
      %v3194 = vsel %vm3142, %v3003, %v3005
      %v3195 = vsel %vm3142, %v3005, %v3007
      %v3196 = vsel %vm3142, %v3007, %v3009
      %v3197 = vsel %vm3142, %v3009, %v3011
      %v3198 = vsel %vm3142, %v3011, %v3013
      %v3199 = vsel %vm3142, %v3015, %v3017
      %v3200 = vsel %vm3142, %v3017, %v3019
      %v3201 = vsel %vm3142, %v3019, %v3021
      %v3202 = vsel %vm3142, %v3021, %v3023
      %v3203 = vsel %vm3142, %v3023, %v3025
      %v3204 = vsel %vm3142, %v3025, %v3027
      %v3205 = vsel %vm3142, %v3027, %v3029
      %v3206 = vsel %vm3142, %v3031, %v3033
      %v3207 = vsel %vm3142, %v3033, %v3035
      %v3208 = vsel %vm3142, %v3035, %v3037
      %v3209 = vsel %vm3142, %v3037, %v3039
      %v3210 = vsel %vm3142, %v3039, %v3041
      %v3211 = vsel %vm3142, %v3041, %v3043
      %v3212 = vsel %vm3142, %v3043, %v3045
      %v3213 = vsel %vm3142, %v3047, %v3049
      %v3214 = vsel %vm3142, %v3049, %v3051
      %v3215 = vsel %vm3142, %v3051, %v3053
      %v3216 = vsel %vm3142, %v3053, %v3055
      %v3217 = vsel %vm3142, %v3055, %v3057
      %v3218 = vsel %vm3142, %v3057, %v3059
      %v3219 = vsel %vm3142, %v3059, %v3061
      %v3220 = vsel %vm3142, %v3063, %v3065
      %v3221 = vsel %vm3142, %v3065, %v3067
      %v3222 = vsel %vm3142, %v3067, %v3069
      %v3223 = vsel %vm3142, %v3069, %v3071
      %v3224 = vsel %vm3142, %v3071, %v3073
      %v3225 = vsel %vm3142, %v3073, %v3075
      %v3226 = vsel %vm3142, %v3075, %v3077
      %v3227 = vsel %vm3142, %v3079, %v3081
      %v3228 = vsel %vm3142, %v3081, %v3083
      %v3229 = vsel %vm3142, %v3083, %v3085
      %v3230 = vsel %vm3142, %v3085, %v3087
      %v3231 = vsel %vm3142, %v3087, %v3089
      %v3232 = vsel %vm3142, %v3089, %v3091
      %v3233 = vsel %vm3142, %v3091, %v3093
      %v3234 = vsel %vm3142, %v3095, %v3097
      %v3235 = vsel %vm3142, %v3097, %v3099
      %v3236 = vsel %vm3142, %v3099, %v3101
      %v3237 = vsel %vm3142, %v3101, %v3103
      %v3238 = vsel %vm3142, %v3103, %v3105
      %v3239 = vsel %vm3142, %v3105, %v3107
      %v3240 = vsel %vm3142, %v3107, %v3109
      %v3241 = vsel %vm3142, %v3111, %v3113
      %v3242 = vsel %vm3142, %v3113, %v3115
      %v3243 = vsel %vm3142, %v3115, %v3117
      %v3244 = vsel %vm3142, %v3117, %v3119
      %v3245 = vsel %vm3142, %v3119, %v3121
      %v3246 = vsel %vm3142, %v3121, %v3123
      %v3247 = vsel %vm3142, %v3123, %v3125
      %v3248 = vsel %vm3142, %v3127, %v3129
      %v3249 = vsel %vm3142, %v3129, %v3131
      %v3250 = vsel %vm3142, %v3131, %v3133
      %v3251 = vsel %vm3142, %v3133, %v3135
      %v3252 = vsel %vm3142, %v3135, %v3137
      %v3253 = vsel %vm3142, %v3137, %v3139
      %v3254 = vsel %vm3142, %v3139, %v3141
      %3367 = vrot.lane.b32.xlu0 %v172, 25
      %v3368 = vpop.permute.xlu0 %3367
      %3369 = vrot.lane.b32.xlu0 %v173, 25
      %v3370 = vpop.permute.xlu0 %3369
      %3371 = vrot.lane.b32.xlu0 %v174, 25
      %v3372 = vpop.permute.xlu0 %3371
      %3373 = vrot.lane.b32.xlu0 %v175, 25
      %v3374 = vpop.permute.xlu0 %3373
      %3375 = vrot.lane.b32.xlu0 %v176, 25
      %v3376 = vpop.permute.xlu0 %3375
      %3377 = vrot.lane.b32.xlu0 %v177, 25
      %v3378 = vpop.permute.xlu0 %3377
      %3379 = vrot.lane.b32.xlu0 %v178, 25
      %v3380 = vpop.permute.xlu0 %3379
      %3381 = vrot.lane.b32.xlu0 %v179, 25
      %v3382 = vpop.permute.xlu0 %3381
      %3383 = vrot.lane.b32.xlu0 %v181, 25
      %v3384 = vpop.permute.xlu0 %3383
      %3385 = vrot.lane.b32.xlu0 %v182, 25
      %v3386 = vpop.permute.xlu0 %3385
      %3387 = vrot.lane.b32.xlu0 %v183, 25
      %v3388 = vpop.permute.xlu0 %3387
      %3389 = vrot.lane.b32.xlu0 %v184, 25
      %v3390 = vpop.permute.xlu0 %3389
      %3391 = vrot.lane.b32.xlu0 %v185, 25
      %v3392 = vpop.permute.xlu0 %3391
      %3393 = vrot.lane.b32.xlu0 %v186, 25
      %v3394 = vpop.permute.xlu0 %3393
      %3395 = vrot.lane.b32.xlu0 %v187, 25
      %v3396 = vpop.permute.xlu0 %3395
      %3397 = vrot.lane.b32.xlu0 %v188, 25
      %v3398 = vpop.permute.xlu0 %3397
      %3399 = vrot.lane.b32.xlu0 %v233, 25
      %v3400 = vpop.permute.xlu0 %3399
      %3401 = vrot.lane.b32.xlu0 %v234, 25
      %v3402 = vpop.permute.xlu0 %3401
      %3403 = vrot.lane.b32.xlu0 %v235, 25
      %v3404 = vpop.permute.xlu0 %3403
      %3405 = vrot.lane.b32.xlu0 %v236, 25
      %v3406 = vpop.permute.xlu0 %3405
      %3407 = vrot.lane.b32.xlu0 %v237, 25
      %v3408 = vpop.permute.xlu0 %3407
      %3409 = vrot.lane.b32.xlu0 %v594, 25
      %v3410 = vpop.permute.xlu0 %3409
      %3411 = vrot.lane.b32.xlu0 %v638, 25
      %v3412 = vpop.permute.xlu0 %3411
      %3413 = vrot.lane.b32.xlu0 %v635, 25
      %v3414 = vpop.permute.xlu0 %3413
      %3415 = vrot.lane.b32.xlu0 %v239, 25
      %v3416 = vpop.permute.xlu0 %3415
      %3417 = vrot.lane.b32.xlu0 %v240, 25
      %v3418 = vpop.permute.xlu0 %3417
      %3419 = vrot.lane.b32.xlu0 %v241, 25
      %v3420 = vpop.permute.xlu0 %3419
      %3421 = vrot.lane.b32.xlu0 %v242, 25
      %v3422 = vpop.permute.xlu0 %3421
      %3423 = vrot.lane.b32.xlu0 %v243, 25
      %v3424 = vpop.permute.xlu0 %3423
      %3425 = vrot.lane.b32.xlu0 %v595, 25
      %v3426 = vpop.permute.xlu0 %3425
      %3427 = vrot.lane.b32.xlu0 %v639, 25
      %v3428 = vpop.permute.xlu0 %3427
      %3429 = vrot.lane.b32.xlu0 %v637, 25
      %v3430 = vpop.permute.xlu0 %3429
      %3431 = vrot.lane.b32.xlu0 %v288, 25
      %v3432 = vpop.permute.xlu0 %3431
      %3433 = vrot.lane.b32.xlu0 %v289, 25
      %v3434 = vpop.permute.xlu0 %3433
      %3435 = vrot.lane.b32.xlu0 %v290, 25
      %v3436 = vpop.permute.xlu0 %3435
      %3437 = vrot.lane.b32.xlu0 %v291, 25
      %v3438 = vpop.permute.xlu0 %3437
      %3439 = vrot.lane.b32.xlu0 %v292, 25
      %v3440 = vpop.permute.xlu0 %3439
      %3441 = vrot.lane.b32.xlu0 %v600, 25
      %v3442 = vpop.permute.xlu0 %3441
      %3443 = vrot.lane.b32.xlu0 %v644, 25
      %v3444 = vpop.permute.xlu0 %3443
      %3445 = vrot.lane.b32.xlu0 %v641, 25
      %v3446 = vpop.permute.xlu0 %3445
      %3447 = vrot.lane.b32.xlu0 %v294, 25
      %v3448 = vpop.permute.xlu0 %3447
      %3449 = vrot.lane.b32.xlu0 %v295, 25
      %v3450 = vpop.permute.xlu0 %3449
      %3451 = vrot.lane.b32.xlu0 %v296, 25
      %v3452 = vpop.permute.xlu0 %3451
      %3453 = vrot.lane.b32.xlu0 %v297, 25
      %v3454 = vpop.permute.xlu0 %3453
      %3455 = vrot.lane.b32.xlu0 %v298, 25
      %v3456 = vpop.permute.xlu0 %3455
      %3457 = vrot.lane.b32.xlu0 %v601, 25
      %v3458 = vpop.permute.xlu0 %3457
      %3459 = vrot.lane.b32.xlu0 %v645, 25
      %v3460 = vpop.permute.xlu0 %3459
      %3461 = vrot.lane.b32.xlu0 %v643, 25
      %v3462 = vpop.permute.xlu0 %3461
      %3463 = vrot.lane.b32.xlu0 %v343, 25
      %v3464 = vpop.permute.xlu0 %3463
      %3465 = vrot.lane.b32.xlu0 %v344, 25
      %v3466 = vpop.permute.xlu0 %3465
      %3467 = vrot.lane.b32.xlu0 %v345, 25
      %v3468 = vpop.permute.xlu0 %3467
      %3469 = vrot.lane.b32.xlu0 %v346, 25
      %v3470 = vpop.permute.xlu0 %3469
      %3471 = vrot.lane.b32.xlu0 %v347, 25
      %v3472 = vpop.permute.xlu0 %3471
      %3473 = vrot.lane.b32.xlu0 %v606, 25
      %v3474 = vpop.permute.xlu0 %3473
      %3475 = vrot.lane.b32.xlu0 %v650, 25
      %v3476 = vpop.permute.xlu0 %3475
      %3477 = vrot.lane.b32.xlu0 %v647, 25
      %v3478 = vpop.permute.xlu0 %3477
      %3479 = vrot.lane.b32.xlu0 %v349, 25
      %v3480 = vpop.permute.xlu0 %3479
      %3481 = vrot.lane.b32.xlu0 %v350, 25
      %v3482 = vpop.permute.xlu0 %3481
      %3483 = vrot.lane.b32.xlu0 %v351, 25
      %v3484 = vpop.permute.xlu0 %3483
      %3485 = vrot.lane.b32.xlu0 %v352, 25
      %v3486 = vpop.permute.xlu0 %3485
      %3487 = vrot.lane.b32.xlu0 %v353, 25
      %v3488 = vpop.permute.xlu0 %3487
      %3489 = vrot.lane.b32.xlu0 %v607, 25
      %v3490 = vpop.permute.xlu0 %3489
      %3491 = vrot.lane.b32.xlu0 %v651, 25
      %v3492 = vpop.permute.xlu0 %3491
      %3493 = vrot.lane.b32.xlu0 %v649, 25
      %v3494 = vpop.permute.xlu0 %3493
      %3495 = vrot.lane.b32.xlu0 %v398, 25
      %v3496 = vpop.permute.xlu0 %3495
      %3497 = vrot.lane.b32.xlu0 %v399, 25
      %v3498 = vpop.permute.xlu0 %3497
      %3499 = vrot.lane.b32.xlu0 %v400, 25
      %v3500 = vpop.permute.xlu0 %3499
      %3501 = vrot.lane.b32.xlu0 %v401, 25
      %v3502 = vpop.permute.xlu0 %3501
      %3503 = vrot.lane.b32.xlu0 %v402, 25
      %v3504 = vpop.permute.xlu0 %3503
      %3505 = vrot.lane.b32.xlu0 %v612, 25
      %v3506 = vpop.permute.xlu0 %3505
      %3507 = vrot.lane.b32.xlu0 %v656, 25
      %v3508 = vpop.permute.xlu0 %3507
      %3509 = vrot.lane.b32.xlu0 %v653, 25
      %v3510 = vpop.permute.xlu0 %3509
      %3511 = vrot.lane.b32.xlu0 %v404, 25
      %v3512 = vpop.permute.xlu0 %3511
      %3513 = vrot.lane.b32.xlu0 %v405, 25
      %v3514 = vpop.permute.xlu0 %3513
      %3515 = vrot.lane.b32.xlu0 %v406, 25
      %v3516 = vpop.permute.xlu0 %3515
      %3517 = vrot.lane.b32.xlu0 %v407, 25
      %v3518 = vpop.permute.xlu0 %3517
      %3519 = vrot.lane.b32.xlu0 %v408, 25
      %v3520 = vpop.permute.xlu0 %3519
      %3521 = vrot.lane.b32.xlu0 %v613, 25
      %v3522 = vpop.permute.xlu0 %3521
      %3523 = vrot.lane.b32.xlu0 %v657, 25
      %v3524 = vpop.permute.xlu0 %3523
      %3525 = vrot.lane.b32.xlu0 %v655, 25
      %v3526 = vpop.permute.xlu0 %3525
      %3527 = vrot.lane.b32.xlu0 %v453, 25
      %v3528 = vpop.permute.xlu0 %3527
      %3529 = vrot.lane.b32.xlu0 %v454, 25
      %v3530 = vpop.permute.xlu0 %3529
      %3531 = vrot.lane.b32.xlu0 %v455, 25
      %v3532 = vpop.permute.xlu0 %3531
      %3533 = vrot.lane.b32.xlu0 %v456, 25
      %v3534 = vpop.permute.xlu0 %3533
      %3535 = vrot.lane.b32.xlu0 %v457, 25
      %v3536 = vpop.permute.xlu0 %3535
      %3537 = vrot.lane.b32.xlu0 %v618, 25
      %v3538 = vpop.permute.xlu0 %3537
      %3539 = vrot.lane.b32.xlu0 %v662, 25
      %v3540 = vpop.permute.xlu0 %3539
      %3541 = vrot.lane.b32.xlu0 %v659, 25
      %v3542 = vpop.permute.xlu0 %3541
      %3543 = vrot.lane.b32.xlu0 %v459, 25
      %v3544 = vpop.permute.xlu0 %3543
      %3545 = vrot.lane.b32.xlu0 %v460, 25
      %v3546 = vpop.permute.xlu0 %3545
      %3547 = vrot.lane.b32.xlu0 %v461, 25
      %v3548 = vpop.permute.xlu0 %3547
      %3549 = vrot.lane.b32.xlu0 %v462, 25
      %v3550 = vpop.permute.xlu0 %3549
      %3551 = vrot.lane.b32.xlu0 %v463, 25
      %v3552 = vpop.permute.xlu0 %3551
      %3553 = vrot.lane.b32.xlu0 %v619, 25
      %v3554 = vpop.permute.xlu0 %3553
      %3555 = vrot.lane.b32.xlu0 %v663, 25
      %v3556 = vpop.permute.xlu0 %3555
      %3557 = vrot.lane.b32.xlu0 %v661, 25
      %v3558 = vpop.permute.xlu0 %3557
      %3559 = vrot.lane.b32.xlu0 %v508, 25
      %v3560 = vpop.permute.xlu0 %3559
      %3561 = vrot.lane.b32.xlu0 %v509, 25
      %v3562 = vpop.permute.xlu0 %3561
      %3563 = vrot.lane.b32.xlu0 %v510, 25
      %v3564 = vpop.permute.xlu0 %3563
      %3565 = vrot.lane.b32.xlu0 %v511, 25
      %v3566 = vpop.permute.xlu0 %3565
      %3567 = vrot.lane.b32.xlu0 %v512, 25
      %v3568 = vpop.permute.xlu0 %3567
      %3569 = vrot.lane.b32.xlu0 %v624, 25
      %v3570 = vpop.permute.xlu0 %3569
      %3571 = vrot.lane.b32.xlu0 %v668, 25
      %v3572 = vpop.permute.xlu0 %3571
      %3573 = vrot.lane.b32.xlu0 %v665, 25
      %v3574 = vpop.permute.xlu0 %3573
      %3575 = vrot.lane.b32.xlu0 %v514, 25
      %v3576 = vpop.permute.xlu0 %3575
      %3577 = vrot.lane.b32.xlu0 %v515, 25
      %v3578 = vpop.permute.xlu0 %3577
      %3579 = vrot.lane.b32.xlu0 %v516, 25
      %v3580 = vpop.permute.xlu0 %3579
      %3581 = vrot.lane.b32.xlu0 %v517, 25
      %v3582 = vpop.permute.xlu0 %3581
      %3583 = vrot.lane.b32.xlu0 %v518, 25
      %v3584 = vpop.permute.xlu0 %3583
      %3585 = vrot.lane.b32.xlu0 %v625, 25
      %v3586 = vpop.permute.xlu0 %3585
      %3587 = vrot.lane.b32.xlu0 %v669, 25
      %v3588 = vpop.permute.xlu0 %3587
      %3589 = vrot.lane.b32.xlu0 %v667, 25
      %v3590 = vpop.permute.xlu0 %3589
      %3591 = vrot.lane.b32.xlu0 %v563, 25
      %v3592 = vpop.permute.xlu0 %3591
      %3593 = vrot.lane.b32.xlu0 %v564, 25
      %v3594 = vpop.permute.xlu0 %3593
      %3595 = vrot.lane.b32.xlu0 %v565, 25
      %v3596 = vpop.permute.xlu0 %3595
      %3597 = vrot.lane.b32.xlu0 %v566, 25
      %v3598 = vpop.permute.xlu0 %3597
      %3599 = vrot.lane.b32.xlu0 %v567, 25
      %v3600 = vpop.permute.xlu0 %3599
      %3601 = vrot.lane.b32.xlu0 %v630, 25
      %v3602 = vpop.permute.xlu0 %3601
      %3603 = vrot.lane.b32.xlu0 %v674, 25
      %v3604 = vpop.permute.xlu0 %3603
      %3605 = vrot.lane.b32.xlu0 %v671, 25
      %v3606 = vpop.permute.xlu0 %3605
      %3607 = vrot.lane.b32.xlu0 %v569, 25
      %v3608 = vpop.permute.xlu0 %3607
      %3609 = vrot.lane.b32.xlu0 %v570, 25
      %v3610 = vpop.permute.xlu0 %3609
      %3611 = vrot.lane.b32.xlu0 %v571, 25
      %v3612 = vpop.permute.xlu0 %3611
      %3613 = vrot.lane.b32.xlu0 %v572, 25
      %v3614 = vpop.permute.xlu0 %3613
      %3615 = vrot.lane.b32.xlu0 %v573, 25
      %v3616 = vpop.permute.xlu0 %3615
      %3617 = vrot.lane.b32.xlu0 %v631, 25
      %v3618 = vpop.permute.xlu0 %3617
      %3619 = vrot.lane.b32.xlu0 %v675, 25
      %v3620 = vpop.permute.xlu0 %3619
      %3621 = vrot.lane.b32.xlu0 %v673, 25
      %v3622 = vpop.permute.xlu0 %3621
      %vm3623 = vcmask 203776
      %v3624 = vsel %vm3623, %v3368, %v3370
      %v3625 = vsel %vm3623, %v3370, %v3372
      %v3626 = vsel %vm3623, %v3372, %v3374
      %v3627 = vsel %vm3623, %v3374, %v3376
      %v3628 = vsel %vm3623, %v3376, %v3378
      %v3629 = vsel %vm3623, %v3378, %v3380
      %v3630 = vsel %vm3623, %v3380, %v3382
      %v3631 = vsel %vm3623, %v3384, %v3386
      %v3632 = vsel %vm3623, %v3386, %v3388
      %v3633 = vsel %vm3623, %v3388, %v3390
      %v3634 = vsel %vm3623, %v3390, %v3392
      %v3635 = vsel %vm3623, %v3392, %v3394
      %v3636 = vsel %vm3623, %v3394, %v3396
      %v3637 = vsel %vm3623, %v3396, %v3398
      %v3638 = vsel %vm3623, %v3400, %v3402
      %v3639 = vsel %vm3623, %v3402, %v3404
      %v3640 = vsel %vm3623, %v3404, %v3406
      %v3641 = vsel %vm3623, %v3406, %v3408
      %v3642 = vsel %vm3623, %v3408, %v3410
      %v3643 = vsel %vm3623, %v3410, %v3412
      %v3644 = vsel %vm3623, %v3412, %v3414
      %v3645 = vsel %vm3623, %v3416, %v3418
      %v3646 = vsel %vm3623, %v3418, %v3420
      %v3647 = vsel %vm3623, %v3420, %v3422
      %v3648 = vsel %vm3623, %v3422, %v3424
      %v3649 = vsel %vm3623, %v3424, %v3426
      %v3650 = vsel %vm3623, %v3426, %v3428
      %v3651 = vsel %vm3623, %v3428, %v3430
      %v3652 = vsel %vm3623, %v3432, %v3434
      %v3653 = vsel %vm3623, %v3434, %v3436
      %v3654 = vsel %vm3623, %v3436, %v3438
      %v3655 = vsel %vm3623, %v3438, %v3440
      %v3656 = vsel %vm3623, %v3440, %v3442
      %v3657 = vsel %vm3623, %v3442, %v3444
      %v3658 = vsel %vm3623, %v3444, %v3446
      %v3659 = vsel %vm3623, %v3448, %v3450
      %v3660 = vsel %vm3623, %v3450, %v3452
      %v3661 = vsel %vm3623, %v3452, %v3454
      %v3662 = vsel %vm3623, %v3454, %v3456
      %v3663 = vsel %vm3623, %v3456, %v3458
      %v3664 = vsel %vm3623, %v3458, %v3460
      %v3665 = vsel %vm3623, %v3460, %v3462
      %v3666 = vsel %vm3623, %v3464, %v3466
      %v3667 = vsel %vm3623, %v3466, %v3468
      %v3668 = vsel %vm3623, %v3468, %v3470
      %v3669 = vsel %vm3623, %v3470, %v3472
      %v3670 = vsel %vm3623, %v3472, %v3474
      %v3671 = vsel %vm3623, %v3474, %v3476
      %v3672 = vsel %vm3623, %v3476, %v3478
      %v3673 = vsel %vm3623, %v3480, %v3482
      %v3674 = vsel %vm3623, %v3482, %v3484
      %v3675 = vsel %vm3623, %v3484, %v3486
      %v3676 = vsel %vm3623, %v3486, %v3488
      %v3677 = vsel %vm3623, %v3488, %v3490
      %v3678 = vsel %vm3623, %v3490, %v3492
      %v3679 = vsel %vm3623, %v3492, %v3494
      %v3680 = vsel %vm3623, %v3496, %v3498
      %v3681 = vsel %vm3623, %v3498, %v3500
      %v3682 = vsel %vm3623, %v3500, %v3502
      %v3683 = vsel %vm3623, %v3502, %v3504
      %v3684 = vsel %vm3623, %v3504, %v3506
      %v3685 = vsel %vm3623, %v3506, %v3508
      %v3686 = vsel %vm3623, %v3508, %v3510
      %v3687 = vsel %vm3623, %v3512, %v3514
      %v3688 = vsel %vm3623, %v3514, %v3516
      %v3689 = vsel %vm3623, %v3516, %v3518
      %v3690 = vsel %vm3623, %v3518, %v3520
      %v3691 = vsel %vm3623, %v3520, %v3522
      %v3692 = vsel %vm3623, %v3522, %v3524
      %v3693 = vsel %vm3623, %v3524, %v3526
      %v3694 = vsel %vm3623, %v3528, %v3530
      %v3695 = vsel %vm3623, %v3530, %v3532
      %v3696 = vsel %vm3623, %v3532, %v3534
      %v3697 = vsel %vm3623, %v3534, %v3536
      %v3698 = vsel %vm3623, %v3536, %v3538
      %v3699 = vsel %vm3623, %v3538, %v3540
      %v3700 = vsel %vm3623, %v3540, %v3542
      %v3701 = vsel %vm3623, %v3544, %v3546
      %v3702 = vsel %vm3623, %v3546, %v3548
      %v3703 = vsel %vm3623, %v3548, %v3550
      %v3704 = vsel %vm3623, %v3550, %v3552
      %v3705 = vsel %vm3623, %v3552, %v3554
      %v3706 = vsel %vm3623, %v3554, %v3556
      %v3707 = vsel %vm3623, %v3556, %v3558
      %v3708 = vsel %vm3623, %v3560, %v3562
      %v3709 = vsel %vm3623, %v3562, %v3564
      %v3710 = vsel %vm3623, %v3564, %v3566
      %v3711 = vsel %vm3623, %v3566, %v3568
      %v3712 = vsel %vm3623, %v3568, %v3570
      %v3713 = vsel %vm3623, %v3570, %v3572
      %v3714 = vsel %vm3623, %v3572, %v3574
      %v3715 = vsel %vm3623, %v3576, %v3578
      %v3716 = vsel %vm3623, %v3578, %v3580
      %v3717 = vsel %vm3623, %v3580, %v3582
      %v3718 = vsel %vm3623, %v3582, %v3584
      %v3719 = vsel %vm3623, %v3584, %v3586
      %v3720 = vsel %vm3623, %v3586, %v3588
      %v3721 = vsel %vm3623, %v3588, %v3590
      %v3722 = vsel %vm3623, %v3592, %v3594
      %v3723 = vsel %vm3623, %v3594, %v3596
      %v3724 = vsel %vm3623, %v3596, %v3598
      %v3725 = vsel %vm3623, %v3598, %v3600
      %v3726 = vsel %vm3623, %v3600, %v3602
      %v3727 = vsel %vm3623, %v3602, %v3604
      %v3728 = vsel %vm3623, %v3604, %v3606
      %v3729 = vsel %vm3623, %v3608, %v3610
      %v3730 = vsel %vm3623, %v3610, %v3612
      %v3731 = vsel %vm3623, %v3612, %v3614
      %v3732 = vsel %vm3623, %v3614, %v3616
      %v3733 = vsel %vm3623, %v3616, %v3618
      %v3734 = vsel %vm3623, %v3618, %v3620
      %v3735 = vsel %vm3623, %v3620, %v3622
      %v3848 = vld [vmem:[%s1] sm:$0xff]
      %v3849 = vld [vmem:[%s1 + $0x8] sm:$0xff]
      %v3850 = vld [vmem:[%s1 + $0x10] sm:$0xff]
      %v3851 = vld [vmem:[%s1 + $0x18] sm:$0xff]
      %v3852 = vld [vmem:[%s1 + $0x20] sm:$0xff]
      %v3853 = vld [vmem:[%s1 + $0x28] sm:$0xff]
      %v3854 = vld [vmem:[%s1 + $0x30] sm:$0xff]
      %v3855 = vld [vmem:[%s1 + $0x38] sm:$0xff]
      %v3856 = vld [vmem:[%s2] sm:$0xff]
      %3858 = vset.pattern.permute.xlu0 0
      %3859 = vperm.xlu0 %3858, %v3856
      %v3860 = vpop.permute.xlu0 %3859
      %3862 = vmatprep.subr.mxu0 %v172
      %3863 = vmatpush1.msra.mxu0 %v171
      %3864 = vmatprep.subr.mxu0 %v181
      %3865 = vmatpush1.msra.mxu0 %v180
      %3866 = vmatprep.subr.mxu0 %v233
      %3867 = vmatpush1.msra.mxu0 %v232
      %3868 = vmatprep.subr.mxu0 %v239
      %3869 = vmatpush1.msra.mxu0 %v238
      %3870 = vmatprep.subr.mxu0 %v288
      %3871 = vmatpush1.msra.mxu0 %v287
      %3872 = vmatprep.subr.mxu0 %v294
      %3873 = vmatpush1.msra.mxu0 %v293
      %3874 = vmatprep.subr.mxu0 %v343
      %3875 = vmatpush1.msra.mxu0 %v342
      %3876 = vmatprep.subr.mxu0 %v349
      %3877 = vmatpush1.msra.mxu0 %v348
      %3878 = vmatprep.subr.mxu0 %v398
      %3879 = vmatpush1.msra.mxu0 %v397
      %3880 = vmatprep.subr.mxu0 %v404
      %3881 = vmatpush1.msra.mxu0 %v403
      %3882 = vmatprep.subr.mxu0 %v453
      %3883 = vmatpush1.msra.mxu0 %v452
      %3884 = vmatprep.subr.mxu0 %v459
      %3885 = vmatpush1.msra.mxu0 %v458
      %3886 = vmatprep.subr.mxu0 %v508
      %3887 = vmatpush1.msra.mxu0 %v507
      %3888 = vmatprep.subr.mxu0 %v514
      %3889 = vmatpush1.msra.mxu0 %v513
      %3890 = vmatprep.subr.mxu0 %v563
      %3891 = vmatpush1.msra.mxu0 %v562
      %3892 = vmatprep.subr.mxu0 %v569
      %3893 = vmatpush1.msra.mxu0 %v568
      %3894 = vmatprep.subr.mxu0 %v902
      %3895 = vmatpush1.msra.mxu0 %v901
      %3896 = vmatprep.subr.mxu0 %v908
      %3897 = vmatpush1.msra.mxu0 %v907
      %3898 = vmatprep.subr.mxu0 %v914
      %3899 = vmatpush1.msra.mxu0 %v913
      %3900 = vmatprep.subr.mxu0 %v920
      %3901 = vmatpush1.msra.mxu0 %v919
      %3902 = vmatprep.subr.mxu0 %v926
      %3903 = vmatpush1.msra.mxu0 %v925
      %3904 = vmatprep.subr.mxu0 %v932
      %3905 = vmatpush1.msra.mxu0 %v931
      %3906 = vmatprep.subr.mxu0 %v938
      %3907 = vmatpush1.msra.mxu0 %v937
      %3908 = vmatprep.subr.mxu0 %v944
      %3909 = vmatpush1.msra.mxu0 %v943
      %3910 = vmatprep.subr.mxu0 %v950
      %3911 = vmatpush1.msra.mxu0 %v949
      %3912 = vmatprep.subr.mxu0 %v956
      %3913 = vmatpush1.msra.mxu0 %v955
      %3914 = vmatprep.subr.mxu0 %v962
      %3915 = vmatpush1.msra.mxu0 %v961
      %3916 = vmatprep.subr.mxu0 %v968
      %3917 = vmatpush1.msra.mxu0 %v967
      %3918 = vmatprep.subr.mxu0 %v974
      %3919 = vmatpush1.msra.mxu0 %v973
      %3920 = vmatprep.subr.mxu0 %v980
      %3921 = vmatpush1.msra.mxu0 %v979
      %3922 = vmatprep.subr.mxu0 %v986
      %3923 = vmatpush1.msra.mxu0 %v985
      %3924 = vmatprep.subr.mxu0 %v992
      %3925 = vmatpush1.msra.mxu0 %v991
      %3926 = vmatprep.mubr.f32.mxu0 %v3849
      %3927 = vmatmul.mubr.f32.gmra.mrb[0].mxu0 %v3848
      %v3928 = vpop.f32.mrb[0].mxu0
      %v3929 = vadd.f32 %v3860, %v3928
      %v3930 = vpop.f32.mrb[0].mxu0
      %v3931 = vadd.f32 %v3860, %v3930
      %3932 = vdwg.mxu0
      %3933 = vmatprep.subr.mxu0 %v1367
      %3934 = vmatpush1.msra.mxu0 %v1366
      %3935 = vmatprep.subr.mxu0 %v1374
      %3936 = vmatpush1.msra.mxu0 %v1373
      %3937 = vmatprep.subr.mxu0 %v1381
      %3938 = vmatpush1.msra.mxu0 %v1380
      %3939 = vmatprep.subr.mxu0 %v1388
      %3940 = vmatpush1.msra.mxu0 %v1387
      %3941 = vmatprep.subr.mxu0 %v1395
      %3942 = vmatpush1.msra.mxu0 %v1394
      %3943 = vmatprep.subr.mxu0 %v1402
      %3944 = vmatpush1.msra.mxu0 %v1401
      %3945 = vmatprep.subr.mxu0 %v1409
      %3946 = vmatpush1.msra.mxu0 %v1408
      %3947 = vmatprep.subr.mxu0 %v1416
      %3948 = vmatpush1.msra.mxu0 %v1415
      %3949 = vmatprep.subr.mxu0 %v1423
      %3950 = vmatpush1.msra.mxu0 %v1422
      %3951 = vmatprep.subr.mxu0 %v1430
      %3952 = vmatpush1.msra.mxu0 %v1429
      %3953 = vmatprep.subr.mxu0 %v1437
      %3954 = vmatpush1.msra.mxu0 %v1436
      %3955 = vmatprep.subr.mxu0 %v1444
      %3956 = vmatpush1.msra.mxu0 %v1443
      %3957 = vmatprep.subr.mxu0 %v1451
      %3958 = vmatpush1.msra.mxu0 %v1450
      %3959 = vmatprep.subr.mxu0 %v1458
      %3960 = vmatpush1.msra.mxu0 %v1457
      %3961 = vmatprep.subr.mxu0 %v1465
      %3962 = vmatpush1.msra.mxu0 %v1464
      %3963 = vmatprep.subr.mxu0 %v1472
      %3964 = vmatpush1.msra.mxu0 %v1471
      %3965 = vmatprep.subr.mxu0 %v1848
      %3966 = vmatpush1.msra.mxu0 %v1847
      %3967 = vmatprep.subr.mxu0 %v1855
      %3968 = vmatpush1.msra.mxu0 %v1854
      %3969 = vmatprep.subr.mxu0 %v1862
      %3970 = vmatpush1.msra.mxu0 %v1861
      %3971 = vmatprep.subr.mxu0 %v1869
      %3972 = vmatpush1.msra.mxu0 %v1868
      %3973 = vmatprep.subr.mxu0 %v1876
      %3974 = vmatpush1.msra.mxu0 %v1875
      %3975 = vmatprep.subr.mxu0 %v1883
      %3976 = vmatpush1.msra.mxu0 %v1882
      %3977 = vmatprep.subr.mxu0 %v1890
      %3978 = vmatpush1.msra.mxu0 %v1889
      %3979 = vmatprep.subr.mxu0 %v1897
      %3980 = vmatpush1.msra.mxu0 %v1896
      %3981 = vmatprep.subr.mxu0 %v1904
      %3982 = vmatpush1.msra.mxu0 %v1903
      %3983 = vmatprep.subr.mxu0 %v1911
      %3984 = vmatpush1.msra.mxu0 %v1910
      %3985 = vmatprep.subr.mxu0 %v1918
      %3986 = vmatpush1.msra.mxu0 %v1917
      %3987 = vmatprep.subr.mxu0 %v1925
      %3988 = vmatpush1.msra.mxu0 %v1924
      %3989 = vmatprep.subr.mxu0 %v1932
      %3990 = vmatpush1.msra.mxu0 %v1931
      %3991 = vmatprep.subr.mxu0 %v1939
      %3992 = vmatpush1.msra.mxu0 %v1938
      %3993 = vmatprep.subr.mxu0 %v1946
      %3994 = vmatpush1.msra.mxu0 %v1945
      %3995 = vmatprep.subr.mxu0 %v1953
      %3996 = vmatpush1.msra.mxu0 %v1952
      %3997 = vmatprep.mubr.f32.mxu0 %v3851
      %3998 = vmatmul.mubr.f32.gmra.mrb[0].mxu0 %v3850
      %v3999 = vpop.f32.mrb[0].mxu0
      %v4000 = vadd.f32 %v3929, %v3999
      %v4001 = vpop.f32.mrb[0].mxu0
      %v4002 = vadd.f32 %v3931, %v4001
      %4003 = vdwg.mxu0
      %4004 = vmatprep.subr.mxu0 %v399
      %4005 = vmatpush1.msra.mxu0 %v398
      %4006 = vmatprep.subr.mxu0 %v405
      %4007 = vmatpush1.msra.mxu0 %v404
      %4008 = vmatprep.subr.mxu0 %v2268
      %4009 = vmatpush1.msra.mxu0 %v2267
      %4010 = vmatprep.subr.mxu0 %v2274
      %4011 = vmatpush1.msra.mxu0 %v2273
      %4012 = vmatprep.subr.mxu0 %v2280
      %4013 = vmatpush1.msra.mxu0 %v2279
      %4014 = vmatprep.subr.mxu0 %v2286
      %4015 = vmatpush1.msra.mxu0 %v2285
      %4016 = vmatprep.subr.mxu0 %v2292
      %4017 = vmatpush1.msra.mxu0 %v2291
      %4018 = vmatprep.subr.mxu0 %v2298
      %4019 = vmatpush1.msra.mxu0 %v2297
      %4020 = vmatprep.subr.mxu0 %v2304
      %4021 = vmatpush1.msra.mxu0 %v2303
      %4022 = vmatprep.subr.mxu0 %v2310
      %4023 = vmatpush1.msra.mxu0 %v2309
      %4024 = vmatprep.subr.mxu0 %v2316
      %4025 = vmatpush1.msra.mxu0 %v2315
      %4026 = vmatprep.subr.mxu0 %v2322
      %4027 = vmatpush1.msra.mxu0 %v2321
      %4028 = vmatprep.subr.mxu0 %v2328
      %4029 = vmatpush1.msra.mxu0 %v2327
      %4030 = vmatprep.subr.mxu0 %v2334
      %4031 = vmatpush1.msra.mxu0 %v2333
      %4032 = vmatprep.subr.mxu0 %v2340
      %4033 = vmatpush1.msra.mxu0 %v2339
      %4034 = vmatprep.subr.mxu0 %v2346
      %4035 = vmatpush1.msra.mxu0 %v2345
      %4036 = vmatprep.subr.mxu0 %v2679
      %4037 = vmatpush1.msra.mxu0 %v2678
      %4038 = vmatprep.subr.mxu0 %v2685
      %4039 = vmatpush1.msra.mxu0 %v2684
      %4040 = vmatprep.subr.mxu0 %v2691
      %4041 = vmatpush1.msra.mxu0 %v2690
      %4042 = vmatprep.subr.mxu0 %v2697
      %4043 = vmatpush1.msra.mxu0 %v2696
      %4044 = vmatprep.subr.mxu0 %v2703
      %4045 = vmatpush1.msra.mxu0 %v2702
      %4046 = vmatprep.subr.mxu0 %v2709
      %4047 = vmatpush1.msra.mxu0 %v2708
      %4048 = vmatprep.subr.mxu0 %v2715
      %4049 = vmatpush1.msra.mxu0 %v2714
      %4050 = vmatprep.subr.mxu0 %v2721
      %4051 = vmatpush1.msra.mxu0 %v2720
      %4052 = vmatprep.subr.mxu0 %v2727
      %4053 = vmatpush1.msra.mxu0 %v2726
      %4054 = vmatprep.subr.mxu0 %v2733
      %4055 = vmatpush1.msra.mxu0 %v2732
      %4056 = vmatprep.subr.mxu0 %v2739
      %4057 = vmatpush1.msra.mxu0 %v2738
      %4058 = vmatprep.subr.mxu0 %v2745
      %4059 = vmatpush1.msra.mxu0 %v2744
      %4060 = vmatprep.subr.mxu0 %v2751
      %4061 = vmatpush1.msra.mxu0 %v2750
      %4062 = vmatprep.subr.mxu0 %v2757
      %4063 = vmatpush1.msra.mxu0 %v2756
      %4064 = vmatprep.subr.mxu0 %v2763
      %4065 = vmatpush1.msra.mxu0 %v2762
      %4066 = vmatprep.subr.mxu0 %v2769
      %4067 = vmatpush1.msra.mxu0 %v2768
      %4068 = vmatprep.mubr.f32.mxu0 %v3853
      %4069 = vmatmul.mubr.f32.gmra.mrb[0].mxu0 %v3852
      %v4070 = vpop.f32.mrb[0].mxu0
      %v4071 = vadd.f32 %v4000, %v4070
      %v4072 = vpop.f32.mrb[0].mxu0
      %v4073 = vadd.f32 %v4002, %v4072
      %4074 = vdwg.mxu0
      %4075 = vmatprep.subr.mxu0 %v3144
      %4076 = vmatpush1.msra.mxu0 %v3143
      %4077 = vmatprep.subr.mxu0 %v3151
      %4078 = vmatpush1.msra.mxu0 %v3150
      %4079 = vmatprep.subr.mxu0 %v3158
      %4080 = vmatpush1.msra.mxu0 %v3157
      %4081 = vmatprep.subr.mxu0 %v3165
      %4082 = vmatpush1.msra.mxu0 %v3164
      %4083 = vmatprep.subr.mxu0 %v3172
      %4084 = vmatpush1.msra.mxu0 %v3171
      %4085 = vmatprep.subr.mxu0 %v3179
      %4086 = vmatpush1.msra.mxu0 %v3178
      %4087 = vmatprep.subr.mxu0 %v3186
      %4088 = vmatpush1.msra.mxu0 %v3185
      %4089 = vmatprep.subr.mxu0 %v3193
      %4090 = vmatpush1.msra.mxu0 %v3192
      %4091 = vmatprep.subr.mxu0 %v3200
      %4092 = vmatpush1.msra.mxu0 %v3199
      %4093 = vmatprep.subr.mxu0 %v3207
      %4094 = vmatpush1.msra.mxu0 %v3206
      %4095 = vmatprep.subr.mxu0 %v3214
      %4096 = vmatpush1.msra.mxu0 %v3213
      %4097 = vmatprep.subr.mxu0 %v3221
      %4098 = vmatpush1.msra.mxu0 %v3220
      %4099 = vmatprep.subr.mxu0 %v3228
      %4100 = vmatpush1.msra.mxu0 %v3227
      %4101 = vmatprep.subr.mxu0 %v3235
      %4102 = vmatpush1.msra.mxu0 %v3234
      %4103 = vmatprep.subr.mxu0 %v3242
      %4104 = vmatpush1.msra.mxu0 %v3241
      %4105 = vmatprep.subr.mxu0 %v3249
      %4106 = vmatpush1.msra.mxu0 %v3248
      %4107 = vmatprep.subr.mxu0 %v3625
      %4108 = vmatpush1.msra.mxu0 %v3624
      %4109 = vmatprep.subr.mxu0 %v3632
      %4110 = vmatpush1.msra.mxu0 %v3631
      %4111 = vmatprep.subr.mxu0 %v3639
      %4112 = vmatpush1.msra.mxu0 %v3638
      %4113 = vmatprep.subr.mxu0 %v3646
      %4114 = vmatpush1.msra.mxu0 %v3645
      %4115 = vmatprep.subr.mxu0 %v3653
      %4116 = vmatpush1.msra.mxu0 %v3652
      %4117 = vmatprep.subr.mxu0 %v3660
      %4118 = vmatpush1.msra.mxu0 %v3659
      %4119 = vmatprep.subr.mxu0 %v3667
      %4120 = vmatpush1.msra.mxu0 %v3666
      %4121 = vmatprep.subr.mxu0 %v3674
      %4122 = vmatpush1.msra.mxu0 %v3673
      %4123 = vmatprep.subr.mxu0 %v3681
      %4124 = vmatpush1.msra.mxu0 %v3680
      %4125 = vmatprep.subr.mxu0 %v3688
      %4126 = vmatpush1.msra.mxu0 %v3687
      %4127 = vmatprep.subr.mxu0 %v3695
      %4128 = vmatpush1.msra.mxu0 %v3694
      %4129 = vmatprep.subr.mxu0 %v3702
      %4130 = vmatpush1.msra.mxu0 %v3701
      %4131 = vmatprep.subr.mxu0 %v3709
      %4132 = vmatpush1.msra.mxu0 %v3708
      %4133 = vmatprep.subr.mxu0 %v3716
      %4134 = vmatpush1.msra.mxu0 %v3715
      %4135 = vmatprep.subr.mxu0 %v3723
      %4136 = vmatpush1.msra.mxu0 %v3722
      %4137 = vmatprep.subr.mxu0 %v3730
      %4138 = vmatpush1.msra.mxu0 %v3729
      %4139 = vmatprep.mubr.f32.mxu0 %v3855
      %4140 = vmatmul.mubr.f32.gmra.mrb[0].mxu0 %v3854
      %v4141 = vpop.f32.mrb[0].mxu0
      %v4142 = vadd.f32 %v4071, %v4141
      %v4143 = vpop.f32.mrb[0].mxu0
      %v4144 = vadd.f32 %v4073, %v4143
      %4145 = vdwg.mxu0
      %4146 = vmatprep.subr.mxu0 %v174
      %4147 = vmatpush1.msra.mxu0 %v173
      %4148 = vmatprep.subr.mxu0 %v183
      %4149 = vmatpush1.msra.mxu0 %v182
      %4150 = vmatprep.subr.mxu0 %v235
      %4151 = vmatpush1.msra.mxu0 %v234
      %4152 = vmatprep.subr.mxu0 %v241
      %4153 = vmatpush1.msra.mxu0 %v240
      %4154 = vmatprep.subr.mxu0 %v290
      %4155 = vmatpush1.msra.mxu0 %v289
      %4156 = vmatprep.subr.mxu0 %v296
      %4157 = vmatpush1.msra.mxu0 %v295
      %4158 = vmatprep.subr.mxu0 %v345
      %4159 = vmatpush1.msra.mxu0 %v344
      %4160 = vmatprep.subr.mxu0 %v351
      %4161 = vmatpush1.msra.mxu0 %v350
      %4162 = vmatprep.subr.mxu0 %v400
      %4163 = vmatpush1.msra.mxu0 %v399
      %4164 = vmatprep.subr.mxu0 %v406
      %4165 = vmatpush1.msra.mxu0 %v405
      %4166 = vmatprep.subr.mxu0 %v455
      %4167 = vmatpush1.msra.mxu0 %v454
      %4168 = vmatprep.subr.mxu0 %v461
      %4169 = vmatpush1.msra.mxu0 %v460
      %4170 = vmatprep.subr.mxu0 %v510
      %4171 = vmatpush1.msra.mxu0 %v509
      %4172 = vmatprep.subr.mxu0 %v516
      %4173 = vmatpush1.msra.mxu0 %v515
      %4174 = vmatprep.subr.mxu0 %v565
      %4175 = vmatpush1.msra.mxu0 %v564
      %4176 = vmatprep.subr.mxu0 %v571
      %4177 = vmatpush1.msra.mxu0 %v570
      %4178 = vmatprep.subr.mxu0 %v904
      %4179 = vmatpush1.msra.mxu0 %v903
      %4180 = vmatprep.subr.mxu0 %v910
      %4181 = vmatpush1.msra.mxu0 %v909
      %4182 = vmatprep.subr.mxu0 %v916
      %4183 = vmatpush1.msra.mxu0 %v915
      %4184 = vmatprep.subr.mxu0 %v922
      %4185 = vmatpush1.msra.mxu0 %v921
      %4186 = vmatprep.subr.mxu0 %v928
      %4187 = vmatpush1.msra.mxu0 %v927
      %4188 = vmatprep.subr.mxu0 %v934
      %4189 = vmatpush1.msra.mxu0 %v933
      %4190 = vmatprep.subr.mxu0 %v940
      %4191 = vmatpush1.msra.mxu0 %v939
      %4192 = vmatprep.subr.mxu0 %v946
      %4193 = vmatpush1.msra.mxu0 %v945
      %4194 = vmatprep.subr.mxu0 %v952
      %4195 = vmatpush1.msra.mxu0 %v951
      %4196 = vmatprep.subr.mxu0 %v958
      %4197 = vmatpush1.msra.mxu0 %v957
      %4198 = vmatprep.subr.mxu0 %v964
      %4199 = vmatpush1.msra.mxu0 %v963
      %4200 = vmatprep.subr.mxu0 %v970
      %4201 = vmatpush1.msra.mxu0 %v969
      %4202 = vmatprep.subr.mxu0 %v976
      %4203 = vmatpush1.msra.mxu0 %v975
      %4204 = vmatprep.subr.mxu0 %v982
      %4205 = vmatpush1.msra.mxu0 %v981
      %4206 = vmatprep.subr.mxu0 %v988
      %4207 = vmatpush1.msra.mxu0 %v987
      %4208 = vmatprep.subr.mxu0 %v994
      %4209 = vmatpush1.msra.mxu0 %v993
      %4210 = vmatprep.mubr.f32.mxu0 %v3849
      %4211 = vmatmul.mubr.f32.gmra.mrb[0].mxu0 %v3848
      %v4212 = vpop.f32.mrb[0].mxu0
      %v4213 = vadd.f32 %v3860, %v4212
      %v4214 = vpop.f32.mrb[0].mxu0
      %v4215 = vadd.f32 %v3860, %v4214
      %4216 = vdwg.mxu0
      %4217 = vmatprep.subr.mxu0 %v1369
      %4218 = vmatpush1.msra.mxu0 %v1368
      %4219 = vmatprep.subr.mxu0 %v1376
      %4220 = vmatpush1.msra.mxu0 %v1375
      %4221 = vmatprep.subr.mxu0 %v1383
      %4222 = vmatpush1.msra.mxu0 %v1382
      %4223 = vmatprep.subr.mxu0 %v1390
      %4224 = vmatpush1.msra.mxu0 %v1389
      %4225 = vmatprep.subr.mxu0 %v1397
      %4226 = vmatpush1.msra.mxu0 %v1396
      %4227 = vmatprep.subr.mxu0 %v1404
      %4228 = vmatpush1.msra.mxu0 %v1403
      %4229 = vmatprep.subr.mxu0 %v1411
      %4230 = vmatpush1.msra.mxu0 %v1410
      %4231 = vmatprep.subr.mxu0 %v1418
      %4232 = vmatpush1.msra.mxu0 %v1417
      %4233 = vmatprep.subr.mxu0 %v1425
      %4234 = vmatpush1.msra.mxu0 %v1424
      %4235 = vmatprep.subr.mxu0 %v1432
      %4236 = vmatpush1.msra.mxu0 %v1431
      %4237 = vmatprep.subr.mxu0 %v1439
      %4238 = vmatpush1.msra.mxu0 %v1438
      %4239 = vmatprep.subr.mxu0 %v1446
      %4240 = vmatpush1.msra.mxu0 %v1445
      %4241 = vmatprep.subr.mxu0 %v1453
      %4242 = vmatpush1.msra.mxu0 %v1452
      %4243 = vmatprep.subr.mxu0 %v1460
      %4244 = vmatpush1.msra.mxu0 %v1459
      %4245 = vmatprep.subr.mxu0 %v1467
      %4246 = vmatpush1.msra.mxu0 %v1466
      %4247 = vmatprep.subr.mxu0 %v1474
      %4248 = vmatpush1.msra.mxu0 %v1473
      %4249 = vmatprep.subr.mxu0 %v1850
      %4250 = vmatpush1.msra.mxu0 %v1849
      %4251 = vmatprep.subr.mxu0 %v1857
      %4252 = vmatpush1.msra.mxu0 %v1856
      %4253 = vmatprep.subr.mxu0 %v1864
      %4254 = vmatpush1.msra.mxu0 %v1863
      %4255 = vmatprep.subr.mxu0 %v1871
      %4256 = vmatpush1.msra.mxu0 %v1870
      %4257 = vmatprep.subr.mxu0 %v1878
      %4258 = vmatpush1.msra.mxu0 %v1877
      %4259 = vmatprep.subr.mxu0 %v1885
      %4260 = vmatpush1.msra.mxu0 %v1884
      %4261 = vmatprep.subr.mxu0 %v1892
      %4262 = vmatpush1.msra.mxu0 %v1891
      %4263 = vmatprep.subr.mxu0 %v1899
      %4264 = vmatpush1.msra.mxu0 %v1898
      %4265 = vmatprep.subr.mxu0 %v1906
      %4266 = vmatpush1.msra.mxu0 %v1905
      %4267 = vmatprep.subr.mxu0 %v1913
      %4268 = vmatpush1.msra.mxu0 %v1912
      %4269 = vmatprep.subr.mxu0 %v1920
      %4270 = vmatpush1.msra.mxu0 %v1919
      %4271 = vmatprep.subr.mxu0 %v1927
      %4272 = vmatpush1.msra.mxu0 %v1926
      %4273 = vmatprep.subr.mxu0 %v1934
      %4274 = vmatpush1.msra.mxu0 %v1933
      %4275 = vmatprep.subr.mxu0 %v1941
      %4276 = vmatpush1.msra.mxu0 %v1940
      %4277 = vmatprep.subr.mxu0 %v1948
      %4278 = vmatpush1.msra.mxu0 %v1947
      %4279 = vmatprep.subr.mxu0 %v1955
      %4280 = vmatpush1.msra.mxu0 %v1954
      %4281 = vmatprep.mubr.f32.mxu0 %v3851
      %4282 = vmatmul.mubr.f32.gmra.mrb[0].mxu0 %v3850
      %v4283 = vpop.f32.mrb[0].mxu0
      %v4284 = vadd.f32 %v4213, %v4283
      %v4285 = vpop.f32.mrb[0].mxu0
      %v4286 = vadd.f32 %v4215, %v4285
      %4287 = vdwg.mxu0
      %4288 = vmatprep.subr.mxu0 %v401
      %4289 = vmatpush1.msra.mxu0 %v400
      %4290 = vmatprep.subr.mxu0 %v407
      %4291 = vmatpush1.msra.mxu0 %v406
      %4292 = vmatprep.subr.mxu0 %v2270
      %4293 = vmatpush1.msra.mxu0 %v2269
      %4294 = vmatprep.subr.mxu0 %v2276
      %4295 = vmatpush1.msra.mxu0 %v2275
      %4296 = vmatprep.subr.mxu0 %v2282
      %4297 = vmatpush1.msra.mxu0 %v2281
      %4298 = vmatprep.subr.mxu0 %v2288
      %4299 = vmatpush1.msra.mxu0 %v2287
      %4300 = vmatprep.subr.mxu0 %v2294
      %4301 = vmatpush1.msra.mxu0 %v2293
      %4302 = vmatprep.subr.mxu0 %v2300
      %4303 = vmatpush1.msra.mxu0 %v2299
      %4304 = vmatprep.subr.mxu0 %v2306
      %4305 = vmatpush1.msra.mxu0 %v2305
      %4306 = vmatprep.subr.mxu0 %v2312
      %4307 = vmatpush1.msra.mxu0 %v2311
      %4308 = vmatprep.subr.mxu0 %v2318
      %4309 = vmatpush1.msra.mxu0 %v2317
      %4310 = vmatprep.subr.mxu0 %v2324
      %4311 = vmatpush1.msra.mxu0 %v2323
      %4312 = vmatprep.subr.mxu0 %v2330
      %4313 = vmatpush1.msra.mxu0 %v2329
      %4314 = vmatprep.subr.mxu0 %v2336
      %4315 = vmatpush1.msra.mxu0 %v2335
      %4316 = vmatprep.subr.mxu0 %v2342
      %4317 = vmatpush1.msra.mxu0 %v2341
      %4318 = vmatprep.subr.mxu0 %v2348
      %4319 = vmatpush1.msra.mxu0 %v2347
      %4320 = vmatprep.subr.mxu0 %v2681
      %4321 = vmatpush1.msra.mxu0 %v2680
      %4322 = vmatprep.subr.mxu0 %v2687
      %4323 = vmatpush1.msra.mxu0 %v2686
      %4324 = vmatprep.subr.mxu0 %v2693
      %4325 = vmatpush1.msra.mxu0 %v2692
      %4326 = vmatprep.subr.mxu0 %v2699
      %4327 = vmatpush1.msra.mxu0 %v2698
      %4328 = vmatprep.subr.mxu0 %v2705
      %4329 = vmatpush1.msra.mxu0 %v2704
      %4330 = vmatprep.subr.mxu0 %v2711
      %4331 = vmatpush1.msra.mxu0 %v2710
      %4332 = vmatprep.subr.mxu0 %v2717
      %4333 = vmatpush1.msra.mxu0 %v2716
      %4334 = vmatprep.subr.mxu0 %v2723
      %4335 = vmatpush1.msra.mxu0 %v2722
      %4336 = vmatprep.subr.mxu0 %v2729
      %4337 = vmatpush1.msra.mxu0 %v2728
      %4338 = vmatprep.subr.mxu0 %v2735
      %4339 = vmatpush1.msra.mxu0 %v2734
      %4340 = vmatprep.subr.mxu0 %v2741
      %4341 = vmatpush1.msra.mxu0 %v2740
      %4342 = vmatprep.subr.mxu0 %v2747
      %4343 = vmatpush1.msra.mxu0 %v2746
      %4344 = vmatprep.subr.mxu0 %v2753
      %4345 = vmatpush1.msra.mxu0 %v2752
      %4346 = vmatprep.subr.mxu0 %v2759
      %4347 = vmatpush1.msra.mxu0 %v2758
      %4348 = vmatprep.subr.mxu0 %v2765
      %4349 = vmatpush1.msra.mxu0 %v2764
      %4350 = vmatprep.subr.mxu0 %v2771
      %4351 = vmatpush1.msra.mxu0 %v2770
      %4352 = vmatprep.mubr.f32.mxu0 %v3853
      %4353 = vmatmul.mubr.f32.gmra.mrb[0].mxu0 %v3852
      %v4354 = vpop.f32.mrb[0].mxu0
      %v4355 = vadd.f32 %v4284, %v4354
      %v4356 = vpop.f32.mrb[0].mxu0
      %v4357 = vadd.f32 %v4286, %v4356
      %4358 = vdwg.mxu0
      %4359 = vmatprep.subr.mxu0 %v3146
      %4360 = vmatpush1.msra.mxu0 %v3145
      %4361 = vmatprep.subr.mxu0 %v3153
      %4362 = vmatpush1.msra.mxu0 %v3152
      %4363 = vmatprep.subr.mxu0 %v3160
      %4364 = vmatpush1.msra.mxu0 %v3159
      %4365 = vmatprep.subr.mxu0 %v3167
      %4366 = vmatpush1.msra.mxu0 %v3166
      %4367 = vmatprep.subr.mxu0 %v3174
      %4368 = vmatpush1.msra.mxu0 %v3173
      %4369 = vmatprep.subr.mxu0 %v3181
      %4370 = vmatpush1.msra.mxu0 %v3180
      %4371 = vmatprep.subr.mxu0 %v3188
      %4372 = vmatpush1.msra.mxu0 %v3187
      %4373 = vmatprep.subr.mxu0 %v3195
      %4374 = vmatpush1.msra.mxu0 %v3194
      %4375 = vmatprep.subr.mxu0 %v3202
      %4376 = vmatpush1.msra.mxu0 %v3201
      %4377 = vmatprep.subr.mxu0 %v3209
      %4378 = vmatpush1.msra.mxu0 %v3208
      %4379 = vmatprep.subr.mxu0 %v3216
      %4380 = vmatpush1.msra.mxu0 %v3215
      %4381 = vmatprep.subr.mxu0 %v3223
      %4382 = vmatpush1.msra.mxu0 %v3222
      %4383 = vmatprep.subr.mxu0 %v3230
      %4384 = vmatpush1.msra.mxu0 %v3229
      %4385 = vmatprep.subr.mxu0 %v3237
      %4386 = vmatpush1.msra.mxu0 %v3236
      %4387 = vmatprep.subr.mxu0 %v3244
      %4388 = vmatpush1.msra.mxu0 %v3243
      %4389 = vmatprep.subr.mxu0 %v3251
      %4390 = vmatpush1.msra.mxu0 %v3250
      %4391 = vmatprep.subr.mxu0 %v3627
      %4392 = vmatpush1.msra.mxu0 %v3626
      %4393 = vmatprep.subr.mxu0 %v3634
      %4394 = vmatpush1.msra.mxu0 %v3633
      %4395 = vmatprep.subr.mxu0 %v3641
      %4396 = vmatpush1.msra.mxu0 %v3640
      %4397 = vmatprep.subr.mxu0 %v3648
      %4398 = vmatpush1.msra.mxu0 %v3647
      %4399 = vmatprep.subr.mxu0 %v3655
      %4400 = vmatpush1.msra.mxu0 %v3654
      %4401 = vmatprep.subr.mxu0 %v3662
      %4402 = vmatpush1.msra.mxu0 %v3661
      %4403 = vmatprep.subr.mxu0 %v3669
      %4404 = vmatpush1.msra.mxu0 %v3668
      %4405 = vmatprep.subr.mxu0 %v3676
      %4406 = vmatpush1.msra.mxu0 %v3675
      %4407 = vmatprep.subr.mxu0 %v3683
      %4408 = vmatpush1.msra.mxu0 %v3682
      %4409 = vmatprep.subr.mxu0 %v3690
      %4410 = vmatpush1.msra.mxu0 %v3689
      %4411 = vmatprep.subr.mxu0 %v3697
      %4412 = vmatpush1.msra.mxu0 %v3696
      %4413 = vmatprep.subr.mxu0 %v3704
      %4414 = vmatpush1.msra.mxu0 %v3703
      %4415 = vmatprep.subr.mxu0 %v3711
      %4416 = vmatpush1.msra.mxu0 %v3710
      %4417 = vmatprep.subr.mxu0 %v3718
      %4418 = vmatpush1.msra.mxu0 %v3717
      %4419 = vmatprep.subr.mxu0 %v3725
      %4420 = vmatpush1.msra.mxu0 %v3724
      %4421 = vmatprep.subr.mxu0 %v3732
      %4422 = vmatpush1.msra.mxu0 %v3731
      %4423 = vmatprep.mubr.f32.mxu0 %v3855
      %4424 = vmatmul.mubr.f32.gmra.mrb[0].mxu0 %v3854
      %v4425 = vpop.f32.mrb[0].mxu0
      %v4426 = vadd.f32 %v4355, %v4425
      %v4427 = vpop.f32.mrb[0].mxu0
      %v4428 = vadd.f32 %v4357, %v4427
      %4429 = vdwg.mxu0
      %4430 = vmatprep.subr.mxu0 %v176
      %4431 = vmatpush1.msra.mxu0 %v175
      %4432 = vmatprep.subr.mxu0 %v185
      %4433 = vmatpush1.msra.mxu0 %v184
      %4434 = vmatprep.subr.mxu0 %v237
      %4435 = vmatpush1.msra.mxu0 %v236
      %4436 = vmatprep.subr.mxu0 %v243
      %4437 = vmatpush1.msra.mxu0 %v242
      %4438 = vmatprep.subr.mxu0 %v292
      %4439 = vmatpush1.msra.mxu0 %v291
      %4440 = vmatprep.subr.mxu0 %v298
      %4441 = vmatpush1.msra.mxu0 %v297
      %4442 = vmatprep.subr.mxu0 %v347
      %4443 = vmatpush1.msra.mxu0 %v346
      %4444 = vmatprep.subr.mxu0 %v353
      %4445 = vmatpush1.msra.mxu0 %v352
      %4446 = vmatprep.subr.mxu0 %v402
      %4447 = vmatpush1.msra.mxu0 %v401
      %4448 = vmatprep.subr.mxu0 %v408
      %4449 = vmatpush1.msra.mxu0 %v407
      %4450 = vmatprep.subr.mxu0 %v457
      %4451 = vmatpush1.msra.mxu0 %v456
      %4452 = vmatprep.subr.mxu0 %v463
      %4453 = vmatpush1.msra.mxu0 %v462
      %4454 = vmatprep.subr.mxu0 %v512
      %4455 = vmatpush1.msra.mxu0 %v511
      %4456 = vmatprep.subr.mxu0 %v518
      %4457 = vmatpush1.msra.mxu0 %v517
      %4458 = vmatprep.subr.mxu0 %v567
      %4459 = vmatpush1.msra.mxu0 %v566
      %4460 = vmatprep.subr.mxu0 %v573
      %4461 = vmatpush1.msra.mxu0 %v572
      %4462 = vmatprep.subr.mxu0 %v906
      %4463 = vmatpush1.msra.mxu0 %v905
      %4464 = vmatprep.subr.mxu0 %v912
      %4465 = vmatpush1.msra.mxu0 %v911
      %4466 = vmatprep.subr.mxu0 %v918
      %4467 = vmatpush1.msra.mxu0 %v917
      %4468 = vmatprep.subr.mxu0 %v924
      %4469 = vmatpush1.msra.mxu0 %v923
      %4470 = vmatprep.subr.mxu0 %v930
      %4471 = vmatpush1.msra.mxu0 %v929
      %4472 = vmatprep.subr.mxu0 %v936
      %4473 = vmatpush1.msra.mxu0 %v935
      %4474 = vmatprep.subr.mxu0 %v942
      %4475 = vmatpush1.msra.mxu0 %v941
      %4476 = vmatprep.subr.mxu0 %v948
      %4477 = vmatpush1.msra.mxu0 %v947
      %4478 = vmatprep.subr.mxu0 %v954
      %4479 = vmatpush1.msra.mxu0 %v953
      %4480 = vmatprep.subr.mxu0 %v960
      %4481 = vmatpush1.msra.mxu0 %v959
      %4482 = vmatprep.subr.mxu0 %v966
      %4483 = vmatpush1.msra.mxu0 %v965
      %4484 = vmatprep.subr.mxu0 %v972
      %4485 = vmatpush1.msra.mxu0 %v971
      %4486 = vmatprep.subr.mxu0 %v978
      %4487 = vmatpush1.msra.mxu0 %v977
      %4488 = vmatprep.subr.mxu0 %v984
      %4489 = vmatpush1.msra.mxu0 %v983
      %4490 = vmatprep.subr.mxu0 %v990
      %4491 = vmatpush1.msra.mxu0 %v989
      %4492 = vmatprep.subr.mxu0 %v996
      %4493 = vmatpush1.msra.mxu0 %v995
      %4494 = vmatprep.mubr.f32.mxu0 %v3849
      %4495 = vmatmul.mubr.f32.gmra.mrb[0].mxu0 %v3848
      %v4496 = vpop.f32.mrb[0].mxu0
      %v4497 = vadd.f32 %v3860, %v4496
      %v4498 = vpop.f32.mrb[0].mxu0
      %v4499 = vadd.f32 %v3860, %v4498
      %4500 = vdwg.mxu0
      %4501 = vmatprep.subr.mxu0 %v1371
      %4502 = vmatpush1.msra.mxu0 %v1370
      %4503 = vmatprep.subr.mxu0 %v1378
      %4504 = vmatpush1.msra.mxu0 %v1377
      %4505 = vmatprep.subr.mxu0 %v1385
      %4506 = vmatpush1.msra.mxu0 %v1384
      %4507 = vmatprep.subr.mxu0 %v1392
      %4508 = vmatpush1.msra.mxu0 %v1391
      %4509 = vmatprep.subr.mxu0 %v1399
      %4510 = vmatpush1.msra.mxu0 %v1398
      %4511 = vmatprep.subr.mxu0 %v1406
      %4512 = vmatpush1.msra.mxu0 %v1405
      %4513 = vmatprep.subr.mxu0 %v1413
      %4514 = vmatpush1.msra.mxu0 %v1412
      %4515 = vmatprep.subr.mxu0 %v1420
      %4516 = vmatpush1.msra.mxu0 %v1419
      %4517 = vmatprep.subr.mxu0 %v1427
      %4518 = vmatpush1.msra.mxu0 %v1426
      %4519 = vmatprep.subr.mxu0 %v1434
      %4520 = vmatpush1.msra.mxu0 %v1433
      %4521 = vmatprep.subr.mxu0 %v1441
      %4522 = vmatpush1.msra.mxu0 %v1440
      %4523 = vmatprep.subr.mxu0 %v1448
      %4524 = vmatpush1.msra.mxu0 %v1447
      %4525 = vmatprep.subr.mxu0 %v1455
      %4526 = vmatpush1.msra.mxu0 %v1454
      %4527 = vmatprep.subr.mxu0 %v1462
      %4528 = vmatpush1.msra.mxu0 %v1461
      %4529 = vmatprep.subr.mxu0 %v1469
      %4530 = vmatpush1.msra.mxu0 %v1468
      %4531 = vmatprep.subr.mxu0 %v1476
      %4532 = vmatpush1.msra.mxu0 %v1475
      %4533 = vmatprep.subr.mxu0 %v1852
      %4534 = vmatpush1.msra.mxu0 %v1851
      %4535 = vmatprep.subr.mxu0 %v1859
      %4536 = vmatpush1.msra.mxu0 %v1858
      %4537 = vmatprep.subr.mxu0 %v1866
      %4538 = vmatpush1.msra.mxu0 %v1865
      %4539 = vmatprep.subr.mxu0 %v1873
      %4540 = vmatpush1.msra.mxu0 %v1872
      %4541 = vmatprep.subr.mxu0 %v1880
      %4542 = vmatpush1.msra.mxu0 %v1879
      %4543 = vmatprep.subr.mxu0 %v1887
      %4544 = vmatpush1.msra.mxu0 %v1886
      %4545 = vmatprep.subr.mxu0 %v1894
      %4546 = vmatpush1.msra.mxu0 %v1893
      %4547 = vmatprep.subr.mxu0 %v1901
      %4548 = vmatpush1.msra.mxu0 %v1900
      %4549 = vmatprep.subr.mxu0 %v1908
      %4550 = vmatpush1.msra.mxu0 %v1907
      %4551 = vmatprep.subr.mxu0 %v1915
      %4552 = vmatpush1.msra.mxu0 %v1914
      %4553 = vmatprep.subr.mxu0 %v1922
      %4554 = vmatpush1.msra.mxu0 %v1921
      %4555 = vmatprep.subr.mxu0 %v1929
      %4556 = vmatpush1.msra.mxu0 %v1928
      %4557 = vmatprep.subr.mxu0 %v1936
      %4558 = vmatpush1.msra.mxu0 %v1935
      %4559 = vmatprep.subr.mxu0 %v1943
      %4560 = vmatpush1.msra.mxu0 %v1942
      %4561 = vmatprep.subr.mxu0 %v1950
      %4562 = vmatpush1.msra.mxu0 %v1949
      %4563 = vmatprep.subr.mxu0 %v1957
      %4564 = vmatpush1.msra.mxu0 %v1956
      %4565 = vmatprep.mubr.f32.mxu0 %v3851
      %4566 = vmatmul.mubr.f32.gmra.mrb[0].mxu0 %v3850
      %v4567 = vpop.f32.mrb[0].mxu0
      %v4568 = vadd.f32 %v4497, %v4567
      %v4569 = vpop.f32.mrb[0].mxu0
      %v4570 = vadd.f32 %v4499, %v4569
      %4571 = vdwg.mxu0
      %4572 = vmatprep.subr.mxu0 %v612
      %4573 = vmatpush1.msra.mxu0 %v402
      %4574 = vmatprep.subr.mxu0 %v613
      %4575 = vmatpush1.msra.mxu0 %v408
      %4576 = vmatprep.subr.mxu0 %v2272
      %4577 = vmatpush1.msra.mxu0 %v2271
      %4578 = vmatprep.subr.mxu0 %v2278
      %4579 = vmatpush1.msra.mxu0 %v2277
      %4580 = vmatprep.subr.mxu0 %v2284
      %4581 = vmatpush1.msra.mxu0 %v2283
      %4582 = vmatprep.subr.mxu0 %v2290
      %4583 = vmatpush1.msra.mxu0 %v2289
      %4584 = vmatprep.subr.mxu0 %v2296
      %4585 = vmatpush1.msra.mxu0 %v2295
      %4586 = vmatprep.subr.mxu0 %v2302
      %4587 = vmatpush1.msra.mxu0 %v2301
      %4588 = vmatprep.subr.mxu0 %v2308
      %4589 = vmatpush1.msra.mxu0 %v2307
      %4590 = vmatprep.subr.mxu0 %v2314
      %4591 = vmatpush1.msra.mxu0 %v2313
      %4592 = vmatprep.subr.mxu0 %v2320
      %4593 = vmatpush1.msra.mxu0 %v2319
      %4594 = vmatprep.subr.mxu0 %v2326
      %4595 = vmatpush1.msra.mxu0 %v2325
      %4596 = vmatprep.subr.mxu0 %v2332
      %4597 = vmatpush1.msra.mxu0 %v2331
      %4598 = vmatprep.subr.mxu0 %v2338
      %4599 = vmatpush1.msra.mxu0 %v2337
      %4600 = vmatprep.subr.mxu0 %v2344
      %4601 = vmatpush1.msra.mxu0 %v2343
      %4602 = vmatprep.subr.mxu0 %v2350
      %4603 = vmatpush1.msra.mxu0 %v2349
      %4604 = vmatprep.subr.mxu0 %v2683
      %4605 = vmatpush1.msra.mxu0 %v2682
      %4606 = vmatprep.subr.mxu0 %v2689
      %4607 = vmatpush1.msra.mxu0 %v2688
      %4608 = vmatprep.subr.mxu0 %v2695
      %4609 = vmatpush1.msra.mxu0 %v2694
      %4610 = vmatprep.subr.mxu0 %v2701
      %4611 = vmatpush1.msra.mxu0 %v2700
      %4612 = vmatprep.subr.mxu0 %v2707
      %4613 = vmatpush1.msra.mxu0 %v2706
      %4614 = vmatprep.subr.mxu0 %v2713
      %4615 = vmatpush1.msra.mxu0 %v2712
      %4616 = vmatprep.subr.mxu0 %v2719
      %4617 = vmatpush1.msra.mxu0 %v2718
      %4618 = vmatprep.subr.mxu0 %v2725
      %4619 = vmatpush1.msra.mxu0 %v2724
      %4620 = vmatprep.subr.mxu0 %v2731
      %4621 = vmatpush1.msra.mxu0 %v2730
      %4622 = vmatprep.subr.mxu0 %v2737
      %4623 = vmatpush1.msra.mxu0 %v2736
      %4624 = vmatprep.subr.mxu0 %v2743
      %4625 = vmatpush1.msra.mxu0 %v2742
      %4626 = vmatprep.subr.mxu0 %v2749
      %4627 = vmatpush1.msra.mxu0 %v2748
      %4628 = vmatprep.subr.mxu0 %v2755
      %4629 = vmatpush1.msra.mxu0 %v2754
      %4630 = vmatprep.subr.mxu0 %v2761
      %4631 = vmatpush1.msra.mxu0 %v2760
      %4632 = vmatprep.subr.mxu0 %v2767
      %4633 = vmatpush1.msra.mxu0 %v2766
      %4634 = vmatprep.subr.mxu0 %v2773
      %4635 = vmatpush1.msra.mxu0 %v2772
      %4636 = vmatprep.mubr.f32.mxu0 %v3853
      %4637 = vmatmul.mubr.f32.gmra.mrb[0].mxu0 %v3852
      %v4638 = vpop.f32.mrb[0].mxu0
      %v4639 = vadd.f32 %v4568, %v4638
      %v4640 = vpop.f32.mrb[0].mxu0
      %v4641 = vadd.f32 %v4570, %v4640
      %4642 = vdwg.mxu0
      %4643 = vmatprep.subr.mxu0 %v3148
      %4644 = vmatpush1.msra.mxu0 %v3147
      %4645 = vmatprep.subr.mxu0 %v3155
      %4646 = vmatpush1.msra.mxu0 %v3154
      %4647 = vmatprep.subr.mxu0 %v3162
      %4648 = vmatpush1.msra.mxu0 %v3161
      %4649 = vmatprep.subr.mxu0 %v3169
      %4650 = vmatpush1.msra.mxu0 %v3168
      %4651 = vmatprep.subr.mxu0 %v3176
      %4652 = vmatpush1.msra.mxu0 %v3175
      %4653 = vmatprep.subr.mxu0 %v3183
      %4654 = vmatpush1.msra.mxu0 %v3182
      %4655 = vmatprep.subr.mxu0 %v3190
      %4656 = vmatpush1.msra.mxu0 %v3189
      %4657 = vmatprep.subr.mxu0 %v3197
      %4658 = vmatpush1.msra.mxu0 %v3196
      %4659 = vmatprep.subr.mxu0 %v3204
      %4660 = vmatpush1.msra.mxu0 %v3203
      %4661 = vmatprep.subr.mxu0 %v3211
      %4662 = vmatpush1.msra.mxu0 %v3210
      %4663 = vmatprep.subr.mxu0 %v3218
      %4664 = vmatpush1.msra.mxu0 %v3217
      %4665 = vmatprep.subr.mxu0 %v3225
      %4666 = vmatpush1.msra.mxu0 %v3224
      %4667 = vmatprep.subr.mxu0 %v3232
      %4668 = vmatpush1.msra.mxu0 %v3231
      %4669 = vmatprep.subr.mxu0 %v3239
      %4670 = vmatpush1.msra.mxu0 %v3238
      %4671 = vmatprep.subr.mxu0 %v3246
      %4672 = vmatpush1.msra.mxu0 %v3245
      %4673 = vmatprep.subr.mxu0 %v3253
      %4674 = vmatpush1.msra.mxu0 %v3252
      %4675 = vmatprep.subr.mxu0 %v3629
      %4676 = vmatpush1.msra.mxu0 %v3628
      %4677 = vmatprep.subr.mxu0 %v3636
      %4678 = vmatpush1.msra.mxu0 %v3635
      %4679 = vmatprep.subr.mxu0 %v3643
      %4680 = vmatpush1.msra.mxu0 %v3642
      %4681 = vmatprep.subr.mxu0 %v3650
      %4682 = vmatpush1.msra.mxu0 %v3649
      %4683 = vmatprep.subr.mxu0 %v3657
      %4684 = vmatpush1.msra.mxu0 %v3656
      %4685 = vmatprep.subr.mxu0 %v3664
      %4686 = vmatpush1.msra.mxu0 %v3663
      %4687 = vmatprep.subr.mxu0 %v3671
      %4688 = vmatpush1.msra.mxu0 %v3670
      %4689 = vmatprep.subr.mxu0 %v3678
      %4690 = vmatpush1.msra.mxu0 %v3677
      %4691 = vmatprep.subr.mxu0 %v3685
      %4692 = vmatpush1.msra.mxu0 %v3684
      %4693 = vmatprep.subr.mxu0 %v3692
      %4694 = vmatpush1.msra.mxu0 %v3691
      %4695 = vmatprep.subr.mxu0 %v3699
      %4696 = vmatpush1.msra.mxu0 %v3698
      %4697 = vmatprep.subr.mxu0 %v3706
      %4698 = vmatpush1.msra.mxu0 %v3705
      %4699 = vmatprep.subr.mxu0 %v3713
      %4700 = vmatpush1.msra.mxu0 %v3712
      %4701 = vmatprep.subr.mxu0 %v3720
      %4702 = vmatpush1.msra.mxu0 %v3719
      %4703 = vmatprep.subr.mxu0 %v3727
      %4704 = vmatpush1.msra.mxu0 %v3726
      %4705 = vmatprep.subr.mxu0 %v3734
      %4706 = vmatpush1.msra.mxu0 %v3733
      %4707 = vmatprep.mubr.f32.mxu0 %v3855
      %4708 = vmatmul.mubr.f32.gmra.mrb[0].mxu0 %v3854
      %v4709 = vpop.f32.mrb[0].mxu0
      %v4710 = vadd.f32 %v4639, %v4709
      %v4711 = vpop.f32.mrb[0].mxu0
      %v4712 = vadd.f32 %v4641, %v4711
      %4713 = vdwg.mxu0
      %4714 = vmatprep.subr.mxu0 0.0
      %4715 = vmatpush1.msra.mxu0 %v177
      %4716 = vmatprep.subr.mxu0 0.0
      %4717 = vmatpush1.msra.mxu0 %v186
      %4718 = vmatprep.subr.mxu0 0.0
      %4719 = vmatpush1.msra.mxu0 %v216
      %4720 = vmatprep.subr.mxu0 0.0
      %4721 = vmatpush1.msra.mxu0 %v230
      %4722 = vmatprep.subr.mxu0 0.0
      %4723 = vmatpush1.msra.mxu0 %v271
      %4724 = vmatprep.subr.mxu0 0.0
      %4725 = vmatpush1.msra.mxu0 %v285
      %4726 = vmatprep.subr.mxu0 0.0
      %4727 = vmatpush1.msra.mxu0 %v326
      %4728 = vmatprep.subr.mxu0 0.0
      %4729 = vmatpush1.msra.mxu0 %v340
      %4730 = vmatprep.subr.mxu0 0.0
      %4731 = vmatpush1.msra.mxu0 %v381
      %4732 = vmatprep.subr.mxu0 0.0
      %4733 = vmatpush1.msra.mxu0 %v395
      %4734 = vmatprep.subr.mxu0 0.0
      %4735 = vmatpush1.msra.mxu0 %v436
      %4736 = vmatprep.subr.mxu0 0.0
      %4737 = vmatpush1.msra.mxu0 %v450
      %4738 = vmatprep.subr.mxu0 0.0
      %4739 = vmatpush1.msra.mxu0 %v491
      %4740 = vmatprep.subr.mxu0 0.0
      %4741 = vmatpush1.msra.mxu0 %v505
      %4742 = vmatprep.subr.mxu0 0.0
      %4743 = vmatpush1.msra.mxu0 %v546
      %4744 = vmatprep.subr.mxu0 0.0
      %4745 = vmatpush1.msra.mxu0 %v560
      %4746 = vmatprep.subr.mxu0 0.0
      %4747 = vmatpush1.msra.mxu0 %v689
      %4748 = vmatprep.subr.mxu0 0.0
      %4749 = vmatpush1.msra.mxu0 %v703
      %4750 = vmatprep.subr.mxu0 0.0
      %4751 = vmatpush1.msra.mxu0 %v717
      %4752 = vmatprep.subr.mxu0 0.0
      %4753 = vmatpush1.msra.mxu0 %v731
      %4754 = vmatprep.subr.mxu0 0.0
      %4755 = vmatpush1.msra.mxu0 %v745
      %4756 = vmatprep.subr.mxu0 0.0
      %4757 = vmatpush1.msra.mxu0 %v759
      %4758 = vmatprep.subr.mxu0 0.0
      %4759 = vmatpush1.msra.mxu0 %v773
      %4760 = vmatprep.subr.mxu0 0.0
      %4761 = vmatpush1.msra.mxu0 %v787
      %4762 = vmatprep.subr.mxu0 0.0
      %4763 = vmatpush1.msra.mxu0 %v801
      %4764 = vmatprep.subr.mxu0 0.0
      %4765 = vmatpush1.msra.mxu0 %v815
      %4766 = vmatprep.subr.mxu0 0.0
      %4767 = vmatpush1.msra.mxu0 %v829
      %4768 = vmatprep.subr.mxu0 0.0
      %4769 = vmatpush1.msra.mxu0 %v843
      %4770 = vmatprep.subr.mxu0 0.0
      %4771 = vmatpush1.msra.mxu0 %v857
      %4772 = vmatprep.subr.mxu0 0.0
      %4773 = vmatpush1.msra.mxu0 %v871
      %4774 = vmatprep.subr.mxu0 0.0
      %4775 = vmatpush1.msra.mxu0 %v885
      %4776 = vmatprep.subr.mxu0 0.0
      %4777 = vmatpush1.msra.mxu0 %v899
      %4778 = vmatprep.mubr.f32.mxu0 %v3849
      %4779 = vmatmul.mubr.f32.gmra.mrb[0].mxu0 %v3848
      %v4780 = vpop.f32.mrb[0].mxu0
      %v4781 = vadd.f32 %v3860, %v4780
      %v4782 = vpop.f32.mrb[0].mxu0
      %4783 = vdwg.mxu0
      %4784 = vmatprep.subr.mxu0 0.0
      %4785 = vmatpush1.msra.mxu0 %v1372
      %4786 = vmatprep.subr.mxu0 0.0
      %4787 = vmatpush1.msra.mxu0 %v1379
      %4788 = vmatprep.subr.mxu0 0.0
      %4789 = vmatpush1.msra.mxu0 %v1386
      %4790 = vmatprep.subr.mxu0 0.0
      %4791 = vmatpush1.msra.mxu0 %v1393
      %4792 = vmatprep.subr.mxu0 0.0
      %4793 = vmatpush1.msra.mxu0 %v1400
      %4794 = vmatprep.subr.mxu0 0.0
      %4795 = vmatpush1.msra.mxu0 %v1407
      %4796 = vmatprep.subr.mxu0 0.0
      %4797 = vmatpush1.msra.mxu0 %v1414
      %4798 = vmatprep.subr.mxu0 0.0
      %4799 = vmatpush1.msra.mxu0 %v1421
      %4800 = vmatprep.subr.mxu0 0.0
      %4801 = vmatpush1.msra.mxu0 %v1428
      %4802 = vmatprep.subr.mxu0 0.0
      %4803 = vmatpush1.msra.mxu0 %v1435
      %4804 = vmatprep.subr.mxu0 0.0
      %4805 = vmatpush1.msra.mxu0 %v1442
      %4806 = vmatprep.subr.mxu0 0.0
      %4807 = vmatpush1.msra.mxu0 %v1449
      %4808 = vmatprep.subr.mxu0 0.0
      %4809 = vmatpush1.msra.mxu0 %v1456
      %4810 = vmatprep.subr.mxu0 0.0
      %4811 = vmatpush1.msra.mxu0 %v1463
      %4812 = vmatprep.subr.mxu0 0.0
      %4813 = vmatpush1.msra.mxu0 %v1470
      %4814 = vmatprep.subr.mxu0 0.0
      %4815 = vmatpush1.msra.mxu0 %v1477
      %4816 = vmatprep.subr.mxu0 0.0
      %4817 = vmatpush1.msra.mxu0 %v1853
      %4818 = vmatprep.subr.mxu0 0.0
      %4819 = vmatpush1.msra.mxu0 %v1860
      %4820 = vmatprep.subr.mxu0 0.0
      %4821 = vmatpush1.msra.mxu0 %v1867
      %4822 = vmatprep.subr.mxu0 0.0
      %4823 = vmatpush1.msra.mxu0 %v1874
      %4824 = vmatprep.subr.mxu0 0.0
      %4825 = vmatpush1.msra.mxu0 %v1881
      %4826 = vmatprep.subr.mxu0 0.0
      %4827 = vmatpush1.msra.mxu0 %v1888
      %4828 = vmatprep.subr.mxu0 0.0
      %4829 = vmatpush1.msra.mxu0 %v1895
      %4830 = vmatprep.subr.mxu0 0.0
      %4831 = vmatpush1.msra.mxu0 %v1902
      %4832 = vmatprep.subr.mxu0 0.0
      %4833 = vmatpush1.msra.mxu0 %v1909
      %4834 = vmatprep.subr.mxu0 0.0
      %4835 = vmatpush1.msra.mxu0 %v1916
      %4836 = vmatprep.subr.mxu0 0.0
      %4837 = vmatpush1.msra.mxu0 %v1923
      %4838 = vmatprep.subr.mxu0 0.0
      %4839 = vmatpush1.msra.mxu0 %v1930
      %4840 = vmatprep.subr.mxu0 0.0
      %4841 = vmatpush1.msra.mxu0 %v1937
      %4842 = vmatprep.subr.mxu0 0.0
      %4843 = vmatpush1.msra.mxu0 %v1944
      %4844 = vmatprep.subr.mxu0 0.0
      %4845 = vmatpush1.msra.mxu0 %v1951
      %4846 = vmatprep.subr.mxu0 0.0
      %4847 = vmatpush1.msra.mxu0 %v1958
      %4848 = vmatprep.mubr.f32.mxu0 %v3851
      %4849 = vmatmul.mubr.f32.gmra.mrb[0].mxu0 %v3850
      %v4850 = vpop.f32.mrb[0].mxu0
      %v4851 = vadd.f32 %v4781, %v4850
      %v4852 = vpop.f32.mrb[0].mxu0
      %4853 = vdwg.mxu0
      %4854 = vmatprep.subr.mxu0 0.0
      %4855 = vmatpush1.msra.mxu0 %v609
      %4856 = vmatprep.subr.mxu0 0.0
      %4857 = vmatpush1.msra.mxu0 %v611
      %4858 = vmatprep.subr.mxu0 0.0
      %4859 = vmatpush1.msra.mxu0 %v2084
      %4860 = vmatprep.subr.mxu0 0.0
      %4861 = vmatpush1.msra.mxu0 %v2098
      %4862 = vmatprep.subr.mxu0 0.0
      %4863 = vmatpush1.msra.mxu0 %v2112
      %4864 = vmatprep.subr.mxu0 0.0
      %4865 = vmatpush1.msra.mxu0 %v2126
      %4866 = vmatprep.subr.mxu0 0.0
      %4867 = vmatpush1.msra.mxu0 %v2140
      %4868 = vmatprep.subr.mxu0 0.0
      %4869 = vmatpush1.msra.mxu0 %v2154
      %4870 = vmatprep.subr.mxu0 0.0
      %4871 = vmatpush1.msra.mxu0 %v2168
      %4872 = vmatprep.subr.mxu0 0.0
      %4873 = vmatpush1.msra.mxu0 %v2182
      %4874 = vmatprep.subr.mxu0 0.0
      %4875 = vmatpush1.msra.mxu0 %v2196
      %4876 = vmatprep.subr.mxu0 0.0
      %4877 = vmatpush1.msra.mxu0 %v2210
      %4878 = vmatprep.subr.mxu0 0.0
      %4879 = vmatpush1.msra.mxu0 %v2224
      %4880 = vmatprep.subr.mxu0 0.0
      %4881 = vmatpush1.msra.mxu0 %v2238
      %4882 = vmatprep.subr.mxu0 0.0
      %4883 = vmatpush1.msra.mxu0 %v2252
      %4884 = vmatprep.subr.mxu0 0.0
      %4885 = vmatpush1.msra.mxu0 %v2266
      %4886 = vmatprep.subr.mxu0 0.0
      %4887 = vmatpush1.msra.mxu0 %v2466
      %4888 = vmatprep.subr.mxu0 0.0
      %4889 = vmatpush1.msra.mxu0 %v2480
      %4890 = vmatprep.subr.mxu0 0.0
      %4891 = vmatpush1.msra.mxu0 %v2494
      %4892 = vmatprep.subr.mxu0 0.0
      %4893 = vmatpush1.msra.mxu0 %v2508
      %4894 = vmatprep.subr.mxu0 0.0
      %4895 = vmatpush1.msra.mxu0 %v2522
      %4896 = vmatprep.subr.mxu0 0.0
      %4897 = vmatpush1.msra.mxu0 %v2536
      %4898 = vmatprep.subr.mxu0 0.0
      %4899 = vmatpush1.msra.mxu0 %v2550
      %4900 = vmatprep.subr.mxu0 0.0
      %4901 = vmatpush1.msra.mxu0 %v2564
      %4902 = vmatprep.subr.mxu0 0.0
      %4903 = vmatpush1.msra.mxu0 %v2578
      %4904 = vmatprep.subr.mxu0 0.0
      %4905 = vmatpush1.msra.mxu0 %v2592
      %4906 = vmatprep.subr.mxu0 0.0
      %4907 = vmatpush1.msra.mxu0 %v2606
      %4908 = vmatprep.subr.mxu0 0.0
      %4909 = vmatpush1.msra.mxu0 %v2620
      %4910 = vmatprep.subr.mxu0 0.0
      %4911 = vmatpush1.msra.mxu0 %v2634
      %4912 = vmatprep.subr.mxu0 0.0
      %4913 = vmatpush1.msra.mxu0 %v2648
      %4914 = vmatprep.subr.mxu0 0.0
      %4915 = vmatpush1.msra.mxu0 %v2662
      %4916 = vmatprep.subr.mxu0 0.0
      %4917 = vmatpush1.msra.mxu0 %v2676
      %4918 = vmatprep.mubr.f32.mxu0 %v3853
      %4919 = vmatmul.mubr.f32.gmra.mrb[0].mxu0 %v3852
      %v4920 = vpop.f32.mrb[0].mxu0
      %v4921 = vadd.f32 %v4851, %v4920
      %v4922 = vpop.f32.mrb[0].mxu0
      %4923 = vdwg.mxu0
      %4924 = vmatprep.subr.mxu0 0.0
      %4925 = vmatpush1.msra.mxu0 %v3149
      %4926 = vmatprep.subr.mxu0 0.0
      %4927 = vmatpush1.msra.mxu0 %v3156
      %4928 = vmatprep.subr.mxu0 0.0
      %4929 = vmatpush1.msra.mxu0 %v3163
      %4930 = vmatprep.subr.mxu0 0.0
      %4931 = vmatpush1.msra.mxu0 %v3170
      %4932 = vmatprep.subr.mxu0 0.0
      %4933 = vmatpush1.msra.mxu0 %v3177
      %4934 = vmatprep.subr.mxu0 0.0
      %4935 = vmatpush1.msra.mxu0 %v3184
      %4936 = vmatprep.subr.mxu0 0.0
      %4937 = vmatpush1.msra.mxu0 %v3191
      %4938 = vmatprep.subr.mxu0 0.0
      %4939 = vmatpush1.msra.mxu0 %v3198
      %4940 = vmatprep.subr.mxu0 0.0
      %4941 = vmatpush1.msra.mxu0 %v3205
      %4942 = vmatprep.subr.mxu0 0.0
      %4943 = vmatpush1.msra.mxu0 %v3212
      %4944 = vmatprep.subr.mxu0 0.0
      %4945 = vmatpush1.msra.mxu0 %v3219
      %4946 = vmatprep.subr.mxu0 0.0
      %4947 = vmatpush1.msra.mxu0 %v3226
      %4948 = vmatprep.subr.mxu0 0.0
      %4949 = vmatpush1.msra.mxu0 %v3233
      %4950 = vmatprep.subr.mxu0 0.0
      %4951 = vmatpush1.msra.mxu0 %v3240
      %4952 = vmatprep.subr.mxu0 0.0
      %4953 = vmatpush1.msra.mxu0 %v3247
      %4954 = vmatprep.subr.mxu0 0.0
      %4955 = vmatpush1.msra.mxu0 %v3254
      %4956 = vmatprep.subr.mxu0 0.0
      %4957 = vmatpush1.msra.mxu0 %v3630
      %4958 = vmatprep.subr.mxu0 0.0
      %4959 = vmatpush1.msra.mxu0 %v3637
      %4960 = vmatprep.subr.mxu0 0.0
      %4961 = vmatpush1.msra.mxu0 %v3644
      %4962 = vmatprep.subr.mxu0 0.0
      %4963 = vmatpush1.msra.mxu0 %v3651
      %4964 = vmatprep.subr.mxu0 0.0
      %4965 = vmatpush1.msra.mxu0 %v3658
      %4966 = vmatprep.subr.mxu0 0.0
      %4967 = vmatpush1.msra.mxu0 %v3665
      %4968 = vmatprep.subr.mxu0 0.0
      %4969 = vmatpush1.msra.mxu0 %v3672
      %4970 = vmatprep.subr.mxu0 0.0
      %4971 = vmatpush1.msra.mxu0 %v3679
      %4972 = vmatprep.subr.mxu0 0.0
      %4973 = vmatpush1.msra.mxu0 %v3686
      %4974 = vmatprep.subr.mxu0 0.0
      %4975 = vmatpush1.msra.mxu0 %v3693
      %4976 = vmatprep.subr.mxu0 0.0
      %4977 = vmatpush1.msra.mxu0 %v3700
      %4978 = vmatprep.subr.mxu0 0.0
      %4979 = vmatpush1.msra.mxu0 %v3707
      %4980 = vmatprep.subr.mxu0 0.0
      %4981 = vmatpush1.msra.mxu0 %v3714
      %4982 = vmatprep.subr.mxu0 0.0
      %4983 = vmatpush1.msra.mxu0 %v3721
      %4984 = vmatprep.subr.mxu0 0.0
      %4985 = vmatpush1.msra.mxu0 %v3728
      %4986 = vmatprep.subr.mxu0 0.0
      %4987 = vmatpush1.msra.mxu0 %v3735
      %4988 = vmatprep.mubr.f32.mxu0 %v3855
      %4989 = vmatmul.mubr.f32.gmra.mrb[0].mxu0 %v3854
      %v4990 = vpop.f32.mrb[0].mxu0
      %v4991 = vadd.f32 %v4921, %v4990
      %v4992 = vpop.f32.mrb[0].mxu0
      %4993 = vdwg.mxu0
      %v4994 = vmax.f32 %v4142, 0.0
      %v4995 = vmax.f32 %v4144, 0.0
      %v4996 = vmax.f32 %v4426, 0.0
      %v4997 = vmax.f32 %v4428, 0.0
      %v4998 = vmax.f32 %v4710, 0.0
      %v4999 = vmax.f32 %v4712, 0.0
      %v5000 = vmax.f32 %v4991, 0.0
      %5001 = vst [vmem:[%s170] sm:$0xff] %v4994
      %5002 = vst [vmem:[%s170 + $0x8] sm:$0xff] %v4995
      %5003 = vst [vmem:[%s170 + $0x10] sm:$0xff] %v4996
      %5004 = vst [vmem:[%s170 + $0x18] sm:$0xff] %v4997
      %5005 = vst [vmem:[%s170 + $0x20] sm:$0xff] %v4998
      %5006 = vst [vmem:[%s170 + $0x28] sm:$0xff] %v4999
      %vm5007 = vcmask 678912
      %5008 = vst.msk [vmem:[%s170 + $0x30] sm:$0xff] %vm5007, %v5000
      %p5009 = scmp.lt.s32.totalorder %s14, 1
      %s5010 = scalar_select %p5009, %s14, 1
      %s5011 = smul.addr %s5010, 7
      %s5012 = smul.addr %s5011, 8
      %s5013 = scalar_lea.vmem %s3, %s5012
      // Predicated region
      $region33: #{compressor_forward.6} parent=31 // pred_check
        %p5014 = pneg %p100
      $region34: #{compressor_forward.6} parent=31 // pred_check_branch
        %5016 = sbr.rel (%p5014) target = $region36
      $region35: #{compressor_forward.6} parent=31 // pred_region
        _
      $region36: #{compressor_forward.6} parent=31 // pred_fallthru
        _
    $region32: #{compressor_forward.6} parent=5 // pred_fallthru
      _
    %p5017 = scmp.le.s32.totalorder 2, %s9
    // Predicated region
    $region37: #{compressor_forward.6} parent=5 // pred_check
      %p5018 = pneg %p5017
    $region38: #{compressor_forward.6} parent=5 // pred_check_branch
      %5020 = sbr.rel (%p5018) target = $region40
    $region39: #{compressor_forward.6} parent=5 // pred_region
      %s5021 = ssub.s32 %s9, 2
      // Predicated region
      $region41: #{compressor_forward.6} parent=39 // pred_check
        %p5022 = pneg %p106
      $region42: #{compressor_forward.6} parent=39 // pred_check_branch
        %5024 = sbr.rel (%p5022) target = $region44
      $region43: #{compressor_forward.6} parent=39 // pred_region
        %p5025 = scmp.lt.s32.totalorder %s15, 1
        %s5026 = scalar_select %p5025, %s15, 1
        %s5027 = smul.addr %s5026, 7
        %s5028 = smul.addr %s5027, 8
        %s5029 = scalar_lea.vmem %s3, %s5028
      $region44: #{compressor_forward.6} parent=39 // pred_fallthru
        _
    $region40: #{compressor_forward.6} parent=5 // pred_fallthru
      _
  $region6: #{compressor_forward.6} parent=0 // loop_footer
    %s13 = sadd.s32 1, %s9
  $region7: #{compressor_forward.6} parent=0 // loop_footer_branch
    %8 = sbr.rel target = $region3
  $region8: #{compressor_forward.6} parent=0 // loop_exit
    _

</llo_original>
